<compile_context>
chip_gen: v6e
topology: v6e:2x2x1
jax: 0.10.0
libtpu: 0.0.40
codegen_flags: <defaults>
</compile_context>

<pallas_src>
import functools

import jax
import jax.numpy as jnp
import numpy as np
from jax.experimental import pallas as pl
from jax.experimental.pallas import tpu as pltpu


# Column layout of the packed per-example "side" input (B, 9).
(_BU_MU, _BU_SG, _BI_MU, _BI_SG, _INV_SQRT_N,
 _KNOWN_U, _KNOWN_M, _N_BU, _N_BI) = range(9)
_N_SIDE = 9


# ---------------------------------------------------------------------------
# Pallas kernels
# ---------------------------------------------------------------------------
def _bias_and_pq(side, p_mu, p_sg, q_mu, q_sg, n_p, n_q):
    col = lambda c: side[:, c:c + 1]
    bu = col(_BU_MU) + col(_BU_SG) * col(_N_BU)          # (BM, 1)
    bi = col(_BI_MU) + col(_BI_SG) * col(_N_BI)          # (BM, 1)
    p = p_mu + p_sg * n_p                                # (BM, E)
    q = q_mu + q_sg * n_q                                # (BM, E)
    return bu, bi, p, q


def _finalize(training, side, bu, bi, p, q, y, gm, out_ref):
    col = lambda c: side[:, c:c + 1]
    y = y * col(_INV_SQRT_N)
    dot = jnp.sum(q * (p + y), axis=-1, keepdims=True)   # (BM, 1)
    if not training:  # static Python branch (eval-mode known-user/movie masks)
        ku = col(_KNOWN_U)
        km = col(_KNOWN_M)
        # ku masks p and y, km masks q  =>  dot scales by ku*km (exact for 0/1).
        dot = (ku * km) * dot
        bu = ku * bu
        bi = km * bi
    out_ref[...] = dot + bi + bu + gm


def _svdpp_fused_kernel(training, L,
                        gm_ref, side_ref, idx_ref,
                        p_mu_ref, p_sg_ref, q_mu_ref, q_sg_ref,
                        np_ref, nq_ref, ny_ref,
                        ymu_ref, ysg_ref,
                        out_ref):
    """Fused path: Y_mu / Y_sigma tables are VMEM-resident; the per-example row
    gather is a one-hot matmul on the MXU (only (B, L) int32 indices travel
    from HBM per example instead of 2x(L, E) gathered rows)."""
    side = side_ref[...]                                  # (BM, 9)
    bu, bi, p, q = _bias_and_pq(side, p_mu_ref[...], p_sg_ref[...],
                                q_mu_ref[...], q_sg_ref[...],
                                np_ref[...], nq_ref[...])

    idx = idx_ref[...]                                    # (BM, L) int32
    ymu = ymu_ref[...]                                    # (M1p, E), resident
    ysg = ysg_ref[...]                                    # (M1p, E), resident
    bm = idx.shape[0]
    m1p = ymu.shape[0]
    movie_ids = jax.lax.broadcasted_iota(jnp.int32, (bm, m1p), 1)  # hoisted

    counts = jnp.zeros((bm, m1p), jnp.float32)
    y = jnp.zeros(p.shape, jnp.float32)                   # (BM, E) accumulator
    for l in range(L):                                    # static unroll over slots
        onehot = (idx[:, l:l + 1] == movie_ids).astype(jnp.float32)   # (BM, M1p)
        counts = counts + onehot
        sig_l = jnp.dot(onehot, ysg, preferred_element_type=jnp.float32)  # (BM, E)
        y = y + sig_l * ny_ref[:, l, :]
    # mu contribution collapses to one matmul with the per-movie counts.
    y = y + jnp.dot(counts, ymu, preferred_element_type=jnp.float32)

    _finalize(training, side, bu, bi, p, q, y, gm_ref[0], out_ref)


def _svdpp_pregather_kernel(training, L,
                            gm_ref, side_ref,
                            p_mu_ref, p_sg_ref, q_mu_ref, q_sg_ref,
                            np_ref, nq_ref,
                            y_mu_ref, y_sg_ref, ny_ref,
                            out_ref):
    """Fallback path (large Y tables): Y rows pre-gathered in JAX, but the
    L-reduction is still an unrolled accumulate (no (BM, L, E) temporary)."""
    side = side_ref[...]
    bu, bi, p, q = _bias_and_pq(side, p_mu_ref[...], p_sg_ref[...],
                                q_mu_ref[...], q_sg_ref[...],
                                np_ref[...], nq_ref[...])
    y = jnp.zeros(p.shape, jnp.float32)
    for l in range(L):                                    # static unroll
        y = y + y_mu_ref[:, l, :] + y_sg_ref[:, l, :] * ny_ref[:, l, :]
    _finalize(training, side, bu, bi, p, q, y, gm_ref[0], out_ref)


# ---------------------------------------------------------------------------
# Wrapper helpers
# ---------------------------------------------------------------------------
def _round_up(x, m):
    return (x + m - 1) // m * m


def _cdiv(a, b):
    return -(-a // b)


def _pad_rows(x, rows):
    pad = rows - x.shape[0]
    if pad <= 0:
        return x
    cfg = [(0, pad)] + [(0, 0)] * (x.ndim - 1)
    return jnp.pad(x, cfg)


def _vmem_capacity_bytes():
    try:
        return int(pltpu.get_tpu_info().vmem_capacity_bytes)
    except Exception:
        return 64 * 1024 * 1024  # conservative (v7x per-TensorCore VMEM)


def _lane_bytes(inner_shape, dtype_bytes=4):
    """Approx. per-row bytes of one (block_b, *inner_shape) VMEM block buffer
    (minor dim lane-padded to 128)."""
    lead = 1
    for d in inner_shape[:-1]:
        lead *= int(d)
    return lead * _round_up(int(inner_shape[-1]), 128) * dtype_bytes


# ---------------------------------------------------------------------------
# Forward wrapper: gathers + packing + pallas_call
# ---------------------------------------------------------------------------
def svdpp_forward(params, data, noise, *, global_mean, training=False,
                  block_b=None, fuse_y_gather=None, vmem_budget_bytes=None):
    users = data["user"]
    movies = data["movie"]
    rated = data["movies_rated_by_this_user"].astype(jnp.int32)

    take = lambda tbl, idx: jnp.take(tbl, idx, axis=0)
    softplus = lambda x: jnp.logaddexp(x, 0.0)            # == F.softplus

    # sigma = softplus(logsigma) is computed once on the small parameter tables
    # and then gathered: exact (elementwise op commutes with the gather), dedupes
    # repeated users/movies, and removes all transcendentals from the kernel.
    p_mu = take(params["P_mu"], users)                    # (B, E)
    p_sg = take(softplus(params["P_logsigma"]), users)
    q_mu = take(params["Q_mu"], movies)
    q_sg = take(softplus(params["Q_logsigma"]), movies)

    inv_sqrt_n = 1.0 / data["sqrt_of_number_of_movies_rated_by_this_user"]   # (B, 1)

    # Pack all nine (B, 1) per-example scalars into one lane-packed (B, 9) array.
    side = jnp.concatenate(
        [take(params["Bu_mu"], users),
         take(softplus(params["Bu_logsigma"]), users),
         take(params["Bi_mu"], movies),
         take(softplus(params["Bi_logsigma"]), movies),
         inv_sqrt_n,
         data["is_known_user"],
         data["is_known_movie"],
         noise["bu"],
         noise["bi"]],
        axis=1).astype(jnp.float32)                       # (B, 9)

    B, E = p_mu.shape
    L = rated.shape[1]
    m1 = params["Y_mu"].shape[0]
    m1p = _round_up(m1, 8)

    # ---- VMEM sizing (per-chip) --------------------------------------------
    cap = _vmem_capacity_bytes()
    budget = int(vmem_budget_bytes) if vmem_budget_bytes else int(cap * 0.45)

    table_bytes = 2 * 2 * m1p * _round_up(E, 128) * 4     # mu+sigma, double-buffered

    if fuse_y_gather is None:
        # Fuse when the resident tables comfortably fit VMEM and the one-hot MXU
        # gather stays cheap (small/moderate movie vocabulary).
        fuse_y_gather = (table_bytes <= budget // 3) and (m1p <= 4096)

    if fuse_y_gather:
        per_row_io = (_lane_bytes((_N_SIDE,)) + _lane_bytes((L,))
                      + 6 * _lane_bytes((E,)) + _lane_bytes((L, E))
                      + _lane_bytes((1,)))
        per_row_tmp = 2 * _lane_bytes((m1p,)) + 6 * _lane_bytes((E,))
        resident = table_bytes
    else:
        per_row_io = (_lane_bytes((_N_SIDE,)) + 6 * _lane_bytes((E,))
                      + 3 * _lane_bytes((L, E)) + _lane_bytes((1,)))
        per_row_tmp = 6 * _lane_bytes((E,))
        resident = 0

    per_row_total = 2 * per_row_io + per_row_tmp          # x2: double-buffered pipeline

    B8 = _round_up(B, 8)                                  # sublane padding only
    rows_fit = max(8, ((budget - resident) // per_row_total) // 8 * 8)
    bb = min(int(block_b) if block_b else 1024, rows_fit)
    # Keep >= 2 grid steps: both v7x TensorCores get work with
    # dimension_semantics=("parallel",), and the DMA pipeline has overlap.
    if B8 >= 16:
        bb = min(bb, _round_up(_cdiv(B8, 2), 8))
    bb = max(8, min(bb, B8) // 8 * 8)

    grid = (_cdiv(B8, bb),)                               # ragged last block is OK

    footprint = bb * per_row_total + resident
    vmem_limit = int(min(cap * 3 // 4,
                         max(32 * 1024 * 1024, footprint * 5 // 4 + (4 << 20))))

    # Pad the batch only to a multiple of 8 (no full-tile jnp.pad copies of the
    # big arrays); Pallas masks the ragged last grid block.
    pad = lambda x: _pad_rows(x, B8)
    side = pad(side)
    p_mu, p_sg, q_mu, q_sg = pad(p_mu), pad(p_sg), pad(q_mu), pad(q_sg)
    n_p, n_q, n_y = pad(noise["p"]), pad(noise["q"]), pad(noise["y"])

    gm = jnp.asarray([global_mean], jnp.float32)          # SMEM scalar input

    spec_smem = pl.BlockSpec(memory_space=pltpu.MemorySpace.SMEM)
    spec_side = pl.BlockSpec((bb, _N_SIDE), lambda i: (i, 0))
    spec_be = pl.BlockSpec((bb, E), lambda i: (i, 0))
    spec_ble = pl.BlockSpec((bb, L, E), lambda i: (i, 0, 0))
    spec_out = pl.BlockSpec((bb, 1), lambda i: (i, 0))
    cparams = pltpu.CompilerParams(dimension_semantics=("parallel",),
                                   vmem_limit_bytes=vmem_limit)

    if fuse_y_gather:
        idx = pad(rated)                                  # (B8, L) int32
        y_mu_tab = jnp.pad(params["Y_mu"].astype(jnp.float32),
                           ((0, m1p - m1), (0, 0)))       # (M1p, E)
        y_sg_tab = jnp.pad(softplus(params["Y_logsigma"]).astype(jnp.float32),
                           ((0, m1p - m1), (0, 0)))
        spec_idx = pl.BlockSpec((bb, L), lambda i: (i, 0))
        spec_tab = pl.BlockSpec((m1p, E), lambda i: (0, 0))   # VMEM-resident

        kernel = functools.partial(_svdpp_fused_kernel, bool(training), int(L))
        out = pl.pallas_call(
            kernel,
            out_shape=jax.ShapeDtypeStruct((B8, 1), jnp.float32),
            grid=grid,
            in_specs=[spec_smem, spec_side, spec_idx,
                      spec_be, spec_be, spec_be, spec_be,   # p_mu, p_sg, q_mu, q_sg
                      spec_be, spec_be, spec_ble,           # noise p, q, y
                      spec_tab, spec_tab],                  # Y_mu, Y_sigma tables
            out_specs=spec_out,
            compiler_params=cparams,
        )(gm, side, idx, p_mu, p_sg, q_mu, q_sg, n_p, n_q, n_y,
          y_mu_tab, y_sg_tab)
    else:
        y_mu = pad(take(params["Y_mu"], rated))            # (B8, L, E)
        y_sg = pad(take(softplus(params["Y_logsigma"]), rated))
        kernel = functools.partial(_svdpp_pregather_kernel, bool(training), int(L))
        out = pl.pallas_call(
            kernel,
            out_shape=jax.ShapeDtypeStruct((B8, 1), jnp.float32),
            grid=grid,
            in_specs=[spec_smem, spec_side,
                      spec_be, spec_be, spec_be, spec_be,
                      spec_be, spec_be,
                      spec_ble, spec_ble, spec_ble],
            out_specs=spec_out,
            compiler_params=cparams,
        )(gm, side, p_mu, p_sg, q_mu, q_sg, n_p, n_q, y_mu, y_sg, n_y)

    return out[:B, 0]                                      # (B,), matches torch


# ---------------------------------------------------------------------------
# Pure-JAX reference (mirrors the PyTorch forward exactly)
# ---------------------------------------------------------------------------
def svdpp_reference(params, data, noise, *, global_mean, training=False):
    softplus = lambda x: jnp.logaddexp(x, 0.0)
    take = lambda tbl, idx: jnp.take(tbl, idx, axis=0)
    users, movies, rated = data["user"], data["movie"], data["movies_rated_by_this_user"]

    bu = take(params["Bu_mu"], users) + softplus(take(params["Bu_logsigma"], users)) * noise["bu"]
    bi = take(params["Bi_mu"], movies) + softplus(take(params["Bi_logsigma"], movies)) * noise["bi"]
    p = take(params["P_mu"], users) + softplus(take(params["P_logsigma"], users)) * noise["p"]
    q = take(params["Q_mu"], movies) + softplus(take(params["Q_logsigma"], movies)) * noise["q"]
    y = take(params["Y_mu"], rated) + softplus(take(params["Y_logsigma"], rated)) * noise["y"]
    y = jnp.sum(y, axis=1) / data["sqrt_of_number_of_movies_rated_by_this_user"]
    if not training:
        bu = data["is_known_user"] * bu
        bi = data["is_known_movie"] * bi
        p = data["is_known_user"] * p
        q = data["is_known_movie"] * q
        y = data["is_known_user"] * y
    res = jnp.sum(q * (p + y), axis=1) + jnp.squeeze(bi, -1) + jnp.squeeze(bu, -1) + global_mean
    return res


# ---------------------------------------------------------------------------
# Deterministic parameter / input construction
# ---------------------------------------------------------------------------
def make_params(key, num_users, num_movies, emb, mu_mean, mu_std, logsigma_const):
    ks = jax.random.split(key, 5)
    normal = lambda k, shape: (mu_mean + mu_std * jax.random.normal(k, shape)).astype(jnp.float32)
    const = lambda shape: jnp.full(shape, logsigma_const, jnp.float32)
    # Note: the padding_idx row of Y is overwritten by normal_ in the PyTorch
    # __init__, so no special zero row is needed here.
    return {
        "Bu_mu": normal(ks[0], (num_users, 1)),       "Bu_logsigma": const((num_users, 1)),
        "Bi_mu": normal(ks[1], (num_movies, 1)),      "Bi_logsigma": const((num_movies, 1)),
        "P_mu": normal(ks[2], (num_users, emb)),      "P_logsigma": const((num_users, emb)),
        "Q_mu": normal(ks[3], (num_movies, emb)),     "Q_logsigma": const((num_movies, emb)),
        "Y_mu": normal(ks[4], (num_movies + 1, emb)), "Y_logsigma": const((num_movies + 1, emb)),
    }


if __name__ == "__main__":
    # Small, kernel-friendly sizes (E lane-aligned).
    B, L, E = 200, 8, 128
    NUM_USERS, NUM_MOVIES = 64, 48
    GLOBAL_MEAN = 3.5
    MU_MEAN_INIT, MU_STD_INIT, LOGSIGMA_CONST_INIT = 0.0, 0.1, -5.0

    root = jax.random.PRNGKey(0)
    k_param, k_u, k_m, k_rated, k_cnt, k_ku, k_km, k_noise = jax.random.split(root, 8)

    params = make_params(k_param, NUM_USERS, NUM_MOVIES, E,
                         MU_MEAN_INIT, MU_STD_INIT, LOGSIGMA_CONST_INIT)

    counts = jax.random.randint(k_cnt, (B, 1), 1, L + 1)
    data = {
        "user": jax.random.randint(k_u, (B,), 0, NUM_USERS),
        "movie": jax.random.randint(k_m, (B,), 0, NUM_MOVIES),
        "movies_rated_by_this_user": jax.random.randint(k_rated, (B, L), 0, NUM_MOVIES + 1),
        "sqrt_of_number_of_movies_rated_by_this_user": jnp.sqrt(counts.astype(jnp.float32)),
        "is_known_user": jax.random.bernoulli(k_ku, 0.8, (B, 1)).astype(jnp.float32),
        "is_known_movie": jax.random.bernoulli(k_km, 0.8, (B, 1)).astype(jnp.float32),
    }

    kn = jax.random.split(k_noise, 5)
    noise = {
        "bu": jax.random.normal(kn[0], (B, 1), jnp.float32),
        "bi": jax.random.normal(kn[1], (B, 1), jnp.float32),
        "p": jax.random.normal(kn[2], (B, E), jnp.float32),
        "q": jax.random.normal(kn[3], (B, E), jnp.float32),
        "y": jax.random.normal(kn[4], (B, L, E), jnp.float32),
    }

    ref_eval = svdpp_reference(params, data, noise, global_mean=GLOBAL_MEAN, training=False)
    ref_train = svdpp_reference(params, data, noise, global_mean=GLOBAL_MEAN, training=True)

    # Fused-path tolerance: the one-hot gather runs on the MXU, which may use
    # bf16 mantissa passes for f32 operands depending on default precision.
    FUSED_TOL = dict(rtol=2e-3, atol=2e-3)
    TIGHT_TOL = dict(rtol=2e-5, atol=2e-5)

    # 1) Eval mode, fused Y gather, auto tile (>= 2 grid steps).
    out = jax.block_until_ready(
        svdpp_forward(params, data, noise, global_mean=GLOBAL_MEAN, training=False))
    np.testing.assert_allclose(np.asarray(out), np.asarray(ref_eval), **FUSED_TOL)

    # 2) Eval mode, fused, small tile -> several grid steps incl. a ragged last block.
    out = jax.block_until_ready(
        svdpp_forward(params, data, noise, global_mean=GLOBAL_MEAN, training=False, block_b=64))
    np.testing.assert_allclose(np.asarray(out), np.asarray(ref_eval), **FUSED_TOL)

    # 3) Eval mode, forced pre-gather fallback (matmul-free) -> tight check.
    out = jax.block_until_ready(
        svdpp_forward(params, data, noise, global_mean=GLOBAL_MEAN, training=False,
                      fuse_y_gather=False))
    np.testing.assert_allclose(np.asarray(out), np.asarray(ref_eval), **TIGHT_TOL)

    # 4) Training mode (no known-user/movie masking), fused path.
    out = jax.block_until_ready(
        svdpp_forward(params, data, noise, global_mean=GLOBAL_MEAN, training=True))
    np.testing.assert_allclose(np.asarray(out), np.asarray(ref_train), **FUSED_TOL)

    # 5) Ragged batch (B not a multiple of 8) -> exercises the pad-to-8 path.
    Bo = 197
    data_o = {k: v[:Bo] for k, v in data.items()}
    noise_o = {k: v[:Bo] for k, v in noise.items()}
    ref_o = svdpp_reference(params, data_o, noise_o, global_mean=GLOBAL_MEAN, training=False)
    out = jax.block_until_ready(
        svdpp_forward(params, data_o, noise_o, global_mean=GLOBAL_MEAN, training=False))
    np.testing.assert_allclose(np.asarray(out), np.asarray(ref_o), **FUSED_TOL)

    print("KERNEL_OK")
</pallas_src>

<mosaic_0001>
module attributes {stable_mosaic.version = 11 : i64} {
  func.func @_svdpp_fused_kernel(%arg0: i32, %arg1: memref<1xf32, #tpu.memory_space<smem>>, %arg2: memref<104x9xf32, #tpu.memory_space<vmem>>, %arg3: memref<104x8xi32, #tpu.memory_space<vmem>>, %arg4: memref<104x128xf32, #tpu.memory_space<vmem>>, %arg5: memref<104x128xf32, #tpu.memory_space<vmem>>, %arg6: memref<104x128xf32, #tpu.memory_space<vmem>>, %arg7: memref<104x128xf32, #tpu.memory_space<vmem>>, %arg8: memref<104x128xf32, #tpu.memory_space<vmem>>, %arg9: memref<104x128xf32, #tpu.memory_space<vmem>>, %arg10: memref<104x8x128xf32, #tpu.memory_space<vmem>>, %arg11: memref<56x128xf32, #tpu.memory_space<vmem>>, %arg12: memref<56x128xf32, #tpu.memory_space<vmem>>, %arg13: memref<104x1xf32, #tpu.memory_space<vmem>>) attributes {dimension_semantics = [#tpu.dimension_semantics<parallel>], iteration_bounds = array<i64: 2>, scalar_prefetch = 0 : i64, scratch_operands = 0 : i64, tpu.core_type = #tpu.core_type<tc>, window_params = [{transform_indices = @transform_0, window_bounds = array<i64: 1>}, {transform_indices = @transform_1, window_bounds = array<i64: 104, 9>}, {transform_indices = @transform_2, window_bounds = array<i64: 104, 8>}, {transform_indices = @transform_3, window_bounds = array<i64: 104, 128>}, {transform_indices = @transform_4, window_bounds = array<i64: 104, 128>}, {transform_indices = @transform_5, window_bounds = array<i64: 104, 128>}, {transform_indices = @transform_6, window_bounds = array<i64: 104, 128>}, {transform_indices = @transform_7, window_bounds = array<i64: 104, 128>}, {transform_indices = @transform_8, window_bounds = array<i64: 104, 128>}, {transform_indices = @transform_9, window_bounds = array<i64: 104, 8, 128>}, {pipeline_mode = #tpu.pipeline_mode<synchronous>, transform_indices = @transform_10, window_bounds = array<i64: 56, 128>}, {pipeline_mode = #tpu.pipeline_mode<synchronous>, transform_indices = @transform_11, window_bounds = array<i64: 56, 128>}, {transform_indices = @transform_12, window_bounds = array<i64: 104, 1>}]} {
    %c0 = arith.constant 0 : index
    %c0_0 = arith.constant 0 : index
    %0 = vector.load %arg2[%c0, %c0_0] : memref<104x9xf32, #tpu.memory_space<vmem>>, vector<104x9xf32>
    %c0_1 = arith.constant 0 : index
    %c0_2 = arith.constant 0 : index
    %1 = vector.load %arg4[%c0_1, %c0_2] : memref<104x128xf32, #tpu.memory_space<vmem>>, vector<104x128xf32>
    %c0_3 = arith.constant 0 : index
    %c0_4 = arith.constant 0 : index
    %2 = vector.load %arg5[%c0_3, %c0_4] : memref<104x128xf32, #tpu.memory_space<vmem>>, vector<104x128xf32>
    %c0_5 = arith.constant 0 : index
    %c0_6 = arith.constant 0 : index
    %3 = vector.load %arg6[%c0_5, %c0_6] : memref<104x128xf32, #tpu.memory_space<vmem>>, vector<104x128xf32>
    %c0_7 = arith.constant 0 : index
    %c0_8 = arith.constant 0 : index
    %4 = vector.load %arg7[%c0_7, %c0_8] : memref<104x128xf32, #tpu.memory_space<vmem>>, vector<104x128xf32>
    %c0_9 = arith.constant 0 : index
    %c0_10 = arith.constant 0 : index
    %5 = vector.load %arg8[%c0_9, %c0_10] : memref<104x128xf32, #tpu.memory_space<vmem>>, vector<104x128xf32>
    %c0_11 = arith.constant 0 : index
    %c0_12 = arith.constant 0 : index
    %6 = vector.load %arg9[%c0_11, %c0_12] : memref<104x128xf32, #tpu.memory_space<vmem>>, vector<104x128xf32>
    %7 = vector.extract_strided_slice %0 {offsets = [0, 0], sizes = [104, 1], strides = [1, 1]} : vector<104x9xf32> to vector<104x1xf32>
    %8 = vector.extract_strided_slice %0 {offsets = [0, 1], sizes = [104, 1], strides = [1, 1]} : vector<104x9xf32> to vector<104x1xf32>
    %9 = vector.extract_strided_slice %0 {offsets = [0, 7], sizes = [104, 1], strides = [1, 1]} : vector<104x9xf32> to vector<104x1xf32>
    %10 = arith.mulf %8, %9 : vector<104x1xf32>
    %11 = arith.addf %7, %10 : vector<104x1xf32>
    %12 = vector.extract_strided_slice %0 {offsets = [0, 2], sizes = [104, 1], strides = [1, 1]} : vector<104x9xf32> to vector<104x1xf32>
    %13 = vector.extract_strided_slice %0 {offsets = [0, 3], sizes = [104, 1], strides = [1, 1]} : vector<104x9xf32> to vector<104x1xf32>
    %14 = vector.extract_strided_slice %0 {offsets = [0, 8], sizes = [104, 1], strides = [1, 1]} : vector<104x9xf32> to vector<104x1xf32>
    %15 = arith.mulf %13, %14 : vector<104x1xf32>
    %16 = arith.addf %12, %15 : vector<104x1xf32>
    %17 = arith.mulf %2, %5 : vector<104x128xf32>
    %18 = arith.addf %1, %17 : vector<104x128xf32>
    %19 = arith.mulf %4, %6 : vector<104x128xf32>
    %20 = arith.addf %3, %19 : vector<104x128xf32>
    %c0_13 = arith.constant 0 : index
    %c0_14 = arith.constant 0 : index
    %21 = vector.load %arg3[%c0_13, %c0_14] : memref<104x8xi32, #tpu.memory_space<vmem>>, vector<104x8xi32>
    %c0_15 = arith.constant 0 : index
    %c0_16 = arith.constant 0 : index
    %22 = vector.load %arg11[%c0_15, %c0_16] : memref<56x128xf32, #tpu.memory_space<vmem>>, vector<56x128xf32>
    %c0_17 = arith.constant 0 : index
    %c0_18 = arith.constant 0 : index
    %23 = vector.load %arg12[%c0_17, %c0_18] : memref<56x128xf32, #tpu.memory_space<vmem>>, vector<56x128xf32>
    %24 = tpu.iota {dimensions = array<i32: 1>} : vector<104x56xi32>
    %cst = arith.constant 0.000000e+00 : f32
    %25 = vector.broadcast %cst : f32 to vector<104x56xf32>
    %cst_19 = arith.constant 0.000000e+00 : f32
    %26 = vector.broadcast %cst_19 : f32 to vector<104x128xf32>
    %27 = vector.extract_strided_slice %21 {offsets = [0, 0], sizes = [104, 1], strides = [1, 1]} : vector<104x8xi32> to vector<104x1xi32>
    %28 = vector.broadcast %27 : vector<104x1xi32> to vector<104x56xi32>
    %29 = arith.cmpi eq, %28, %24 : vector<104x56xi32>
    %30 = arith.extui %29 : vector<104x56xi1> to vector<104x56xi32>
    %31 = arith.sitofp %30 : vector<104x56xi32> to vector<104x56xf32>
    %32 = arith.addf %25, %31 : vector<104x56xf32>
    %cst_20 = arith.constant dense<0.000000e+00> : vector<104x128xf32>
    %33 = tpu.matmul %31, %23, %cst_20 {dimension_numbers = #tpu.dot_dimension_numbers<[1], [0], [0], [1], [0, 0, 1, 1], [], []>} : vector<104x56xf32>, vector<56x128xf32>, vector<104x128xf32> -> vector<104x128xf32>
    %c0_21 = arith.constant 0 : index
    %c0_22 = arith.constant 0 : index
    %c0_23 = arith.constant 0 : index
    %34 = vector.load %arg10[%c0_21, %c0_22, %c0_23] : memref<104x8x128xf32, #tpu.memory_space<vmem>>, vector<104x1x128xf32>
    %35 = vector.shape_cast %34 : vector<104x1x128xf32> to vector<104x128xf32>
    %36 = arith.mulf %33, %35 : vector<104x128xf32>
    %37 = arith.addf %26, %36 : vector<104x128xf32>
    %38 = vector.extract_strided_slice %21 {offsets = [0, 1], sizes = [104, 1], strides = [1, 1]} : vector<104x8xi32> to vector<104x1xi32>
    %39 = vector.broadcast %38 : vector<104x1xi32> to vector<104x56xi32>
    %40 = arith.cmpi eq, %39, %24 : vector<104x56xi32>
    %41 = arith.extui %40 : vector<104x56xi1> to vector<104x56xi32>
    %42 = arith.sitofp %41 : vector<104x56xi32> to vector<104x56xf32>
    %43 = arith.addf %32, %42 : vector<104x56xf32>
    %cst_24 = arith.constant dense<0.000000e+00> : vector<104x128xf32>
    %44 = tpu.matmul %42, %23, %cst_24 {dimension_numbers = #tpu.dot_dimension_numbers<[1], [0], [0], [1], [0, 0, 1, 1], [], []>} : vector<104x56xf32>, vector<56x128xf32>, vector<104x128xf32> -> vector<104x128xf32>
    %c0_25 = arith.constant 0 : index
    %c1 = arith.constant 1 : index
    %c0_26 = arith.constant 0 : index
    %45 = vector.load %arg10[%c0_25, %c1, %c0_26] : memref<104x8x128xf32, #tpu.memory_space<vmem>>, vector<104x1x128xf32>
    %46 = vector.shape_cast %45 : vector<104x1x128xf32> to vector<104x128xf32>
    %47 = arith.mulf %44, %46 : vector<104x128xf32>
    %48 = arith.addf %37, %47 : vector<104x128xf32>
    %49 = vector.extract_strided_slice %21 {offsets = [0, 2], sizes = [104, 1], strides = [1, 1]} : vector<104x8xi32> to vector<104x1xi32>
    %50 = vector.broadcast %49 : vector<104x1xi32> to vector<104x56xi32>
    %51 = arith.cmpi eq, %50, %24 : vector<104x56xi32>
    %52 = arith.extui %51 : vector<104x56xi1> to vector<104x56xi32>
    %53 = arith.sitofp %52 : vector<104x56xi32> to vector<104x56xf32>
    %54 = arith.addf %43, %53 : vector<104x56xf32>
    %cst_27 = arith.constant dense<0.000000e+00> : vector<104x128xf32>
    %55 = tpu.matmul %53, %23, %cst_27 {dimension_numbers = #tpu.dot_dimension_numbers<[1], [0], [0], [1], [0, 0, 1, 1], [], []>} : vector<104x56xf32>, vector<56x128xf32>, vector<104x128xf32> -> vector<104x128xf32>
    %c0_28 = arith.constant 0 : index
    %c2 = arith.constant 2 : index
    %c0_29 = arith.constant 0 : index
    %56 = vector.load %arg10[%c0_28, %c2, %c0_29] : memref<104x8x128xf32, #tpu.memory_space<vmem>>, vector<104x1x128xf32>
    %57 = vector.shape_cast %56 : vector<104x1x128xf32> to vector<104x128xf32>
    %58 = arith.mulf %55, %57 : vector<104x128xf32>
    %59 = arith.addf %48, %58 : vector<104x128xf32>
    %60 = vector.extract_strided_slice %21 {offsets = [0, 3], sizes = [104, 1], strides = [1, 1]} : vector<104x8xi32> to vector<104x1xi32>
    %61 = vector.broadcast %60 : vector<104x1xi32> to vector<104x56xi32>
    %62 = arith.cmpi eq, %61, %24 : vector<104x56xi32>
    %63 = arith.extui %62 : vector<104x56xi1> to vector<104x56xi32>
    %64 = arith.sitofp %63 : vector<104x56xi32> to vector<104x56xf32>
    %65 = arith.addf %54, %64 : vector<104x56xf32>
    %cst_30 = arith.constant dense<0.000000e+00> : vector<104x128xf32>
    %66 = tpu.matmul %64, %23, %cst_30 {dimension_numbers = #tpu.dot_dimension_numbers<[1], [0], [0], [1], [0, 0, 1, 1], [], []>} : vector<104x56xf32>, vector<56x128xf32>, vector<104x128xf32> -> vector<104x128xf32>
    %c0_31 = arith.constant 0 : index
    %c3 = arith.constant 3 : index
    %c0_32 = arith.constant 0 : index
    %67 = vector.load %arg10[%c0_31, %c3, %c0_32] : memref<104x8x128xf32, #tpu.memory_space<vmem>>, vector<104x1x128xf32>
    %68 = vector.shape_cast %67 : vector<104x1x128xf32> to vector<104x128xf32>
    %69 = arith.mulf %66, %68 : vector<104x128xf32>
    %70 = arith.addf %59, %69 : vector<104x128xf32>
    %71 = vector.extract_strided_slice %21 {offsets = [0, 4], sizes = [104, 1], strides = [1, 1]} : vector<104x8xi32> to vector<104x1xi32>
    %72 = vector.broadcast %71 : vector<104x1xi32> to vector<104x56xi32>
    %73 = arith.cmpi eq, %72, %24 : vector<104x56xi32>
    %74 = arith.extui %73 : vector<104x56xi1> to vector<104x56xi32>
    %75 = arith.sitofp %74 : vector<104x56xi32> to vector<104x56xf32>
    %76 = arith.addf %65, %75 : vector<104x56xf32>
    %cst_33 = arith.constant dense<0.000000e+00> : vector<104x128xf32>
    %77 = tpu.matmul %75, %23, %cst_33 {dimension_numbers = #tpu.dot_dimension_numbers<[1], [0], [0], [1], [0, 0, 1, 1], [], []>} : vector<104x56xf32>, vector<56x128xf32>, vector<104x128xf32> -> vector<104x128xf32>
    %c0_34 = arith.constant 0 : index
    %c4 = arith.constant 4 : index
    %c0_35 = arith.constant 0 : index
    %78 = vector.load %arg10[%c0_34, %c4, %c0_35] : memref<104x8x128xf32, #tpu.memory_space<vmem>>, vector<104x1x128xf32>
    %79 = vector.shape_cast %78 : vector<104x1x128xf32> to vector<104x128xf32>
    %80 = arith.mulf %77, %79 : vector<104x128xf32>
    %81 = arith.addf %70, %80 : vector<104x128xf32>
    %82 = vector.extract_strided_slice %21 {offsets = [0, 5], sizes = [104, 1], strides = [1, 1]} : vector<104x8xi32> to vector<104x1xi32>
    %83 = vector.broadcast %82 : vector<104x1xi32> to vector<104x56xi32>
    %84 = arith.cmpi eq, %83, %24 : vector<104x56xi32>
    %85 = arith.extui %84 : vector<104x56xi1> to vector<104x56xi32>
    %86 = arith.sitofp %85 : vector<104x56xi32> to vector<104x56xf32>
    %87 = arith.addf %76, %86 : vector<104x56xf32>
    %cst_36 = arith.constant dense<0.000000e+00> : vector<104x128xf32>
    %88 = tpu.matmul %86, %23, %cst_36 {dimension_numbers = #tpu.dot_dimension_numbers<[1], [0], [0], [1], [0, 0, 1, 1], [], []>} : vector<104x56xf32>, vector<56x128xf32>, vector<104x128xf32> -> vector<104x128xf32>
    %c0_37 = arith.constant 0 : index
    %c5 = arith.constant 5 : index
    %c0_38 = arith.constant 0 : index
    %89 = vector.load %arg10[%c0_37, %c5, %c0_38] : memref<104x8x128xf32, #tpu.memory_space<vmem>>, vector<104x1x128xf32>
    %90 = vector.shape_cast %89 : vector<104x1x128xf32> to vector<104x128xf32>
    %91 = arith.mulf %88, %90 : vector<104x128xf32>
    %92 = arith.addf %81, %91 : vector<104x128xf32>
    %93 = vector.extract_strided_slice %21 {offsets = [0, 6], sizes = [104, 1], strides = [1, 1]} : vector<104x8xi32> to vector<104x1xi32>
    %94 = vector.broadcast %93 : vector<104x1xi32> to vector<104x56xi32>
    %95 = arith.cmpi eq, %94, %24 : vector<104x56xi32>
    %96 = arith.extui %95 : vector<104x56xi1> to vector<104x56xi32>
    %97 = arith.sitofp %96 : vector<104x56xi32> to vector<104x56xf32>
    %98 = arith.addf %87, %97 : vector<104x56xf32>
    %cst_39 = arith.constant dense<0.000000e+00> : vector<104x128xf32>
    %99 = tpu.matmul %97, %23, %cst_39 {dimension_numbers = #tpu.dot_dimension_numbers<[1], [0], [0], [1], [0, 0, 1, 1], [], []>} : vector<104x56xf32>, vector<56x128xf32>, vector<104x128xf32> -> vector<104x128xf32>
    %c0_40 = arith.constant 0 : index
    %c6 = arith.constant 6 : index
    %c0_41 = arith.constant 0 : index
    %100 = vector.load %arg10[%c0_40, %c6, %c0_41] : memref<104x8x128xf32, #tpu.memory_space<vmem>>, vector<104x1x128xf32>
    %101 = vector.shape_cast %100 : vector<104x1x128xf32> to vector<104x128xf32>
    %102 = arith.mulf %99, %101 : vector<104x128xf32>
    %103 = arith.addf %92, %102 : vector<104x128xf32>
    %104 = vector.extract_strided_slice %21 {offsets = [0, 7], sizes = [104, 1], strides = [1, 1]} : vector<104x8xi32> to vector<104x1xi32>
    %105 = vector.broadcast %104 : vector<104x1xi32> to vector<104x56xi32>
    %106 = arith.cmpi eq, %105, %24 : vector<104x56xi32>
    %107 = arith.extui %106 : vector<104x56xi1> to vector<104x56xi32>
    %108 = arith.sitofp %107 : vector<104x56xi32> to vector<104x56xf32>
    %109 = arith.addf %98, %108 : vector<104x56xf32>
    %cst_42 = arith.constant dense<0.000000e+00> : vector<104x128xf32>
    %110 = tpu.matmul %108, %23, %cst_42 {dimension_numbers = #tpu.dot_dimension_numbers<[1], [0], [0], [1], [0, 0, 1, 1], [], []>} : vector<104x56xf32>, vector<56x128xf32>, vector<104x128xf32> -> vector<104x128xf32>
    %c0_43 = arith.constant 0 : index
    %c7 = arith.constant 7 : index
    %c0_44 = arith.constant 0 : index
    %111 = vector.load %arg10[%c0_43, %c7, %c0_44] : memref<104x8x128xf32, #tpu.memory_space<vmem>>, vector<104x1x128xf32>
    %112 = vector.shape_cast %111 : vector<104x1x128xf32> to vector<104x128xf32>
    %113 = arith.mulf %110, %112 : vector<104x128xf32>
    %114 = arith.addf %103, %113 : vector<104x128xf32>
    %cst_45 = arith.constant dense<0.000000e+00> : vector<104x128xf32>
    %115 = tpu.matmul %109, %22, %cst_45 {dimension_numbers = #tpu.dot_dimension_numbers<[1], [0], [0], [1], [0, 0, 1, 1], [], []>} : vector<104x56xf32>, vector<56x128xf32>, vector<104x128xf32> -> vector<104x128xf32>
    %116 = arith.addf %114, %115 : vector<104x128xf32>
    %c0_46 = arith.constant 0 : index
    %117 = memref.load %arg1[%c0_46] : memref<1xf32, #tpu.memory_space<smem>>
    %118 = vector.extract_strided_slice %0 {offsets = [0, 4], sizes = [104, 1], strides = [1, 1]} : vector<104x9xf32> to vector<104x1xf32>
    %119 = vector.broadcast %118 : vector<104x1xf32> to vector<104x128xf32>
    %120 = arith.mulf %116, %119 : vector<104x128xf32>
    %121 = arith.addf %18, %120 : vector<104x128xf32>
    %122 = arith.mulf %20, %121 : vector<104x128xf32>
    %cst_47 = arith.constant dense<0.000000e+00> : vector<104xf32>
    %123 = vector.multi_reduction <add>, %122, %cst_47 [1] : vector<104x128xf32> to vector<104xf32>
    %124 = vector.shape_cast %123 : vector<104xf32> to vector<104x1xf32>
    %125 = vector.extract_strided_slice %0 {offsets = [0, 5], sizes = [104, 1], strides = [1, 1]} : vector<104x9xf32> to vector<104x1xf32>
    %126 = vector.extract_strided_slice %0 {offsets = [0, 6], sizes = [104, 1], strides = [1, 1]} : vector<104x9xf32> to vector<104x1xf32>
    %127 = arith.mulf %125, %126 : vector<104x1xf32>
    %128 = arith.mulf %127, %124 : vector<104x1xf32>
    %129 = arith.mulf %125, %11 : vector<104x1xf32>
    %130 = arith.mulf %126, %16 : vector<104x1xf32>
    %131 = arith.addf %128, %130 : vector<104x1xf32>
    %132 = arith.addf %131, %129 : vector<104x1xf32>
    %133 = vector.broadcast %117 : f32 to vector<104x1xf32>
    %134 = arith.addf %132, %133 : vector<104x1xf32>
    %c0_48 = arith.constant 0 : index
    %c0_49 = arith.constant 0 : index
    %135 = vector.load %arg13[%c0_48, %c0_49] : memref<104x1xf32, #tpu.memory_space<vmem>>, vector<104x1xf32>
    tpu.vector_store %arg13[%c0_48, %c0_49], %134 {strides = array<i32>} : memref<104x1xf32, #tpu.memory_space<vmem>>, vector<104x1xf32>,
    return
  }
  func.func @transform_0(%arg0: i32) -> i32 {
    %c0_i32 = arith.constant 0 : i32
    %c0_i32_0 = arith.constant 0 : i32
    return %c0_i32 : i32
  }
  func.func @transform_1(%arg0: i32) -> (i32, i32) {
    %c0_i32 = arith.constant 0 : i32
    %c0_i32_0 = arith.constant 0 : i32
    return %arg0, %c0_i32 : i32, i32
  }
  func.func @transform_2(%arg0: i32) -> (i32, i32) {
    %c0_i32 = arith.constant 0 : i32
    %c0_i32_0 = arith.constant 0 : i32
    return %arg0, %c0_i32 : i32, i32
  }
  func.func @transform_3(%arg0: i32) -> (i32, i32) {
    %c0_i32 = arith.constant 0 : i32
    %c0_i32_0 = arith.constant 0 : i32
    return %arg0, %c0_i32 : i32, i32
  }
  func.func @transform_4(%arg0: i32) -> (i32, i32) {
    %c0_i32 = arith.constant 0 : i32
    %c0_i32_0 = arith.constant 0 : i32
    return %arg0, %c0_i32 : i32, i32
  }
  func.func @transform_5(%arg0: i32) -> (i32, i32) {
    %c0_i32 = arith.constant 0 : i32
    %c0_i32_0 = arith.constant 0 : i32
    return %arg0, %c0_i32 : i32, i32
  }
  func.func @transform_6(%arg0: i32) -> (i32, i32) {
    %c0_i32 = arith.constant 0 : i32
    %c0_i32_0 = arith.constant 0 : i32
    return %arg0, %c0_i32 : i32, i32
  }
  func.func @transform_7(%arg0: i32) -> (i32, i32) {
    %c0_i32 = arith.constant 0 : i32
    %c0_i32_0 = arith.constant 0 : i32
    return %arg0, %c0_i32 : i32, i32
  }
  func.func @transform_8(%arg0: i32) -> (i32, i32) {
    %c0_i32 = arith.constant 0 : i32
    %c0_i32_0 = arith.constant 0 : i32
    return %arg0, %c0_i32 : i32, i32
  }
  func.func @transform_9(%arg0: i32) -> (i32, i32, i32) {
    %c0_i32 = arith.constant 0 : i32
    %c0_i32_0 = arith.constant 0 : i32
    %c0_i32_1 = arith.constant 0 : i32
    return %arg0, %c0_i32, %c0_i32_0 : i32, i32, i32
  }
  func.func @transform_10(%arg0: i32) -> (i32, i32) {
    %c0_i32 = arith.constant 0 : i32
    %c0_i32_0 = arith.constant 0 : i32
    %c0_i32_1 = arith.constant 0 : i32
    return %c0_i32, %c0_i32_0 : i32, i32
  }
  func.func @transform_11(%arg0: i32) -> (i32, i32) {
    %c0_i32 = arith.constant 0 : i32
    %c0_i32_0 = arith.constant 0 : i32
    %c0_i32_1 = arith.constant 0 : i32
    return %c0_i32, %c0_i32_0 : i32, i32
  }
  func.func @transform_12(%arg0: i32) -> (i32, i32) {
    %c0_i32 = arith.constant 0 : i32
    %c0_i32_0 = arith.constant 0 : i32
    return %arg0, %c0_i32 : i32, i32
  }
}

</mosaic_0001>

<llo_original>
// kernel: tpu_custom_call.1
$region0: #{tpu_custom_call.1}
  #allocation0 [shape = 'u32[]', space=smem, size = 0x4, offset = 0x4, fixed_abs, tag = 'smem constant byte address 0x4 - core index']
  #allocation1 [shape = 'u32[144,128]{1,0:T(1,128)}', space=vmem, size = 0x12000, scoped, tag = 'internal scratch']
  #allocation2 [shape = 'f32[1]{0:T(128)S(6)}', space=smem, size = 0x200, scoped, tag = 'scoped memory for tpu_custom_call.1']
  %s0 = inlined_call_operand.<no memory space> [shape: f32[1], index: 0, kind: input, shape index: {}]
  %s1 = inlined_call_operand.vmem [shape: f32[200,9], index: 1, kind: input, shape index: {}]
  %s2 = inlined_call_operand.vmem [shape: s32[200,8], index: 2, kind: input, shape index: {}]
  %s3 = inlined_call_operand.vmem [shape: f32[200,128], index: 3, kind: input, shape index: {}]
  %s4 = inlined_call_operand.vmem [shape: f32[200,128], index: 4, kind: input, shape index: {}]
  %s5 = inlined_call_operand.hbm [shape: f32[200,128], index: 5, kind: input, shape index: {}]
  %s6 = inlined_call_operand.hbm [shape: f32[200,128], index: 6, kind: input, shape index: {}]
  %s7 = inlined_call_operand.hbm [shape: f32[200,128], index: 7, kind: input, shape index: {}]
  %s8 = inlined_call_operand.hbm [shape: f32[200,128], index: 8, kind: input, shape index: {}]
  %s9 = inlined_call_operand.hbm [shape: f32[200,8,128], index: 9, kind: input, shape index: {}]
  %s10 = inlined_call_operand.vmem [shape: f32[56,128], index: 10, kind: input, shape index: {}]
  %s11 = inlined_call_operand.hbm [shape: f32[56,128], index: 11, kind: input, shape index: {}]
  %s12 = inlined_call_operand.vmem [shape: f32[200,1], index: 12, kind: output, shape index: {}]
  %s13 = sld [smem:[#allocation0]]
  $region153: #{tpu_custom_call.1} parent=0
    _
  %s15 = ssub.s32 1, %s13
  %s16 = scalar_select 0, %s15, %s13
  %17 = sst [smem:[#allocation2]] %s0
  $region1: #{tpu_custom_call.1} parent=0
    #allocation3 [shape = 'u8[106496]{0}', space=vmem, size = 0x1a000, scoped, tag = 'input window, operand 5']
    #allocation4 [shape = 's32[2]{0}', space=sflag, size = 0x8, scoped, tag = 'scoped memory for tpu_custom_call.1']
    #allocation5 [shape = 'u8[106496]{0}', space=vmem, size = 0x1a000, scoped, tag = 'input window, operand 6']
    #allocation6 [shape = 's32[2]{0}', space=sflag, size = 0x8, scoped, tag = 'scoped memory for tpu_custom_call.1']
    #allocation7 [shape = 'u8[106496]{0}', space=vmem, size = 0x1a000, scoped, tag = 'input window, operand 7']
    #allocation8 [shape = 'u8[106496]{0}', space=vmem, size = 0x1a000, scoped, tag = 'input window, operand 8']
    #allocation9 [shape = 's32[2]{0}', space=sflag, size = 0x8, scoped, tag = 'scoped memory for tpu_custom_call.1']
    #allocation10 [shape = 'u8[851968]{0}', space=vmem, size = 0xd0000, scoped, tag = 'input window, operand 9']
    #allocation11 [shape = 'u8[28672]{0}', space=vmem, size = 0x7000, scoped, tag = 'input window, operand 11, single buffered']
    #allocation12 [shape = 's32[1]{0}', space=sflag, size = 0x4, scoped, tag = 'scoped memory for tpu_custom_call.1']
    #allocation13 [shape = 'u8[106496]{0}', space=vmem, size = 0x1a000, scoped, tag = 'output window, operand 0']
    %18 = vsyncpa [#allocation4], 0
    %s19 = scalar_lea.sflag [#allocation4], 1
    %20 = vsyncpa %s19, 0
    %21 = vsyncpa [#allocation6], 0
    %s22 = scalar_lea.sflag [#allocation6], 1
    %23 = vsyncpa %s22, 0
    %24 = vsyncpa [#allocation9], 0
    %s25 = scalar_lea.sflag [#allocation9], 1
    %26 = vsyncpa %s25, 0
    %27 = vsyncpa [#allocation12], 0
    loop: start=0, step=1, limit=4
    $region2: #{tpu_custom_call.1} parent=1 // loop_pre_header
      _
    $region3: #{tpu_custom_call.1} parent=1 // loop_header
      %s29 = sphi 0, %s33
      %p30 = scmp.ge.s32.totalorder %s29, 4
      %s37 = sphi 0, %s37
      %s39 = sphi 0, %s37
      %s40 = sphi 0, %s39
      %s54 = sphi 0, %s40
      %s60 = sphi 0, %s62
      %s63 = sphi 0, %s60
      %s64 = sphi 0, %s63
      %s80 = sphi 0, %s64
      %s86 = sphi 0, %s88
      %s89 = sphi 0, %s86
      %s90 = sphi 0, %s89
      %s106 = sphi 0, %s90
      %s112 = sphi 0, %s114
      %s115 = sphi 0, %s112
      %s116 = sphi 0, %s115
      %s132 = sphi 0, %s116
      %s138 = sphi 0, %s140
      %s141 = sphi 0, %s138
      %s142 = sphi 0, %s141
      %s158 = sphi 0, %s142
      %s164 = sphi 0, %s166
      %s167 = sphi 0, %s164
      %s168 = sphi 0, %s167
      %s184 = sphi 0, %s168
      %s190 = sphi 0, %s192
      %s193 = sphi 0, %s190
      %s194 = sphi 0, %s193
      %s210 = sphi 0, %s194
      %s216 = sphi 0, %s218
      %s219 = sphi 0, %s216
      %s220 = sphi 0, %s219
      %s236 = sphi 0, %s220
      %s242 = sphi 0, %s244
      %s245 = sphi 0, %s242
      %s246 = sphi 0, %s245
      %s262 = sphi 0, %s246
      %s268 = sphi 0, %s270
      %s271 = sphi 0, %s268
      %s272 = sphi 0, %s271
      %s288 = sphi 0, %s272
      %s292 = sphi 0, %s292
      %s294 = sphi 0, %s292
      %s295 = sphi 0, %s294
      %s309 = sphi 0, %s295
      %s313 = sphi 0, %s313
      %s315 = sphi 0, %s313
      %s316 = sphi 0, %s315
      %s330 = sphi 0, %s316
      %s336 = sphi 0, %s338
      %s339 = sphi 0, %s336
      %s340 = sphi 0, %s339
      %s356 = sphi 0, %s340
    $region4: #{tpu_custom_call.1} parent=1 // loop_header_branch
      %32 = sbr.rel (%p30) target = $region8
    $region5: #{tpu_custom_call.1} parent=1 // loop_body
      %s34 = ssub.s32 %s29, 1
      %s35 = ssub.s32 %s29, 2
      %s36 = sadd.s32 %s29, 1
      %s38 = sadd.s32 %s37, 1
      %p41 = scmp.eq.s32.totalorder %s29, 1
      %p42 = scmp.ne.s32.totalorder %s37, %s39
      %p43 = scmp.eq.s32.totalorder %s29, 0
      %p44 = por %p42, %p43
      %p45 = scmp.ne.s32.totalorder %s37, %s39
      %p46 = scmp.eq.s32.totalorder %s34, 1
      %p47 = por %p45, %p46
      %p48 = scmp.ne.s32.totalorder %s39, %s40
      %p49 = scmp.eq.s32.totalorder %s34, 0
      %p50 = por %p48, %p49
      %p51 = scmp.ne.s32.totalorder %s39, %s40
      %p52 = scmp.eq.s32.totalorder %s35, 1
      %p53 = por %p51, %p52
      %p55 = scmp.ne.s32.totalorder %s40, %s54
      %p56 = scmp.eq.s32.totalorder %s35, 0
      %p57 = por %p55, %p56
      %s58 = ssub.s32 %s29, %s36
      %p59 = scmp.eq.s32.totalorder %s58, 0
      %s61 = sadd.s32 %s60, 1
      %s62 = scalar_select %p59, %s60, %s61
      %p65 = pneg %p59
      %p66 = scmp.eq.s32.totalorder %s29, 1
      %p67 = por %p65, %p66
      %p68 = scmp.ne.s32.totalorder %s60, %s63
      %p69 = scmp.eq.s32.totalorder %s29, 0
      %p70 = por %p68, %p69
      %p71 = scmp.ne.s32.totalorder %s60, %s63
      %p72 = scmp.eq.s32.totalorder %s34, 1
      %p73 = por %p71, %p72
      %p74 = scmp.ne.s32.totalorder %s63, %s64
      %p75 = scmp.eq.s32.totalorder %s34, 0
      %p76 = por %p74, %p75
      %p77 = scmp.ne.s32.totalorder %s63, %s64
      %p78 = scmp.eq.s32.totalorder %s35, 1
      %p79 = por %p77, %p78
      %p81 = scmp.ne.s32.totalorder %s64, %s80
      %p82 = scmp.eq.s32.totalorder %s35, 0
      %p83 = por %p81, %p82
      %s84 = ssub.s32 %s29, %s36
      %p85 = scmp.eq.s32.totalorder %s84, 0
      %s87 = sadd.s32 %s86, 1
      %s88 = scalar_select %p85, %s86, %s87
      %p91 = pneg %p85
      %p92 = scmp.eq.s32.totalorder %s29, 1
      %p93 = por %p91, %p92
      %p94 = scmp.ne.s32.totalorder %s86, %s89
      %p95 = scmp.eq.s32.totalorder %s29, 0
      %p96 = por %p94, %p95
      %p97 = scmp.ne.s32.totalorder %s86, %s89
      %p98 = scmp.eq.s32.totalorder %s34, 1
      %p99 = por %p97, %p98
      %p100 = scmp.ne.s32.totalorder %s89, %s90
      %p101 = scmp.eq.s32.totalorder %s34, 0
      %p102 = por %p100, %p101
      %p103 = scmp.ne.s32.totalorder %s89, %s90
      %p104 = scmp.eq.s32.totalorder %s35, 1
      %p105 = por %p103, %p104
      %p107 = scmp.ne.s32.totalorder %s90, %s106
      %p108 = scmp.eq.s32.totalorder %s35, 0
      %p109 = por %p107, %p108
      %s110 = ssub.s32 %s29, %s36
      %p111 = scmp.eq.s32.totalorder %s110, 0
      %s113 = sadd.s32 %s112, 1
      %s114 = scalar_select %p111, %s112, %s113
      %p117 = pneg %p111
      %p118 = scmp.eq.s32.totalorder %s29, 1
      %p119 = por %p117, %p118
      %p120 = scmp.ne.s32.totalorder %s112, %s115
      %p121 = scmp.eq.s32.totalorder %s29, 0
      %p122 = por %p120, %p121
      %p123 = scmp.ne.s32.totalorder %s112, %s115
      %p124 = scmp.eq.s32.totalorder %s34, 1
      %p125 = por %p123, %p124
      %p126 = scmp.ne.s32.totalorder %s115, %s116
      %p127 = scmp.eq.s32.totalorder %s34, 0
      %p128 = por %p126, %p127
      %p129 = scmp.ne.s32.totalorder %s115, %s116
      %p130 = scmp.eq.s32.totalorder %s35, 1
      %p131 = por %p129, %p130
      %p133 = scmp.ne.s32.totalorder %s116, %s132
      %p134 = scmp.eq.s32.totalorder %s35, 0
      %p135 = por %p133, %p134
      %s136 = ssub.s32 %s29, %s36
      %p137 = scmp.eq.s32.totalorder %s136, 0
      %s139 = sadd.s32 %s138, 1
      %s140 = scalar_select %p137, %s138, %s139
      %p143 = pneg %p137
      %p144 = scmp.eq.s32.totalorder %s29, 1
      %p145 = por %p143, %p144
      %p146 = scmp.ne.s32.totalorder %s138, %s141
      %p147 = scmp.eq.s32.totalorder %s29, 0
      %p148 = por %p146, %p147
      %p149 = scmp.ne.s32.totalorder %s138, %s141
      %p150 = scmp.eq.s32.totalorder %s34, 1
      %p151 = por %p149, %p150
      %p152 = scmp.ne.s32.totalorder %s141, %s142
      %p153 = scmp.eq.s32.totalorder %s34, 0
      %p154 = por %p152, %p153
      %p155 = scmp.ne.s32.totalorder %s141, %s142
      %p156 = scmp.eq.s32.totalorder %s35, 1
      %p157 = por %p155, %p156
      %p159 = scmp.ne.s32.totalorder %s142, %s158
      %p160 = scmp.eq.s32.totalorder %s35, 0
      %p161 = por %p159, %p160
      %s162 = ssub.s32 %s29, %s36
      %p163 = scmp.eq.s32.totalorder %s162, 0
      %s165 = sadd.s32 %s164, 1
      %s166 = scalar_select %p163, %s164, %s165
      %p169 = pneg %p163
      %p170 = scmp.eq.s32.totalorder %s29, 1
      %p171 = por %p169, %p170
      %p172 = scmp.ne.s32.totalorder %s164, %s167
      %p173 = scmp.eq.s32.totalorder %s29, 0
      %p174 = por %p172, %p173
      %p175 = scmp.ne.s32.totalorder %s164, %s167
      %p176 = scmp.eq.s32.totalorder %s34, 1
      %p177 = por %p175, %p176
      %p178 = scmp.ne.s32.totalorder %s167, %s168
      %p179 = scmp.eq.s32.totalorder %s34, 0
      %p180 = por %p178, %p179
      %p181 = scmp.ne.s32.totalorder %s167, %s168
      %p182 = scmp.eq.s32.totalorder %s35, 1
      %p183 = por %p181, %p182
      %p185 = scmp.ne.s32.totalorder %s168, %s184
      %p186 = scmp.eq.s32.totalorder %s35, 0
      %p187 = por %p185, %p186
      %s188 = ssub.s32 %s29, %s36
      %p189 = scmp.eq.s32.totalorder %s188, 0
      %s191 = sadd.s32 %s190, 1
      %s192 = scalar_select %p189, %s190, %s191
      %p195 = pneg %p189
      %p196 = scmp.eq.s32.totalorder %s29, 1
      %p197 = por %p195, %p196
      %p198 = scmp.ne.s32.totalorder %s190, %s193
      %p199 = scmp.eq.s32.totalorder %s29, 0
      %p200 = por %p198, %p199
      %p201 = scmp.ne.s32.totalorder %s190, %s193
      %p202 = scmp.eq.s32.totalorder %s34, 1
      %p203 = por %p201, %p202
      %p204 = scmp.ne.s32.totalorder %s193, %s194
      %p205 = scmp.eq.s32.totalorder %s34, 0
      %p206 = por %p204, %p205
      %p207 = scmp.ne.s32.totalorder %s193, %s194
      %p208 = scmp.eq.s32.totalorder %s35, 1
      %p209 = por %p207, %p208
      %p211 = scmp.ne.s32.totalorder %s194, %s210
      %p212 = scmp.eq.s32.totalorder %s35, 0
      %p213 = por %p211, %p212
      %s214 = ssub.s32 %s29, %s36
      %p215 = scmp.eq.s32.totalorder %s214, 0
      %s217 = sadd.s32 %s216, 1
      %s218 = scalar_select %p215, %s216, %s217
      %p221 = pneg %p215
      %p222 = scmp.eq.s32.totalorder %s29, 1
      %p223 = por %p221, %p222
      %p224 = scmp.ne.s32.totalorder %s216, %s219
      %p225 = scmp.eq.s32.totalorder %s29, 0
      %p226 = por %p224, %p225
      %p227 = scmp.ne.s32.totalorder %s216, %s219
      %p228 = scmp.eq.s32.totalorder %s34, 1
      %p229 = por %p227, %p228
      %p230 = scmp.ne.s32.totalorder %s219, %s220
      %p231 = scmp.eq.s32.totalorder %s34, 0
      %p232 = por %p230, %p231
      %p233 = scmp.ne.s32.totalorder %s219, %s220
      %p234 = scmp.eq.s32.totalorder %s35, 1
      %p235 = por %p233, %p234
      %p237 = scmp.ne.s32.totalorder %s220, %s236
      %p238 = scmp.eq.s32.totalorder %s35, 0
      %p239 = por %p237, %p238
      %s240 = ssub.s32 %s29, %s36
      %p241 = scmp.eq.s32.totalorder %s240, 0
      %s243 = sadd.s32 %s242, 1
      %s244 = scalar_select %p241, %s242, %s243
      %p247 = pneg %p241
      %p248 = scmp.eq.s32.totalorder %s29, 1
      %p249 = por %p247, %p248
      %p250 = scmp.ne.s32.totalorder %s242, %s245
      %p251 = scmp.eq.s32.totalorder %s29, 0
      %p252 = por %p250, %p251
      %p253 = scmp.ne.s32.totalorder %s242, %s245
      %p254 = scmp.eq.s32.totalorder %s34, 1
      %p255 = por %p253, %p254
      %p256 = scmp.ne.s32.totalorder %s245, %s246
      %p257 = scmp.eq.s32.totalorder %s34, 0
      %p258 = por %p256, %p257
      %p259 = scmp.ne.s32.totalorder %s245, %s246
      %p260 = scmp.eq.s32.totalorder %s35, 1
      %p261 = por %p259, %p260
      %p263 = scmp.ne.s32.totalorder %s246, %s262
      %p264 = scmp.eq.s32.totalorder %s35, 0
      %p265 = por %p263, %p264
      %s266 = ssub.s32 %s29, %s36
      %p267 = scmp.eq.s32.totalorder %s266, 0
      %s269 = sadd.s32 %s268, 1
      %s270 = scalar_select %p267, %s268, %s269
      %p273 = pneg %p267
      %p274 = scmp.eq.s32.totalorder %s29, 1
      %p275 = por %p273, %p274
      %p276 = scmp.ne.s32.totalorder %s268, %s271
      %p277 = scmp.eq.s32.totalorder %s29, 0
      %p278 = por %p276, %p277
      %p279 = scmp.ne.s32.totalorder %s268, %s271
      %p280 = scmp.eq.s32.totalorder %s34, 1
      %p281 = por %p279, %p280
      %p282 = scmp.ne.s32.totalorder %s271, %s272
      %p283 = scmp.eq.s32.totalorder %s34, 0
      %p284 = por %p282, %p283
      %p285 = scmp.ne.s32.totalorder %s271, %s272
      %p286 = scmp.eq.s32.totalorder %s35, 1
      %p287 = por %p285, %p286
      %p289 = scmp.ne.s32.totalorder %s272, %s288
      %p290 = scmp.eq.s32.totalorder %s35, 0
      %p291 = por %p289, %p290
      %s293 = sadd.s32 %s292, 1
      %p296 = scmp.eq.s32.totalorder %s29, 1
      %p297 = scmp.ne.s32.totalorder %s292, %s294
      %p298 = scmp.eq.s32.totalorder %s29, 0
      %p299 = por %p297, %p298
      %p300 = scmp.ne.s32.totalorder %s292, %s294
      %p301 = scmp.eq.s32.totalorder %s34, 1
      %p302 = por %p300, %p301
      %p303 = scmp.ne.s32.totalorder %s294, %s295
      %p304 = scmp.eq.s32.totalorder %s34, 0
      %p305 = por %p303, %p304
      %p306 = scmp.ne.s32.totalorder %s294, %s295
      %p307 = scmp.eq.s32.totalorder %s35, 1
      %p308 = por %p306, %p307
      %p310 = scmp.ne.s32.totalorder %s295, %s309
      %p311 = scmp.eq.s32.totalorder %s35, 0
      %p312 = por %p310, %p311
      %s314 = sadd.s32 %s313, 1
      %p317 = scmp.eq.s32.totalorder %s29, 1
      %p318 = scmp.ne.s32.totalorder %s313, %s315
      %p319 = scmp.eq.s32.totalorder %s29, 0
      %p320 = por %p318, %p319
      %p321 = scmp.ne.s32.totalorder %s313, %s315
      %p322 = scmp.eq.s32.totalorder %s34, 1
      %p323 = por %p321, %p322
      %p324 = scmp.ne.s32.totalorder %s315, %s316
      %p325 = scmp.eq.s32.totalorder %s34, 0
      %p326 = por %p324, %p325
      %p327 = scmp.ne.s32.totalorder %s315, %s316
      %p328 = scmp.eq.s32.totalorder %s35, 1
      %p329 = por %p327, %p328
      %p331 = scmp.ne.s32.totalorder %s316, %s330
      %p332 = scmp.eq.s32.totalorder %s35, 0
      %p333 = por %p331, %p332
      %s334 = ssub.s32 %s29, %s36
      %p335 = scmp.eq.s32.totalorder %s334, 0
      %s337 = sadd.s32 %s336, 1
      %s338 = scalar_select %p335, %s336, %s337
      %p341 = pneg %p335
      %p342 = scmp.eq.s32.totalorder %s29, 1
      %p343 = por %p341, %p342
      %p344 = scmp.ne.s32.totalorder %s336, %s339
      %p345 = scmp.eq.s32.totalorder %s29, 0
      %p346 = por %p344, %p345
      %p347 = scmp.ne.s32.totalorder %s336, %s339
      %p348 = scmp.eq.s32.totalorder %s34, 1
      %p349 = por %p347, %p348
      %p350 = scmp.ne.s32.totalorder %s339, %s340
      %p351 = scmp.eq.s32.totalorder %s34, 0
      %p352 = por %p350, %p351
      %p353 = scmp.ne.s32.totalorder %s339, %s340
      %p354 = scmp.eq.s32.totalorder %s35, 1
      %p355 = por %p353, %p354
      %p357 = scmp.ne.s32.totalorder %s340, %s356
      %p358 = scmp.eq.s32.totalorder %s35, 0
      %p359 = por %p357, %p358
      %p360 = scmp.le.s32.totalorder 1, %s29
      %p361 = scmp.lt.s32.totalorder %s29, 3
      %p362 = pnand %p360, %p361
      %p363 = pneg %p362
      // Predicated region
      $region9: #{tpu_custom_call.1} parent=5 // pred_check
        _
      $region10: #{tpu_custom_call.1} parent=5 // pred_check_branch
        %365 = sbr.rel (%p362) target = $region12
      $region11: #{tpu_custom_call.1} parent=5 // pred_region
        %s366 = ssub.s32 %s29, 1
        // Predicated region
        $region13: #{tpu_custom_call.1} parent=11 // pred_check
          %p367 = pneg %p50
        $region14: #{tpu_custom_call.1} parent=11 // pred_check_branch
          %369 = sbr.rel (%p367) target = $region16
        $region15: #{tpu_custom_call.1} parent=11 // pred_region
          _
        $region16: #{tpu_custom_call.1} parent=11 // pred_fallthru
          _
        // Predicated region
        $region17: #{tpu_custom_call.1} parent=11 // pred_check
          %p370 = pneg %p305
        $region18: #{tpu_custom_call.1} parent=11 // pred_check_branch
          %372 = sbr.rel (%p370) target = $region20
        $region19: #{tpu_custom_call.1} parent=11 // pred_region
          _
        $region20: #{tpu_custom_call.1} parent=11 // pred_fallthru
          _
        // Predicated region
        $region21: #{tpu_custom_call.1} parent=11 // pred_check
          %p373 = pneg %p326
        $region22: #{tpu_custom_call.1} parent=11 // pred_check_branch
          %375 = sbr.rel (%p373) target = $region24
        $region23: #{tpu_custom_call.1} parent=11 // pred_region
          %s377 = ssub.s32 896, 896
          %378 = vsyncadd [#allocation12], %s377
          %s379 = sshll.u32 [#allocation11], 4
          %s380 = int_to_ptr.vmem [resolvable:$true] %s379
          %385 = dma.hbm_to_vmem [thread:$0]  %s11, 896, %s380, [#allocation12], 128, 128, 8
        $region24: #{tpu_custom_call.1} parent=11 // pred_fallthru
          _
      $region12: #{tpu_custom_call.1} parent=5 // pred_fallthru
        _
      %p386 = scmp.lt.s32.totalorder %s29, 2
      // Predicated region
      $region25: #{tpu_custom_call.1} parent=5 // pred_check
        %p387 = pneg %p386
      $region26: #{tpu_custom_call.1} parent=5 // pred_check_branch
        %389 = sbr.rel (%p387) target = $region28
      $region27: #{tpu_custom_call.1} parent=5 // pred_region
        // Predicated region
        $region29: #{tpu_custom_call.1} parent=27 // pred_check
          %p390 = pneg %p70
        $region30: #{tpu_custom_call.1} parent=27 // pred_check_branch
          %392 = sbr.rel (%p390) target = $region32
        $region31: #{tpu_custom_call.1} parent=27 // pred_region
          %s393 = smul.u32 13, %s29
          %s394 = ssub.s32 25, %s393
          %p395 = scmp.lt.s32.totalorder %s394, 13
          %s396 = scalar_select %p395, %s394, 13
          %s397 = smul.u32 128, %s396
          %p398 = scmp.lt.s32.totalorder %s393, 24
          %s399 = scalar_select %p398, %s393, 24
          %s400 = smul.addr %s399, 8
          %s401 = scalar_lea.vmem %s1, %s400
          %s402 = smul.u32 13, %s29
          %s403 = ssub.s32 25, %s402
          %p404 = scmp.lt.s32.totalorder %s403, 13
          %s405 = scalar_select %p404, %s403, 13
          %s406 = smul.u32 128, %s405
        $region32: #{tpu_custom_call.1} parent=27 // pred_fallthru
          _
        // Predicated region
        $region33: #{tpu_custom_call.1} parent=27 // pred_check
          %p407 = pneg %p96
        $region34: #{tpu_custom_call.1} parent=27 // pred_check_branch
          %409 = sbr.rel (%p407) target = $region36
        $region35: #{tpu_custom_call.1} parent=27 // pred_region
          %s410 = smul.u32 13, %s29
          %s411 = ssub.s32 25, %s410
          %p412 = scmp.lt.s32.totalorder %s411, 13
          %s413 = scalar_select %p412, %s411, 13
          %s414 = smul.u32 128, %s413
          %p415 = scmp.lt.s32.totalorder %s410, 24
          %s416 = scalar_select %p415, %s410, 24
          %s417 = smul.addr %s416, 8
          %s418 = scalar_lea.vmem %s2, %s417
          %s419 = smul.u32 13, %s29
          %s420 = ssub.s32 25, %s419
          %p421 = scmp.lt.s32.totalorder %s420, 13
          %s422 = scalar_select %p421, %s420, 13
          %s423 = smul.u32 128, %s422
        $region36: #{tpu_custom_call.1} parent=27 // pred_fallthru
          _
        // Predicated region
        $region37: #{tpu_custom_call.1} parent=27 // pred_check
          %p424 = pneg %p122
        $region38: #{tpu_custom_call.1} parent=27 // pred_check_branch
          %426 = sbr.rel (%p424) target = $region40
        $region39: #{tpu_custom_call.1} parent=27 // pred_region
          %s427 = smul.u32 13, %s29
          %s428 = ssub.s32 25, %s427
          %p429 = scmp.lt.s32.totalorder %s428, 13
          %s430 = scalar_select %p429, %s428, 13
          %s431 = smul.u32 128, %s430
          %p432 = scmp.lt.s32.totalorder %s427, 24
          %s433 = scalar_select %p432, %s427, 24
          %s434 = smul.addr %s433, 8
          %s435 = scalar_lea.vmem %s3, %s434
          %s436 = smul.u32 13, %s29
          %s437 = ssub.s32 25, %s436
          %p438 = scmp.lt.s32.totalorder %s437, 13
          %s439 = scalar_select %p438, %s437, 13
          %s440 = smul.u32 128, %s439
        $region40: #{tpu_custom_call.1} parent=27 // pred_fallthru
          _
        // Predicated region
        $region41: #{tpu_custom_call.1} parent=27 // pred_check
          %p441 = pneg %p148
        $region42: #{tpu_custom_call.1} parent=27 // pred_check_branch
          %443 = sbr.rel (%p441) target = $region44
        $region43: #{tpu_custom_call.1} parent=27 // pred_region
          %s444 = smul.u32 13, %s29
          %s445 = ssub.s32 25, %s444
          %p446 = scmp.lt.s32.totalorder %s445, 13
          %s447 = scalar_select %p446, %s445, 13
          %s448 = smul.u32 128, %s447
          %p449 = scmp.lt.s32.totalorder %s444, 24
          %s450 = scalar_select %p449, %s444, 24
          %s451 = smul.addr %s450, 8
          %s452 = scalar_lea.vmem %s4, %s451
          %s453 = smul.u32 13, %s29
          %s454 = ssub.s32 25, %s453
          %p455 = scmp.lt.s32.totalorder %s454, 13
          %s456 = scalar_select %p455, %s454, 13
          %s457 = smul.u32 128, %s456
        $region44: #{tpu_custom_call.1} parent=27 // pred_fallthru
          _
        // Predicated region
        $region45: #{tpu_custom_call.1} parent=27 // pred_check
          %p458 = pneg %p174
        $region46: #{tpu_custom_call.1} parent=27 // pred_check_branch
          %460 = sbr.rel (%p458) target = $region48
        $region47: #{tpu_custom_call.1} parent=27 // pred_region
          %s461 = sand.u32 %s164, 1
          %s462 = scalar_lea.sflag [#allocation4], %s461
          %s463 = sand.u32 %s164, 1
          %s464 = smul.addr %s463, 104
          %s465 = scalar_lea.vmem [#allocation3], %s464
          %s466 = smul.u32 13, %s29
          %s467 = ssub.s32 25, %s466
          %p468 = scmp.lt.s32.totalorder %s467, 13
          %s469 = scalar_select %p468, %s467, 13
          %s470 = smul.u32 128, %s469
          %s472 = ssub.s32 1664, %s470
          %473 = vsyncadd %s462, %s472
          %p474 = scmp.ne.s32.totalorder 0, %s470
          %s475 = smul.addr %s466, 128
          %s476 = scalar_lea.hbm %s5, %s475
          %s477 = smul.u32 8, %s469
          %s478 = sshll.u32 %s465, 4
          %s479 = int_to_ptr.vmem [resolvable:$true] %s478
          %s480 = sshll.u32 %s477, 4
          %484 = dma.hbm_to_vmem [thread:$0]  (%p474), %s476, %s480, %s479, %s462, 128, 128, 8
        $region48: #{tpu_custom_call.1} parent=27 // pred_fallthru
          _
        // Predicated region
        $region49: #{tpu_custom_call.1} parent=27 // pred_check
          %p485 = pneg %p200
        $region50: #{tpu_custom_call.1} parent=27 // pred_check_branch
          %487 = sbr.rel (%p485) target = $region52
        $region51: #{tpu_custom_call.1} parent=27 // pred_region
          %s488 = sand.u32 %s29, 1
          %s489 = scalar_lea.sflag [#allocation6], %s488
          %s490 = sand.u32 %s190, 1
          %s491 = smul.addr %s490, 104
          %s492 = scalar_lea.vmem [#allocation5], %s491
          %s493 = smul.u32 13, %s29
          %s494 = ssub.s32 25, %s493
          %p495 = scmp.lt.s32.totalorder %s494, 13
          %s496 = scalar_select %p495, %s494, 13
          %s497 = smul.u32 128, %s496
          %s499 = ssub.s32 1664, %s497
          %500 = vsyncadd %s489, %s499
          %p501 = scmp.ne.s32.totalorder 0, %s497
          %s502 = smul.addr %s493, 128
          %s503 = scalar_lea.hbm %s6, %s502
          %s504 = smul.u32 8, %s496
          %s505 = sshll.u32 %s492, 4
          %s506 = int_to_ptr.vmem [resolvable:$true] %s505
          %s507 = sshll.u32 %s504, 4
          %511 = dma.hbm_to_vmem [thread:$0]  (%p501), %s503, %s507, %s506, %s489, 128, 128, 8
        $region52: #{tpu_custom_call.1} parent=27 // pred_fallthru
          _
        // Predicated region
        $region53: #{tpu_custom_call.1} parent=27 // pred_check
          %p512 = pneg %p226
        $region54: #{tpu_custom_call.1} parent=27 // pred_check_branch
          %514 = sbr.rel (%p512) target = $region56
        $region55: #{tpu_custom_call.1} parent=27 // pred_region
          %s515 = sand.u32 %s29, 1
          %s516 = scalar_lea.sflag [#allocation6], %s515
          %s517 = sand.u32 %s216, 1
          %s518 = smul.addr %s517, 104
          %s519 = scalar_lea.vmem [#allocation7], %s518
          %s520 = smul.u32 13, %s29
          %s521 = ssub.s32 25, %s520
          %p522 = scmp.lt.s32.totalorder %s521, 13
          %s523 = scalar_select %p522, %s521, 13
          %s524 = smul.u32 128, %s523
          %s526 = ssub.s32 1664, %s524
          %527 = vsyncadd %s516, %s526
          %p528 = scmp.ne.s32.totalorder 0, %s524
          %s529 = smul.addr %s520, 128
          %s530 = scalar_lea.hbm %s7, %s529
          %s531 = smul.u32 8, %s523
          %s532 = sshll.u32 %s519, 4
          %s533 = int_to_ptr.vmem [resolvable:$true] %s532
          %s534 = sshll.u32 %s531, 4
          %538 = dma.hbm_to_vmem [thread:$0]  (%p528), %s530, %s534, %s533, %s516, 128, 128, 8
        $region56: #{tpu_custom_call.1} parent=27 // pred_fallthru
          _
        // Predicated region
        $region57: #{tpu_custom_call.1} parent=27 // pred_check
          %p539 = pneg %p252
        $region58: #{tpu_custom_call.1} parent=27 // pred_check_branch
          %541 = sbr.rel (%p539) target = $region60
        $region59: #{tpu_custom_call.1} parent=27 // pred_region
          %s542 = sand.u32 %s29, 1
          %s543 = scalar_lea.sflag [#allocation9], %s542
          %s544 = sand.u32 %s242, 1
          %s545 = smul.addr %s544, 104
          %s546 = scalar_lea.vmem [#allocation8], %s545
          %s547 = smul.u32 13, %s29
          %s548 = ssub.s32 25, %s547
          %p549 = scmp.lt.s32.totalorder %s548, 13
          %s550 = scalar_select %p549, %s548, 13
          %s551 = smul.u32 128, %s550
          %s553 = ssub.s32 1664, %s551
          %554 = vsyncadd %s543, %s553
          %p555 = scmp.ne.s32.totalorder 0, %s551
          %s556 = smul.addr %s547, 128
          %s557 = scalar_lea.hbm %s8, %s556
          %s558 = smul.u32 8, %s550
          %s559 = sshll.u32 %s546, 4
          %s560 = int_to_ptr.vmem [resolvable:$true] %s559
          %s561 = sshll.u32 %s558, 4
          %565 = dma.hbm_to_vmem [thread:$0]  (%p555), %s557, %s561, %s560, %s543, 128, 128, 8
        $region60: #{tpu_custom_call.1} parent=27 // pred_fallthru
          _
        // Predicated region
        $region61: #{tpu_custom_call.1} parent=27 // pred_check
          %p566 = pneg %p278
        $region62: #{tpu_custom_call.1} parent=27 // pred_check_branch
          %568 = sbr.rel (%p566) target = $region64
        $region63: #{tpu_custom_call.1} parent=27 // pred_region
          %s569 = sand.u32 %s29, 1
          %s570 = scalar_lea.sflag [#allocation9], %s569
          %s571 = sand.u32 %s268, 1
          %s572 = smul.addr %s571, 832
          %s573 = scalar_lea.vmem [#allocation10], %s572
          %s574 = smul.u32 104, %s29
          %s575 = ssub.s32 200, %s574
          %p576 = scmp.lt.s32.totalorder %s575, 104
          %s577 = scalar_select %p576, %s575, 104
          %s578 = smul.u32 128, %s577
          %s580 = ssub.s32 13312, %s578
          %581 = vsyncadd %s570, %s580
          %p582 = scmp.ne.s32.totalorder 0, %s578
          %s583 = smul.addr %s574, 128
          %s584 = scalar_lea.hbm %s9, %s583
          %s585 = smul.u32 8, %s577
          %s586 = sshll.u32 %s573, 4
          %s587 = int_to_ptr.vmem [resolvable:$true] %s586
          %s588 = sshll.u32 %s585, 4
          %592 = dma.hbm_to_vmem [thread:$0]  (%p582), %s584, %s588, %s587, %s570, 128, 128, 8
        $region64: #{tpu_custom_call.1} parent=27 // pred_fallthru
          _
      $region28: #{tpu_custom_call.1} parent=5 // pred_fallthru
        _
      %p593 = scmp.le.s32.totalorder 1, %s29
      %p594 = scmp.lt.s32.totalorder %s29, 3
      %p595 = pnand %p593, %p594
      %p596 = pneg %p595
      // Predicated region
      $region65: #{tpu_custom_call.1} parent=5 // pred_check
        _
      $region66: #{tpu_custom_call.1} parent=5 // pred_check_branch
        %598 = sbr.rel (%p595) target = $region68
      $region67: #{tpu_custom_call.1} parent=5 // pred_region
        %s599 = ssub.s32 %s29, 1
        %s600 = sand.u32 %s167, 1
        %s601 = scalar_lea.sflag [#allocation4], %s600
        %s602 = sand.u32 %s167, 1
        %s603 = smul.addr %s602, 104
        %s604 = scalar_lea.vmem [#allocation3], %s603
        // Predicated region
        $region69: #{tpu_custom_call.1} parent=67 // pred_check
          %p605 = pneg %p180
        $region70: #{tpu_custom_call.1} parent=67 // pred_check_branch
          %607 = sbr.rel (%p605) target = $region72
        $region71: #{tpu_custom_call.1} parent=67 // pred_region
          %608 = dma.done %s601, 1664
        $region72: #{tpu_custom_call.1} parent=67 // pred_fallthru
          _
        %s609 = sand.u32 %s34, 1
        %s610 = scalar_lea.sflag [#allocation6], %s609
        %s611 = sand.u32 %s193, 1
        %s612 = smul.addr %s611, 104
        %s613 = scalar_lea.vmem [#allocation5], %s612
        // Predicated region
        $region73: #{tpu_custom_call.1} parent=67 // pred_check
          %p614 = pneg %p206
        $region74: #{tpu_custom_call.1} parent=67 // pred_check_branch
          %616 = sbr.rel (%p614) target = $region76
        $region75: #{tpu_custom_call.1} parent=67 // pred_region
          %617 = dma.done %s610, 1664
        $region76: #{tpu_custom_call.1} parent=67 // pred_fallthru
          _
        %s618 = sand.u32 %s34, 1
        %s619 = scalar_lea.sflag [#allocation6], %s618
        %s620 = sand.u32 %s219, 1
        %s621 = smul.addr %s620, 104
        %s622 = scalar_lea.vmem [#allocation7], %s621
        // Predicated region
        $region77: #{tpu_custom_call.1} parent=67 // pred_check
          %p623 = pneg %p232
        $region78: #{tpu_custom_call.1} parent=67 // pred_check_branch
          %625 = sbr.rel (%p623) target = $region80
        $region79: #{tpu_custom_call.1} parent=67 // pred_region
          %626 = dma.done %s619, 1664
        $region80: #{tpu_custom_call.1} parent=67 // pred_fallthru
          _
        %s627 = sand.u32 %s34, 1
        %s628 = scalar_lea.sflag [#allocation9], %s627
        %s629 = sand.u32 %s245, 1
        %s630 = smul.addr %s629, 104
        %s631 = scalar_lea.vmem [#allocation8], %s630
        // Predicated region
        $region81: #{tpu_custom_call.1} parent=67 // pred_check
          %p632 = pneg %p258
        $region82: #{tpu_custom_call.1} parent=67 // pred_check_branch
          %634 = sbr.rel (%p632) target = $region84
        $region83: #{tpu_custom_call.1} parent=67 // pred_region
          %635 = dma.done %s628, 1664
        $region84: #{tpu_custom_call.1} parent=67 // pred_fallthru
          _
        %s636 = sand.u32 %s34, 1
        %s637 = scalar_lea.sflag [#allocation9], %s636
        %s638 = sand.u32 %s271, 1
        %s639 = smul.addr %s638, 832
        %s640 = scalar_lea.vmem [#allocation10], %s639
        // Predicated region
        $region85: #{tpu_custom_call.1} parent=67 // pred_check
          %p641 = pneg %p284
        $region86: #{tpu_custom_call.1} parent=67 // pred_check_branch
          %643 = sbr.rel (%p641) target = $region88
        $region87: #{tpu_custom_call.1} parent=67 // pred_region
          %644 = dma.done %s637, 13312
        $region88: #{tpu_custom_call.1} parent=67 // pred_fallthru
          _
        // Predicated region
        $region89: #{tpu_custom_call.1} parent=67 // pred_check
          %p645 = pneg %p326
        $region90: #{tpu_custom_call.1} parent=67 // pred_check_branch
          %647 = sbr.rel (%p645) target = $region92
        $region91: #{tpu_custom_call.1} parent=67 // pred_region
          %648 = dma.done [#allocation12], 896
        $region92: #{tpu_custom_call.1} parent=67 // pred_fallthru
          _
        %p649 = pneg %p50
        %p650 = pneg %p47
        %s651 = smul.u32 13, %s34
        %s652 = ssub.s32 25, %s651
        %p653 = scmp.lt.s32.totalorder %s652, 13
        %s654 = scalar_select %p653, %s652, 13
        %s655 = smul.u32 128, %s654
        %p656 = scmp.lt.s32.totalorder %s651, 24
        %s657 = scalar_select %p656, %s651, 24
        %s658 = smul.addr %s657, 8
        %s659 = scalar_lea.vmem %s1, %s658
        %p660 = pneg %p76
        %p661 = pneg %p73
        %s662 = smul.u32 13, %s34
        %s663 = ssub.s32 25, %s662
        %p664 = scmp.lt.s32.totalorder %s663, 13
        %s665 = scalar_select %p664, %s663, 13
        %s666 = smul.u32 128, %s665
        %p667 = scmp.lt.s32.totalorder %s662, 24
        %s668 = scalar_select %p667, %s662, 24
        %s669 = smul.addr %s668, 8
        %s670 = scalar_lea.vmem %s2, %s669
        %p671 = pneg %p102
        %p672 = pneg %p99
        %s673 = smul.u32 13, %s34
        %s674 = ssub.s32 25, %s673
        %p675 = scmp.lt.s32.totalorder %s674, 13
        %s676 = scalar_select %p675, %s674, 13
        %s677 = smul.u32 128, %s676
        %p678 = scmp.lt.s32.totalorder %s673, 24
        %s679 = scalar_select %p678, %s673, 24
        %s680 = smul.addr %s679, 8
        %s681 = scalar_lea.vmem %s3, %s680
        %p682 = pneg %p128
        %p683 = pneg %p125
        %s684 = smul.u32 13, %s34
        %s685 = ssub.s32 25, %s684
        %p686 = scmp.lt.s32.totalorder %s685, 13
        %s687 = scalar_select %p686, %s685, 13
        %s688 = smul.u32 128, %s687
        %p689 = scmp.lt.s32.totalorder %s684, 24
        %s690 = scalar_select %p689, %s684, 24
        %s691 = smul.addr %s690, 8
        %s692 = scalar_lea.vmem %s4, %s691
        %p693 = pneg %p154
        %p694 = pneg %p151
        %s695 = sand.u32 %s167, 1
        %s696 = scalar_lea.sflag [#allocation4], %s695
        %s697 = sand.u32 %s167, 1
        %s698 = smul.addr %s697, 104
        %s699 = scalar_lea.vmem [#allocation3], %s698
        %p700 = pneg %p180
        %p701 = pneg %p177
        %s702 = sand.u32 %s34, 1
        %s703 = scalar_lea.sflag [#allocation6], %s702
        %s704 = sand.u32 %s193, 1
        %s705 = smul.addr %s704, 104
        %s706 = scalar_lea.vmem [#allocation5], %s705
        %p707 = pneg %p206
        %p708 = pneg %p203
        %s709 = sand.u32 %s34, 1
        %s710 = scalar_lea.sflag [#allocation6], %s709
        %s711 = sand.u32 %s219, 1
        %s712 = smul.addr %s711, 104
        %s713 = scalar_lea.vmem [#allocation7], %s712
        %p714 = pneg %p232
        %p715 = pneg %p229
        %s716 = sand.u32 %s34, 1
        %s717 = scalar_lea.sflag [#allocation9], %s716
        %s718 = sand.u32 %s245, 1
        %s719 = smul.addr %s718, 104
        %s720 = scalar_lea.vmem [#allocation8], %s719
        %p721 = pneg %p258
        %p722 = pneg %p255
        %s723 = sand.u32 %s34, 1
        %s724 = scalar_lea.sflag [#allocation9], %s723
        %s725 = sand.u32 %s271, 1
        %s726 = smul.addr %s725, 832
        %s727 = scalar_lea.vmem [#allocation10], %s726
        %p728 = pneg %p284
        %p729 = pneg %p281
        %p730 = pneg %p305
        %p731 = pneg %p302
        %p732 = pneg %p326
        %p733 = pneg %p323
        %p734 = pneg %p352
        %p735 = pneg %p349
        %s736 = sand.u32 %s339, 1
        %s737 = sand.u32 %s339, 1
        %s738 = smul.addr %s737, 104
        %s739 = scalar_lea.vmem [#allocation13], %s738
        %s740 = smul.u32 13, %s34
        %s741 = ssub.s32 25, %s740
        %p742 = scmp.lt.s32.totalorder %s741, 13
        %s743 = scalar_select %p742, %s741, 13
        %s744 = smul.u32 128, %s743
        %p745 = scmp.lt.s32.totalorder %s740, 24
        %s746 = scalar_select %p745, %s740, 24
        %s747 = smul.addr %s746, 8
        %s748 = scalar_lea.vmem %s1, %s747
        %s749 = smul.u32 13, %s34
        %s750 = ssub.s32 25, %s749
        %p751 = scmp.lt.s32.totalorder %s750, 13
        %s752 = scalar_select %p751, %s750, 13
        %s753 = smul.u32 128, %s752
        %s754 = smul.u32 13, %s34
        %s755 = ssub.s32 25, %s754
        %p756 = scmp.lt.s32.totalorder %s755, 13
        %s757 = scalar_select %p756, %s755, 13
        %s758 = smul.u32 128, %s757
        %p759 = scmp.lt.s32.totalorder %s754, 24
        %s760 = scalar_select %p759, %s754, 24
        %s761 = smul.addr %s760, 8
        %s762 = scalar_lea.vmem %s2, %s761
        %s763 = smul.u32 13, %s34
        %s764 = ssub.s32 25, %s763
        %p765 = scmp.lt.s32.totalorder %s764, 13
        %s766 = scalar_select %p765, %s764, 13
        %s767 = smul.u32 128, %s766
        %s768 = smul.u32 13, %s34
        %s769 = ssub.s32 25, %s768
        %p770 = scmp.lt.s32.totalorder %s769, 13
        %s771 = scalar_select %p770, %s769, 13
        %s772 = smul.u32 128, %s771
        %p773 = scmp.lt.s32.totalorder %s768, 24
        %s774 = scalar_select %p773, %s768, 24
        %s775 = smul.addr %s774, 8
        %s776 = scalar_lea.vmem %s3, %s775
        %s777 = smul.u32 13, %s34
        %s778 = ssub.s32 25, %s777
        %p779 = scmp.lt.s32.totalorder %s778, 13
        %s780 = scalar_select %p779, %s778, 13
        %s781 = smul.u32 128, %s780
        %s782 = smul.u32 13, %s34
        %s783 = ssub.s32 25, %s782
        %p784 = scmp.lt.s32.totalorder %s783, 13
        %s785 = scalar_select %p784, %s783, 13
        %s786 = smul.u32 128, %s785
        %p787 = scmp.lt.s32.totalorder %s782, 24
        %s788 = scalar_select %p787, %s782, 24
        %s789 = smul.addr %s788, 8
        %s790 = scalar_lea.vmem %s4, %s789
        %s791 = smul.u32 13, %s34
        %s792 = ssub.s32 25, %s791
        %p793 = scmp.lt.s32.totalorder %s792, 13
        %s794 = scalar_select %p793, %s792, 13
        %s795 = smul.u32 128, %s794
        %s796 = smul.u32 13, %s34
        %s797 = ssub.s32 25, %s796
        %p798 = scmp.lt.s32.totalorder %s797, 13
        %s799 = scalar_select %p798, %s797, 13
        %s800 = smul.u32 128, %s799
        %s801 = smul.u32 13, %s34
        %s802 = ssub.s32 25, %s801
        %p803 = scmp.lt.s32.totalorder %s802, 13
        %s804 = scalar_select %p803, %s802, 13
        %s805 = smul.u32 128, %s804
        %s806 = smul.u32 13, %s34
        %s807 = ssub.s32 25, %s806
        %p808 = scmp.lt.s32.totalorder %s807, 13
        %s809 = scalar_select %p808, %s807, 13
        %s810 = smul.u32 128, %s809
        %s811 = smul.u32 13, %s34
        %s812 = ssub.s32 25, %s811
        %p813 = scmp.lt.s32.totalorder %s812, 13
        %s814 = scalar_select %p813, %s812, 13
        %s815 = smul.u32 128, %s814
        %s816 = smul.u32 104, %s34
        %s817 = ssub.s32 200, %s816
        %p818 = scmp.lt.s32.totalorder %s817, 104
        %s819 = scalar_select %p818, %s817, 104
        %s820 = smul.u32 128, %s819
        %s821 = smul.u32 13, %s34
        %s822 = ssub.s32 25, %s821
        %p823 = scmp.lt.s32.totalorder %s822, 13
        %s824 = scalar_select %p823, %s822, 13
        %s825 = smul.u32 128, %s824
        %v826 = vld [vmem:[%s748] sm:$0xff]
        %v827 = vld [vmem:[%s748 + $0x8] sm:$0xff]
        %v828 = vld [vmem:[%s748 + $0x10] sm:$0xff]
        %v829 = vld [vmem:[%s748 + $0x18] sm:$0xff]
        %v830 = vld [vmem:[%s748 + $0x20] sm:$0xff]
        %v831 = vld [vmem:[%s748 + $0x28] sm:$0xff]
        %v832 = vld [vmem:[%s748 + $0x30] sm:$0xff]
        %v833 = vld [vmem:[%s748 + $0x38] sm:$0xff]
        %v834 = vld [vmem:[%s748 + $0x40] sm:$0xff]
        %v835 = vld [vmem:[%s748 + $0x48] sm:$0xff]
        %v836 = vld [vmem:[%s748 + $0x50] sm:$0xff]
        %v837 = vld [vmem:[%s748 + $0x58] sm:$0xff]
        %v838 = vld [vmem:[%s748 + $0x60] sm:$0xff]
        %v839 = vld [vmem:[%s776] sm:$0xff]
        %v840 = vld [vmem:[%s776 + $0x8] sm:$0xff]
        %v841 = vld [vmem:[%s776 + $0x10] sm:$0xff]
        %v842 = vld [vmem:[%s776 + $0x18] sm:$0xff]
        %v843 = vld [vmem:[%s776 + $0x20] sm:$0xff]
        %v844 = vld [vmem:[%s776 + $0x28] sm:$0xff]
        %v845 = vld [vmem:[%s776 + $0x30] sm:$0xff]
        %v846 = vld [vmem:[%s776 + $0x38] sm:$0xff]
        %v847 = vld [vmem:[%s776 + $0x40] sm:$0xff]
        %v848 = vld [vmem:[%s776 + $0x48] sm:$0xff]
        %v849 = vld [vmem:[%s776 + $0x50] sm:$0xff]
        %v850 = vld [vmem:[%s776 + $0x58] sm:$0xff]
        %v851 = vld [vmem:[%s776 + $0x60] sm:$0xff]
        %v852 = vld [vmem:[%s790] sm:$0xff]
        %v853 = vld [vmem:[%s790 + $0x8] sm:$0xff]
        %v854 = vld [vmem:[%s790 + $0x10] sm:$0xff]
        %v855 = vld [vmem:[%s790 + $0x18] sm:$0xff]
        %v856 = vld [vmem:[%s790 + $0x20] sm:$0xff]
        %v857 = vld [vmem:[%s790 + $0x28] sm:$0xff]
        %v858 = vld [vmem:[%s790 + $0x30] sm:$0xff]
        %v859 = vld [vmem:[%s790 + $0x38] sm:$0xff]
        %v860 = vld [vmem:[%s790 + $0x40] sm:$0xff]
        %v861 = vld [vmem:[%s790 + $0x48] sm:$0xff]
        %v862 = vld [vmem:[%s790 + $0x50] sm:$0xff]
        %v863 = vld [vmem:[%s790 + $0x58] sm:$0xff]
        %v864 = vld [vmem:[%s790 + $0x60] sm:$0xff]
        %v865 = vld [vmem:[%s604] sm:$0xff]
        %v866 = vld [vmem:[%s604 + $0x8] sm:$0xff]
        %v867 = vld [vmem:[%s604 + $0x10] sm:$0xff]
        %v868 = vld [vmem:[%s604 + $0x18] sm:$0xff]
        %v869 = vld [vmem:[%s604 + $0x20] sm:$0xff]
        %v870 = vld [vmem:[%s604 + $0x28] sm:$0xff]
        %v871 = vld [vmem:[%s604 + $0x30] sm:$0xff]
        %v872 = vld [vmem:[%s604 + $0x38] sm:$0xff]
        %v873 = vld [vmem:[%s604 + $0x40] sm:$0xff]
        %v874 = vld [vmem:[%s604 + $0x48] sm:$0xff]
        %v875 = vld [vmem:[%s604 + $0x50] sm:$0xff]
        %v876 = vld [vmem:[%s604 + $0x58] sm:$0xff]
        %v877 = vld [vmem:[%s604 + $0x60] sm:$0xff]
        %v878 = vld [vmem:[%s613] sm:$0xff]
        %v879 = vld [vmem:[%s613 + $0x8] sm:$0xff]
        %v880 = vld [vmem:[%s613 + $0x10] sm:$0xff]
        %v881 = vld [vmem:[%s613 + $0x18] sm:$0xff]
        %v882 = vld [vmem:[%s613 + $0x20] sm:$0xff]
        %v883 = vld [vmem:[%s613 + $0x28] sm:$0xff]
        %v884 = vld [vmem:[%s613 + $0x30] sm:$0xff]
        %v885 = vld [vmem:[%s613 + $0x38] sm:$0xff]
        %v886 = vld [vmem:[%s613 + $0x40] sm:$0xff]
        %v887 = vld [vmem:[%s613 + $0x48] sm:$0xff]
        %v888 = vld [vmem:[%s613 + $0x50] sm:$0xff]
        %v889 = vld [vmem:[%s613 + $0x58] sm:$0xff]
        %v890 = vld [vmem:[%s613 + $0x60] sm:$0xff]
        %v891 = vld [vmem:[%s622] sm:$0xff]
        %v892 = vld [vmem:[%s622 + $0x8] sm:$0xff]
        %v893 = vld [vmem:[%s622 + $0x10] sm:$0xff]
        %v894 = vld [vmem:[%s622 + $0x18] sm:$0xff]
        %v895 = vld [vmem:[%s622 + $0x20] sm:$0xff]
        %v896 = vld [vmem:[%s622 + $0x28] sm:$0xff]
        %v897 = vld [vmem:[%s622 + $0x30] sm:$0xff]
        %v898 = vld [vmem:[%s622 + $0x38] sm:$0xff]
        %v899 = vld [vmem:[%s622 + $0x40] sm:$0xff]
        %v900 = vld [vmem:[%s622 + $0x48] sm:$0xff]
        %v901 = vld [vmem:[%s622 + $0x50] sm:$0xff]
        %v902 = vld [vmem:[%s622 + $0x58] sm:$0xff]
        %v903 = vld [vmem:[%s622 + $0x60] sm:$0xff]
        %v904 = vld [vmem:[%s631] sm:$0xff]
        %v905 = vld [vmem:[%s631 + $0x8] sm:$0xff]
        %v906 = vld [vmem:[%s631 + $0x10] sm:$0xff]
        %v907 = vld [vmem:[%s631 + $0x18] sm:$0xff]
        %v908 = vld [vmem:[%s631 + $0x20] sm:$0xff]
        %v909 = vld [vmem:[%s631 + $0x28] sm:$0xff]
        %v910 = vld [vmem:[%s631 + $0x30] sm:$0xff]
        %v911 = vld [vmem:[%s631 + $0x38] sm:$0xff]
        %v912 = vld [vmem:[%s631 + $0x40] sm:$0xff]
        %v913 = vld [vmem:[%s631 + $0x48] sm:$0xff]
        %v914 = vld [vmem:[%s631 + $0x50] sm:$0xff]
        %v915 = vld [vmem:[%s631 + $0x58] sm:$0xff]
        %v916 = vld [vmem:[%s631 + $0x60] sm:$0xff]
        %930 = vrot.lane.b32.xlu0 %v826, 122
        %v931 = vpop.permute.xlu0 %930
        %932 = vrot.lane.b32.xlu0 %v827, 122
        %v933 = vpop.permute.xlu0 %932
        %934 = vrot.lane.b32.xlu0 %v828, 122
        %v935 = vpop.permute.xlu0 %934
        %936 = vrot.lane.b32.xlu0 %v829, 122
        %v937 = vpop.permute.xlu0 %936
        %938 = vrot.lane.b32.xlu0 %v830, 122
        %v939 = vpop.permute.xlu0 %938
        %940 = vrot.lane.b32.xlu0 %v831, 122
        %v941 = vpop.permute.xlu0 %940
        %942 = vrot.lane.b32.xlu0 %v832, 122
        %v943 = vpop.permute.xlu0 %942
        %944 = vrot.lane.b32.xlu0 %v833, 122
        %v945 = vpop.permute.xlu0 %944
        %946 = vrot.lane.b32.xlu0 %v834, 122
        %v947 = vpop.permute.xlu0 %946
        %948 = vrot.lane.b32.xlu0 %v835, 122
        %v949 = vpop.permute.xlu0 %948
        %950 = vrot.lane.b32.xlu0 %v836, 122
        %v951 = vpop.permute.xlu0 %950
        %952 = vrot.lane.b32.xlu0 %v837, 122
        %v953 = vpop.permute.xlu0 %952
        %954 = vrot.lane.b32.xlu0 %v838, 122
        %v955 = vpop.permute.xlu0 %954
        %v969 = vmul.f32 %v826, %v931
        %v970 = vmul.f32 %v827, %v933
        %v971 = vmul.f32 %v828, %v935
        %v972 = vmul.f32 %v829, %v937
        %v973 = vmul.f32 %v830, %v939
        %v974 = vmul.f32 %v831, %v941
        %v975 = vmul.f32 %v832, %v943
        %v976 = vmul.f32 %v833, %v945
        %v977 = vmul.f32 %v834, %v947
        %v978 = vmul.f32 %v835, %v949
        %v979 = vmul.f32 %v836, %v951
        %v980 = vmul.f32 %v837, %v953
        %v981 = vmul.f32 %v838, %v955
        %995 = vrot.lane.b32.xlu0 %v969, 127
        %v996 = vpop.permute.xlu0 %995
        %997 = vrot.lane.b32.xlu0 %v970, 127
        %v998 = vpop.permute.xlu0 %997
        %999 = vrot.lane.b32.xlu0 %v971, 127
        %v1000 = vpop.permute.xlu0 %999
        %1001 = vrot.lane.b32.xlu0 %v972, 127
        %v1002 = vpop.permute.xlu0 %1001
        %1003 = vrot.lane.b32.xlu0 %v973, 127
        %v1004 = vpop.permute.xlu0 %1003
        %1005 = vrot.lane.b32.xlu0 %v974, 127
        %v1006 = vpop.permute.xlu0 %1005
        %1007 = vrot.lane.b32.xlu0 %v975, 127
        %v1008 = vpop.permute.xlu0 %1007
        %1009 = vrot.lane.b32.xlu0 %v976, 127
        %v1010 = vpop.permute.xlu0 %1009
        %1011 = vrot.lane.b32.xlu0 %v977, 127
        %v1012 = vpop.permute.xlu0 %1011
        %1013 = vrot.lane.b32.xlu0 %v978, 127
        %v1014 = vpop.permute.xlu0 %1013
        %1015 = vrot.lane.b32.xlu0 %v979, 127
        %v1016 = vpop.permute.xlu0 %1015
        %1017 = vrot.lane.b32.xlu0 %v980, 127
        %v1018 = vpop.permute.xlu0 %1017
        %1019 = vrot.lane.b32.xlu0 %v981, 127
        %v1020 = vpop.permute.xlu0 %1019
        %v1034 = vadd.f32 %v826, %v996
        %v1035 = vadd.f32 %v827, %v998
        %v1036 = vadd.f32 %v828, %v1000
        %v1037 = vadd.f32 %v829, %v1002
        %v1038 = vadd.f32 %v830, %v1004
        %v1039 = vadd.f32 %v831, %v1006
        %v1040 = vadd.f32 %v832, %v1008
        %v1041 = vadd.f32 %v833, %v1010
        %v1042 = vadd.f32 %v834, %v1012
        %v1043 = vadd.f32 %v835, %v1014
        %v1044 = vadd.f32 %v836, %v1016
        %v1045 = vadd.f32 %v837, %v1018
        %v1046 = vadd.f32 %v838, %v1020
        %1047 = vrot.lane.b32.xlu0 %v826, 123
        %v1048 = vpop.permute.xlu0 %1047
        %1049 = vrot.lane.b32.xlu0 %v827, 123
        %v1050 = vpop.permute.xlu0 %1049
        %1051 = vrot.lane.b32.xlu0 %v828, 123
        %v1052 = vpop.permute.xlu0 %1051
        %1053 = vrot.lane.b32.xlu0 %v829, 123
        %v1054 = vpop.permute.xlu0 %1053
        %1055 = vrot.lane.b32.xlu0 %v830, 123
        %v1056 = vpop.permute.xlu0 %1055
        %1057 = vrot.lane.b32.xlu0 %v831, 123
        %v1058 = vpop.permute.xlu0 %1057
        %1059 = vrot.lane.b32.xlu0 %v832, 123
        %v1060 = vpop.permute.xlu0 %1059
        %1061 = vrot.lane.b32.xlu0 %v833, 123
        %v1062 = vpop.permute.xlu0 %1061
        %1063 = vrot.lane.b32.xlu0 %v834, 123
        %v1064 = vpop.permute.xlu0 %1063
        %1065 = vrot.lane.b32.xlu0 %v835, 123
        %v1066 = vpop.permute.xlu0 %1065
        %1067 = vrot.lane.b32.xlu0 %v836, 123
        %v1068 = vpop.permute.xlu0 %1067
        %1069 = vrot.lane.b32.xlu0 %v837, 123
        %v1070 = vpop.permute.xlu0 %1069
        %1071 = vrot.lane.b32.xlu0 %v838, 123
        %v1072 = vpop.permute.xlu0 %1071
        %v1086 = vmul.f32 %v826, %v1048
        %v1087 = vmul.f32 %v827, %v1050
        %v1088 = vmul.f32 %v828, %v1052
        %v1089 = vmul.f32 %v829, %v1054
        %v1090 = vmul.f32 %v830, %v1056
        %v1091 = vmul.f32 %v831, %v1058
        %v1092 = vmul.f32 %v832, %v1060
        %v1093 = vmul.f32 %v833, %v1062
        %v1094 = vmul.f32 %v834, %v1064
        %v1095 = vmul.f32 %v835, %v1066
        %v1096 = vmul.f32 %v836, %v1068
        %v1097 = vmul.f32 %v837, %v1070
        %v1098 = vmul.f32 %v838, %v1072
        %1112 = vrot.lane.b32.xlu0 %v1086, 127
        %v1113 = vpop.permute.xlu0 %1112
        %1114 = vrot.lane.b32.xlu0 %v1087, 127
        %v1115 = vpop.permute.xlu0 %1114
        %1116 = vrot.lane.b32.xlu0 %v1088, 127
        %v1117 = vpop.permute.xlu0 %1116
        %1118 = vrot.lane.b32.xlu0 %v1089, 127
        %v1119 = vpop.permute.xlu0 %1118
        %1120 = vrot.lane.b32.xlu0 %v1090, 127
        %v1121 = vpop.permute.xlu0 %1120
        %1122 = vrot.lane.b32.xlu0 %v1091, 127
        %v1123 = vpop.permute.xlu0 %1122
        %1124 = vrot.lane.b32.xlu0 %v1092, 127
        %v1125 = vpop.permute.xlu0 %1124
        %1126 = vrot.lane.b32.xlu0 %v1093, 127
        %v1127 = vpop.permute.xlu0 %1126
        %1128 = vrot.lane.b32.xlu0 %v1094, 127
        %v1129 = vpop.permute.xlu0 %1128
        %1130 = vrot.lane.b32.xlu0 %v1095, 127
        %v1131 = vpop.permute.xlu0 %1130
        %1132 = vrot.lane.b32.xlu0 %v1096, 127
        %v1133 = vpop.permute.xlu0 %1132
        %1134 = vrot.lane.b32.xlu0 %v1097, 127
        %v1135 = vpop.permute.xlu0 %1134
        %1136 = vrot.lane.b32.xlu0 %v1098, 127
        %v1137 = vpop.permute.xlu0 %1136
        %v1151 = vadd.f32 %v826, %v1113
        %v1152 = vadd.f32 %v827, %v1115
        %v1153 = vadd.f32 %v828, %v1117
        %v1154 = vadd.f32 %v829, %v1119
        %v1155 = vadd.f32 %v830, %v1121
        %v1156 = vadd.f32 %v831, %v1123
        %v1157 = vadd.f32 %v832, %v1125
        %v1158 = vadd.f32 %v833, %v1127
        %v1159 = vadd.f32 %v834, %v1129
        %v1160 = vadd.f32 %v835, %v1131
        %v1161 = vadd.f32 %v836, %v1133
        %v1162 = vadd.f32 %v837, %v1135
        %v1163 = vadd.f32 %v838, %v1137
        %v1164 = vmul.f32 %v852, %v891
        %v1165 = vmul.f32 %v853, %v892
        %v1166 = vmul.f32 %v854, %v893
        %v1167 = vmul.f32 %v855, %v894
        %v1168 = vmul.f32 %v856, %v895
        %v1169 = vmul.f32 %v857, %v896
        %v1170 = vmul.f32 %v858, %v897
        %v1171 = vmul.f32 %v859, %v898
        %v1172 = vmul.f32 %v860, %v899
        %v1173 = vmul.f32 %v861, %v900
        %v1174 = vmul.f32 %v862, %v901
        %v1175 = vmul.f32 %v863, %v902
        %v1176 = vmul.f32 %v864, %v903
        %v1177 = vadd.f32 %v839, %v1164
        %v1178 = vadd.f32 %v840, %v1165
        %v1179 = vadd.f32 %v841, %v1166
        %v1180 = vadd.f32 %v842, %v1167
        %v1181 = vadd.f32 %v843, %v1168
        %v1182 = vadd.f32 %v844, %v1169
        %v1183 = vadd.f32 %v845, %v1170
        %v1184 = vadd.f32 %v846, %v1171
        %v1185 = vadd.f32 %v847, %v1172
        %v1186 = vadd.f32 %v848, %v1173
        %v1187 = vadd.f32 %v849, %v1174
        %v1188 = vadd.f32 %v850, %v1175
        %v1189 = vadd.f32 %v851, %v1176
        %v1190 = vmul.f32 %v878, %v904
        %v1191 = vmul.f32 %v879, %v905
        %v1192 = vmul.f32 %v880, %v906
        %v1193 = vmul.f32 %v881, %v907
        %v1194 = vmul.f32 %v882, %v908
        %v1195 = vmul.f32 %v883, %v909
        %v1196 = vmul.f32 %v884, %v910
        %v1197 = vmul.f32 %v885, %v911
        %v1198 = vmul.f32 %v886, %v912
        %v1199 = vmul.f32 %v887, %v913
        %v1200 = vmul.f32 %v888, %v914
        %v1201 = vmul.f32 %v889, %v915
        %v1202 = vmul.f32 %v890, %v916
        %v1203 = vadd.f32 %v865, %v1190
        %v1204 = vadd.f32 %v866, %v1191
        %v1205 = vadd.f32 %v867, %v1192
        %v1206 = vadd.f32 %v868, %v1193
        %v1207 = vadd.f32 %v869, %v1194
        %v1208 = vadd.f32 %v870, %v1195
        %v1209 = vadd.f32 %v871, %v1196
        %v1210 = vadd.f32 %v872, %v1197
        %v1211 = vadd.f32 %v873, %v1198
        %v1212 = vadd.f32 %v874, %v1199
        %v1213 = vadd.f32 %v875, %v1200
        %v1214 = vadd.f32 %v876, %v1201
        %v1215 = vadd.f32 %v877, %v1202
        %v1216 = vld [vmem:[%s762] sm:$0xff]
        %v1217 = vld [vmem:[%s762 + $0x8] sm:$0xff]
        %v1218 = vld [vmem:[%s762 + $0x10] sm:$0xff]
        %v1219 = vld [vmem:[%s762 + $0x18] sm:$0xff]
        %v1220 = vld [vmem:[%s762 + $0x20] sm:$0xff]
        %v1221 = vld [vmem:[%s762 + $0x28] sm:$0xff]
        %v1222 = vld [vmem:[%s762 + $0x30] sm:$0xff]
        %v1223 = vld [vmem:[%s762 + $0x38] sm:$0xff]
        %v1224 = vld [vmem:[%s762 + $0x40] sm:$0xff]
        %v1225 = vld [vmem:[%s762 + $0x48] sm:$0xff]
        %v1226 = vld [vmem:[%s762 + $0x50] sm:$0xff]
        %v1227 = vld [vmem:[%s762 + $0x58] sm:$0xff]
        %v1228 = vld [vmem:[%s762 + $0x60] sm:$0xff]
        %v1229 = vld [vmem:[%s10] sm:$0xff]
        %v1230 = vld [vmem:[%s10 + $0x8] sm:$0xff]
        %v1231 = vld [vmem:[%s10 + $0x10] sm:$0xff]
        %v1232 = vld [vmem:[%s10 + $0x18] sm:$0xff]
        %v1233 = vld [vmem:[%s10 + $0x20] sm:$0xff]
        %v1234 = vld [vmem:[%s10 + $0x28] sm:$0xff]
        %v1235 = vld [vmem:[%s10 + $0x30] sm:$0xff]
        %v1236 = vld [vmem:[#allocation11] sm:$0xff]
        %v1237 = vld [vmem:[#allocation11 + $0x8] sm:$0xff]
        %v1238 = vld [vmem:[#allocation11 + $0x10] sm:$0xff]
        %v1239 = vld [vmem:[#allocation11 + $0x18] sm:$0xff]
        %v1240 = vld [vmem:[#allocation11 + $0x20] sm:$0xff]
        %v1241 = vld [vmem:[#allocation11 + $0x28] sm:$0xff]
        %v1242 = vld [vmem:[#allocation11 + $0x30] sm:$0xff]
        %v1243 = vlaneseq
        %v1244 = vand.u32 %v1243, 127
        %1245 = vset.pattern.permute.xlu0 0
        %1246 = vperm.xlu0 %1245, %v1216
        %v1247 = vpop.permute.xlu0 %1246
        %1248 = vset.pattern.permute.xlu0 0
        %1249 = vperm.xlu0 %1248, %v1217
        %v1250 = vpop.permute.xlu0 %1249
        %1251 = vset.pattern.permute.xlu0 0
        %1252 = vperm.xlu0 %1251, %v1218
        %v1253 = vpop.permute.xlu0 %1252
        %1254 = vset.pattern.permute.xlu0 0
        %1255 = vperm.xlu0 %1254, %v1219
        %v1256 = vpop.permute.xlu0 %1255
        %1257 = vset.pattern.permute.xlu0 0
        %1258 = vperm.xlu0 %1257, %v1220
        %v1259 = vpop.permute.xlu0 %1258
        %1260 = vset.pattern.permute.xlu0 0
        %1261 = vperm.xlu0 %1260, %v1221
        %v1262 = vpop.permute.xlu0 %1261
        %1263 = vset.pattern.permute.xlu0 0
        %1264 = vperm.xlu0 %1263, %v1222
        %v1265 = vpop.permute.xlu0 %1264
        %1266 = vset.pattern.permute.xlu0 0
        %1267 = vperm.xlu0 %1266, %v1223
        %v1268 = vpop.permute.xlu0 %1267
        %1269 = vset.pattern.permute.xlu0 0
        %1270 = vperm.xlu0 %1269, %v1224
        %v1271 = vpop.permute.xlu0 %1270
        %1272 = vset.pattern.permute.xlu0 0
        %1273 = vperm.xlu0 %1272, %v1225
        %v1274 = vpop.permute.xlu0 %1273
        %1275 = vset.pattern.permute.xlu0 0
        %1276 = vperm.xlu0 %1275, %v1226
        %v1277 = vpop.permute.xlu0 %1276
        %1278 = vset.pattern.permute.xlu0 0
        %1279 = vperm.xlu0 %1278, %v1227
        %v1280 = vpop.permute.xlu0 %1279
        %1281 = vset.pattern.permute.xlu0 0
        %1282 = vperm.xlu0 %1281, %v1228
        %v1283 = vpop.permute.xlu0 %1282
        %vm1284 = vcmp.eq.s32.totalorder %v1247, %v1244
        %vm1285 = vcmp.eq.s32.totalorder %v1250, %v1244
        %vm1286 = vcmp.eq.s32.totalorder %v1253, %v1244
        %vm1287 = vcmp.eq.s32.totalorder %v1256, %v1244
        %vm1288 = vcmp.eq.s32.totalorder %v1259, %v1244
        %vm1289 = vcmp.eq.s32.totalorder %v1262, %v1244
        %vm1290 = vcmp.eq.s32.totalorder %v1265, %v1244
        %vm1291 = vcmp.eq.s32.totalorder %v1268, %v1244
        %vm1292 = vcmp.eq.s32.totalorder %v1271, %v1244
        %vm1293 = vcmp.eq.s32.totalorder %v1274, %v1244
        %vm1294 = vcmp.eq.s32.totalorder %v1277, %v1244
        %vm1295 = vcmp.eq.s32.totalorder %v1280, %v1244
        %vm1296 = vcmp.eq.s32.totalorder %v1283, %v1244
        %v1297 = vsel %vm1284, 1, 0
        %v1298 = vsel %vm1285, 1, 0
        %v1299 = vsel %vm1286, 1, 0
        %v1300 = vsel %vm1287, 1, 0
        %v1301 = vsel %vm1288, 1, 0
        %v1302 = vsel %vm1289, 1, 0
        %v1303 = vsel %vm1290, 1, 0
        %v1304 = vsel %vm1291, 1, 0
        %v1305 = vsel %vm1292, 1, 0
        %v1306 = vsel %vm1293, 1, 0
        %v1307 = vsel %vm1294, 1, 0
        %v1308 = vsel %vm1295, 1, 0
        %v1309 = vsel %vm1296, 1, 0
        %v1310 = vcvt.s32.f32 %v1297
        %v1311 = vcvt.s32.f32 %v1298
        %v1312 = vcvt.s32.f32 %v1299
        %v1313 = vcvt.s32.f32 %v1300
        %v1314 = vcvt.s32.f32 %v1301
        %v1315 = vcvt.s32.f32 %v1302
        %v1316 = vcvt.s32.f32 %v1303
        %v1317 = vcvt.s32.f32 %v1304
        %v1318 = vcvt.s32.f32 %v1305
        %v1319 = vcvt.s32.f32 %v1306
        %v1320 = vcvt.s32.f32 %v1307
        %v1321 = vcvt.s32.f32 %v1308
        %v1322 = vcvt.s32.f32 %v1309
        %v1323 = vadd.f32 %v1310, 0.0
        %v1324 = vadd.f32 %v1311, 0.0
        %v1325 = vadd.f32 %v1312, 0.0
        %v1326 = vadd.f32 %v1313, 0.0
        %v1327 = vadd.f32 %v1314, 0.0
        %v1328 = vadd.f32 %v1315, 0.0
        %v1329 = vadd.f32 %v1316, 0.0
        %v1330 = vadd.f32 %v1317, 0.0
        %v1331 = vadd.f32 %v1318, 0.0
        %v1332 = vadd.f32 %v1319, 0.0
        %v1333 = vadd.f32 %v1320, 0.0
        %v1334 = vadd.f32 %v1321, 0.0
        %v1335 = vadd.f32 %v1322, 0.0
        %vm1336 = vcmask 457728
        %v1338 = vsel %vm1336, %v1310, 0
        %v1341 = vsel %vm1336, %v1311, 0
        %v1344 = vsel %vm1336, %v1312, 0
        %v1347 = vsel %vm1336, %v1313, 0
        %v1350 = vsel %vm1336, %v1314, 0
        %v1353 = vsel %vm1336, %v1315, 0
        %v1356 = vsel %vm1336, %v1316, 0
        %v1359 = vsel %vm1336, %v1317, 0
        %v1362 = vsel %vm1336, %v1318, 0
        %v1365 = vsel %vm1336, %v1319, 0
        %v1368 = vsel %vm1336, %v1320, 0
        %v1371 = vsel %vm1336, %v1321, 0
        %v1374 = vsel %vm1336, %v1322, 0
        %1376 = vmatprep.subr.mxu0 0.0
        %1377 = vmatpush1.msra.mxu0 0.0
        %1378 = vmatprep.subr.mxu0 0.0
        %1379 = vmatpush1.msra.mxu0 0.0
        %1380 = vmatprep.subr.mxu0 0.0
        %1381 = vmatpush1.msra.mxu0 0.0
        %1382 = vmatprep.subr.mxu0 0.0
        %1383 = vmatpush1.msra.mxu0 0.0
        %1384 = vmatprep.subr.mxu0 0.0
        %1385 = vmatpush1.msra.mxu0 0.0
        %1386 = vmatprep.subr.mxu0 0.0
        %1387 = vmatpush1.msra.mxu0 0.0
        %1388 = vmatprep.subr.mxu0 0.0
        %1389 = vmatpush1.msra.mxu0 0.0
        %1390 = vmatprep.subr.mxu0 0.0
        %1391 = vmatpush1.msra.mxu0 0.0
        %1392 = vmatprep.subr.mxu0 0.0
        %1393 = vmatpush1.msra.mxu0 0.0
        %1394 = vmatprep.subr.mxu0 0.0
        %1395 = vmatpush1.msra.mxu0 %v1242
        %1396 = vmatprep.subr.mxu0 0.0
        %1397 = vmatpush1.msra.mxu0 %v1241
        %1398 = vmatprep.subr.mxu0 0.0
        %1399 = vmatpush1.msra.mxu0 %v1240
        %1400 = vmatprep.subr.mxu0 0.0
        %1401 = vmatpush1.msra.mxu0 %v1239
        %1402 = vmatprep.subr.mxu0 0.0
        %1403 = vmatpush1.msra.mxu0 %v1238
        %1404 = vmatprep.subr.mxu0 0.0
        %1405 = vmatpush1.msra.mxu0 %v1237
        %1406 = vmatprep.subr.mxu0 0.0
        %1407 = vmatpush1.msra.mxu0 %v1236
        %1408 = vmatprep.subr.mxu0 0.0
        %1409 = vmatpush2.msra.mxu0 0.0
        %1410 = vmatprep.subr.mxu0 0.0
        %1411 = vmatpush2.msra.mxu0 0.0
        %1412 = vmatprep.subr.mxu0 0.0
        %1413 = vmatpush2.msra.mxu0 0.0
        %1414 = vmatprep.subr.mxu0 0.0
        %1415 = vmatpush2.msra.mxu0 0.0
        %1416 = vmatprep.subr.mxu0 0.0
        %1417 = vmatpush2.msra.mxu0 0.0
        %1418 = vmatprep.subr.mxu0 0.0
        %1419 = vmatpush2.msra.mxu0 0.0
        %1420 = vmatprep.subr.mxu0 0.0
        %1421 = vmatpush2.msra.mxu0 0.0
        %1422 = vmatprep.subr.mxu0 0.0
        %1423 = vmatpush2.msra.mxu0 0.0
        %1424 = vmatprep.subr.mxu0 0.0
        %1425 = vmatpush2.msra.mxu0 0.0
        %1426 = vmatprep.subr.mxu0 0.0
        %1427 = vmatpush2.msra.mxu0 0.0
        %1428 = vmatprep.subr.mxu0 0.0
        %1429 = vmatpush2.msra.mxu0 0.0
        %1430 = vmatprep.subr.mxu0 0.0
        %1431 = vmatpush2.msra.mxu0 0.0
        %1432 = vmatprep.subr.mxu0 0.0
        %1433 = vmatpush2.msra.mxu0 0.0
        %1434 = vmatprep.subr.mxu0 0.0
        %1435 = vmatpush2.msra.mxu0 0.0
        %1436 = vmatprep.subr.mxu0 0.0
        %1437 = vmatpush2.msra.mxu0 0.0
        %1438 = vmatprep.subr.mxu0 0.0
        %1439 = vmatpush2.msra.mxu0 0.0
        %1440 = vmatprep.mubr.f32.mxu0 0.0
        %1441 = vmatmul.mubr.f32.gmra.mxu0 %v1338
        %v1442 = vpop.f32.mrf.mxu0
        %v1443 = vadd.f32 0.0, %v1442
        %v1444 = vpop.f32.mrf.mxu0
        %1445 = vmatprep.mubr.f32.mxu0 0.0
        %1446 = vmatmul.mubr.f32.gmra.mxu0 %v1341
        %v1447 = vpop.f32.mrf.mxu0
        %v1448 = vadd.f32 0.0, %v1447
        %v1449 = vpop.f32.mrf.mxu0
        %1450 = vmatprep.mubr.f32.mxu0 0.0
        %1451 = vmatmul.mubr.f32.gmra.mxu0 %v1344
        %v1452 = vpop.f32.mrf.mxu0
        %v1453 = vadd.f32 0.0, %v1452
        %v1454 = vpop.f32.mrf.mxu0
        %1455 = vmatprep.mubr.f32.mxu0 0.0
        %1456 = vmatmul.mubr.f32.gmra.mxu0 %v1347
        %v1457 = vpop.f32.mrf.mxu0
        %v1458 = vadd.f32 0.0, %v1457
        %v1459 = vpop.f32.mrf.mxu0
        %1460 = vmatprep.mubr.f32.mxu0 0.0
        %1461 = vmatmul.mubr.f32.gmra.mxu0 %v1350
        %v1462 = vpop.f32.mrf.mxu0
        %v1463 = vadd.f32 0.0, %v1462
        %v1464 = vpop.f32.mrf.mxu0
        %1465 = vmatprep.mubr.f32.mxu0 0.0
        %1466 = vmatmul.mubr.f32.gmra.mxu0 %v1353
        %v1467 = vpop.f32.mrf.mxu0
        %v1468 = vadd.f32 0.0, %v1467
        %v1469 = vpop.f32.mrf.mxu0
        %1470 = vmatprep.mubr.f32.mxu0 0.0
        %1471 = vmatmul.mubr.f32.gmra.mxu0 %v1356
        %v1472 = vpop.f32.mrf.mxu0
        %v1473 = vadd.f32 0.0, %v1472
        %v1474 = vpop.f32.mrf.mxu0
        %1475 = vmatprep.mubr.f32.mxu0 0.0
        %1476 = vmatmul.mubr.f32.gmra.mxu0 %v1359
        %v1477 = vpop.f32.mrf.mxu0
        %v1478 = vadd.f32 0.0, %v1477
        %v1479 = vpop.f32.mrf.mxu0
        %1480 = vmatprep.mubr.f32.mxu0 0.0
        %1481 = vmatmul.mubr.f32.gmra.mxu0 %v1362
        %v1482 = vpop.f32.mrf.mxu0
        %v1483 = vadd.f32 0.0, %v1482
        %v1484 = vpop.f32.mrf.mxu0
        %1485 = vmatprep.mubr.f32.mxu0 0.0
        %1486 = vmatmul.mubr.f32.gmra.mxu0 %v1365
        %v1487 = vpop.f32.mrf.mxu0
        %v1488 = vadd.f32 0.0, %v1487
        %v1489 = vpop.f32.mrf.mxu0
        %1490 = vmatprep.mubr.f32.mxu0 0.0
        %1491 = vmatmul.mubr.f32.gmra.mxu0 %v1368
        %v1492 = vpop.f32.mrf.mxu0
        %v1493 = vadd.f32 0.0, %v1492
        %v1494 = vpop.f32.mrf.mxu0
        %1495 = vmatprep.mubr.f32.mxu0 0.0
        %1496 = vmatmul.mubr.f32.gmra.mxu0 %v1371
        %v1497 = vpop.f32.mrf.mxu0
        %v1498 = vadd.f32 0.0, %v1497
        %v1499 = vpop.f32.mrf.mxu0
        %1500 = vmatprep.mubr.f32.mxu0 0.0
        %1501 = vmatmul.mubr.f32.gmra.mxu0 %v1374
        %v1502 = vpop.f32.mrf.mxu0
        %v1503 = vadd.f32 0.0, %v1502
        %v1504 = vpop.f32.mrf.mxu0
        %1505 = vdwg.mxu0
        %v1506 = vld [vmem:[%s640] sm:$0x1]
        %v1507 = vld [vmem:[%s640 + $0x8] sm:$0x1]
        %v1508 = vld [vmem:[%s640 + $0x10] sm:$0x1]
        %v1509 = vld [vmem:[%s640 + $0x18] sm:$0x1]
        %v1510 = vld [vmem:[%s640 + $0x20] sm:$0x1]
        %v1511 = vld [vmem:[%s640 + $0x28] sm:$0x1]
        %v1512 = vld [vmem:[%s640 + $0x30] sm:$0x1]
        %v1513 = vld [vmem:[%s640 + $0x38] sm:$0x1]
        %v1514 = vld [vmem:[%s640 + $0x40] sm:$0x1]
        %v1515 = vld [vmem:[%s640 + $0x48] sm:$0x1]
        %v1516 = vld [vmem:[%s640 + $0x50] sm:$0x1]
        %v1517 = vld [vmem:[%s640 + $0x58] sm:$0x1]
        %v1518 = vld [vmem:[%s640 + $0x60] sm:$0x1]
        %v1519 = vld [vmem:[%s640 + $0x68] sm:$0x1]
        %v1520 = vld [vmem:[%s640 + $0x70] sm:$0x1]
        %v1521 = vld [vmem:[%s640 + $0x78] sm:$0x1]
        %v1522 = vld [vmem:[%s640 + $0x80] sm:$0x1]
        %v1523 = vld [vmem:[%s640 + $0x88] sm:$0x1]
        %v1524 = vld [vmem:[%s640 + $0x90] sm:$0x1]
        %v1525 = vld [vmem:[%s640 + $0x98] sm:$0x1]
        %v1526 = vld [vmem:[%s640 + $0xa0] sm:$0x1]
        %v1527 = vld [vmem:[%s640 + $0xa8] sm:$0x1]
        %v1528 = vld [vmem:[%s640 + $0xb0] sm:$0x1]
        %v1529 = vld [vmem:[%s640 + $0xb8] sm:$0x1]
        %v1530 = vld [vmem:[%s640 + $0xc0] sm:$0x1]
        %v1531 = vld [vmem:[%s640 + $0xc8] sm:$0x1]
        %v1532 = vld [vmem:[%s640 + $0xd0] sm:$0x1]
        %v1533 = vld [vmem:[%s640 + $0xd8] sm:$0x1]
        %v1534 = vld [vmem:[%s640 + $0xe0] sm:$0x1]
        %v1535 = vld [vmem:[%s640 + $0xe8] sm:$0x1]
        %v1536 = vld [vmem:[%s640 + $0xf0] sm:$0x1]
        %v1537 = vld [vmem:[%s640 + $0xf8] sm:$0x1]
        %v1538 = vld [vmem:[%s640 + $0x100] sm:$0x1]
        %v1539 = vld [vmem:[%s640 + $0x108] sm:$0x1]
        %v1540 = vld [vmem:[%s640 + $0x110] sm:$0x1]
        %v1541 = vld [vmem:[%s640 + $0x118] sm:$0x1]
        %v1542 = vld [vmem:[%s640 + $0x120] sm:$0x1]
        %v1543 = vld [vmem:[%s640 + $0x128] sm:$0x1]
        %v1544 = vld [vmem:[%s640 + $0x130] sm:$0x1]
        %v1545 = vld [vmem:[%s640 + $0x138] sm:$0x1]
        %v1546 = vld [vmem:[%s640 + $0x140] sm:$0x1]
        %v1547 = vld [vmem:[%s640 + $0x148] sm:$0x1]
        %v1548 = vld [vmem:[%s640 + $0x150] sm:$0x1]
        %v1549 = vld [vmem:[%s640 + $0x158] sm:$0x1]
        %v1550 = vld [vmem:[%s640 + $0x160] sm:$0x1]
        %v1551 = vld [vmem:[%s640 + $0x168] sm:$0x1]
        %v1552 = vld [vmem:[%s640 + $0x170] sm:$0x1]
        %v1553 = vld [vmem:[%s640 + $0x178] sm:$0x1]
        %v1554 = vld [vmem:[%s640 + $0x180] sm:$0x1]
        %v1555 = vld [vmem:[%s640 + $0x188] sm:$0x1]
        %v1556 = vld [vmem:[%s640 + $0x190] sm:$0x1]
        %v1557 = vld [vmem:[%s640 + $0x198] sm:$0x1]
        %v1558 = vld [vmem:[%s640 + $0x1a0] sm:$0x1]
        %v1559 = vld [vmem:[%s640 + $0x1a8] sm:$0x1]
        %v1560 = vld [vmem:[%s640 + $0x1b0] sm:$0x1]
        %v1561 = vld [vmem:[%s640 + $0x1b8] sm:$0x1]
        %v1562 = vld [vmem:[%s640 + $0x1c0] sm:$0x1]
        %v1563 = vld [vmem:[%s640 + $0x1c8] sm:$0x1]
        %v1564 = vld [vmem:[%s640 + $0x1d0] sm:$0x1]
        %v1565 = vld [vmem:[%s640 + $0x1d8] sm:$0x1]
        %v1566 = vld [vmem:[%s640 + $0x1e0] sm:$0x1]
        %v1567 = vld [vmem:[%s640 + $0x1e8] sm:$0x1]
        %v1568 = vld [vmem:[%s640 + $0x1f0] sm:$0x1]
        %v1569 = vld [vmem:[%s640 + $0x1f8] sm:$0x1]
        %v1570 = vld [vmem:[%s640 + $0x200] sm:$0x1]
        %v1571 = vld [vmem:[%s640 + $0x208] sm:$0x1]
        %v1572 = vld [vmem:[%s640 + $0x210] sm:$0x1]
        %v1573 = vld [vmem:[%s640 + $0x218] sm:$0x1]
        %v1574 = vld [vmem:[%s640 + $0x220] sm:$0x1]
        %v1575 = vld [vmem:[%s640 + $0x228] sm:$0x1]
        %v1576 = vld [vmem:[%s640 + $0x230] sm:$0x1]
        %v1577 = vld [vmem:[%s640 + $0x238] sm:$0x1]
        %v1578 = vld [vmem:[%s640 + $0x240] sm:$0x1]
        %v1579 = vld [vmem:[%s640 + $0x248] sm:$0x1]
        %v1580 = vld [vmem:[%s640 + $0x250] sm:$0x1]
        %v1581 = vld [vmem:[%s640 + $0x258] sm:$0x1]
        %v1582 = vld [vmem:[%s640 + $0x260] sm:$0x1]
        %v1583 = vld [vmem:[%s640 + $0x268] sm:$0x1]
        %v1584 = vld [vmem:[%s640 + $0x270] sm:$0x1]
        %v1585 = vld [vmem:[%s640 + $0x278] sm:$0x1]
        %v1586 = vld [vmem:[%s640 + $0x280] sm:$0x1]
        %v1587 = vld [vmem:[%s640 + $0x288] sm:$0x1]
        %v1588 = vld [vmem:[%s640 + $0x290] sm:$0x1]
        %v1589 = vld [vmem:[%s640 + $0x298] sm:$0x1]
        %v1590 = vld [vmem:[%s640 + $0x2a0] sm:$0x1]
        %v1591 = vld [vmem:[%s640 + $0x2a8] sm:$0x1]
        %v1592 = vld [vmem:[%s640 + $0x2b0] sm:$0x1]
        %v1593 = vld [vmem:[%s640 + $0x2b8] sm:$0x1]
        %v1594 = vld [vmem:[%s640 + $0x2c0] sm:$0x1]
        %v1595 = vld [vmem:[%s640 + $0x2c8] sm:$0x1]
        %v1596 = vld [vmem:[%s640 + $0x2d0] sm:$0x1]
        %v1597 = vld [vmem:[%s640 + $0x2d8] sm:$0x1]
        %v1598 = vld [vmem:[%s640 + $0x2e0] sm:$0x1]
        %v1599 = vld [vmem:[%s640 + $0x2e8] sm:$0x1]
        %v1600 = vld [vmem:[%s640 + $0x2f0] sm:$0x1]
        %v1601 = vld [vmem:[%s640 + $0x2f8] sm:$0x1]
        %v1602 = vld [vmem:[%s640 + $0x300] sm:$0x1]
        %v1603 = vld [vmem:[%s640 + $0x308] sm:$0x1]
        %v1604 = vld [vmem:[%s640 + $0x310] sm:$0x1]
        %v1605 = vld [vmem:[%s640 + $0x318] sm:$0x1]
        %v1606 = vld [vmem:[%s640 + $0x320] sm:$0x1]
        %v1607 = vld [vmem:[%s640 + $0x328] sm:$0x1]
        %v1608 = vld [vmem:[%s640 + $0x330] sm:$0x1]
        %v1609 = vld [vmem:[%s640 + $0x338] sm:$0x1]
        %v1714 = vrot.slane %v1507, 7
        %vm1715 = vcmask 1041409
        %v1716 = vsel %vm1715, %v1714, %v1506
        %v1717 = vrot.slane %v1508, 6
        %vm1718 = vcmask 1042434
        %v1719 = vsel %vm1718, %v1717, %v1716
        %v1720 = vrot.slane %v1509, 5
        %vm1721 = vcmask 1043459
        %v1722 = vsel %vm1721, %v1720, %v1719
        %v1723 = vrot.slane %v1510, 4
        %vm1724 = vcmask 1044484
        %v1725 = vsel %vm1724, %v1723, %v1722
        %v1726 = vrot.slane %v1511, 3
        %vm1727 = vcmask 1045509
        %v1728 = vsel %vm1727, %v1726, %v1725
        %v1729 = vrot.slane %v1512, 2
        %vm1730 = vcmask 1046534
        %v1731 = vsel %vm1730, %v1729, %v1728
        %v1732 = vrot.slane %v1513, 1
        %vm1733 = vcmask 1047559
        %v1734 = vsel %vm1733, %v1732, %v1731
        %v1735 = vrot.slane %v1515, 7
        %v1736 = vsel %vm1715, %v1735, %v1514
        %v1737 = vrot.slane %v1516, 6
        %v1738 = vsel %vm1718, %v1737, %v1736
        %v1739 = vrot.slane %v1517, 5
        %v1740 = vsel %vm1721, %v1739, %v1738
        %v1741 = vrot.slane %v1518, 4
        %v1742 = vsel %vm1724, %v1741, %v1740
        %v1743 = vrot.slane %v1519, 3
        %v1744 = vsel %vm1727, %v1743, %v1742
        %v1745 = vrot.slane %v1520, 2
        %v1746 = vsel %vm1730, %v1745, %v1744
        %v1747 = vrot.slane %v1521, 1
        %v1748 = vsel %vm1733, %v1747, %v1746
        %v1749 = vrot.slane %v1523, 7
        %v1750 = vsel %vm1715, %v1749, %v1522
        %v1751 = vrot.slane %v1524, 6
        %v1752 = vsel %vm1718, %v1751, %v1750
        %v1753 = vrot.slane %v1525, 5
        %v1754 = vsel %vm1721, %v1753, %v1752
        %v1755 = vrot.slane %v1526, 4
        %v1756 = vsel %vm1724, %v1755, %v1754
        %v1757 = vrot.slane %v1527, 3
        %v1758 = vsel %vm1727, %v1757, %v1756
        %v1759 = vrot.slane %v1528, 2
        %v1760 = vsel %vm1730, %v1759, %v1758
        %v1761 = vrot.slane %v1529, 1
        %v1762 = vsel %vm1733, %v1761, %v1760
        %v1763 = vrot.slane %v1531, 7
        %v1764 = vsel %vm1715, %v1763, %v1530
        %v1765 = vrot.slane %v1532, 6
        %v1766 = vsel %vm1718, %v1765, %v1764
        %v1767 = vrot.slane %v1533, 5
        %v1768 = vsel %vm1721, %v1767, %v1766
        %v1769 = vrot.slane %v1534, 4
        %v1770 = vsel %vm1724, %v1769, %v1768
        %v1771 = vrot.slane %v1535, 3
        %v1772 = vsel %vm1727, %v1771, %v1770
        %v1773 = vrot.slane %v1536, 2
        %v1774 = vsel %vm1730, %v1773, %v1772
        %v1775 = vrot.slane %v1537, 1
        %v1776 = vsel %vm1733, %v1775, %v1774
        %v1777 = vrot.slane %v1539, 7
        %v1778 = vsel %vm1715, %v1777, %v1538
        %v1779 = vrot.slane %v1540, 6
        %v1780 = vsel %vm1718, %v1779, %v1778
        %v1781 = vrot.slane %v1541, 5
        %v1782 = vsel %vm1721, %v1781, %v1780
        %v1783 = vrot.slane %v1542, 4
        %v1784 = vsel %vm1724, %v1783, %v1782
        %v1785 = vrot.slane %v1543, 3
        %v1786 = vsel %vm1727, %v1785, %v1784
        %v1787 = vrot.slane %v1544, 2
        %v1788 = vsel %vm1730, %v1787, %v1786
        %v1789 = vrot.slane %v1545, 1
        %v1790 = vsel %vm1733, %v1789, %v1788
        %v1791 = vrot.slane %v1547, 7
        %v1792 = vsel %vm1715, %v1791, %v1546
        %v1793 = vrot.slane %v1548, 6
        %v1794 = vsel %vm1718, %v1793, %v1792
        %v1795 = vrot.slane %v1549, 5
        %v1796 = vsel %vm1721, %v1795, %v1794
        %v1797 = vrot.slane %v1550, 4
        %v1798 = vsel %vm1724, %v1797, %v1796
        %v1799 = vrot.slane %v1551, 3
        %v1800 = vsel %vm1727, %v1799, %v1798
        %v1801 = vrot.slane %v1552, 2
        %v1802 = vsel %vm1730, %v1801, %v1800
        %v1803 = vrot.slane %v1553, 1
        %v1804 = vsel %vm1733, %v1803, %v1802
        %v1805 = vrot.slane %v1555, 7
        %v1806 = vsel %vm1715, %v1805, %v1554
        %v1807 = vrot.slane %v1556, 6
        %v1808 = vsel %vm1718, %v1807, %v1806
        %v1809 = vrot.slane %v1557, 5
        %v1810 = vsel %vm1721, %v1809, %v1808
        %v1811 = vrot.slane %v1558, 4
        %v1812 = vsel %vm1724, %v1811, %v1810
        %v1813 = vrot.slane %v1559, 3
        %v1814 = vsel %vm1727, %v1813, %v1812
        %v1815 = vrot.slane %v1560, 2
        %v1816 = vsel %vm1730, %v1815, %v1814
        %v1817 = vrot.slane %v1561, 1
        %v1818 = vsel %vm1733, %v1817, %v1816
        %v1819 = vrot.slane %v1563, 7
        %v1820 = vsel %vm1715, %v1819, %v1562
        %v1821 = vrot.slane %v1564, 6
        %v1822 = vsel %vm1718, %v1821, %v1820
        %v1823 = vrot.slane %v1565, 5
        %v1824 = vsel %vm1721, %v1823, %v1822
        %v1825 = vrot.slane %v1566, 4
        %v1826 = vsel %vm1724, %v1825, %v1824
        %v1827 = vrot.slane %v1567, 3
        %v1828 = vsel %vm1727, %v1827, %v1826
        %v1829 = vrot.slane %v1568, 2
        %v1830 = vsel %vm1730, %v1829, %v1828
        %v1831 = vrot.slane %v1569, 1
        %v1832 = vsel %vm1733, %v1831, %v1830
        %v1833 = vrot.slane %v1571, 7
        %v1834 = vsel %vm1715, %v1833, %v1570
        %v1835 = vrot.slane %v1572, 6
        %v1836 = vsel %vm1718, %v1835, %v1834
        %v1837 = vrot.slane %v1573, 5
        %v1838 = vsel %vm1721, %v1837, %v1836
        %v1839 = vrot.slane %v1574, 4
        %v1840 = vsel %vm1724, %v1839, %v1838
        %v1841 = vrot.slane %v1575, 3
        %v1842 = vsel %vm1727, %v1841, %v1840
        %v1843 = vrot.slane %v1576, 2
        %v1844 = vsel %vm1730, %v1843, %v1842
        %v1845 = vrot.slane %v1577, 1
        %v1846 = vsel %vm1733, %v1845, %v1844
        %v1847 = vrot.slane %v1579, 7
        %v1848 = vsel %vm1715, %v1847, %v1578
        %v1849 = vrot.slane %v1580, 6
        %v1850 = vsel %vm1718, %v1849, %v1848
        %v1851 = vrot.slane %v1581, 5
        %v1852 = vsel %vm1721, %v1851, %v1850
        %v1853 = vrot.slane %v1582, 4
        %v1854 = vsel %vm1724, %v1853, %v1852
        %v1855 = vrot.slane %v1583, 3
        %v1856 = vsel %vm1727, %v1855, %v1854
        %v1857 = vrot.slane %v1584, 2
        %v1858 = vsel %vm1730, %v1857, %v1856
        %v1859 = vrot.slane %v1585, 1
        %v1860 = vsel %vm1733, %v1859, %v1858
        %v1861 = vrot.slane %v1587, 7
        %v1862 = vsel %vm1715, %v1861, %v1586
        %v1863 = vrot.slane %v1588, 6
        %v1864 = vsel %vm1718, %v1863, %v1862
        %v1865 = vrot.slane %v1589, 5
        %v1866 = vsel %vm1721, %v1865, %v1864
        %v1867 = vrot.slane %v1590, 4
        %v1868 = vsel %vm1724, %v1867, %v1866
        %v1869 = vrot.slane %v1591, 3
        %v1870 = vsel %vm1727, %v1869, %v1868
        %v1871 = vrot.slane %v1592, 2
        %v1872 = vsel %vm1730, %v1871, %v1870
        %v1873 = vrot.slane %v1593, 1
        %v1874 = vsel %vm1733, %v1873, %v1872
        %v1875 = vrot.slane %v1595, 7
        %v1876 = vsel %vm1715, %v1875, %v1594
        %v1877 = vrot.slane %v1596, 6
        %v1878 = vsel %vm1718, %v1877, %v1876
        %v1879 = vrot.slane %v1597, 5
        %v1880 = vsel %vm1721, %v1879, %v1878
        %v1881 = vrot.slane %v1598, 4
        %v1882 = vsel %vm1724, %v1881, %v1880
        %v1883 = vrot.slane %v1599, 3
        %v1884 = vsel %vm1727, %v1883, %v1882
        %v1885 = vrot.slane %v1600, 2
        %v1886 = vsel %vm1730, %v1885, %v1884
        %v1887 = vrot.slane %v1601, 1
        %v1888 = vsel %vm1733, %v1887, %v1886
        %v1889 = vrot.slane %v1603, 7
        %v1890 = vsel %vm1715, %v1889, %v1602
        %v1891 = vrot.slane %v1604, 6
        %v1892 = vsel %vm1718, %v1891, %v1890
        %v1893 = vrot.slane %v1605, 5
        %v1894 = vsel %vm1721, %v1893, %v1892
        %v1895 = vrot.slane %v1606, 4
        %v1896 = vsel %vm1724, %v1895, %v1894
        %v1897 = vrot.slane %v1607, 3
        %v1898 = vsel %vm1727, %v1897, %v1896
        %v1899 = vrot.slane %v1608, 2
        %v1900 = vsel %vm1730, %v1899, %v1898
        %v1901 = vrot.slane %v1609, 1
        %v1902 = vsel %vm1733, %v1901, %v1900
        %v1916 = vmul.f32 %v1443, %v1734
        %v1917 = vmul.f32 %v1448, %v1748
        %v1918 = vmul.f32 %v1453, %v1762
        %v1919 = vmul.f32 %v1458, %v1776
        %v1920 = vmul.f32 %v1463, %v1790
        %v1921 = vmul.f32 %v1468, %v1804
        %v1922 = vmul.f32 %v1473, %v1818
        %v1923 = vmul.f32 %v1478, %v1832
        %v1924 = vmul.f32 %v1483, %v1846
        %v1925 = vmul.f32 %v1488, %v1860
        %v1926 = vmul.f32 %v1493, %v1874
        %v1927 = vmul.f32 %v1498, %v1888
        %v1928 = vmul.f32 %v1503, %v1902
        %v1929 = vadd.f32 %v1916, 0.0
        %v1930 = vadd.f32 %v1917, 0.0
        %v1931 = vadd.f32 %v1918, 0.0
        %v1932 = vadd.f32 %v1919, 0.0
        %v1933 = vadd.f32 %v1920, 0.0
        %v1934 = vadd.f32 %v1921, 0.0
        %v1935 = vadd.f32 %v1922, 0.0
        %v1936 = vadd.f32 %v1923, 0.0
        %v1937 = vadd.f32 %v1924, 0.0
        %v1938 = vadd.f32 %v1925, 0.0
        %v1939 = vadd.f32 %v1926, 0.0
        %v1940 = vadd.f32 %v1927, 0.0
        %v1941 = vadd.f32 %v1928, 0.0
        %1942 = vset.pattern.permute.xlu0 1
        %1943 = vperm.xlu0 %1942, %v1216
        %v1944 = vpop.permute.xlu0 %1943
        %1945 = vset.pattern.permute.xlu0 1
        %1946 = vperm.xlu0 %1945, %v1217
        %v1947 = vpop.permute.xlu0 %1946
        %1948 = vset.pattern.permute.xlu0 1
        %1949 = vperm.xlu0 %1948, %v1218
        %v1950 = vpop.permute.xlu0 %1949
        %1951 = vset.pattern.permute.xlu0 1
        %1952 = vperm.xlu0 %1951, %v1219
        %v1953 = vpop.permute.xlu0 %1952
        %1954 = vset.pattern.permute.xlu0 1
        %1955 = vperm.xlu0 %1954, %v1220
        %v1956 = vpop.permute.xlu0 %1955
        %1957 = vset.pattern.permute.xlu0 1
        %1958 = vperm.xlu0 %1957, %v1221
        %v1959 = vpop.permute.xlu0 %1958
        %1960 = vset.pattern.permute.xlu0 1
        %1961 = vperm.xlu0 %1960, %v1222
        %v1962 = vpop.permute.xlu0 %1961
        %1963 = vset.pattern.permute.xlu0 1
        %1964 = vperm.xlu0 %1963, %v1223
        %v1965 = vpop.permute.xlu0 %1964
        %1966 = vset.pattern.permute.xlu0 1
        %1967 = vperm.xlu0 %1966, %v1224
        %v1968 = vpop.permute.xlu0 %1967
        %1969 = vset.pattern.permute.xlu0 1
        %1970 = vperm.xlu0 %1969, %v1225
        %v1971 = vpop.permute.xlu0 %1970
        %1972 = vset.pattern.permute.xlu0 1
        %1973 = vperm.xlu0 %1972, %v1226
        %v1974 = vpop.permute.xlu0 %1973
        %1975 = vset.pattern.permute.xlu0 1
        %1976 = vperm.xlu0 %1975, %v1227
        %v1977 = vpop.permute.xlu0 %1976
        %1978 = vset.pattern.permute.xlu0 1
        %1979 = vperm.xlu0 %1978, %v1228
        %v1980 = vpop.permute.xlu0 %1979
        %vm1981 = vcmp.eq.s32.totalorder %v1944, %v1244
        %vm1982 = vcmp.eq.s32.totalorder %v1947, %v1244
        %vm1983 = vcmp.eq.s32.totalorder %v1950, %v1244
        %vm1984 = vcmp.eq.s32.totalorder %v1953, %v1244
        %vm1985 = vcmp.eq.s32.totalorder %v1956, %v1244
        %vm1986 = vcmp.eq.s32.totalorder %v1959, %v1244
        %vm1987 = vcmp.eq.s32.totalorder %v1962, %v1244
        %vm1988 = vcmp.eq.s32.totalorder %v1965, %v1244
        %vm1989 = vcmp.eq.s32.totalorder %v1968, %v1244
        %vm1990 = vcmp.eq.s32.totalorder %v1971, %v1244
        %vm1991 = vcmp.eq.s32.totalorder %v1974, %v1244
        %vm1992 = vcmp.eq.s32.totalorder %v1977, %v1244
        %vm1993 = vcmp.eq.s32.totalorder %v1980, %v1244
        %v1994 = vsel %vm1981, 1, 0
        %v1995 = vsel %vm1982, 1, 0
        %v1996 = vsel %vm1983, 1, 0
        %v1997 = vsel %vm1984, 1, 0
        %v1998 = vsel %vm1985, 1, 0
        %v1999 = vsel %vm1986, 1, 0
        %v2000 = vsel %vm1987, 1, 0
        %v2001 = vsel %vm1988, 1, 0
        %v2002 = vsel %vm1989, 1, 0
        %v2003 = vsel %vm1990, 1, 0
        %v2004 = vsel %vm1991, 1, 0
        %v2005 = vsel %vm1992, 1, 0
        %v2006 = vsel %vm1993, 1, 0
        %v2007 = vcvt.s32.f32 %v1994
        %v2008 = vcvt.s32.f32 %v1995
        %v2009 = vcvt.s32.f32 %v1996
        %v2010 = vcvt.s32.f32 %v1997
        %v2011 = vcvt.s32.f32 %v1998
        %v2012 = vcvt.s32.f32 %v1999
        %v2013 = vcvt.s32.f32 %v2000
        %v2014 = vcvt.s32.f32 %v2001
        %v2015 = vcvt.s32.f32 %v2002
        %v2016 = vcvt.s32.f32 %v2003
        %v2017 = vcvt.s32.f32 %v2004
        %v2018 = vcvt.s32.f32 %v2005
        %v2019 = vcvt.s32.f32 %v2006
        %v2020 = vadd.f32 %v1323, %v2007
        %v2021 = vadd.f32 %v1324, %v2008
        %v2022 = vadd.f32 %v1325, %v2009
        %v2023 = vadd.f32 %v1326, %v2010
        %v2024 = vadd.f32 %v1327, %v2011
        %v2025 = vadd.f32 %v1328, %v2012
        %v2026 = vadd.f32 %v1329, %v2013
        %v2027 = vadd.f32 %v1330, %v2014
        %v2028 = vadd.f32 %v1331, %v2015
        %v2029 = vadd.f32 %v1332, %v2016
        %v2030 = vadd.f32 %v1333, %v2017
        %v2031 = vadd.f32 %v1334, %v2018
        %v2032 = vadd.f32 %v1335, %v2019
        %v2034 = vsel %vm1336, %v2007, 0
        %v2037 = vsel %vm1336, %v2008, 0
        %v2040 = vsel %vm1336, %v2009, 0
        %v2043 = vsel %vm1336, %v2010, 0
        %v2046 = vsel %vm1336, %v2011, 0
        %v2049 = vsel %vm1336, %v2012, 0
        %v2052 = vsel %vm1336, %v2013, 0
        %v2055 = vsel %vm1336, %v2014, 0
        %v2058 = vsel %vm1336, %v2015, 0
        %v2061 = vsel %vm1336, %v2016, 0
        %v2064 = vsel %vm1336, %v2017, 0
        %v2067 = vsel %vm1336, %v2018, 0
        %v2070 = vsel %vm1336, %v2019, 0
        %2072 = vmatprep.subr.mxu0 0.0
        %2073 = vmatpush1.msra.mxu0 0.0
        %2074 = vmatprep.subr.mxu0 0.0
        %2075 = vmatpush1.msra.mxu0 0.0
        %2076 = vmatprep.subr.mxu0 0.0
        %2077 = vmatpush1.msra.mxu0 0.0
        %2078 = vmatprep.subr.mxu0 0.0
        %2079 = vmatpush1.msra.mxu0 0.0
        %2080 = vmatprep.subr.mxu0 0.0
        %2081 = vmatpush1.msra.mxu0 0.0
        %2082 = vmatprep.subr.mxu0 0.0
        %2083 = vmatpush1.msra.mxu0 0.0
        %2084 = vmatprep.subr.mxu0 0.0
        %2085 = vmatpush1.msra.mxu0 0.0
        %2086 = vmatprep.subr.mxu0 0.0
        %2087 = vmatpush1.msra.mxu0 0.0
        %2088 = vmatprep.subr.mxu0 0.0
        %2089 = vmatpush1.msra.mxu0 0.0
        %2090 = vmatprep.subr.mxu0 0.0
        %2091 = vmatpush1.msra.mxu0 %v1242
        %2092 = vmatprep.subr.mxu0 0.0
        %2093 = vmatpush1.msra.mxu0 %v1241
        %2094 = vmatprep.subr.mxu0 0.0
        %2095 = vmatpush1.msra.mxu0 %v1240
        %2096 = vmatprep.subr.mxu0 0.0
        %2097 = vmatpush1.msra.mxu0 %v1239
        %2098 = vmatprep.subr.mxu0 0.0
        %2099 = vmatpush1.msra.mxu0 %v1238
        %2100 = vmatprep.subr.mxu0 0.0
        %2101 = vmatpush1.msra.mxu0 %v1237
        %2102 = vmatprep.subr.mxu0 0.0
        %2103 = vmatpush1.msra.mxu0 %v1236
        %2104 = vmatprep.subr.mxu0 0.0
        %2105 = vmatpush2.msra.mxu0 0.0
        %2106 = vmatprep.subr.mxu0 0.0
        %2107 = vmatpush2.msra.mxu0 0.0
        %2108 = vmatprep.subr.mxu0 0.0
        %2109 = vmatpush2.msra.mxu0 0.0
        %2110 = vmatprep.subr.mxu0 0.0
        %2111 = vmatpush2.msra.mxu0 0.0
        %2112 = vmatprep.subr.mxu0 0.0
        %2113 = vmatpush2.msra.mxu0 0.0
        %2114 = vmatprep.subr.mxu0 0.0
        %2115 = vmatpush2.msra.mxu0 0.0
        %2116 = vmatprep.subr.mxu0 0.0
        %2117 = vmatpush2.msra.mxu0 0.0
        %2118 = vmatprep.subr.mxu0 0.0
        %2119 = vmatpush2.msra.mxu0 0.0
        %2120 = vmatprep.subr.mxu0 0.0
        %2121 = vmatpush2.msra.mxu0 0.0
        %2122 = vmatprep.subr.mxu0 0.0
        %2123 = vmatpush2.msra.mxu0 0.0
        %2124 = vmatprep.subr.mxu0 0.0
        %2125 = vmatpush2.msra.mxu0 0.0
        %2126 = vmatprep.subr.mxu0 0.0
        %2127 = vmatpush2.msra.mxu0 0.0
        %2128 = vmatprep.subr.mxu0 0.0
        %2129 = vmatpush2.msra.mxu0 0.0
        %2130 = vmatprep.subr.mxu0 0.0
        %2131 = vmatpush2.msra.mxu0 0.0
        %2132 = vmatprep.subr.mxu0 0.0
        %2133 = vmatpush2.msra.mxu0 0.0
        %2134 = vmatprep.subr.mxu0 0.0
        %2135 = vmatpush2.msra.mxu0 0.0
        %2136 = vmatprep.mubr.f32.mxu0 0.0
        %2137 = vmatmul.mubr.f32.gmra.mxu0 %v2034
        %v2138 = vpop.f32.mrf.mxu0
        %v2139 = vadd.f32 0.0, %v2138
        %v2140 = vpop.f32.mrf.mxu0
        %2141 = vmatprep.mubr.f32.mxu0 0.0
        %2142 = vmatmul.mubr.f32.gmra.mxu0 %v2037
        %v2143 = vpop.f32.mrf.mxu0
        %v2144 = vadd.f32 0.0, %v2143
        %v2145 = vpop.f32.mrf.mxu0
        %2146 = vmatprep.mubr.f32.mxu0 0.0
        %2147 = vmatmul.mubr.f32.gmra.mxu0 %v2040
        %v2148 = vpop.f32.mrf.mxu0
        %v2149 = vadd.f32 0.0, %v2148
        %v2150 = vpop.f32.mrf.mxu0
        %2151 = vmatprep.mubr.f32.mxu0 0.0
        %2152 = vmatmul.mubr.f32.gmra.mxu0 %v2043
        %v2153 = vpop.f32.mrf.mxu0
        %v2154 = vadd.f32 0.0, %v2153
        %v2155 = vpop.f32.mrf.mxu0
        %2156 = vmatprep.mubr.f32.mxu0 0.0
        %2157 = vmatmul.mubr.f32.gmra.mxu0 %v2046
        %v2158 = vpop.f32.mrf.mxu0
        %v2159 = vadd.f32 0.0, %v2158
        %v2160 = vpop.f32.mrf.mxu0
        %2161 = vmatprep.mubr.f32.mxu0 0.0
        %2162 = vmatmul.mubr.f32.gmra.mxu0 %v2049
        %v2163 = vpop.f32.mrf.mxu0
        %v2164 = vadd.f32 0.0, %v2163
        %v2165 = vpop.f32.mrf.mxu0
        %2166 = vmatprep.mubr.f32.mxu0 0.0
        %2167 = vmatmul.mubr.f32.gmra.mxu0 %v2052
        %v2168 = vpop.f32.mrf.mxu0
        %v2169 = vadd.f32 0.0, %v2168
        %v2170 = vpop.f32.mrf.mxu0
        %2171 = vmatprep.mubr.f32.mxu0 0.0
        %2172 = vmatmul.mubr.f32.gmra.mxu0 %v2055
        %v2173 = vpop.f32.mrf.mxu0
        %v2174 = vadd.f32 0.0, %v2173
        %v2175 = vpop.f32.mrf.mxu0
        %2176 = vmatprep.mubr.f32.mxu0 0.0
        %2177 = vmatmul.mubr.f32.gmra.mxu0 %v2058
        %v2178 = vpop.f32.mrf.mxu0
        %v2179 = vadd.f32 0.0, %v2178
        %v2180 = vpop.f32.mrf.mxu0
        %2181 = vmatprep.mubr.f32.mxu0 0.0
        %2182 = vmatmul.mubr.f32.gmra.mxu0 %v2061
        %v2183 = vpop.f32.mrf.mxu0
        %v2184 = vadd.f32 0.0, %v2183
        %v2185 = vpop.f32.mrf.mxu0
        %2186 = vmatprep.mubr.f32.mxu0 0.0
        %2187 = vmatmul.mubr.f32.gmra.mxu0 %v2064
        %v2188 = vpop.f32.mrf.mxu0
        %v2189 = vadd.f32 0.0, %v2188
        %v2190 = vpop.f32.mrf.mxu0
        %2191 = vmatprep.mubr.f32.mxu0 0.0
        %2192 = vmatmul.mubr.f32.gmra.mxu0 %v2067
        %v2193 = vpop.f32.mrf.mxu0
        %v2194 = vadd.f32 0.0, %v2193
        %v2195 = vpop.f32.mrf.mxu0
        %2196 = vmatprep.mubr.f32.mxu0 0.0
        %2197 = vmatmul.mubr.f32.gmra.mxu0 %v2070
        %v2198 = vpop.f32.mrf.mxu0
        %v2199 = vadd.f32 0.0, %v2198
        %v2200 = vpop.f32.mrf.mxu0
        %2201 = vdwg.mxu0
        %v2202 = vld [vmem:[%s640 + $0x1] sm:$0x1]
        %v2203 = vld [vmem:[%s640 + $0x9] sm:$0x1]
        %v2204 = vld [vmem:[%s640 + $0x11] sm:$0x1]
        %v2205 = vld [vmem:[%s640 + $0x19] sm:$0x1]
        %v2206 = vld [vmem:[%s640 + $0x21] sm:$0x1]
        %v2207 = vld [vmem:[%s640 + $0x29] sm:$0x1]
        %v2208 = vld [vmem:[%s640 + $0x31] sm:$0x1]
        %v2209 = vld [vmem:[%s640 + $0x39] sm:$0x1]
        %v2210 = vld [vmem:[%s640 + $0x41] sm:$0x1]
        %v2211 = vld [vmem:[%s640 + $0x49] sm:$0x1]
        %v2212 = vld [vmem:[%s640 + $0x51] sm:$0x1]
        %v2213 = vld [vmem:[%s640 + $0x59] sm:$0x1]
        %v2214 = vld [vmem:[%s640 + $0x61] sm:$0x1]
        %v2215 = vld [vmem:[%s640 + $0x69] sm:$0x1]
        %v2216 = vld [vmem:[%s640 + $0x71] sm:$0x1]
        %v2217 = vld [vmem:[%s640 + $0x79] sm:$0x1]
        %v2218 = vld [vmem:[%s640 + $0x81] sm:$0x1]
        %v2219 = vld [vmem:[%s640 + $0x89] sm:$0x1]
        %v2220 = vld [vmem:[%s640 + $0x91] sm:$0x1]
        %v2221 = vld [vmem:[%s640 + $0x99] sm:$0x1]
        %v2222 = vld [vmem:[%s640 + $0xa1] sm:$0x1]
        %v2223 = vld [vmem:[%s640 + $0xa9] sm:$0x1]
        %v2224 = vld [vmem:[%s640 + $0xb1] sm:$0x1]
        %v2225 = vld [vmem:[%s640 + $0xb9] sm:$0x1]
        %v2226 = vld [vmem:[%s640 + $0xc1] sm:$0x1]
        %v2227 = vld [vmem:[%s640 + $0xc9] sm:$0x1]
        %v2228 = vld [vmem:[%s640 + $0xd1] sm:$0x1]
        %v2229 = vld [vmem:[%s640 + $0xd9] sm:$0x1]
        %v2230 = vld [vmem:[%s640 + $0xe1] sm:$0x1]
        %v2231 = vld [vmem:[%s640 + $0xe9] sm:$0x1]
        %v2232 = vld [vmem:[%s640 + $0xf1] sm:$0x1]
        %v2233 = vld [vmem:[%s640 + $0xf9] sm:$0x1]
        %v2234 = vld [vmem:[%s640 + $0x101] sm:$0x1]
        %v2235 = vld [vmem:[%s640 + $0x109] sm:$0x1]
        %v2236 = vld [vmem:[%s640 + $0x111] sm:$0x1]
        %v2237 = vld [vmem:[%s640 + $0x119] sm:$0x1]
        %v2238 = vld [vmem:[%s640 + $0x121] sm:$0x1]
        %v2239 = vld [vmem:[%s640 + $0x129] sm:$0x1]
        %v2240 = vld [vmem:[%s640 + $0x131] sm:$0x1]
        %v2241 = vld [vmem:[%s640 + $0x139] sm:$0x1]
        %v2242 = vld [vmem:[%s640 + $0x141] sm:$0x1]
        %v2243 = vld [vmem:[%s640 + $0x149] sm:$0x1]
        %v2244 = vld [vmem:[%s640 + $0x151] sm:$0x1]
        %v2245 = vld [vmem:[%s640 + $0x159] sm:$0x1]
        %v2246 = vld [vmem:[%s640 + $0x161] sm:$0x1]
        %v2247 = vld [vmem:[%s640 + $0x169] sm:$0x1]
        %v2248 = vld [vmem:[%s640 + $0x171] sm:$0x1]
        %v2249 = vld [vmem:[%s640 + $0x179] sm:$0x1]
        %v2250 = vld [vmem:[%s640 + $0x181] sm:$0x1]
        %v2251 = vld [vmem:[%s640 + $0x189] sm:$0x1]
        %v2252 = vld [vmem:[%s640 + $0x191] sm:$0x1]
        %v2253 = vld [vmem:[%s640 + $0x199] sm:$0x1]
        %v2254 = vld [vmem:[%s640 + $0x1a1] sm:$0x1]
        %v2255 = vld [vmem:[%s640 + $0x1a9] sm:$0x1]
        %v2256 = vld [vmem:[%s640 + $0x1b1] sm:$0x1]
        %v2257 = vld [vmem:[%s640 + $0x1b9] sm:$0x1]
        %v2258 = vld [vmem:[%s640 + $0x1c1] sm:$0x1]
        %v2259 = vld [vmem:[%s640 + $0x1c9] sm:$0x1]
        %v2260 = vld [vmem:[%s640 + $0x1d1] sm:$0x1]
        %v2261 = vld [vmem:[%s640 + $0x1d9] sm:$0x1]
        %v2262 = vld [vmem:[%s640 + $0x1e1] sm:$0x1]
        %v2263 = vld [vmem:[%s640 + $0x1e9] sm:$0x1]
        %v2264 = vld [vmem:[%s640 + $0x1f1] sm:$0x1]
        %v2265 = vld [vmem:[%s640 + $0x1f9] sm:$0x1]
        %v2266 = vld [vmem:[%s640 + $0x201] sm:$0x1]
        %v2267 = vld [vmem:[%s640 + $0x209] sm:$0x1]
        %v2268 = vld [vmem:[%s640 + $0x211] sm:$0x1]
        %v2269 = vld [vmem:[%s640 + $0x219] sm:$0x1]
        %v2270 = vld [vmem:[%s640 + $0x221] sm:$0x1]
        %v2271 = vld [vmem:[%s640 + $0x229] sm:$0x1]
        %v2272 = vld [vmem:[%s640 + $0x231] sm:$0x1]
        %v2273 = vld [vmem:[%s640 + $0x239] sm:$0x1]
        %v2274 = vld [vmem:[%s640 + $0x241] sm:$0x1]
        %v2275 = vld [vmem:[%s640 + $0x249] sm:$0x1]
        %v2276 = vld [vmem:[%s640 + $0x251] sm:$0x1]
        %v2277 = vld [vmem:[%s640 + $0x259] sm:$0x1]
        %v2278 = vld [vmem:[%s640 + $0x261] sm:$0x1]
        %v2279 = vld [vmem:[%s640 + $0x269] sm:$0x1]
        %v2280 = vld [vmem:[%s640 + $0x271] sm:$0x1]
        %v2281 = vld [vmem:[%s640 + $0x279] sm:$0x1]
        %v2282 = vld [vmem:[%s640 + $0x281] sm:$0x1]
        %v2283 = vld [vmem:[%s640 + $0x289] sm:$0x1]
        %v2284 = vld [vmem:[%s640 + $0x291] sm:$0x1]
        %v2285 = vld [vmem:[%s640 + $0x299] sm:$0x1]
        %v2286 = vld [vmem:[%s640 + $0x2a1] sm:$0x1]
        %v2287 = vld [vmem:[%s640 + $0x2a9] sm:$0x1]
        %v2288 = vld [vmem:[%s640 + $0x2b1] sm:$0x1]
        %v2289 = vld [vmem:[%s640 + $0x2b9] sm:$0x1]
        %v2290 = vld [vmem:[%s640 + $0x2c1] sm:$0x1]
        %v2291 = vld [vmem:[%s640 + $0x2c9] sm:$0x1]
        %v2292 = vld [vmem:[%s640 + $0x2d1] sm:$0x1]
        %v2293 = vld [vmem:[%s640 + $0x2d9] sm:$0x1]
        %v2294 = vld [vmem:[%s640 + $0x2e1] sm:$0x1]
        %v2295 = vld [vmem:[%s640 + $0x2e9] sm:$0x1]
        %v2296 = vld [vmem:[%s640 + $0x2f1] sm:$0x1]
        %v2297 = vld [vmem:[%s640 + $0x2f9] sm:$0x1]
        %v2298 = vld [vmem:[%s640 + $0x301] sm:$0x1]
        %v2299 = vld [vmem:[%s640 + $0x309] sm:$0x1]
        %v2300 = vld [vmem:[%s640 + $0x311] sm:$0x1]
        %v2301 = vld [vmem:[%s640 + $0x319] sm:$0x1]
        %v2302 = vld [vmem:[%s640 + $0x321] sm:$0x1]
        %v2303 = vld [vmem:[%s640 + $0x329] sm:$0x1]
        %v2304 = vld [vmem:[%s640 + $0x331] sm:$0x1]
        %v2305 = vld [vmem:[%s640 + $0x339] sm:$0x1]
        %v2410 = vrot.slane %v2203, 7
        %v2411 = vsel %vm1715, %v2410, %v2202
        %v2412 = vrot.slane %v2204, 6
        %v2413 = vsel %vm1718, %v2412, %v2411
        %v2414 = vrot.slane %v2205, 5
        %v2415 = vsel %vm1721, %v2414, %v2413
        %v2416 = vrot.slane %v2206, 4
        %v2417 = vsel %vm1724, %v2416, %v2415
        %v2418 = vrot.slane %v2207, 3
        %v2419 = vsel %vm1727, %v2418, %v2417
        %v2420 = vrot.slane %v2208, 2
        %v2421 = vsel %vm1730, %v2420, %v2419
        %v2422 = vrot.slane %v2209, 1
        %v2423 = vsel %vm1733, %v2422, %v2421
        %v2424 = vrot.slane %v2211, 7
        %v2425 = vsel %vm1715, %v2424, %v2210
        %v2426 = vrot.slane %v2212, 6
        %v2427 = vsel %vm1718, %v2426, %v2425
        %v2428 = vrot.slane %v2213, 5
        %v2429 = vsel %vm1721, %v2428, %v2427
        %v2430 = vrot.slane %v2214, 4
        %v2431 = vsel %vm1724, %v2430, %v2429
        %v2432 = vrot.slane %v2215, 3
        %v2433 = vsel %vm1727, %v2432, %v2431
        %v2434 = vrot.slane %v2216, 2
        %v2435 = vsel %vm1730, %v2434, %v2433
        %v2436 = vrot.slane %v2217, 1
        %v2437 = vsel %vm1733, %v2436, %v2435
        %v2438 = vrot.slane %v2219, 7
        %v2439 = vsel %vm1715, %v2438, %v2218
        %v2440 = vrot.slane %v2220, 6
        %v2441 = vsel %vm1718, %v2440, %v2439
        %v2442 = vrot.slane %v2221, 5
        %v2443 = vsel %vm1721, %v2442, %v2441
        %v2444 = vrot.slane %v2222, 4
        %v2445 = vsel %vm1724, %v2444, %v2443
        %v2446 = vrot.slane %v2223, 3
        %v2447 = vsel %vm1727, %v2446, %v2445
        %v2448 = vrot.slane %v2224, 2
        %v2449 = vsel %vm1730, %v2448, %v2447
        %v2450 = vrot.slane %v2225, 1
        %v2451 = vsel %vm1733, %v2450, %v2449
        %v2452 = vrot.slane %v2227, 7
        %v2453 = vsel %vm1715, %v2452, %v2226
        %v2454 = vrot.slane %v2228, 6
        %v2455 = vsel %vm1718, %v2454, %v2453
        %v2456 = vrot.slane %v2229, 5
        %v2457 = vsel %vm1721, %v2456, %v2455
        %v2458 = vrot.slane %v2230, 4
        %v2459 = vsel %vm1724, %v2458, %v2457
        %v2460 = vrot.slane %v2231, 3
        %v2461 = vsel %vm1727, %v2460, %v2459
        %v2462 = vrot.slane %v2232, 2
        %v2463 = vsel %vm1730, %v2462, %v2461
        %v2464 = vrot.slane %v2233, 1
        %v2465 = vsel %vm1733, %v2464, %v2463
        %v2466 = vrot.slane %v2235, 7
        %v2467 = vsel %vm1715, %v2466, %v2234
        %v2468 = vrot.slane %v2236, 6
        %v2469 = vsel %vm1718, %v2468, %v2467
        %v2470 = vrot.slane %v2237, 5
        %v2471 = vsel %vm1721, %v2470, %v2469
        %v2472 = vrot.slane %v2238, 4
        %v2473 = vsel %vm1724, %v2472, %v2471
        %v2474 = vrot.slane %v2239, 3
        %v2475 = vsel %vm1727, %v2474, %v2473
        %v2476 = vrot.slane %v2240, 2
        %v2477 = vsel %vm1730, %v2476, %v2475
        %v2478 = vrot.slane %v2241, 1
        %v2479 = vsel %vm1733, %v2478, %v2477
        %v2480 = vrot.slane %v2243, 7
        %v2481 = vsel %vm1715, %v2480, %v2242
        %v2482 = vrot.slane %v2244, 6
        %v2483 = vsel %vm1718, %v2482, %v2481
        %v2484 = vrot.slane %v2245, 5
        %v2485 = vsel %vm1721, %v2484, %v2483
        %v2486 = vrot.slane %v2246, 4
        %v2487 = vsel %vm1724, %v2486, %v2485
        %v2488 = vrot.slane %v2247, 3
        %v2489 = vsel %vm1727, %v2488, %v2487
        %v2490 = vrot.slane %v2248, 2
        %v2491 = vsel %vm1730, %v2490, %v2489
        %v2492 = vrot.slane %v2249, 1
        %v2493 = vsel %vm1733, %v2492, %v2491
        %v2494 = vrot.slane %v2251, 7
        %v2495 = vsel %vm1715, %v2494, %v2250
        %v2496 = vrot.slane %v2252, 6
        %v2497 = vsel %vm1718, %v2496, %v2495
        %v2498 = vrot.slane %v2253, 5
        %v2499 = vsel %vm1721, %v2498, %v2497
        %v2500 = vrot.slane %v2254, 4
        %v2501 = vsel %vm1724, %v2500, %v2499
        %v2502 = vrot.slane %v2255, 3
        %v2503 = vsel %vm1727, %v2502, %v2501
        %v2504 = vrot.slane %v2256, 2
        %v2505 = vsel %vm1730, %v2504, %v2503
        %v2506 = vrot.slane %v2257, 1
        %v2507 = vsel %vm1733, %v2506, %v2505
        %v2508 = vrot.slane %v2259, 7
        %v2509 = vsel %vm1715, %v2508, %v2258
        %v2510 = vrot.slane %v2260, 6
        %v2511 = vsel %vm1718, %v2510, %v2509
        %v2512 = vrot.slane %v2261, 5
        %v2513 = vsel %vm1721, %v2512, %v2511
        %v2514 = vrot.slane %v2262, 4
        %v2515 = vsel %vm1724, %v2514, %v2513
        %v2516 = vrot.slane %v2263, 3
        %v2517 = vsel %vm1727, %v2516, %v2515
        %v2518 = vrot.slane %v2264, 2
        %v2519 = vsel %vm1730, %v2518, %v2517
        %v2520 = vrot.slane %v2265, 1
        %v2521 = vsel %vm1733, %v2520, %v2519
        %v2522 = vrot.slane %v2267, 7
        %v2523 = vsel %vm1715, %v2522, %v2266
        %v2524 = vrot.slane %v2268, 6
        %v2525 = vsel %vm1718, %v2524, %v2523
        %v2526 = vrot.slane %v2269, 5
        %v2527 = vsel %vm1721, %v2526, %v2525
        %v2528 = vrot.slane %v2270, 4
        %v2529 = vsel %vm1724, %v2528, %v2527
        %v2530 = vrot.slane %v2271, 3
        %v2531 = vsel %vm1727, %v2530, %v2529
        %v2532 = vrot.slane %v2272, 2
        %v2533 = vsel %vm1730, %v2532, %v2531
        %v2534 = vrot.slane %v2273, 1
        %v2535 = vsel %vm1733, %v2534, %v2533
        %v2536 = vrot.slane %v2275, 7
        %v2537 = vsel %vm1715, %v2536, %v2274
        %v2538 = vrot.slane %v2276, 6
        %v2539 = vsel %vm1718, %v2538, %v2537
        %v2540 = vrot.slane %v2277, 5
        %v2541 = vsel %vm1721, %v2540, %v2539
        %v2542 = vrot.slane %v2278, 4
        %v2543 = vsel %vm1724, %v2542, %v2541
        %v2544 = vrot.slane %v2279, 3
        %v2545 = vsel %vm1727, %v2544, %v2543
        %v2546 = vrot.slane %v2280, 2
        %v2547 = vsel %vm1730, %v2546, %v2545
        %v2548 = vrot.slane %v2281, 1
        %v2549 = vsel %vm1733, %v2548, %v2547
        %v2550 = vrot.slane %v2283, 7
        %v2551 = vsel %vm1715, %v2550, %v2282
        %v2552 = vrot.slane %v2284, 6
        %v2553 = vsel %vm1718, %v2552, %v2551
        %v2554 = vrot.slane %v2285, 5
        %v2555 = vsel %vm1721, %v2554, %v2553
        %v2556 = vrot.slane %v2286, 4
        %v2557 = vsel %vm1724, %v2556, %v2555
        %v2558 = vrot.slane %v2287, 3
        %v2559 = vsel %vm1727, %v2558, %v2557
        %v2560 = vrot.slane %v2288, 2
        %v2561 = vsel %vm1730, %v2560, %v2559
        %v2562 = vrot.slane %v2289, 1
        %v2563 = vsel %vm1733, %v2562, %v2561
        %v2564 = vrot.slane %v2291, 7
        %v2565 = vsel %vm1715, %v2564, %v2290
        %v2566 = vrot.slane %v2292, 6
        %v2567 = vsel %vm1718, %v2566, %v2565
        %v2568 = vrot.slane %v2293, 5
        %v2569 = vsel %vm1721, %v2568, %v2567
        %v2570 = vrot.slane %v2294, 4
        %v2571 = vsel %vm1724, %v2570, %v2569
        %v2572 = vrot.slane %v2295, 3
        %v2573 = vsel %vm1727, %v2572, %v2571
        %v2574 = vrot.slane %v2296, 2
        %v2575 = vsel %vm1730, %v2574, %v2573
        %v2576 = vrot.slane %v2297, 1
        %v2577 = vsel %vm1733, %v2576, %v2575
        %v2578 = vrot.slane %v2299, 7
        %v2579 = vsel %vm1715, %v2578, %v2298
        %v2580 = vrot.slane %v2300, 6
        %v2581 = vsel %vm1718, %v2580, %v2579
        %v2582 = vrot.slane %v2301, 5
        %v2583 = vsel %vm1721, %v2582, %v2581
        %v2584 = vrot.slane %v2302, 4
        %v2585 = vsel %vm1724, %v2584, %v2583
        %v2586 = vrot.slane %v2303, 3
        %v2587 = vsel %vm1727, %v2586, %v2585
        %v2588 = vrot.slane %v2304, 2
        %v2589 = vsel %vm1730, %v2588, %v2587
        %v2590 = vrot.slane %v2305, 1
        %v2591 = vsel %vm1733, %v2590, %v2589
        %v2605 = vmul.f32 %v2139, %v2423
        %v2606 = vmul.f32 %v2144, %v2437
        %v2607 = vmul.f32 %v2149, %v2451
        %v2608 = vmul.f32 %v2154, %v2465
        %v2609 = vmul.f32 %v2159, %v2479
        %v2610 = vmul.f32 %v2164, %v2493
        %v2611 = vmul.f32 %v2169, %v2507
        %v2612 = vmul.f32 %v2174, %v2521
        %v2613 = vmul.f32 %v2179, %v2535
        %v2614 = vmul.f32 %v2184, %v2549
        %v2615 = vmul.f32 %v2189, %v2563
        %v2616 = vmul.f32 %v2194, %v2577
        %v2617 = vmul.f32 %v2199, %v2591
        %v2618 = vadd.f32 %v1929, %v2605
        %v2619 = vadd.f32 %v1930, %v2606
        %v2620 = vadd.f32 %v1931, %v2607
        %v2621 = vadd.f32 %v1932, %v2608
        %v2622 = vadd.f32 %v1933, %v2609
        %v2623 = vadd.f32 %v1934, %v2610
        %v2624 = vadd.f32 %v1935, %v2611
        %v2625 = vadd.f32 %v1936, %v2612
        %v2626 = vadd.f32 %v1937, %v2613
        %v2627 = vadd.f32 %v1938, %v2614
        %v2628 = vadd.f32 %v1939, %v2615
        %v2629 = vadd.f32 %v1940, %v2616
        %v2630 = vadd.f32 %v1941, %v2617
        %2631 = vset.pattern.permute.xlu0 2
        %2632 = vperm.xlu0 %2631, %v1216
        %v2633 = vpop.permute.xlu0 %2632
        %2634 = vset.pattern.permute.xlu0 2
        %2635 = vperm.xlu0 %2634, %v1217
        %v2636 = vpop.permute.xlu0 %2635
        %2637 = vset.pattern.permute.xlu0 2
        %2638 = vperm.xlu0 %2637, %v1218
        %v2639 = vpop.permute.xlu0 %2638
        %2640 = vset.pattern.permute.xlu0 2
        %2641 = vperm.xlu0 %2640, %v1219
        %v2642 = vpop.permute.xlu0 %2641
        %2643 = vset.pattern.permute.xlu0 2
        %2644 = vperm.xlu0 %2643, %v1220
        %v2645 = vpop.permute.xlu0 %2644
        %2646 = vset.pattern.permute.xlu0 2
        %2647 = vperm.xlu0 %2646, %v1221
        %v2648 = vpop.permute.xlu0 %2647
        %2649 = vset.pattern.permute.xlu0 2
        %2650 = vperm.xlu0 %2649, %v1222
        %v2651 = vpop.permute.xlu0 %2650
        %2652 = vset.pattern.permute.xlu0 2
        %2653 = vperm.xlu0 %2652, %v1223
        %v2654 = vpop.permute.xlu0 %2653
        %2655 = vset.pattern.permute.xlu0 2
        %2656 = vperm.xlu0 %2655, %v1224
        %v2657 = vpop.permute.xlu0 %2656
        %2658 = vset.pattern.permute.xlu0 2
        %2659 = vperm.xlu0 %2658, %v1225
        %v2660 = vpop.permute.xlu0 %2659
        %2661 = vset.pattern.permute.xlu0 2
        %2662 = vperm.xlu0 %2661, %v1226
        %v2663 = vpop.permute.xlu0 %2662
        %2664 = vset.pattern.permute.xlu0 2
        %2665 = vperm.xlu0 %2664, %v1227
        %v2666 = vpop.permute.xlu0 %2665
        %2667 = vset.pattern.permute.xlu0 2
        %2668 = vperm.xlu0 %2667, %v1228
        %v2669 = vpop.permute.xlu0 %2668
        %vm2670 = vcmp.eq.s32.totalorder %v2633, %v1244
        %vm2671 = vcmp.eq.s32.totalorder %v2636, %v1244
        %vm2672 = vcmp.eq.s32.totalorder %v2639, %v1244
        %vm2673 = vcmp.eq.s32.totalorder %v2642, %v1244
        %vm2674 = vcmp.eq.s32.totalorder %v2645, %v1244
        %vm2675 = vcmp.eq.s32.totalorder %v2648, %v1244
        %vm2676 = vcmp.eq.s32.totalorder %v2651, %v1244
        %vm2677 = vcmp.eq.s32.totalorder %v2654, %v1244
        %vm2678 = vcmp.eq.s32.totalorder %v2657, %v1244
        %vm2679 = vcmp.eq.s32.totalorder %v2660, %v1244
        %vm2680 = vcmp.eq.s32.totalorder %v2663, %v1244
        %vm2681 = vcmp.eq.s32.totalorder %v2666, %v1244
        %vm2682 = vcmp.eq.s32.totalorder %v2669, %v1244
        %v2683 = vsel %vm2670, 1, 0
        %v2684 = vsel %vm2671, 1, 0
        %v2685 = vsel %vm2672, 1, 0
        %v2686 = vsel %vm2673, 1, 0
        %v2687 = vsel %vm2674, 1, 0
        %v2688 = vsel %vm2675, 1, 0
        %v2689 = vsel %vm2676, 1, 0
        %v2690 = vsel %vm2677, 1, 0
        %v2691 = vsel %vm2678, 1, 0
        %v2692 = vsel %vm2679, 1, 0
        %v2693 = vsel %vm2680, 1, 0
        %v2694 = vsel %vm2681, 1, 0
        %v2695 = vsel %vm2682, 1, 0
        %v2696 = vcvt.s32.f32 %v2683
        %v2697 = vcvt.s32.f32 %v2684
        %v2698 = vcvt.s32.f32 %v2685
        %v2699 = vcvt.s32.f32 %v2686
        %v2700 = vcvt.s32.f32 %v2687
        %v2701 = vcvt.s32.f32 %v2688
        %v2702 = vcvt.s32.f32 %v2689
        %v2703 = vcvt.s32.f32 %v2690
        %v2704 = vcvt.s32.f32 %v2691
        %v2705 = vcvt.s32.f32 %v2692
        %v2706 = vcvt.s32.f32 %v2693
        %v2707 = vcvt.s32.f32 %v2694
        %v2708 = vcvt.s32.f32 %v2695
        %v2709 = vadd.f32 %v2020, %v2696
        %v2710 = vadd.f32 %v2021, %v2697
        %v2711 = vadd.f32 %v2022, %v2698
        %v2712 = vadd.f32 %v2023, %v2699
        %v2713 = vadd.f32 %v2024, %v2700
        %v2714 = vadd.f32 %v2025, %v2701
        %v2715 = vadd.f32 %v2026, %v2702
        %v2716 = vadd.f32 %v2027, %v2703
        %v2717 = vadd.f32 %v2028, %v2704
        %v2718 = vadd.f32 %v2029, %v2705
        %v2719 = vadd.f32 %v2030, %v2706
        %v2720 = vadd.f32 %v2031, %v2707
        %v2721 = vadd.f32 %v2032, %v2708
        %v2723 = vsel %vm1336, %v2696, 0
        %v2726 = vsel %vm1336, %v2697, 0
        %v2729 = vsel %vm1336, %v2698, 0
        %v2732 = vsel %vm1336, %v2699, 0
        %v2735 = vsel %vm1336, %v2700, 0
        %v2738 = vsel %vm1336, %v2701, 0
        %v2741 = vsel %vm1336, %v2702, 0
        %v2744 = vsel %vm1336, %v2703, 0
        %v2747 = vsel %vm1336, %v2704, 0
        %v2750 = vsel %vm1336, %v2705, 0
        %v2753 = vsel %vm1336, %v2706, 0
        %v2756 = vsel %vm1336, %v2707, 0
        %v2759 = vsel %vm1336, %v2708, 0
        %2761 = vmatprep.subr.mxu0 0.0
        %2762 = vmatpush1.msra.mxu0 0.0
        %2763 = vmatprep.subr.mxu0 0.0
        %2764 = vmatpush1.msra.mxu0 0.0
        %2765 = vmatprep.subr.mxu0 0.0
        %2766 = vmatpush1.msra.mxu0 0.0
        %2767 = vmatprep.subr.mxu0 0.0
        %2768 = vmatpush1.msra.mxu0 0.0
        %2769 = vmatprep.subr.mxu0 0.0
        %2770 = vmatpush1.msra.mxu0 0.0
        %2771 = vmatprep.subr.mxu0 0.0
        %2772 = vmatpush1.msra.mxu0 0.0
        %2773 = vmatprep.subr.mxu0 0.0
        %2774 = vmatpush1.msra.mxu0 0.0
        %2775 = vmatprep.subr.mxu0 0.0
        %2776 = vmatpush1.msra.mxu0 0.0
        %2777 = vmatprep.subr.mxu0 0.0
        %2778 = vmatpush1.msra.mxu0 0.0
        %2779 = vmatprep.subr.mxu0 0.0
        %2780 = vmatpush1.msra.mxu0 %v1242
        %2781 = vmatprep.subr.mxu0 0.0
        %2782 = vmatpush1.msra.mxu0 %v1241
        %2783 = vmatprep.subr.mxu0 0.0
        %2784 = vmatpush1.msra.mxu0 %v1240
        %2785 = vmatprep.subr.mxu0 0.0
        %2786 = vmatpush1.msra.mxu0 %v1239
        %2787 = vmatprep.subr.mxu0 0.0
        %2788 = vmatpush1.msra.mxu0 %v1238
        %2789 = vmatprep.subr.mxu0 0.0
        %2790 = vmatpush1.msra.mxu0 %v1237
        %2791 = vmatprep.subr.mxu0 0.0
        %2792 = vmatpush1.msra.mxu0 %v1236
        %2793 = vmatprep.subr.mxu0 0.0
        %2794 = vmatpush2.msra.mxu0 0.0
        %2795 = vmatprep.subr.mxu0 0.0
        %2796 = vmatpush2.msra.mxu0 0.0
        %2797 = vmatprep.subr.mxu0 0.0
        %2798 = vmatpush2.msra.mxu0 0.0
        %2799 = vmatprep.subr.mxu0 0.0
        %2800 = vmatpush2.msra.mxu0 0.0
        %2801 = vmatprep.subr.mxu0 0.0
        %2802 = vmatpush2.msra.mxu0 0.0
        %2803 = vmatprep.subr.mxu0 0.0
        %2804 = vmatpush2.msra.mxu0 0.0
        %2805 = vmatprep.subr.mxu0 0.0
        %2806 = vmatpush2.msra.mxu0 0.0
        %2807 = vmatprep.subr.mxu0 0.0
        %2808 = vmatpush2.msra.mxu0 0.0
        %2809 = vmatprep.subr.mxu0 0.0
        %2810 = vmatpush2.msra.mxu0 0.0
        %2811 = vmatprep.subr.mxu0 0.0
        %2812 = vmatpush2.msra.mxu0 0.0
        %2813 = vmatprep.subr.mxu0 0.0
        %2814 = vmatpush2.msra.mxu0 0.0
        %2815 = vmatprep.subr.mxu0 0.0
        %2816 = vmatpush2.msra.mxu0 0.0
        %2817 = vmatprep.subr.mxu0 0.0
        %2818 = vmatpush2.msra.mxu0 0.0
        %2819 = vmatprep.subr.mxu0 0.0
        %2820 = vmatpush2.msra.mxu0 0.0
        %2821 = vmatprep.subr.mxu0 0.0
        %2822 = vmatpush2.msra.mxu0 0.0
        %2823 = vmatprep.subr.mxu0 0.0
        %2824 = vmatpush2.msra.mxu0 0.0
        %2825 = vmatprep.mubr.f32.mxu0 0.0
        %2826 = vmatmul.mubr.f32.gmra.mxu0 %v2723
        %v2827 = vpop.f32.mrf.mxu0
        %v2828 = vadd.f32 0.0, %v2827
        %v2829 = vpop.f32.mrf.mxu0
        %2830 = vmatprep.mubr.f32.mxu0 0.0
        %2831 = vmatmul.mubr.f32.gmra.mxu0 %v2726
        %v2832 = vpop.f32.mrf.mxu0
        %v2833 = vadd.f32 0.0, %v2832
        %v2834 = vpop.f32.mrf.mxu0
        %2835 = vmatprep.mubr.f32.mxu0 0.0
        %2836 = vmatmul.mubr.f32.gmra.mxu0 %v2729
        %v2837 = vpop.f32.mrf.mxu0
        %v2838 = vadd.f32 0.0, %v2837
        %v2839 = vpop.f32.mrf.mxu0
        %2840 = vmatprep.mubr.f32.mxu0 0.0
        %2841 = vmatmul.mubr.f32.gmra.mxu0 %v2732
        %v2842 = vpop.f32.mrf.mxu0
        %v2843 = vadd.f32 0.0, %v2842
        %v2844 = vpop.f32.mrf.mxu0
        %2845 = vmatprep.mubr.f32.mxu0 0.0
        %2846 = vmatmul.mubr.f32.gmra.mxu0 %v2735
        %v2847 = vpop.f32.mrf.mxu0
        %v2848 = vadd.f32 0.0, %v2847
        %v2849 = vpop.f32.mrf.mxu0
        %2850 = vmatprep.mubr.f32.mxu0 0.0
        %2851 = vmatmul.mubr.f32.gmra.mxu0 %v2738
        %v2852 = vpop.f32.mrf.mxu0
        %v2853 = vadd.f32 0.0, %v2852
        %v2854 = vpop.f32.mrf.mxu0
        %2855 = vmatprep.mubr.f32.mxu0 0.0
        %2856 = vmatmul.mubr.f32.gmra.mxu0 %v2741
        %v2857 = vpop.f32.mrf.mxu0
        %v2858 = vadd.f32 0.0, %v2857
        %v2859 = vpop.f32.mrf.mxu0
        %2860 = vmatprep.mubr.f32.mxu0 0.0
        %2861 = vmatmul.mubr.f32.gmra.mxu0 %v2744
        %v2862 = vpop.f32.mrf.mxu0
        %v2863 = vadd.f32 0.0, %v2862
        %v2864 = vpop.f32.mrf.mxu0
        %2865 = vmatprep.mubr.f32.mxu0 0.0
        %2866 = vmatmul.mubr.f32.gmra.mxu0 %v2747
        %v2867 = vpop.f32.mrf.mxu0
        %v2868 = vadd.f32 0.0, %v2867
        %v2869 = vpop.f32.mrf.mxu0
        %2870 = vmatprep.mubr.f32.mxu0 0.0
        %2871 = vmatmul.mubr.f32.gmra.mxu0 %v2750
        %v2872 = vpop.f32.mrf.mxu0
        %v2873 = vadd.f32 0.0, %v2872
        %v2874 = vpop.f32.mrf.mxu0
        %2875 = vmatprep.mubr.f32.mxu0 0.0
        %2876 = vmatmul.mubr.f32.gmra.mxu0 %v2753
        %v2877 = vpop.f32.mrf.mxu0
        %v2878 = vadd.f32 0.0, %v2877
        %v2879 = vpop.f32.mrf.mxu0
        %2880 = vmatprep.mubr.f32.mxu0 0.0
        %2881 = vmatmul.mubr.f32.gmra.mxu0 %v2756
        %v2882 = vpop.f32.mrf.mxu0
        %v2883 = vadd.f32 0.0, %v2882
        %v2884 = vpop.f32.mrf.mxu0
        %2885 = vmatprep.mubr.f32.mxu0 0.0
        %2886 = vmatmul.mubr.f32.gmra.mxu0 %v2759
        %v2887 = vpop.f32.mrf.mxu0
        %v2888 = vadd.f32 0.0, %v2887
        %v2889 = vpop.f32.mrf.mxu0
        %2890 = vdwg.mxu0
        %v2891 = vld [vmem:[%s640 + $0x2] sm:$0x1]
        %v2892 = vld [vmem:[%s640 + $0xa] sm:$0x1]
        %v2893 = vld [vmem:[%s640 + $0x12] sm:$0x1]
        %v2894 = vld [vmem:[%s640 + $0x1a] sm:$0x1]
        %v2895 = vld [vmem:[%s640 + $0x22] sm:$0x1]
        %v2896 = vld [vmem:[%s640 + $0x2a] sm:$0x1]
        %v2897 = vld [vmem:[%s640 + $0x32] sm:$0x1]
        %v2898 = vld [vmem:[%s640 + $0x3a] sm:$0x1]
        %v2899 = vld [vmem:[%s640 + $0x42] sm:$0x1]
        %v2900 = vld [vmem:[%s640 + $0x4a] sm:$0x1]
        %v2901 = vld [vmem:[%s640 + $0x52] sm:$0x1]
        %v2902 = vld [vmem:[%s640 + $0x5a] sm:$0x1]
        %v2903 = vld [vmem:[%s640 + $0x62] sm:$0x1]
        %v2904 = vld [vmem:[%s640 + $0x6a] sm:$0x1]
        %v2905 = vld [vmem:[%s640 + $0x72] sm:$0x1]
        %v2906 = vld [vmem:[%s640 + $0x7a] sm:$0x1]
        %v2907 = vld [vmem:[%s640 + $0x82] sm:$0x1]
        %v2908 = vld [vmem:[%s640 + $0x8a] sm:$0x1]
        %v2909 = vld [vmem:[%s640 + $0x92] sm:$0x1]
        %v2910 = vld [vmem:[%s640 + $0x9a] sm:$0x1]
        %v2911 = vld [vmem:[%s640 + $0xa2] sm:$0x1]
        %v2912 = vld [vmem:[%s640 + $0xaa] sm:$0x1]
        %v2913 = vld [vmem:[%s640 + $0xb2] sm:$0x1]
        %v2914 = vld [vmem:[%s640 + $0xba] sm:$0x1]
        %v2915 = vld [vmem:[%s640 + $0xc2] sm:$0x1]
        %v2916 = vld [vmem:[%s640 + $0xca] sm:$0x1]
        %v2917 = vld [vmem:[%s640 + $0xd2] sm:$0x1]
        %v2918 = vld [vmem:[%s640 + $0xda] sm:$0x1]
        %v2919 = vld [vmem:[%s640 + $0xe2] sm:$0x1]
        %v2920 = vld [vmem:[%s640 + $0xea] sm:$0x1]
        %v2921 = vld [vmem:[%s640 + $0xf2] sm:$0x1]
        %v2922 = vld [vmem:[%s640 + $0xfa] sm:$0x1]
        %v2923 = vld [vmem:[%s640 + $0x102] sm:$0x1]
        %v2924 = vld [vmem:[%s640 + $0x10a] sm:$0x1]
        %v2925 = vld [vmem:[%s640 + $0x112] sm:$0x1]
        %v2926 = vld [vmem:[%s640 + $0x11a] sm:$0x1]
        %v2927 = vld [vmem:[%s640 + $0x122] sm:$0x1]
        %v2928 = vld [vmem:[%s640 + $0x12a] sm:$0x1]
        %v2929 = vld [vmem:[%s640 + $0x132] sm:$0x1]
        %v2930 = vld [vmem:[%s640 + $0x13a] sm:$0x1]
        %v2931 = vld [vmem:[%s640 + $0x142] sm:$0x1]
        %v2932 = vld [vmem:[%s640 + $0x14a] sm:$0x1]
        %v2933 = vld [vmem:[%s640 + $0x152] sm:$0x1]
        %v2934 = vld [vmem:[%s640 + $0x15a] sm:$0x1]
        %v2935 = vld [vmem:[%s640 + $0x162] sm:$0x1]
        %v2936 = vld [vmem:[%s640 + $0x16a] sm:$0x1]
        %v2937 = vld [vmem:[%s640 + $0x172] sm:$0x1]
        %v2938 = vld [vmem:[%s640 + $0x17a] sm:$0x1]
        %v2939 = vld [vmem:[%s640 + $0x182] sm:$0x1]
        %v2940 = vld [vmem:[%s640 + $0x18a] sm:$0x1]
        %v2941 = vld [vmem:[%s640 + $0x192] sm:$0x1]
        %v2942 = vld [vmem:[%s640 + $0x19a] sm:$0x1]
        %v2943 = vld [vmem:[%s640 + $0x1a2] sm:$0x1]
        %v2944 = vld [vmem:[%s640 + $0x1aa] sm:$0x1]
        %v2945 = vld [vmem:[%s640 + $0x1b2] sm:$0x1]
        %v2946 = vld [vmem:[%s640 + $0x1ba] sm:$0x1]
        %v2947 = vld [vmem:[%s640 + $0x1c2] sm:$0x1]
        %v2948 = vld [vmem:[%s640 + $0x1ca] sm:$0x1]
        %v2949 = vld [vmem:[%s640 + $0x1d2] sm:$0x1]
        %v2950 = vld [vmem:[%s640 + $0x1da] sm:$0x1]
        %v2951 = vld [vmem:[%s640 + $0x1e2] sm:$0x1]
        %v2952 = vld [vmem:[%s640 + $0x1ea] sm:$0x1]
        %v2953 = vld [vmem:[%s640 + $0x1f2] sm:$0x1]
        %v2954 = vld [vmem:[%s640 + $0x1fa] sm:$0x1]
        %v2955 = vld [vmem:[%s640 + $0x202] sm:$0x1]
        %v2956 = vld [vmem:[%s640 + $0x20a] sm:$0x1]
        %v2957 = vld [vmem:[%s640 + $0x212] sm:$0x1]
        %v2958 = vld [vmem:[%s640 + $0x21a] sm:$0x1]
        %v2959 = vld [vmem:[%s640 + $0x222] sm:$0x1]
        %v2960 = vld [vmem:[%s640 + $0x22a] sm:$0x1]
        %v2961 = vld [vmem:[%s640 + $0x232] sm:$0x1]
        %v2962 = vld [vmem:[%s640 + $0x23a] sm:$0x1]
        %v2963 = vld [vmem:[%s640 + $0x242] sm:$0x1]
        %v2964 = vld [vmem:[%s640 + $0x24a] sm:$0x1]
        %v2965 = vld [vmem:[%s640 + $0x252] sm:$0x1]
        %v2966 = vld [vmem:[%s640 + $0x25a] sm:$0x1]
        %v2967 = vld [vmem:[%s640 + $0x262] sm:$0x1]
        %v2968 = vld [vmem:[%s640 + $0x26a] sm:$0x1]
        %v2969 = vld [vmem:[%s640 + $0x272] sm:$0x1]
        %v2970 = vld [vmem:[%s640 + $0x27a] sm:$0x1]
        %v2971 = vld [vmem:[%s640 + $0x282] sm:$0x1]
        %v2972 = vld [vmem:[%s640 + $0x28a] sm:$0x1]
        %v2973 = vld [vmem:[%s640 + $0x292] sm:$0x1]
        %v2974 = vld [vmem:[%s640 + $0x29a] sm:$0x1]
        %v2975 = vld [vmem:[%s640 + $0x2a2] sm:$0x1]
        %v2976 = vld [vmem:[%s640 + $0x2aa] sm:$0x1]
        %v2977 = vld [vmem:[%s640 + $0x2b2] sm:$0x1]
        %v2978 = vld [vmem:[%s640 + $0x2ba] sm:$0x1]
        %v2979 = vld [vmem:[%s640 + $0x2c2] sm:$0x1]
        %v2980 = vld [vmem:[%s640 + $0x2ca] sm:$0x1]
        %v2981 = vld [vmem:[%s640 + $0x2d2] sm:$0x1]
        %v2982 = vld [vmem:[%s640 + $0x2da] sm:$0x1]
        %v2983 = vld [vmem:[%s640 + $0x2e2] sm:$0x1]
        %v2984 = vld [vmem:[%s640 + $0x2ea] sm:$0x1]
        %v2985 = vld [vmem:[%s640 + $0x2f2] sm:$0x1]
        %v2986 = vld [vmem:[%s640 + $0x2fa] sm:$0x1]
        %v2987 = vld [vmem:[%s640 + $0x302] sm:$0x1]
        %v2988 = vld [vmem:[%s640 + $0x30a] sm:$0x1]
        %v2989 = vld [vmem:[%s640 + $0x312] sm:$0x1]
        %v2990 = vld [vmem:[%s640 + $0x31a] sm:$0x1]
        %v2991 = vld [vmem:[%s640 + $0x322] sm:$0x1]
        %v2992 = vld [vmem:[%s640 + $0x32a] sm:$0x1]
        %v2993 = vld [vmem:[%s640 + $0x332] sm:$0x1]
        %v2994 = vld [vmem:[%s640 + $0x33a] sm:$0x1]
        %v3099 = vrot.slane %v2892, 7
        %v3100 = vsel %vm1715, %v3099, %v2891
        %v3101 = vrot.slane %v2893, 6
        %v3102 = vsel %vm1718, %v3101, %v3100
        %v3103 = vrot.slane %v2894, 5
        %v3104 = vsel %vm1721, %v3103, %v3102
        %v3105 = vrot.slane %v2895, 4
        %v3106 = vsel %vm1724, %v3105, %v3104
        %v3107 = vrot.slane %v2896, 3
        %v3108 = vsel %vm1727, %v3107, %v3106
        %v3109 = vrot.slane %v2897, 2
        %v3110 = vsel %vm1730, %v3109, %v3108
        %v3111 = vrot.slane %v2898, 1
        %v3112 = vsel %vm1733, %v3111, %v3110
        %v3113 = vrot.slane %v2900, 7
        %v3114 = vsel %vm1715, %v3113, %v2899
        %v3115 = vrot.slane %v2901, 6
        %v3116 = vsel %vm1718, %v3115, %v3114
        %v3117 = vrot.slane %v2902, 5
        %v3118 = vsel %vm1721, %v3117, %v3116
        %v3119 = vrot.slane %v2903, 4
        %v3120 = vsel %vm1724, %v3119, %v3118
        %v3121 = vrot.slane %v2904, 3
        %v3122 = vsel %vm1727, %v3121, %v3120
        %v3123 = vrot.slane %v2905, 2
        %v3124 = vsel %vm1730, %v3123, %v3122
        %v3125 = vrot.slane %v2906, 1
        %v3126 = vsel %vm1733, %v3125, %v3124
        %v3127 = vrot.slane %v2908, 7
        %v3128 = vsel %vm1715, %v3127, %v2907
        %v3129 = vrot.slane %v2909, 6
        %v3130 = vsel %vm1718, %v3129, %v3128
        %v3131 = vrot.slane %v2910, 5
        %v3132 = vsel %vm1721, %v3131, %v3130
        %v3133 = vrot.slane %v2911, 4
        %v3134 = vsel %vm1724, %v3133, %v3132
        %v3135 = vrot.slane %v2912, 3
        %v3136 = vsel %vm1727, %v3135, %v3134
        %v3137 = vrot.slane %v2913, 2
        %v3138 = vsel %vm1730, %v3137, %v3136
        %v3139 = vrot.slane %v2914, 1
        %v3140 = vsel %vm1733, %v3139, %v3138
        %v3141 = vrot.slane %v2916, 7
        %v3142 = vsel %vm1715, %v3141, %v2915
        %v3143 = vrot.slane %v2917, 6
        %v3144 = vsel %vm1718, %v3143, %v3142
        %v3145 = vrot.slane %v2918, 5
        %v3146 = vsel %vm1721, %v3145, %v3144
        %v3147 = vrot.slane %v2919, 4
        %v3148 = vsel %vm1724, %v3147, %v3146
        %v3149 = vrot.slane %v2920, 3
        %v3150 = vsel %vm1727, %v3149, %v3148
        %v3151 = vrot.slane %v2921, 2
        %v3152 = vsel %vm1730, %v3151, %v3150
        %v3153 = vrot.slane %v2922, 1
        %v3154 = vsel %vm1733, %v3153, %v3152
        %v3155 = vrot.slane %v2924, 7
        %v3156 = vsel %vm1715, %v3155, %v2923
        %v3157 = vrot.slane %v2925, 6
        %v3158 = vsel %vm1718, %v3157, %v3156
        %v3159 = vrot.slane %v2926, 5
        %v3160 = vsel %vm1721, %v3159, %v3158
        %v3161 = vrot.slane %v2927, 4
        %v3162 = vsel %vm1724, %v3161, %v3160
        %v3163 = vrot.slane %v2928, 3
        %v3164 = vsel %vm1727, %v3163, %v3162
        %v3165 = vrot.slane %v2929, 2
        %v3166 = vsel %vm1730, %v3165, %v3164
        %v3167 = vrot.slane %v2930, 1
        %v3168 = vsel %vm1733, %v3167, %v3166
        %v3169 = vrot.slane %v2932, 7
        %v3170 = vsel %vm1715, %v3169, %v2931
        %v3171 = vrot.slane %v2933, 6
        %v3172 = vsel %vm1718, %v3171, %v3170
        %v3173 = vrot.slane %v2934, 5
        %v3174 = vsel %vm1721, %v3173, %v3172
        %v3175 = vrot.slane %v2935, 4
        %v3176 = vsel %vm1724, %v3175, %v3174
        %v3177 = vrot.slane %v2936, 3
        %v3178 = vsel %vm1727, %v3177, %v3176
        %v3179 = vrot.slane %v2937, 2
        %v3180 = vsel %vm1730, %v3179, %v3178
        %v3181 = vrot.slane %v2938, 1
        %v3182 = vsel %vm1733, %v3181, %v3180
        %v3183 = vrot.slane %v2940, 7
        %v3184 = vsel %vm1715, %v3183, %v2939
        %v3185 = vrot.slane %v2941, 6
        %v3186 = vsel %vm1718, %v3185, %v3184
        %v3187 = vrot.slane %v2942, 5
        %v3188 = vsel %vm1721, %v3187, %v3186
        %v3189 = vrot.slane %v2943, 4
        %v3190 = vsel %vm1724, %v3189, %v3188
        %v3191 = vrot.slane %v2944, 3
        %v3192 = vsel %vm1727, %v3191, %v3190
        %v3193 = vrot.slane %v2945, 2
        %v3194 = vsel %vm1730, %v3193, %v3192
        %v3195 = vrot.slane %v2946, 1
        %v3196 = vsel %vm1733, %v3195, %v3194
        %v3197 = vrot.slane %v2948, 7
        %v3198 = vsel %vm1715, %v3197, %v2947
        %v3199 = vrot.slane %v2949, 6
        %v3200 = vsel %vm1718, %v3199, %v3198
        %v3201 = vrot.slane %v2950, 5
        %v3202 = vsel %vm1721, %v3201, %v3200
        %v3203 = vrot.slane %v2951, 4
        %v3204 = vsel %vm1724, %v3203, %v3202
        %v3205 = vrot.slane %v2952, 3
        %v3206 = vsel %vm1727, %v3205, %v3204
        %v3207 = vrot.slane %v2953, 2
        %v3208 = vsel %vm1730, %v3207, %v3206
        %v3209 = vrot.slane %v2954, 1
        %v3210 = vsel %vm1733, %v3209, %v3208
        %v3211 = vrot.slane %v2956, 7
        %v3212 = vsel %vm1715, %v3211, %v2955
        %v3213 = vrot.slane %v2957, 6
        %v3214 = vsel %vm1718, %v3213, %v3212
        %v3215 = vrot.slane %v2958, 5
        %v3216 = vsel %vm1721, %v3215, %v3214
        %v3217 = vrot.slane %v2959, 4
        %v3218 = vsel %vm1724, %v3217, %v3216
        %v3219 = vrot.slane %v2960, 3
        %v3220 = vsel %vm1727, %v3219, %v3218
        %v3221 = vrot.slane %v2961, 2
        %v3222 = vsel %vm1730, %v3221, %v3220
        %v3223 = vrot.slane %v2962, 1
        %v3224 = vsel %vm1733, %v3223, %v3222
        %v3225 = vrot.slane %v2964, 7
        %v3226 = vsel %vm1715, %v3225, %v2963
        %v3227 = vrot.slane %v2965, 6
        %v3228 = vsel %vm1718, %v3227, %v3226
        %v3229 = vrot.slane %v2966, 5
        %v3230 = vsel %vm1721, %v3229, %v3228
        %v3231 = vrot.slane %v2967, 4
        %v3232 = vsel %vm1724, %v3231, %v3230
        %v3233 = vrot.slane %v2968, 3
        %v3234 = vsel %vm1727, %v3233, %v3232
        %v3235 = vrot.slane %v2969, 2
        %v3236 = vsel %vm1730, %v3235, %v3234
        %v3237 = vrot.slane %v2970, 1
        %v3238 = vsel %vm1733, %v3237, %v3236
        %v3239 = vrot.slane %v2972, 7
        %v3240 = vsel %vm1715, %v3239, %v2971
        %v3241 = vrot.slane %v2973, 6
        %v3242 = vsel %vm1718, %v3241, %v3240
        %v3243 = vrot.slane %v2974, 5
        %v3244 = vsel %vm1721, %v3243, %v3242
        %v3245 = vrot.slane %v2975, 4
        %v3246 = vsel %vm1724, %v3245, %v3244
        %v3247 = vrot.slane %v2976, 3
        %v3248 = vsel %vm1727, %v3247, %v3246
        %v3249 = vrot.slane %v2977, 2
        %v3250 = vsel %vm1730, %v3249, %v3248
        %v3251 = vrot.slane %v2978, 1
        %v3252 = vsel %vm1733, %v3251, %v3250
        %v3253 = vrot.slane %v2980, 7
        %v3254 = vsel %vm1715, %v3253, %v2979
        %v3255 = vrot.slane %v2981, 6
        %v3256 = vsel %vm1718, %v3255, %v3254
        %v3257 = vrot.slane %v2982, 5
        %v3258 = vsel %vm1721, %v3257, %v3256
        %v3259 = vrot.slane %v2983, 4
        %v3260 = vsel %vm1724, %v3259, %v3258
        %v3261 = vrot.slane %v2984, 3
        %v3262 = vsel %vm1727, %v3261, %v3260
        %v3263 = vrot.slane %v2985, 2
        %v3264 = vsel %vm1730, %v3263, %v3262
        %v3265 = vrot.slane %v2986, 1
        %v3266 = vsel %vm1733, %v3265, %v3264
        %v3267 = vrot.slane %v2988, 7
        %v3268 = vsel %vm1715, %v3267, %v2987
        %v3269 = vrot.slane %v2989, 6
        %v3270 = vsel %vm1718, %v3269, %v3268
        %v3271 = vrot.slane %v2990, 5
        %v3272 = vsel %vm1721, %v3271, %v3270
        %v3273 = vrot.slane %v2991, 4
        %v3274 = vsel %vm1724, %v3273, %v3272
        %v3275 = vrot.slane %v2992, 3
        %v3276 = vsel %vm1727, %v3275, %v3274
        %v3277 = vrot.slane %v2993, 2
        %v3278 = vsel %vm1730, %v3277, %v3276
        %v3279 = vrot.slane %v2994, 1
        %v3280 = vsel %vm1733, %v3279, %v3278
        %v3294 = vmul.f32 %v2828, %v3112
        %v3295 = vmul.f32 %v2833, %v3126
        %v3296 = vmul.f32 %v2838, %v3140
        %v3297 = vmul.f32 %v2843, %v3154
        %v3298 = vmul.f32 %v2848, %v3168
        %v3299 = vmul.f32 %v2853, %v3182
        %v3300 = vmul.f32 %v2858, %v3196
        %v3301 = vmul.f32 %v2863, %v3210
        %v3302 = vmul.f32 %v2868, %v3224
        %v3303 = vmul.f32 %v2873, %v3238
        %v3304 = vmul.f32 %v2878, %v3252
        %v3305 = vmul.f32 %v2883, %v3266
        %v3306 = vmul.f32 %v2888, %v3280
        %v3307 = vadd.f32 %v2618, %v3294
        %v3308 = vadd.f32 %v2619, %v3295
        %v3309 = vadd.f32 %v2620, %v3296
        %v3310 = vadd.f32 %v2621, %v3297
        %v3311 = vadd.f32 %v2622, %v3298
        %v3312 = vadd.f32 %v2623, %v3299
        %v3313 = vadd.f32 %v2624, %v3300
        %v3314 = vadd.f32 %v2625, %v3301
        %v3315 = vadd.f32 %v2626, %v3302
        %v3316 = vadd.f32 %v2627, %v3303
        %v3317 = vadd.f32 %v2628, %v3304
        %v3318 = vadd.f32 %v2629, %v3305
        %v3319 = vadd.f32 %v2630, %v3306
        %3320 = vset.pattern.permute.xlu0 3
        %3321 = vperm.xlu0 %3320, %v1216
        %v3322 = vpop.permute.xlu0 %3321
        %3323 = vset.pattern.permute.xlu0 3
        %3324 = vperm.xlu0 %3323, %v1217
        %v3325 = vpop.permute.xlu0 %3324
        %3326 = vset.pattern.permute.xlu0 3
        %3327 = vperm.xlu0 %3326, %v1218
        %v3328 = vpop.permute.xlu0 %3327
        %3329 = vset.pattern.permute.xlu0 3
        %3330 = vperm.xlu0 %3329, %v1219
        %v3331 = vpop.permute.xlu0 %3330
        %3332 = vset.pattern.permute.xlu0 3
        %3333 = vperm.xlu0 %3332, %v1220
        %v3334 = vpop.permute.xlu0 %3333
        %3335 = vset.pattern.permute.xlu0 3
        %3336 = vperm.xlu0 %3335, %v1221
        %v3337 = vpop.permute.xlu0 %3336
        %3338 = vset.pattern.permute.xlu0 3
        %3339 = vperm.xlu0 %3338, %v1222
        %v3340 = vpop.permute.xlu0 %3339
        %3341 = vset.pattern.permute.xlu0 3
        %3342 = vperm.xlu0 %3341, %v1223
        %v3343 = vpop.permute.xlu0 %3342
        %3344 = vset.pattern.permute.xlu0 3
        %3345 = vperm.xlu0 %3344, %v1224
        %v3346 = vpop.permute.xlu0 %3345
        %3347 = vset.pattern.permute.xlu0 3
        %3348 = vperm.xlu0 %3347, %v1225
        %v3349 = vpop.permute.xlu0 %3348
        %3350 = vset.pattern.permute.xlu0 3
        %3351 = vperm.xlu0 %3350, %v1226
        %v3352 = vpop.permute.xlu0 %3351
        %3353 = vset.pattern.permute.xlu0 3
        %3354 = vperm.xlu0 %3353, %v1227
        %v3355 = vpop.permute.xlu0 %3354
        %3356 = vset.pattern.permute.xlu0 3
        %3357 = vperm.xlu0 %3356, %v1228
        %v3358 = vpop.permute.xlu0 %3357
        %vm3359 = vcmp.eq.s32.totalorder %v3322, %v1244
        %vm3360 = vcmp.eq.s32.totalorder %v3325, %v1244
        %vm3361 = vcmp.eq.s32.totalorder %v3328, %v1244
        %vm3362 = vcmp.eq.s32.totalorder %v3331, %v1244
        %vm3363 = vcmp.eq.s32.totalorder %v3334, %v1244
        %vm3364 = vcmp.eq.s32.totalorder %v3337, %v1244
        %vm3365 = vcmp.eq.s32.totalorder %v3340, %v1244
        %vm3366 = vcmp.eq.s32.totalorder %v3343, %v1244
        %vm3367 = vcmp.eq.s32.totalorder %v3346, %v1244
        %vm3368 = vcmp.eq.s32.totalorder %v3349, %v1244
        %vm3369 = vcmp.eq.s32.totalorder %v3352, %v1244
        %vm3370 = vcmp.eq.s32.totalorder %v3355, %v1244
        %vm3371 = vcmp.eq.s32.totalorder %v3358, %v1244
        %v3372 = vsel %vm3359, 1, 0
        %v3373 = vsel %vm3360, 1, 0
        %v3374 = vsel %vm3361, 1, 0
        %v3375 = vsel %vm3362, 1, 0
        %v3376 = vsel %vm3363, 1, 0
        %v3377 = vsel %vm3364, 1, 0
        %v3378 = vsel %vm3365, 1, 0
        %v3379 = vsel %vm3366, 1, 0
        %v3380 = vsel %vm3367, 1, 0
        %v3381 = vsel %vm3368, 1, 0
        %v3382 = vsel %vm3369, 1, 0
        %v3383 = vsel %vm3370, 1, 0
        %v3384 = vsel %vm3371, 1, 0
        %v3385 = vcvt.s32.f32 %v3372
        %v3386 = vcvt.s32.f32 %v3373
        %v3387 = vcvt.s32.f32 %v3374
        %v3388 = vcvt.s32.f32 %v3375
        %v3389 = vcvt.s32.f32 %v3376
        %v3390 = vcvt.s32.f32 %v3377
        %v3391 = vcvt.s32.f32 %v3378
        %v3392 = vcvt.s32.f32 %v3379
        %v3393 = vcvt.s32.f32 %v3380
        %v3394 = vcvt.s32.f32 %v3381
        %v3395 = vcvt.s32.f32 %v3382
        %v3396 = vcvt.s32.f32 %v3383
        %v3397 = vcvt.s32.f32 %v3384
        %v3398 = vadd.f32 %v2709, %v3385
        %v3399 = vadd.f32 %v2710, %v3386
        %v3400 = vadd.f32 %v2711, %v3387
        %v3401 = vadd.f32 %v2712, %v3388
        %v3402 = vadd.f32 %v2713, %v3389
        %v3403 = vadd.f32 %v2714, %v3390
        %v3404 = vadd.f32 %v2715, %v3391
        %v3405 = vadd.f32 %v2716, %v3392
        %v3406 = vadd.f32 %v2717, %v3393
        %v3407 = vadd.f32 %v2718, %v3394
        %v3408 = vadd.f32 %v2719, %v3395
        %v3409 = vadd.f32 %v2720, %v3396
        %v3410 = vadd.f32 %v2721, %v3397
        %v3412 = vsel %vm1336, %v3385, 0
        %v3415 = vsel %vm1336, %v3386, 0
        %v3418 = vsel %vm1336, %v3387, 0
        %v3421 = vsel %vm1336, %v3388, 0
        %v3424 = vsel %vm1336, %v3389, 0
        %v3427 = vsel %vm1336, %v3390, 0
        %v3430 = vsel %vm1336, %v3391, 0
        %v3433 = vsel %vm1336, %v3392, 0
        %v3436 = vsel %vm1336, %v3393, 0
        %v3439 = vsel %vm1336, %v3394, 0
        %v3442 = vsel %vm1336, %v3395, 0
        %v3445 = vsel %vm1336, %v3396, 0
        %v3448 = vsel %vm1336, %v3397, 0
        %3450 = vmatprep.subr.mxu0 0.0
        %3451 = vmatpush1.msra.mxu0 0.0
        %3452 = vmatprep.subr.mxu0 0.0
        %3453 = vmatpush1.msra.mxu0 0.0
        %3454 = vmatprep.subr.mxu0 0.0
        %3455 = vmatpush1.msra.mxu0 0.0
        %3456 = vmatprep.subr.mxu0 0.0
        %3457 = vmatpush1.msra.mxu0 0.0
        %3458 = vmatprep.subr.mxu0 0.0
        %3459 = vmatpush1.msra.mxu0 0.0
        %3460 = vmatprep.subr.mxu0 0.0
        %3461 = vmatpush1.msra.mxu0 0.0
        %3462 = vmatprep.subr.mxu0 0.0
        %3463 = vmatpush1.msra.mxu0 0.0
        %3464 = vmatprep.subr.mxu0 0.0
        %3465 = vmatpush1.msra.mxu0 0.0
        %3466 = vmatprep.subr.mxu0 0.0
        %3467 = vmatpush1.msra.mxu0 0.0
        %3468 = vmatprep.subr.mxu0 0.0
        %3469 = vmatpush1.msra.mxu0 %v1242
        %3470 = vmatprep.subr.mxu0 0.0
        %3471 = vmatpush1.msra.mxu0 %v1241
        %3472 = vmatprep.subr.mxu0 0.0
        %3473 = vmatpush1.msra.mxu0 %v1240
        %3474 = vmatprep.subr.mxu0 0.0
        %3475 = vmatpush1.msra.mxu0 %v1239
        %3476 = vmatprep.subr.mxu0 0.0
        %3477 = vmatpush1.msra.mxu0 %v1238
        %3478 = vmatprep.subr.mxu0 0.0
        %3479 = vmatpush1.msra.mxu0 %v1237
        %3480 = vmatprep.subr.mxu0 0.0
        %3481 = vmatpush1.msra.mxu0 %v1236
        %3482 = vmatprep.subr.mxu0 0.0
        %3483 = vmatpush2.msra.mxu0 0.0
        %3484 = vmatprep.subr.mxu0 0.0
        %3485 = vmatpush2.msra.mxu0 0.0
        %3486 = vmatprep.subr.mxu0 0.0
        %3487 = vmatpush2.msra.mxu0 0.0
        %3488 = vmatprep.subr.mxu0 0.0
        %3489 = vmatpush2.msra.mxu0 0.0
        %3490 = vmatprep.subr.mxu0 0.0
        %3491 = vmatpush2.msra.mxu0 0.0
        %3492 = vmatprep.subr.mxu0 0.0
        %3493 = vmatpush2.msra.mxu0 0.0
        %3494 = vmatprep.subr.mxu0 0.0
        %3495 = vmatpush2.msra.mxu0 0.0
        %3496 = vmatprep.subr.mxu0 0.0
        %3497 = vmatpush2.msra.mxu0 0.0
        %3498 = vmatprep.subr.mxu0 0.0
        %3499 = vmatpush2.msra.mxu0 0.0
        %3500 = vmatprep.subr.mxu0 0.0
        %3501 = vmatpush2.msra.mxu0 0.0
        %3502 = vmatprep.subr.mxu0 0.0
        %3503 = vmatpush2.msra.mxu0 0.0
        %3504 = vmatprep.subr.mxu0 0.0
        %3505 = vmatpush2.msra.mxu0 0.0
        %3506 = vmatprep.subr.mxu0 0.0
        %3507 = vmatpush2.msra.mxu0 0.0
        %3508 = vmatprep.subr.mxu0 0.0
        %3509 = vmatpush2.msra.mxu0 0.0
        %3510 = vmatprep.subr.mxu0 0.0
        %3511 = vmatpush2.msra.mxu0 0.0
        %3512 = vmatprep.subr.mxu0 0.0
        %3513 = vmatpush2.msra.mxu0 0.0
        %3514 = vmatprep.mubr.f32.mxu0 0.0
        %3515 = vmatmul.mubr.f32.gmra.mxu0 %v3412
        %v3516 = vpop.f32.mrf.mxu0
        %v3517 = vadd.f32 0.0, %v3516
        %v3518 = vpop.f32.mrf.mxu0
        %3519 = vmatprep.mubr.f32.mxu0 0.0
        %3520 = vmatmul.mubr.f32.gmra.mxu0 %v3415
        %v3521 = vpop.f32.mrf.mxu0
        %v3522 = vadd.f32 0.0, %v3521
        %v3523 = vpop.f32.mrf.mxu0
        %3524 = vmatprep.mubr.f32.mxu0 0.0
        %3525 = vmatmul.mubr.f32.gmra.mxu0 %v3418
        %v3526 = vpop.f32.mrf.mxu0
        %v3527 = vadd.f32 0.0, %v3526
        %v3528 = vpop.f32.mrf.mxu0
        %3529 = vmatprep.mubr.f32.mxu0 0.0
        %3530 = vmatmul.mubr.f32.gmra.mxu0 %v3421
        %v3531 = vpop.f32.mrf.mxu0
        %v3532 = vadd.f32 0.0, %v3531
        %v3533 = vpop.f32.mrf.mxu0
        %3534 = vmatprep.mubr.f32.mxu0 0.0
        %3535 = vmatmul.mubr.f32.gmra.mxu0 %v3424
        %v3536 = vpop.f32.mrf.mxu0
        %v3537 = vadd.f32 0.0, %v3536
        %v3538 = vpop.f32.mrf.mxu0
        %3539 = vmatprep.mubr.f32.mxu0 0.0
        %3540 = vmatmul.mubr.f32.gmra.mxu0 %v3427
        %v3541 = vpop.f32.mrf.mxu0
        %v3542 = vadd.f32 0.0, %v3541
        %v3543 = vpop.f32.mrf.mxu0
        %3544 = vmatprep.mubr.f32.mxu0 0.0
        %3545 = vmatmul.mubr.f32.gmra.mxu0 %v3430
        %v3546 = vpop.f32.mrf.mxu0
        %v3547 = vadd.f32 0.0, %v3546
        %v3548 = vpop.f32.mrf.mxu0
        %3549 = vmatprep.mubr.f32.mxu0 0.0
        %3550 = vmatmul.mubr.f32.gmra.mxu0 %v3433
        %v3551 = vpop.f32.mrf.mxu0
        %v3552 = vadd.f32 0.0, %v3551
        %v3553 = vpop.f32.mrf.mxu0
        %3554 = vmatprep.mubr.f32.mxu0 0.0
        %3555 = vmatmul.mubr.f32.gmra.mxu0 %v3436
        %v3556 = vpop.f32.mrf.mxu0
        %v3557 = vadd.f32 0.0, %v3556
        %v3558 = vpop.f32.mrf.mxu0
        %3559 = vmatprep.mubr.f32.mxu0 0.0
        %3560 = vmatmul.mubr.f32.gmra.mxu0 %v3439
        %v3561 = vpop.f32.mrf.mxu0
        %v3562 = vadd.f32 0.0, %v3561
        %v3563 = vpop.f32.mrf.mxu0
        %3564 = vmatprep.mubr.f32.mxu0 0.0
        %3565 = vmatmul.mubr.f32.gmra.mxu0 %v3442
        %v3566 = vpop.f32.mrf.mxu0
        %v3567 = vadd.f32 0.0, %v3566
        %v3568 = vpop.f32.mrf.mxu0
        %3569 = vmatprep.mubr.f32.mxu0 0.0
        %3570 = vmatmul.mubr.f32.gmra.mxu0 %v3445
        %v3571 = vpop.f32.mrf.mxu0
        %v3572 = vadd.f32 0.0, %v3571
        %v3573 = vpop.f32.mrf.mxu0
        %3574 = vmatprep.mubr.f32.mxu0 0.0
        %3575 = vmatmul.mubr.f32.gmra.mxu0 %v3448
        %v3576 = vpop.f32.mrf.mxu0
        %v3577 = vadd.f32 0.0, %v3576
        %v3578 = vpop.f32.mrf.mxu0
        %3579 = vdwg.mxu0
        %v3580 = vld [vmem:[%s640 + $0x3] sm:$0x1]
        %v3581 = vld [vmem:[%s640 + $0xb] sm:$0x1]
        %v3582 = vld [vmem:[%s640 + $0x13] sm:$0x1]
        %v3583 = vld [vmem:[%s640 + $0x1b] sm:$0x1]
        %v3584 = vld [vmem:[%s640 + $0x23] sm:$0x1]
        %v3585 = vld [vmem:[%s640 + $0x2b] sm:$0x1]
        %v3586 = vld [vmem:[%s640 + $0x33] sm:$0x1]
        %v3587 = vld [vmem:[%s640 + $0x3b] sm:$0x1]
        %v3588 = vld [vmem:[%s640 + $0x43] sm:$0x1]
        %v3589 = vld [vmem:[%s640 + $0x4b] sm:$0x1]
        %v3590 = vld [vmem:[%s640 + $0x53] sm:$0x1]
        %v3591 = vld [vmem:[%s640 + $0x5b] sm:$0x1]
        %v3592 = vld [vmem:[%s640 + $0x63] sm:$0x1]
        %v3593 = vld [vmem:[%s640 + $0x6b] sm:$0x1]
        %v3594 = vld [vmem:[%s640 + $0x73] sm:$0x1]
        %v3595 = vld [vmem:[%s640 + $0x7b] sm:$0x1]
        %v3596 = vld [vmem:[%s640 + $0x83] sm:$0x1]
        %v3597 = vld [vmem:[%s640 + $0x8b] sm:$0x1]
        %v3598 = vld [vmem:[%s640 + $0x93] sm:$0x1]
        %v3599 = vld [vmem:[%s640 + $0x9b] sm:$0x1]
        %v3600 = vld [vmem:[%s640 + $0xa3] sm:$0x1]
        %v3601 = vld [vmem:[%s640 + $0xab] sm:$0x1]
        %v3602 = vld [vmem:[%s640 + $0xb3] sm:$0x1]
        %v3603 = vld [vmem:[%s640 + $0xbb] sm:$0x1]
        %v3604 = vld [vmem:[%s640 + $0xc3] sm:$0x1]
        %v3605 = vld [vmem:[%s640 + $0xcb] sm:$0x1]
        %v3606 = vld [vmem:[%s640 + $0xd3] sm:$0x1]
        %v3607 = vld [vmem:[%s640 + $0xdb] sm:$0x1]
        %v3608 = vld [vmem:[%s640 + $0xe3] sm:$0x1]
        %v3609 = vld [vmem:[%s640 + $0xeb] sm:$0x1]
        %v3610 = vld [vmem:[%s640 + $0xf3] sm:$0x1]
        %v3611 = vld [vmem:[%s640 + $0xfb] sm:$0x1]
        %v3612 = vld [vmem:[%s640 + $0x103] sm:$0x1]
        %v3613 = vld [vmem:[%s640 + $0x10b] sm:$0x1]
        %v3614 = vld [vmem:[%s640 + $0x113] sm:$0x1]
        %v3615 = vld [vmem:[%s640 + $0x11b] sm:$0x1]
        %v3616 = vld [vmem:[%s640 + $0x123] sm:$0x1]
        %v3617 = vld [vmem:[%s640 + $0x12b] sm:$0x1]
        %v3618 = vld [vmem:[%s640 + $0x133] sm:$0x1]
        %v3619 = vld [vmem:[%s640 + $0x13b] sm:$0x1]
        %v3620 = vld [vmem:[%s640 + $0x143] sm:$0x1]
        %v3621 = vld [vmem:[%s640 + $0x14b] sm:$0x1]
        %v3622 = vld [vmem:[%s640 + $0x153] sm:$0x1]
        %v3623 = vld [vmem:[%s640 + $0x15b] sm:$0x1]
        %v3624 = vld [vmem:[%s640 + $0x163] sm:$0x1]
        %v3625 = vld [vmem:[%s640 + $0x16b] sm:$0x1]
        %v3626 = vld [vmem:[%s640 + $0x173] sm:$0x1]
        %v3627 = vld [vmem:[%s640 + $0x17b] sm:$0x1]
        %v3628 = vld [vmem:[%s640 + $0x183] sm:$0x1]
        %v3629 = vld [vmem:[%s640 + $0x18b] sm:$0x1]
        %v3630 = vld [vmem:[%s640 + $0x193] sm:$0x1]
        %v3631 = vld [vmem:[%s640 + $0x19b] sm:$0x1]
        %v3632 = vld [vmem:[%s640 + $0x1a3] sm:$0x1]
        %v3633 = vld [vmem:[%s640 + $0x1ab] sm:$0x1]
        %v3634 = vld [vmem:[%s640 + $0x1b3] sm:$0x1]
        %v3635 = vld [vmem:[%s640 + $0x1bb] sm:$0x1]
        %v3636 = vld [vmem:[%s640 + $0x1c3] sm:$0x1]
        %v3637 = vld [vmem:[%s640 + $0x1cb] sm:$0x1]
        %v3638 = vld [vmem:[%s640 + $0x1d3] sm:$0x1]
        %v3639 = vld [vmem:[%s640 + $0x1db] sm:$0x1]
        %v3640 = vld [vmem:[%s640 + $0x1e3] sm:$0x1]
        %v3641 = vld [vmem:[%s640 + $0x1eb] sm:$0x1]
        %v3642 = vld [vmem:[%s640 + $0x1f3] sm:$0x1]
        %v3643 = vld [vmem:[%s640 + $0x1fb] sm:$0x1]
        %v3644 = vld [vmem:[%s640 + $0x203] sm:$0x1]
        %v3645 = vld [vmem:[%s640 + $0x20b] sm:$0x1]
        %v3646 = vld [vmem:[%s640 + $0x213] sm:$0x1]
        %v3647 = vld [vmem:[%s640 + $0x21b] sm:$0x1]
        %v3648 = vld [vmem:[%s640 + $0x223] sm:$0x1]
        %v3649 = vld [vmem:[%s640 + $0x22b] sm:$0x1]
        %v3650 = vld [vmem:[%s640 + $0x233] sm:$0x1]
        %v3651 = vld [vmem:[%s640 + $0x23b] sm:$0x1]
        %v3652 = vld [vmem:[%s640 + $0x243] sm:$0x1]
        %v3653 = vld [vmem:[%s640 + $0x24b] sm:$0x1]
        %v3654 = vld [vmem:[%s640 + $0x253] sm:$0x1]
        %v3655 = vld [vmem:[%s640 + $0x25b] sm:$0x1]
        %v3656 = vld [vmem:[%s640 + $0x263] sm:$0x1]
        %v3657 = vld [vmem:[%s640 + $0x26b] sm:$0x1]
        %v3658 = vld [vmem:[%s640 + $0x273] sm:$0x1]
        %v3659 = vld [vmem:[%s640 + $0x27b] sm:$0x1]
        %v3660 = vld [vmem:[%s640 + $0x283] sm:$0x1]
        %v3661 = vld [vmem:[%s640 + $0x28b] sm:$0x1]
        %v3662 = vld [vmem:[%s640 + $0x293] sm:$0x1]
        %v3663 = vld [vmem:[%s640 + $0x29b] sm:$0x1]
        %v3664 = vld [vmem:[%s640 + $0x2a3] sm:$0x1]
        %v3665 = vld [vmem:[%s640 + $0x2ab] sm:$0x1]
        %v3666 = vld [vmem:[%s640 + $0x2b3] sm:$0x1]
        %v3667 = vld [vmem:[%s640 + $0x2bb] sm:$0x1]
        %v3668 = vld [vmem:[%s640 + $0x2c3] sm:$0x1]
        %v3669 = vld [vmem:[%s640 + $0x2cb] sm:$0x1]
        %v3670 = vld [vmem:[%s640 + $0x2d3] sm:$0x1]
        %v3671 = vld [vmem:[%s640 + $0x2db] sm:$0x1]
        %v3672 = vld [vmem:[%s640 + $0x2e3] sm:$0x1]
        %v3673 = vld [vmem:[%s640 + $0x2eb] sm:$0x1]
        %v3674 = vld [vmem:[%s640 + $0x2f3] sm:$0x1]
        %v3675 = vld [vmem:[%s640 + $0x2fb] sm:$0x1]
        %v3676 = vld [vmem:[%s640 + $0x303] sm:$0x1]
        %v3677 = vld [vmem:[%s640 + $0x30b] sm:$0x1]
        %v3678 = vld [vmem:[%s640 + $0x313] sm:$0x1]
        %v3679 = vld [vmem:[%s640 + $0x31b] sm:$0x1]
        %v3680 = vld [vmem:[%s640 + $0x323] sm:$0x1]
        %v3681 = vld [vmem:[%s640 + $0x32b] sm:$0x1]
        %v3682 = vld [vmem:[%s640 + $0x333] sm:$0x1]
        %v3683 = vld [vmem:[%s640 + $0x33b] sm:$0x1]
        %v3788 = vrot.slane %v3581, 7
        %v3789 = vsel %vm1715, %v3788, %v3580
        %v3790 = vrot.slane %v3582, 6
        %v3791 = vsel %vm1718, %v3790, %v3789
        %v3792 = vrot.slane %v3583, 5
        %v3793 = vsel %vm1721, %v3792, %v3791
        %v3794 = vrot.slane %v3584, 4
        %v3795 = vsel %vm1724, %v3794, %v3793
        %v3796 = vrot.slane %v3585, 3
        %v3797 = vsel %vm1727, %v3796, %v3795
        %v3798 = vrot.slane %v3586, 2
        %v3799 = vsel %vm1730, %v3798, %v3797
        %v3800 = vrot.slane %v3587, 1
        %v3801 = vsel %vm1733, %v3800, %v3799
        %v3802 = vrot.slane %v3589, 7
        %v3803 = vsel %vm1715, %v3802, %v3588
        %v3804 = vrot.slane %v3590, 6
        %v3805 = vsel %vm1718, %v3804, %v3803
        %v3806 = vrot.slane %v3591, 5
        %v3807 = vsel %vm1721, %v3806, %v3805
        %v3808 = vrot.slane %v3592, 4
        %v3809 = vsel %vm1724, %v3808, %v3807
        %v3810 = vrot.slane %v3593, 3
        %v3811 = vsel %vm1727, %v3810, %v3809
        %v3812 = vrot.slane %v3594, 2
        %v3813 = vsel %vm1730, %v3812, %v3811
        %v3814 = vrot.slane %v3595, 1
        %v3815 = vsel %vm1733, %v3814, %v3813
        %v3816 = vrot.slane %v3597, 7
        %v3817 = vsel %vm1715, %v3816, %v3596
        %v3818 = vrot.slane %v3598, 6
        %v3819 = vsel %vm1718, %v3818, %v3817
        %v3820 = vrot.slane %v3599, 5
        %v3821 = vsel %vm1721, %v3820, %v3819
        %v3822 = vrot.slane %v3600, 4
        %v3823 = vsel %vm1724, %v3822, %v3821
        %v3824 = vrot.slane %v3601, 3
        %v3825 = vsel %vm1727, %v3824, %v3823
        %v3826 = vrot.slane %v3602, 2
        %v3827 = vsel %vm1730, %v3826, %v3825
        %v3828 = vrot.slane %v3603, 1
        %v3829 = vsel %vm1733, %v3828, %v3827
        %v3830 = vrot.slane %v3605, 7
        %v3831 = vsel %vm1715, %v3830, %v3604
        %v3832 = vrot.slane %v3606, 6
        %v3833 = vsel %vm1718, %v3832, %v3831
        %v3834 = vrot.slane %v3607, 5
        %v3835 = vsel %vm1721, %v3834, %v3833
        %v3836 = vrot.slane %v3608, 4
        %v3837 = vsel %vm1724, %v3836, %v3835
        %v3838 = vrot.slane %v3609, 3
        %v3839 = vsel %vm1727, %v3838, %v3837
        %v3840 = vrot.slane %v3610, 2
        %v3841 = vsel %vm1730, %v3840, %v3839
        %v3842 = vrot.slane %v3611, 1
        %v3843 = vsel %vm1733, %v3842, %v3841
        %v3844 = vrot.slane %v3613, 7
        %v3845 = vsel %vm1715, %v3844, %v3612
        %v3846 = vrot.slane %v3614, 6
        %v3847 = vsel %vm1718, %v3846, %v3845
        %v3848 = vrot.slane %v3615, 5
        %v3849 = vsel %vm1721, %v3848, %v3847
        %v3850 = vrot.slane %v3616, 4
        %v3851 = vsel %vm1724, %v3850, %v3849
        %v3852 = vrot.slane %v3617, 3
        %v3853 = vsel %vm1727, %v3852, %v3851
        %v3854 = vrot.slane %v3618, 2
        %v3855 = vsel %vm1730, %v3854, %v3853
        %v3856 = vrot.slane %v3619, 1
        %v3857 = vsel %vm1733, %v3856, %v3855
        %v3858 = vrot.slane %v3621, 7
        %v3859 = vsel %vm1715, %v3858, %v3620
        %v3860 = vrot.slane %v3622, 6
        %v3861 = vsel %vm1718, %v3860, %v3859
        %v3862 = vrot.slane %v3623, 5
        %v3863 = vsel %vm1721, %v3862, %v3861
        %v3864 = vrot.slane %v3624, 4
        %v3865 = vsel %vm1724, %v3864, %v3863
        %v3866 = vrot.slane %v3625, 3
        %v3867 = vsel %vm1727, %v3866, %v3865
        %v3868 = vrot.slane %v3626, 2
        %v3869 = vsel %vm1730, %v3868, %v3867
        %v3870 = vrot.slane %v3627, 1
        %v3871 = vsel %vm1733, %v3870, %v3869
        %v3872 = vrot.slane %v3629, 7
        %v3873 = vsel %vm1715, %v3872, %v3628
        %v3874 = vrot.slane %v3630, 6
        %v3875 = vsel %vm1718, %v3874, %v3873
        %v3876 = vrot.slane %v3631, 5
        %v3877 = vsel %vm1721, %v3876, %v3875
        %v3878 = vrot.slane %v3632, 4
        %v3879 = vsel %vm1724, %v3878, %v3877
        %v3880 = vrot.slane %v3633, 3
        %v3881 = vsel %vm1727, %v3880, %v3879
        %v3882 = vrot.slane %v3634, 2
        %v3883 = vsel %vm1730, %v3882, %v3881
        %v3884 = vrot.slane %v3635, 1
        %v3885 = vsel %vm1733, %v3884, %v3883
        %v3886 = vrot.slane %v3637, 7
        %v3887 = vsel %vm1715, %v3886, %v3636
        %v3888 = vrot.slane %v3638, 6
        %v3889 = vsel %vm1718, %v3888, %v3887
        %v3890 = vrot.slane %v3639, 5
        %v3891 = vsel %vm1721, %v3890, %v3889
        %v3892 = vrot.slane %v3640, 4
        %v3893 = vsel %vm1724, %v3892, %v3891
        %v3894 = vrot.slane %v3641, 3
        %v3895 = vsel %vm1727, %v3894, %v3893
        %v3896 = vrot.slane %v3642, 2
        %v3897 = vsel %vm1730, %v3896, %v3895
        %v3898 = vrot.slane %v3643, 1
        %v3899 = vsel %vm1733, %v3898, %v3897
        %v3900 = vrot.slane %v3645, 7
        %v3901 = vsel %vm1715, %v3900, %v3644
        %v3902 = vrot.slane %v3646, 6
        %v3903 = vsel %vm1718, %v3902, %v3901
        %v3904 = vrot.slane %v3647, 5
        %v3905 = vsel %vm1721, %v3904, %v3903
        %v3906 = vrot.slane %v3648, 4
        %v3907 = vsel %vm1724, %v3906, %v3905
        %v3908 = vrot.slane %v3649, 3
        %v3909 = vsel %vm1727, %v3908, %v3907
        %v3910 = vrot.slane %v3650, 2
        %v3911 = vsel %vm1730, %v3910, %v3909
        %v3912 = vrot.slane %v3651, 1
        %v3913 = vsel %vm1733, %v3912, %v3911
        %v3914 = vrot.slane %v3653, 7
        %v3915 = vsel %vm1715, %v3914, %v3652
        %v3916 = vrot.slane %v3654, 6
        %v3917 = vsel %vm1718, %v3916, %v3915
        %v3918 = vrot.slane %v3655, 5
        %v3919 = vsel %vm1721, %v3918, %v3917
        %v3920 = vrot.slane %v3656, 4
        %v3921 = vsel %vm1724, %v3920, %v3919
        %v3922 = vrot.slane %v3657, 3
        %v3923 = vsel %vm1727, %v3922, %v3921
        %v3924 = vrot.slane %v3658, 2
        %v3925 = vsel %vm1730, %v3924, %v3923
        %v3926 = vrot.slane %v3659, 1
        %v3927 = vsel %vm1733, %v3926, %v3925
        %v3928 = vrot.slane %v3661, 7
        %v3929 = vsel %vm1715, %v3928, %v3660
        %v3930 = vrot.slane %v3662, 6
        %v3931 = vsel %vm1718, %v3930, %v3929
        %v3932 = vrot.slane %v3663, 5
        %v3933 = vsel %vm1721, %v3932, %v3931
        %v3934 = vrot.slane %v3664, 4
        %v3935 = vsel %vm1724, %v3934, %v3933
        %v3936 = vrot.slane %v3665, 3
        %v3937 = vsel %vm1727, %v3936, %v3935
        %v3938 = vrot.slane %v3666, 2
        %v3939 = vsel %vm1730, %v3938, %v3937
        %v3940 = vrot.slane %v3667, 1
        %v3941 = vsel %vm1733, %v3940, %v3939
        %v3942 = vrot.slane %v3669, 7
        %v3943 = vsel %vm1715, %v3942, %v3668
        %v3944 = vrot.slane %v3670, 6
        %v3945 = vsel %vm1718, %v3944, %v3943
        %v3946 = vrot.slane %v3671, 5
        %v3947 = vsel %vm1721, %v3946, %v3945
        %v3948 = vrot.slane %v3672, 4
        %v3949 = vsel %vm1724, %v3948, %v3947
        %v3950 = vrot.slane %v3673, 3
        %v3951 = vsel %vm1727, %v3950, %v3949
        %v3952 = vrot.slane %v3674, 2
        %v3953 = vsel %vm1730, %v3952, %v3951
        %v3954 = vrot.slane %v3675, 1
        %v3955 = vsel %vm1733, %v3954, %v3953
        %v3956 = vrot.slane %v3677, 7
        %v3957 = vsel %vm1715, %v3956, %v3676
        %v3958 = vrot.slane %v3678, 6
        %v3959 = vsel %vm1718, %v3958, %v3957
        %v3960 = vrot.slane %v3679, 5
        %v3961 = vsel %vm1721, %v3960, %v3959
        %v3962 = vrot.slane %v3680, 4
        %v3963 = vsel %vm1724, %v3962, %v3961
        %v3964 = vrot.slane %v3681, 3
        %v3965 = vsel %vm1727, %v3964, %v3963
        %v3966 = vrot.slane %v3682, 2
        %v3967 = vsel %vm1730, %v3966, %v3965
        %v3968 = vrot.slane %v3683, 1
        %v3969 = vsel %vm1733, %v3968, %v3967
        %v3983 = vmul.f32 %v3517, %v3801
        %v3984 = vmul.f32 %v3522, %v3815
        %v3985 = vmul.f32 %v3527, %v3829
        %v3986 = vmul.f32 %v3532, %v3843
        %v3987 = vmul.f32 %v3537, %v3857
        %v3988 = vmul.f32 %v3542, %v3871
        %v3989 = vmul.f32 %v3547, %v3885
        %v3990 = vmul.f32 %v3552, %v3899
        %v3991 = vmul.f32 %v3557, %v3913
        %v3992 = vmul.f32 %v3562, %v3927
        %v3993 = vmul.f32 %v3567, %v3941
        %v3994 = vmul.f32 %v3572, %v3955
        %v3995 = vmul.f32 %v3577, %v3969
        %v3996 = vadd.f32 %v3307, %v3983
        %v3997 = vadd.f32 %v3308, %v3984
        %v3998 = vadd.f32 %v3309, %v3985
        %v3999 = vadd.f32 %v3310, %v3986
        %v4000 = vadd.f32 %v3311, %v3987
        %v4001 = vadd.f32 %v3312, %v3988
        %v4002 = vadd.f32 %v3313, %v3989
        %v4003 = vadd.f32 %v3314, %v3990
        %v4004 = vadd.f32 %v3315, %v3991
        %v4005 = vadd.f32 %v3316, %v3992
        %v4006 = vadd.f32 %v3317, %v3993
        %v4007 = vadd.f32 %v3318, %v3994
        %v4008 = vadd.f32 %v3319, %v3995
        %4009 = vset.pattern.permute.xlu0 4
        %4010 = vperm.xlu0 %4009, %v1216
        %v4011 = vpop.permute.xlu0 %4010
        %4012 = vset.pattern.permute.xlu0 4
        %4013 = vperm.xlu0 %4012, %v1217
        %v4014 = vpop.permute.xlu0 %4013
        %4015 = vset.pattern.permute.xlu0 4
        %4016 = vperm.xlu0 %4015, %v1218
        %v4017 = vpop.permute.xlu0 %4016
        %4018 = vset.pattern.permute.xlu0 4
        %4019 = vperm.xlu0 %4018, %v1219
        %v4020 = vpop.permute.xlu0 %4019
        %4021 = vset.pattern.permute.xlu0 4
        %4022 = vperm.xlu0 %4021, %v1220
        %v4023 = vpop.permute.xlu0 %4022
        %4024 = vset.pattern.permute.xlu0 4
        %4025 = vperm.xlu0 %4024, %v1221
        %v4026 = vpop.permute.xlu0 %4025
        %4027 = vset.pattern.permute.xlu0 4
        %4028 = vperm.xlu0 %4027, %v1222
        %v4029 = vpop.permute.xlu0 %4028
        %4030 = vset.pattern.permute.xlu0 4
        %4031 = vperm.xlu0 %4030, %v1223
        %v4032 = vpop.permute.xlu0 %4031
        %4033 = vset.pattern.permute.xlu0 4
        %4034 = vperm.xlu0 %4033, %v1224
        %v4035 = vpop.permute.xlu0 %4034
        %4036 = vset.pattern.permute.xlu0 4
        %4037 = vperm.xlu0 %4036, %v1225
        %v4038 = vpop.permute.xlu0 %4037
        %4039 = vset.pattern.permute.xlu0 4
        %4040 = vperm.xlu0 %4039, %v1226
        %v4041 = vpop.permute.xlu0 %4040
        %4042 = vset.pattern.permute.xlu0 4
        %4043 = vperm.xlu0 %4042, %v1227
        %v4044 = vpop.permute.xlu0 %4043
        %4045 = vset.pattern.permute.xlu0 4
        %4046 = vperm.xlu0 %4045, %v1228
        %v4047 = vpop.permute.xlu0 %4046
        %vm4048 = vcmp.eq.s32.totalorder %v4011, %v1244
        %vm4049 = vcmp.eq.s32.totalorder %v4014, %v1244
        %vm4050 = vcmp.eq.s32.totalorder %v4017, %v1244
        %vm4051 = vcmp.eq.s32.totalorder %v4020, %v1244
        %vm4052 = vcmp.eq.s32.totalorder %v4023, %v1244
        %vm4053 = vcmp.eq.s32.totalorder %v4026, %v1244
        %vm4054 = vcmp.eq.s32.totalorder %v4029, %v1244
        %vm4055 = vcmp.eq.s32.totalorder %v4032, %v1244
        %vm4056 = vcmp.eq.s32.totalorder %v4035, %v1244
        %vm4057 = vcmp.eq.s32.totalorder %v4038, %v1244
        %vm4058 = vcmp.eq.s32.totalorder %v4041, %v1244
        %vm4059 = vcmp.eq.s32.totalorder %v4044, %v1244
        %vm4060 = vcmp.eq.s32.totalorder %v4047, %v1244
        %v4061 = vsel %vm4048, 1, 0
        %v4062 = vsel %vm4049, 1, 0
        %v4063 = vsel %vm4050, 1, 0
        %v4064 = vsel %vm4051, 1, 0
        %v4065 = vsel %vm4052, 1, 0
        %v4066 = vsel %vm4053, 1, 0
        %v4067 = vsel %vm4054, 1, 0
        %v4068 = vsel %vm4055, 1, 0
        %v4069 = vsel %vm4056, 1, 0
        %v4070 = vsel %vm4057, 1, 0
        %v4071 = vsel %vm4058, 1, 0
        %v4072 = vsel %vm4059, 1, 0
        %v4073 = vsel %vm4060, 1, 0
        %v4074 = vcvt.s32.f32 %v4061
        %v4075 = vcvt.s32.f32 %v4062
        %v4076 = vcvt.s32.f32 %v4063
        %v4077 = vcvt.s32.f32 %v4064
        %v4078 = vcvt.s32.f32 %v4065
        %v4079 = vcvt.s32.f32 %v4066
        %v4080 = vcvt.s32.f32 %v4067
        %v4081 = vcvt.s32.f32 %v4068
        %v4082 = vcvt.s32.f32 %v4069
        %v4083 = vcvt.s32.f32 %v4070
        %v4084 = vcvt.s32.f32 %v4071
        %v4085 = vcvt.s32.f32 %v4072
        %v4086 = vcvt.s32.f32 %v4073
        %v4087 = vadd.f32 %v3398, %v4074
        %v4088 = vadd.f32 %v3399, %v4075
        %v4089 = vadd.f32 %v3400, %v4076
        %v4090 = vadd.f32 %v3401, %v4077
        %v4091 = vadd.f32 %v3402, %v4078
        %v4092 = vadd.f32 %v3403, %v4079
        %v4093 = vadd.f32 %v3404, %v4080
        %v4094 = vadd.f32 %v3405, %v4081
        %v4095 = vadd.f32 %v3406, %v4082
        %v4096 = vadd.f32 %v3407, %v4083
        %v4097 = vadd.f32 %v3408, %v4084
        %v4098 = vadd.f32 %v3409, %v4085
        %v4099 = vadd.f32 %v3410, %v4086
        %v4101 = vsel %vm1336, %v4074, 0
        %v4104 = vsel %vm1336, %v4075, 0
        %v4107 = vsel %vm1336, %v4076, 0
        %v4110 = vsel %vm1336, %v4077, 0
        %v4113 = vsel %vm1336, %v4078, 0
        %v4116 = vsel %vm1336, %v4079, 0
        %v4119 = vsel %vm1336, %v4080, 0
        %v4122 = vsel %vm1336, %v4081, 0
        %v4125 = vsel %vm1336, %v4082, 0
        %v4128 = vsel %vm1336, %v4083, 0
        %v4131 = vsel %vm1336, %v4084, 0
        %v4134 = vsel %vm1336, %v4085, 0
        %v4137 = vsel %vm1336, %v4086, 0
        %4139 = vmatprep.subr.mxu0 0.0
        %4140 = vmatpush1.msra.mxu0 0.0
        %4141 = vmatprep.subr.mxu0 0.0
        %4142 = vmatpush1.msra.mxu0 0.0
        %4143 = vmatprep.subr.mxu0 0.0
        %4144 = vmatpush1.msra.mxu0 0.0
        %4145 = vmatprep.subr.mxu0 0.0
        %4146 = vmatpush1.msra.mxu0 0.0
        %4147 = vmatprep.subr.mxu0 0.0
        %4148 = vmatpush1.msra.mxu0 0.0
        %4149 = vmatprep.subr.mxu0 0.0
        %4150 = vmatpush1.msra.mxu0 0.0
        %4151 = vmatprep.subr.mxu0 0.0
        %4152 = vmatpush1.msra.mxu0 0.0
        %4153 = vmatprep.subr.mxu0 0.0
        %4154 = vmatpush1.msra.mxu0 0.0
        %4155 = vmatprep.subr.mxu0 0.0
        %4156 = vmatpush1.msra.mxu0 0.0
        %4157 = vmatprep.subr.mxu0 0.0
        %4158 = vmatpush1.msra.mxu0 %v1242
        %4159 = vmatprep.subr.mxu0 0.0
        %4160 = vmatpush1.msra.mxu0 %v1241
        %4161 = vmatprep.subr.mxu0 0.0
        %4162 = vmatpush1.msra.mxu0 %v1240
        %4163 = vmatprep.subr.mxu0 0.0
        %4164 = vmatpush1.msra.mxu0 %v1239
        %4165 = vmatprep.subr.mxu0 0.0
        %4166 = vmatpush1.msra.mxu0 %v1238
        %4167 = vmatprep.subr.mxu0 0.0
        %4168 = vmatpush1.msra.mxu0 %v1237
        %4169 = vmatprep.subr.mxu0 0.0
        %4170 = vmatpush1.msra.mxu0 %v1236
        %4171 = vmatprep.subr.mxu0 0.0
        %4172 = vmatpush2.msra.mxu0 0.0
        %4173 = vmatprep.subr.mxu0 0.0
        %4174 = vmatpush2.msra.mxu0 0.0
        %4175 = vmatprep.subr.mxu0 0.0
        %4176 = vmatpush2.msra.mxu0 0.0
        %4177 = vmatprep.subr.mxu0 0.0
        %4178 = vmatpush2.msra.mxu0 0.0
        %4179 = vmatprep.subr.mxu0 0.0
        %4180 = vmatpush2.msra.mxu0 0.0
        %4181 = vmatprep.subr.mxu0 0.0
        %4182 = vmatpush2.msra.mxu0 0.0
        %4183 = vmatprep.subr.mxu0 0.0
        %4184 = vmatpush2.msra.mxu0 0.0
        %4185 = vmatprep.subr.mxu0 0.0
        %4186 = vmatpush2.msra.mxu0 0.0
        %4187 = vmatprep.subr.mxu0 0.0
        %4188 = vmatpush2.msra.mxu0 0.0
        %4189 = vmatprep.subr.mxu0 0.0
        %4190 = vmatpush2.msra.mxu0 0.0
        %4191 = vmatprep.subr.mxu0 0.0
        %4192 = vmatpush2.msra.mxu0 0.0
        %4193 = vmatprep.subr.mxu0 0.0
        %4194 = vmatpush2.msra.mxu0 0.0
        %4195 = vmatprep.subr.mxu0 0.0
        %4196 = vmatpush2.msra.mxu0 0.0
        %4197 = vmatprep.subr.mxu0 0.0
        %4198 = vmatpush2.msra.mxu0 0.0
        %4199 = vmatprep.subr.mxu0 0.0
        %4200 = vmatpush2.msra.mxu0 0.0
        %4201 = vmatprep.subr.mxu0 0.0
        %4202 = vmatpush2.msra.mxu0 0.0
        %4203 = vmatprep.mubr.f32.mxu0 0.0
        %4204 = vmatmul.mubr.f32.gmra.mxu0 %v4101
        %v4205 = vpop.f32.mrf.mxu0
        %v4206 = vadd.f32 0.0, %v4205
        %v4207 = vpop.f32.mrf.mxu0
        %4208 = vmatprep.mubr.f32.mxu0 0.0
        %4209 = vmatmul.mubr.f32.gmra.mxu0 %v4104
        %v4210 = vpop.f32.mrf.mxu0
        %v4211 = vadd.f32 0.0, %v4210
        %v4212 = vpop.f32.mrf.mxu0
        %4213 = vmatprep.mubr.f32.mxu0 0.0
        %4214 = vmatmul.mubr.f32.gmra.mxu0 %v4107
        %v4215 = vpop.f32.mrf.mxu0
        %v4216 = vadd.f32 0.0, %v4215
        %v4217 = vpop.f32.mrf.mxu0
        %4218 = vmatprep.mubr.f32.mxu0 0.0
        %4219 = vmatmul.mubr.f32.gmra.mxu0 %v4110
        %v4220 = vpop.f32.mrf.mxu0
        %v4221 = vadd.f32 0.0, %v4220
        %v4222 = vpop.f32.mrf.mxu0
        %4223 = vmatprep.mubr.f32.mxu0 0.0
        %4224 = vmatmul.mubr.f32.gmra.mxu0 %v4113
        %v4225 = vpop.f32.mrf.mxu0
        %v4226 = vadd.f32 0.0, %v4225
        %v4227 = vpop.f32.mrf.mxu0
        %4228 = vmatprep.mubr.f32.mxu0 0.0
        %4229 = vmatmul.mubr.f32.gmra.mxu0 %v4116
        %v4230 = vpop.f32.mrf.mxu0
        %v4231 = vadd.f32 0.0, %v4230
        %v4232 = vpop.f32.mrf.mxu0
        %4233 = vmatprep.mubr.f32.mxu0 0.0
        %4234 = vmatmul.mubr.f32.gmra.mxu0 %v4119
        %v4235 = vpop.f32.mrf.mxu0
        %v4236 = vadd.f32 0.0, %v4235
        %v4237 = vpop.f32.mrf.mxu0
        %4238 = vmatprep.mubr.f32.mxu0 0.0
        %4239 = vmatmul.mubr.f32.gmra.mxu0 %v4122
        %v4240 = vpop.f32.mrf.mxu0
        %v4241 = vadd.f32 0.0, %v4240
        %v4242 = vpop.f32.mrf.mxu0
        %4243 = vmatprep.mubr.f32.mxu0 0.0
        %4244 = vmatmul.mubr.f32.gmra.mxu0 %v4125
        %v4245 = vpop.f32.mrf.mxu0
        %v4246 = vadd.f32 0.0, %v4245
        %v4247 = vpop.f32.mrf.mxu0
        %4248 = vmatprep.mubr.f32.mxu0 0.0
        %4249 = vmatmul.mubr.f32.gmra.mxu0 %v4128
        %v4250 = vpop.f32.mrf.mxu0
        %v4251 = vadd.f32 0.0, %v4250
        %v4252 = vpop.f32.mrf.mxu0
        %4253 = vmatprep.mubr.f32.mxu0 0.0
        %4254 = vmatmul.mubr.f32.gmra.mxu0 %v4131
        %v4255 = vpop.f32.mrf.mxu0
        %v4256 = vadd.f32 0.0, %v4255
        %v4257 = vpop.f32.mrf.mxu0
        %4258 = vmatprep.mubr.f32.mxu0 0.0
        %4259 = vmatmul.mubr.f32.gmra.mxu0 %v4134
        %v4260 = vpop.f32.mrf.mxu0
        %v4261 = vadd.f32 0.0, %v4260
        %v4262 = vpop.f32.mrf.mxu0
        %4263 = vmatprep.mubr.f32.mxu0 0.0
        %4264 = vmatmul.mubr.f32.gmra.mxu0 %v4137
        %v4265 = vpop.f32.mrf.mxu0
        %v4266 = vadd.f32 0.0, %v4265
        %v4267 = vpop.f32.mrf.mxu0
        %4268 = vdwg.mxu0
        %v4269 = vld [vmem:[%s640 + $0x4] sm:$0x1]
        %v4270 = vld [vmem:[%s640 + $0xc] sm:$0x1]
        %v4271 = vld [vmem:[%s640 + $0x14] sm:$0x1]
        %v4272 = vld [vmem:[%s640 + $0x1c] sm:$0x1]
        %v4273 = vld [vmem:[%s640 + $0x24] sm:$0x1]
        %v4274 = vld [vmem:[%s640 + $0x2c] sm:$0x1]
        %v4275 = vld [vmem:[%s640 + $0x34] sm:$0x1]
        %v4276 = vld [vmem:[%s640 + $0x3c] sm:$0x1]
        %v4277 = vld [vmem:[%s640 + $0x44] sm:$0x1]
        %v4278 = vld [vmem:[%s640 + $0x4c] sm:$0x1]
        %v4279 = vld [vmem:[%s640 + $0x54] sm:$0x1]
        %v4280 = vld [vmem:[%s640 + $0x5c] sm:$0x1]
        %v4281 = vld [vmem:[%s640 + $0x64] sm:$0x1]
        %v4282 = vld [vmem:[%s640 + $0x6c] sm:$0x1]
        %v4283 = vld [vmem:[%s640 + $0x74] sm:$0x1]
        %v4284 = vld [vmem:[%s640 + $0x7c] sm:$0x1]
        %v4285 = vld [vmem:[%s640 + $0x84] sm:$0x1]
        %v4286 = vld [vmem:[%s640 + $0x8c] sm:$0x1]
        %v4287 = vld [vmem:[%s640 + $0x94] sm:$0x1]
        %v4288 = vld [vmem:[%s640 + $0x9c] sm:$0x1]
        %v4289 = vld [vmem:[%s640 + $0xa4] sm:$0x1]
        %v4290 = vld [vmem:[%s640 + $0xac] sm:$0x1]
        %v4291 = vld [vmem:[%s640 + $0xb4] sm:$0x1]
        %v4292 = vld [vmem:[%s640 + $0xbc] sm:$0x1]
        %v4293 = vld [vmem:[%s640 + $0xc4] sm:$0x1]
        %v4294 = vld [vmem:[%s640 + $0xcc] sm:$0x1]
        %v4295 = vld [vmem:[%s640 + $0xd4] sm:$0x1]
        %v4296 = vld [vmem:[%s640 + $0xdc] sm:$0x1]
        %v4297 = vld [vmem:[%s640 + $0xe4] sm:$0x1]
        %v4298 = vld [vmem:[%s640 + $0xec] sm:$0x1]
        %v4299 = vld [vmem:[%s640 + $0xf4] sm:$0x1]
        %v4300 = vld [vmem:[%s640 + $0xfc] sm:$0x1]
        %v4301 = vld [vmem:[%s640 + $0x104] sm:$0x1]
        %v4302 = vld [vmem:[%s640 + $0x10c] sm:$0x1]
        %v4303 = vld [vmem:[%s640 + $0x114] sm:$0x1]
        %v4304 = vld [vmem:[%s640 + $0x11c] sm:$0x1]
        %v4305 = vld [vmem:[%s640 + $0x124] sm:$0x1]
        %v4306 = vld [vmem:[%s640 + $0x12c] sm:$0x1]
        %v4307 = vld [vmem:[%s640 + $0x134] sm:$0x1]
        %v4308 = vld [vmem:[%s640 + $0x13c] sm:$0x1]
        %v4309 = vld [vmem:[%s640 + $0x144] sm:$0x1]
        %v4310 = vld [vmem:[%s640 + $0x14c] sm:$0x1]
        %v4311 = vld [vmem:[%s640 + $0x154] sm:$0x1]
        %v4312 = vld [vmem:[%s640 + $0x15c] sm:$0x1]
        %v4313 = vld [vmem:[%s640 + $0x164] sm:$0x1]
        %v4314 = vld [vmem:[%s640 + $0x16c] sm:$0x1]
        %v4315 = vld [vmem:[%s640 + $0x174] sm:$0x1]
        %v4316 = vld [vmem:[%s640 + $0x17c] sm:$0x1]
        %v4317 = vld [vmem:[%s640 + $0x184] sm:$0x1]
        %v4318 = vld [vmem:[%s640 + $0x18c] sm:$0x1]
        %v4319 = vld [vmem:[%s640 + $0x194] sm:$0x1]
        %v4320 = vld [vmem:[%s640 + $0x19c] sm:$0x1]
        %v4321 = vld [vmem:[%s640 + $0x1a4] sm:$0x1]
        %v4322 = vld [vmem:[%s640 + $0x1ac] sm:$0x1]
        %v4323 = vld [vmem:[%s640 + $0x1b4] sm:$0x1]
        %v4324 = vld [vmem:[%s640 + $0x1bc] sm:$0x1]
        %v4325 = vld [vmem:[%s640 + $0x1c4] sm:$0x1]
        %v4326 = vld [vmem:[%s640 + $0x1cc] sm:$0x1]
        %v4327 = vld [vmem:[%s640 + $0x1d4] sm:$0x1]
        %v4328 = vld [vmem:[%s640 + $0x1dc] sm:$0x1]
        %v4329 = vld [vmem:[%s640 + $0x1e4] sm:$0x1]
        %v4330 = vld [vmem:[%s640 + $0x1ec] sm:$0x1]
        %v4331 = vld [vmem:[%s640 + $0x1f4] sm:$0x1]
        %v4332 = vld [vmem:[%s640 + $0x1fc] sm:$0x1]
        %v4333 = vld [vmem:[%s640 + $0x204] sm:$0x1]
        %v4334 = vld [vmem:[%s640 + $0x20c] sm:$0x1]
        %v4335 = vld [vmem:[%s640 + $0x214] sm:$0x1]
        %v4336 = vld [vmem:[%s640 + $0x21c] sm:$0x1]
        %v4337 = vld [vmem:[%s640 + $0x224] sm:$0x1]
        %v4338 = vld [vmem:[%s640 + $0x22c] sm:$0x1]
        %v4339 = vld [vmem:[%s640 + $0x234] sm:$0x1]
        %v4340 = vld [vmem:[%s640 + $0x23c] sm:$0x1]
        %v4341 = vld [vmem:[%s640 + $0x244] sm:$0x1]
        %v4342 = vld [vmem:[%s640 + $0x24c] sm:$0x1]
        %v4343 = vld [vmem:[%s640 + $0x254] sm:$0x1]
        %v4344 = vld [vmem:[%s640 + $0x25c] sm:$0x1]
        %v4345 = vld [vmem:[%s640 + $0x264] sm:$0x1]
        %v4346 = vld [vmem:[%s640 + $0x26c] sm:$0x1]
        %v4347 = vld [vmem:[%s640 + $0x274] sm:$0x1]
        %v4348 = vld [vmem:[%s640 + $0x27c] sm:$0x1]
        %v4349 = vld [vmem:[%s640 + $0x284] sm:$0x1]
        %v4350 = vld [vmem:[%s640 + $0x28c] sm:$0x1]
        %v4351 = vld [vmem:[%s640 + $0x294] sm:$0x1]
        %v4352 = vld [vmem:[%s640 + $0x29c] sm:$0x1]
        %v4353 = vld [vmem:[%s640 + $0x2a4] sm:$0x1]
        %v4354 = vld [vmem:[%s640 + $0x2ac] sm:$0x1]
        %v4355 = vld [vmem:[%s640 + $0x2b4] sm:$0x1]
        %v4356 = vld [vmem:[%s640 + $0x2bc] sm:$0x1]
        %v4357 = vld [vmem:[%s640 + $0x2c4] sm:$0x1]
        %v4358 = vld [vmem:[%s640 + $0x2cc] sm:$0x1]
        %v4359 = vld [vmem:[%s640 + $0x2d4] sm:$0x1]
        %v4360 = vld [vmem:[%s640 + $0x2dc] sm:$0x1]
        %v4361 = vld [vmem:[%s640 + $0x2e4] sm:$0x1]
        %v4362 = vld [vmem:[%s640 + $0x2ec] sm:$0x1]
        %v4363 = vld [vmem:[%s640 + $0x2f4] sm:$0x1]
        %v4364 = vld [vmem:[%s640 + $0x2fc] sm:$0x1]
        %v4365 = vld [vmem:[%s640 + $0x304] sm:$0x1]
        %v4366 = vld [vmem:[%s640 + $0x30c] sm:$0x1]
        %v4367 = vld [vmem:[%s640 + $0x314] sm:$0x1]
        %v4368 = vld [vmem:[%s640 + $0x31c] sm:$0x1]
        %v4369 = vld [vmem:[%s640 + $0x324] sm:$0x1]
        %v4370 = vld [vmem:[%s640 + $0x32c] sm:$0x1]
        %v4371 = vld [vmem:[%s640 + $0x334] sm:$0x1]
        %v4372 = vld [vmem:[%s640 + $0x33c] sm:$0x1]
        %v4477 = vrot.slane %v4270, 7
        %v4478 = vsel %vm1715, %v4477, %v4269
        %v4479 = vrot.slane %v4271, 6
        %v4480 = vsel %vm1718, %v4479, %v4478
        %v4481 = vrot.slane %v4272, 5
        %v4482 = vsel %vm1721, %v4481, %v4480
        %v4483 = vrot.slane %v4273, 4
        %v4484 = vsel %vm1724, %v4483, %v4482
        %v4485 = vrot.slane %v4274, 3
        %v4486 = vsel %vm1727, %v4485, %v4484
        %v4487 = vrot.slane %v4275, 2
        %v4488 = vsel %vm1730, %v4487, %v4486
        %v4489 = vrot.slane %v4276, 1
        %v4490 = vsel %vm1733, %v4489, %v4488
        %v4491 = vrot.slane %v4278, 7
        %v4492 = vsel %vm1715, %v4491, %v4277
        %v4493 = vrot.slane %v4279, 6
        %v4494 = vsel %vm1718, %v4493, %v4492
        %v4495 = vrot.slane %v4280, 5
        %v4496 = vsel %vm1721, %v4495, %v4494
        %v4497 = vrot.slane %v4281, 4
        %v4498 = vsel %vm1724, %v4497, %v4496
        %v4499 = vrot.slane %v4282, 3
        %v4500 = vsel %vm1727, %v4499, %v4498
        %v4501 = vrot.slane %v4283, 2
        %v4502 = vsel %vm1730, %v4501, %v4500
        %v4503 = vrot.slane %v4284, 1
        %v4504 = vsel %vm1733, %v4503, %v4502
        %v4505 = vrot.slane %v4286, 7
        %v4506 = vsel %vm1715, %v4505, %v4285
        %v4507 = vrot.slane %v4287, 6
        %v4508 = vsel %vm1718, %v4507, %v4506
        %v4509 = vrot.slane %v4288, 5
        %v4510 = vsel %vm1721, %v4509, %v4508
        %v4511 = vrot.slane %v4289, 4
        %v4512 = vsel %vm1724, %v4511, %v4510
        %v4513 = vrot.slane %v4290, 3
        %v4514 = vsel %vm1727, %v4513, %v4512
        %v4515 = vrot.slane %v4291, 2
        %v4516 = vsel %vm1730, %v4515, %v4514
        %v4517 = vrot.slane %v4292, 1
        %v4518 = vsel %vm1733, %v4517, %v4516
        %v4519 = vrot.slane %v4294, 7
        %v4520 = vsel %vm1715, %v4519, %v4293
        %v4521 = vrot.slane %v4295, 6
        %v4522 = vsel %vm1718, %v4521, %v4520
        %v4523 = vrot.slane %v4296, 5
        %v4524 = vsel %vm1721, %v4523, %v4522
        %v4525 = vrot.slane %v4297, 4
        %v4526 = vsel %vm1724, %v4525, %v4524
        %v4527 = vrot.slane %v4298, 3
        %v4528 = vsel %vm1727, %v4527, %v4526
        %v4529 = vrot.slane %v4299, 2
        %v4530 = vsel %vm1730, %v4529, %v4528
        %v4531 = vrot.slane %v4300, 1
        %v4532 = vsel %vm1733, %v4531, %v4530
        %v4533 = vrot.slane %v4302, 7
        %v4534 = vsel %vm1715, %v4533, %v4301
        %v4535 = vrot.slane %v4303, 6
        %v4536 = vsel %vm1718, %v4535, %v4534
        %v4537 = vrot.slane %v4304, 5
        %v4538 = vsel %vm1721, %v4537, %v4536
        %v4539 = vrot.slane %v4305, 4
        %v4540 = vsel %vm1724, %v4539, %v4538
        %v4541 = vrot.slane %v4306, 3
        %v4542 = vsel %vm1727, %v4541, %v4540
        %v4543 = vrot.slane %v4307, 2
        %v4544 = vsel %vm1730, %v4543, %v4542
        %v4545 = vrot.slane %v4308, 1
        %v4546 = vsel %vm1733, %v4545, %v4544
        %v4547 = vrot.slane %v4310, 7
        %v4548 = vsel %vm1715, %v4547, %v4309
        %v4549 = vrot.slane %v4311, 6
        %v4550 = vsel %vm1718, %v4549, %v4548
        %v4551 = vrot.slane %v4312, 5
        %v4552 = vsel %vm1721, %v4551, %v4550
        %v4553 = vrot.slane %v4313, 4
        %v4554 = vsel %vm1724, %v4553, %v4552
        %v4555 = vrot.slane %v4314, 3
        %v4556 = vsel %vm1727, %v4555, %v4554
        %v4557 = vrot.slane %v4315, 2
        %v4558 = vsel %vm1730, %v4557, %v4556
        %v4559 = vrot.slane %v4316, 1
        %v4560 = vsel %vm1733, %v4559, %v4558
        %v4561 = vrot.slane %v4318, 7
        %v4562 = vsel %vm1715, %v4561, %v4317
        %v4563 = vrot.slane %v4319, 6
        %v4564 = vsel %vm1718, %v4563, %v4562
        %v4565 = vrot.slane %v4320, 5
        %v4566 = vsel %vm1721, %v4565, %v4564
        %v4567 = vrot.slane %v4321, 4
        %v4568 = vsel %vm1724, %v4567, %v4566
        %v4569 = vrot.slane %v4322, 3
        %v4570 = vsel %vm1727, %v4569, %v4568
        %v4571 = vrot.slane %v4323, 2
        %v4572 = vsel %vm1730, %v4571, %v4570
        %v4573 = vrot.slane %v4324, 1
        %v4574 = vsel %vm1733, %v4573, %v4572
        %v4575 = vrot.slane %v4326, 7
        %v4576 = vsel %vm1715, %v4575, %v4325
        %v4577 = vrot.slane %v4327, 6
        %v4578 = vsel %vm1718, %v4577, %v4576
        %v4579 = vrot.slane %v4328, 5
        %v4580 = vsel %vm1721, %v4579, %v4578
        %v4581 = vrot.slane %v4329, 4
        %v4582 = vsel %vm1724, %v4581, %v4580
        %v4583 = vrot.slane %v4330, 3
        %v4584 = vsel %vm1727, %v4583, %v4582
        %v4585 = vrot.slane %v4331, 2
        %v4586 = vsel %vm1730, %v4585, %v4584
        %v4587 = vrot.slane %v4332, 1
        %v4588 = vsel %vm1733, %v4587, %v4586
        %v4589 = vrot.slane %v4334, 7
        %v4590 = vsel %vm1715, %v4589, %v4333
        %v4591 = vrot.slane %v4335, 6
        %v4592 = vsel %vm1718, %v4591, %v4590
        %v4593 = vrot.slane %v4336, 5
        %v4594 = vsel %vm1721, %v4593, %v4592
        %v4595 = vrot.slane %v4337, 4
        %v4596 = vsel %vm1724, %v4595, %v4594
        %v4597 = vrot.slane %v4338, 3
        %v4598 = vsel %vm1727, %v4597, %v4596
        %v4599 = vrot.slane %v4339, 2
        %v4600 = vsel %vm1730, %v4599, %v4598
        %v4601 = vrot.slane %v4340, 1
        %v4602 = vsel %vm1733, %v4601, %v4600
        %v4603 = vrot.slane %v4342, 7
        %v4604 = vsel %vm1715, %v4603, %v4341
        %v4605 = vrot.slane %v4343, 6
        %v4606 = vsel %vm1718, %v4605, %v4604
        %v4607 = vrot.slane %v4344, 5
        %v4608 = vsel %vm1721, %v4607, %v4606
        %v4609 = vrot.slane %v4345, 4
        %v4610 = vsel %vm1724, %v4609, %v4608
        %v4611 = vrot.slane %v4346, 3
        %v4612 = vsel %vm1727, %v4611, %v4610
        %v4613 = vrot.slane %v4347, 2
        %v4614 = vsel %vm1730, %v4613, %v4612
        %v4615 = vrot.slane %v4348, 1
        %v4616 = vsel %vm1733, %v4615, %v4614
        %v4617 = vrot.slane %v4350, 7
        %v4618 = vsel %vm1715, %v4617, %v4349
        %v4619 = vrot.slane %v4351, 6
        %v4620 = vsel %vm1718, %v4619, %v4618
        %v4621 = vrot.slane %v4352, 5
        %v4622 = vsel %vm1721, %v4621, %v4620
        %v4623 = vrot.slane %v4353, 4
        %v4624 = vsel %vm1724, %v4623, %v4622
        %v4625 = vrot.slane %v4354, 3
        %v4626 = vsel %vm1727, %v4625, %v4624
        %v4627 = vrot.slane %v4355, 2
        %v4628 = vsel %vm1730, %v4627, %v4626
        %v4629 = vrot.slane %v4356, 1
        %v4630 = vsel %vm1733, %v4629, %v4628
        %v4631 = vrot.slane %v4358, 7
        %v4632 = vsel %vm1715, %v4631, %v4357
        %v4633 = vrot.slane %v4359, 6
        %v4634 = vsel %vm1718, %v4633, %v4632
        %v4635 = vrot.slane %v4360, 5
        %v4636 = vsel %vm1721, %v4635, %v4634
        %v4637 = vrot.slane %v4361, 4
        %v4638 = vsel %vm1724, %v4637, %v4636
        %v4639 = vrot.slane %v4362, 3
        %v4640 = vsel %vm1727, %v4639, %v4638
        %v4641 = vrot.slane %v4363, 2
        %v4642 = vsel %vm1730, %v4641, %v4640
        %v4643 = vrot.slane %v4364, 1
        %v4644 = vsel %vm1733, %v4643, %v4642
        %v4645 = vrot.slane %v4366, 7
        %v4646 = vsel %vm1715, %v4645, %v4365
        %v4647 = vrot.slane %v4367, 6
        %v4648 = vsel %vm1718, %v4647, %v4646
        %v4649 = vrot.slane %v4368, 5
        %v4650 = vsel %vm1721, %v4649, %v4648
        %v4651 = vrot.slane %v4369, 4
        %v4652 = vsel %vm1724, %v4651, %v4650
        %v4653 = vrot.slane %v4370, 3
        %v4654 = vsel %vm1727, %v4653, %v4652
        %v4655 = vrot.slane %v4371, 2
        %v4656 = vsel %vm1730, %v4655, %v4654
        %v4657 = vrot.slane %v4372, 1
        %v4658 = vsel %vm1733, %v4657, %v4656
        %v4672 = vmul.f32 %v4206, %v4490
        %v4673 = vmul.f32 %v4211, %v4504
        %v4674 = vmul.f32 %v4216, %v4518
        %v4675 = vmul.f32 %v4221, %v4532
        %v4676 = vmul.f32 %v4226, %v4546
        %v4677 = vmul.f32 %v4231, %v4560
        %v4678 = vmul.f32 %v4236, %v4574
        %v4679 = vmul.f32 %v4241, %v4588
        %v4680 = vmul.f32 %v4246, %v4602
        %v4681 = vmul.f32 %v4251, %v4616
        %v4682 = vmul.f32 %v4256, %v4630
        %v4683 = vmul.f32 %v4261, %v4644
        %v4684 = vmul.f32 %v4266, %v4658
        %v4685 = vadd.f32 %v3996, %v4672
        %v4686 = vadd.f32 %v3997, %v4673
        %v4687 = vadd.f32 %v3998, %v4674
        %v4688 = vadd.f32 %v3999, %v4675
        %v4689 = vadd.f32 %v4000, %v4676
        %v4690 = vadd.f32 %v4001, %v4677
        %v4691 = vadd.f32 %v4002, %v4678
        %v4692 = vadd.f32 %v4003, %v4679
        %v4693 = vadd.f32 %v4004, %v4680
        %v4694 = vadd.f32 %v4005, %v4681
        %v4695 = vadd.f32 %v4006, %v4682
        %v4696 = vadd.f32 %v4007, %v4683
        %v4697 = vadd.f32 %v4008, %v4684
        %4698 = vset.pattern.permute.xlu0 5
        %4699 = vperm.xlu0 %4698, %v1216
        %v4700 = vpop.permute.xlu0 %4699
        %4701 = vset.pattern.permute.xlu0 5
        %4702 = vperm.xlu0 %4701, %v1217
        %v4703 = vpop.permute.xlu0 %4702
        %4704 = vset.pattern.permute.xlu0 5
        %4705 = vperm.xlu0 %4704, %v1218
        %v4706 = vpop.permute.xlu0 %4705
        %4707 = vset.pattern.permute.xlu0 5
        %4708 = vperm.xlu0 %4707, %v1219
        %v4709 = vpop.permute.xlu0 %4708
        %4710 = vset.pattern.permute.xlu0 5
        %4711 = vperm.xlu0 %4710, %v1220
        %v4712 = vpop.permute.xlu0 %4711
        %4713 = vset.pattern.permute.xlu0 5
        %4714 = vperm.xlu0 %4713, %v1221
        %v4715 = vpop.permute.xlu0 %4714
        %4716 = vset.pattern.permute.xlu0 5
        %4717 = vperm.xlu0 %4716, %v1222
        %v4718 = vpop.permute.xlu0 %4717
        %4719 = vset.pattern.permute.xlu0 5
        %4720 = vperm.xlu0 %4719, %v1223
        %v4721 = vpop.permute.xlu0 %4720
        %4722 = vset.pattern.permute.xlu0 5
        %4723 = vperm.xlu0 %4722, %v1224
        %v4724 = vpop.permute.xlu0 %4723
        %4725 = vset.pattern.permute.xlu0 5
        %4726 = vperm.xlu0 %4725, %v1225
        %v4727 = vpop.permute.xlu0 %4726
        %4728 = vset.pattern.permute.xlu0 5
        %4729 = vperm.xlu0 %4728, %v1226
        %v4730 = vpop.permute.xlu0 %4729
        %4731 = vset.pattern.permute.xlu0 5
        %4732 = vperm.xlu0 %4731, %v1227
        %v4733 = vpop.permute.xlu0 %4732
        %4734 = vset.pattern.permute.xlu0 5
        %4735 = vperm.xlu0 %4734, %v1228
        %v4736 = vpop.permute.xlu0 %4735
        %vm4737 = vcmp.eq.s32.totalorder %v4700, %v1244
        %vm4738 = vcmp.eq.s32.totalorder %v4703, %v1244
        %vm4739 = vcmp.eq.s32.totalorder %v4706, %v1244
        %vm4740 = vcmp.eq.s32.totalorder %v4709, %v1244
        %vm4741 = vcmp.eq.s32.totalorder %v4712, %v1244
        %vm4742 = vcmp.eq.s32.totalorder %v4715, %v1244
        %vm4743 = vcmp.eq.s32.totalorder %v4718, %v1244
        %vm4744 = vcmp.eq.s32.totalorder %v4721, %v1244
        %vm4745 = vcmp.eq.s32.totalorder %v4724, %v1244
        %vm4746 = vcmp.eq.s32.totalorder %v4727, %v1244
        %vm4747 = vcmp.eq.s32.totalorder %v4730, %v1244
        %vm4748 = vcmp.eq.s32.totalorder %v4733, %v1244
        %vm4749 = vcmp.eq.s32.totalorder %v4736, %v1244
        %v4750 = vsel %vm4737, 1, 0
        %v4751 = vsel %vm4738, 1, 0
        %v4752 = vsel %vm4739, 1, 0
        %v4753 = vsel %vm4740, 1, 0
        %v4754 = vsel %vm4741, 1, 0
        %v4755 = vsel %vm4742, 1, 0
        %v4756 = vsel %vm4743, 1, 0
        %v4757 = vsel %vm4744, 1, 0
        %v4758 = vsel %vm4745, 1, 0
        %v4759 = vsel %vm4746, 1, 0
        %v4760 = vsel %vm4747, 1, 0
        %v4761 = vsel %vm4748, 1, 0
        %v4762 = vsel %vm4749, 1, 0
        %v4763 = vcvt.s32.f32 %v4750
        %v4764 = vcvt.s32.f32 %v4751
        %v4765 = vcvt.s32.f32 %v4752
        %v4766 = vcvt.s32.f32 %v4753
        %v4767 = vcvt.s32.f32 %v4754
        %v4768 = vcvt.s32.f32 %v4755
        %v4769 = vcvt.s32.f32 %v4756
        %v4770 = vcvt.s32.f32 %v4757
        %v4771 = vcvt.s32.f32 %v4758
        %v4772 = vcvt.s32.f32 %v4759
        %v4773 = vcvt.s32.f32 %v4760
        %v4774 = vcvt.s32.f32 %v4761
        %v4775 = vcvt.s32.f32 %v4762
        %v4776 = vadd.f32 %v4087, %v4763
        %v4777 = vadd.f32 %v4088, %v4764
        %v4778 = vadd.f32 %v4089, %v4765
        %v4779 = vadd.f32 %v4090, %v4766
        %v4780 = vadd.f32 %v4091, %v4767
        %v4781 = vadd.f32 %v4092, %v4768
        %v4782 = vadd.f32 %v4093, %v4769
        %v4783 = vadd.f32 %v4094, %v4770
        %v4784 = vadd.f32 %v4095, %v4771
        %v4785 = vadd.f32 %v4096, %v4772
        %v4786 = vadd.f32 %v4097, %v4773
        %v4787 = vadd.f32 %v4098, %v4774
        %v4788 = vadd.f32 %v4099, %v4775
        %v4790 = vsel %vm1336, %v4763, 0
        %v4793 = vsel %vm1336, %v4764, 0
        %v4796 = vsel %vm1336, %v4765, 0
        %v4799 = vsel %vm1336, %v4766, 0
        %v4802 = vsel %vm1336, %v4767, 0
        %v4805 = vsel %vm1336, %v4768, 0
        %v4808 = vsel %vm1336, %v4769, 0
        %v4811 = vsel %vm1336, %v4770, 0
        %v4814 = vsel %vm1336, %v4771, 0
        %v4817 = vsel %vm1336, %v4772, 0
        %v4820 = vsel %vm1336, %v4773, 0
        %v4823 = vsel %vm1336, %v4774, 0
        %v4826 = vsel %vm1336, %v4775, 0
        %4828 = vmatprep.subr.mxu0 0.0
        %4829 = vmatpush1.msra.mxu0 0.0
        %4830 = vmatprep.subr.mxu0 0.0
        %4831 = vmatpush1.msra.mxu0 0.0
        %4832 = vmatprep.subr.mxu0 0.0
        %4833 = vmatpush1.msra.mxu0 0.0
        %4834 = vmatprep.subr.mxu0 0.0
        %4835 = vmatpush1.msra.mxu0 0.0
        %4836 = vmatprep.subr.mxu0 0.0
        %4837 = vmatpush1.msra.mxu0 0.0
        %4838 = vmatprep.subr.mxu0 0.0
        %4839 = vmatpush1.msra.mxu0 0.0
        %4840 = vmatprep.subr.mxu0 0.0
        %4841 = vmatpush1.msra.mxu0 0.0
        %4842 = vmatprep.subr.mxu0 0.0
        %4843 = vmatpush1.msra.mxu0 0.0
        %4844 = vmatprep.subr.mxu0 0.0
        %4845 = vmatpush1.msra.mxu0 0.0
        %4846 = vmatprep.subr.mxu0 0.0
        %4847 = vmatpush1.msra.mxu0 %v1242
        %4848 = vmatprep.subr.mxu0 0.0
        %4849 = vmatpush1.msra.mxu0 %v1241
        %4850 = vmatprep.subr.mxu0 0.0
        %4851 = vmatpush1.msra.mxu0 %v1240
        %4852 = vmatprep.subr.mxu0 0.0
        %4853 = vmatpush1.msra.mxu0 %v1239
        %4854 = vmatprep.subr.mxu0 0.0
        %4855 = vmatpush1.msra.mxu0 %v1238
        %4856 = vmatprep.subr.mxu0 0.0
        %4857 = vmatpush1.msra.mxu0 %v1237
        %4858 = vmatprep.subr.mxu0 0.0
        %4859 = vmatpush1.msra.mxu0 %v1236
        %4860 = vmatprep.subr.mxu0 0.0
        %4861 = vmatpush2.msra.mxu0 0.0
        %4862 = vmatprep.subr.mxu0 0.0
        %4863 = vmatpush2.msra.mxu0 0.0
        %4864 = vmatprep.subr.mxu0 0.0
        %4865 = vmatpush2.msra.mxu0 0.0
        %4866 = vmatprep.subr.mxu0 0.0
        %4867 = vmatpush2.msra.mxu0 0.0
        %4868 = vmatprep.subr.mxu0 0.0
        %4869 = vmatpush2.msra.mxu0 0.0
        %4870 = vmatprep.subr.mxu0 0.0
        %4871 = vmatpush2.msra.mxu0 0.0
        %4872 = vmatprep.subr.mxu0 0.0
        %4873 = vmatpush2.msra.mxu0 0.0
        %4874 = vmatprep.subr.mxu0 0.0
        %4875 = vmatpush2.msra.mxu0 0.0
        %4876 = vmatprep.subr.mxu0 0.0
        %4877 = vmatpush2.msra.mxu0 0.0
        %4878 = vmatprep.subr.mxu0 0.0
        %4879 = vmatpush2.msra.mxu0 0.0
        %4880 = vmatprep.subr.mxu0 0.0
        %4881 = vmatpush2.msra.mxu0 0.0
        %4882 = vmatprep.subr.mxu0 0.0
        %4883 = vmatpush2.msra.mxu0 0.0
        %4884 = vmatprep.subr.mxu0 0.0
        %4885 = vmatpush2.msra.mxu0 0.0
        %4886 = vmatprep.subr.mxu0 0.0
        %4887 = vmatpush2.msra.mxu0 0.0
        %4888 = vmatprep.subr.mxu0 0.0
        %4889 = vmatpush2.msra.mxu0 0.0
        %4890 = vmatprep.subr.mxu0 0.0
        %4891 = vmatpush2.msra.mxu0 0.0
        %4892 = vmatprep.mubr.f32.mxu0 0.0
        %4893 = vmatmul.mubr.f32.gmra.mxu0 %v4790
        %v4894 = vpop.f32.mrf.mxu0
        %v4895 = vadd.f32 0.0, %v4894
        %v4896 = vpop.f32.mrf.mxu0
        %4897 = vmatprep.mubr.f32.mxu0 0.0
        %4898 = vmatmul.mubr.f32.gmra.mxu0 %v4793
        %v4899 = vpop.f32.mrf.mxu0
        %v4900 = vadd.f32 0.0, %v4899
        %v4901 = vpop.f32.mrf.mxu0
        %4902 = vmatprep.mubr.f32.mxu0 0.0
        %4903 = vmatmul.mubr.f32.gmra.mxu0 %v4796
        %v4904 = vpop.f32.mrf.mxu0
        %v4905 = vadd.f32 0.0, %v4904
        %v4906 = vpop.f32.mrf.mxu0
        %4907 = vmatprep.mubr.f32.mxu0 0.0
        %4908 = vmatmul.mubr.f32.gmra.mxu0 %v4799
        %v4909 = vpop.f32.mrf.mxu0
        %v4910 = vadd.f32 0.0, %v4909
        %v4911 = vpop.f32.mrf.mxu0
        %4912 = vmatprep.mubr.f32.mxu0 0.0
        %4913 = vmatmul.mubr.f32.gmra.mxu0 %v4802
        %v4914 = vpop.f32.mrf.mxu0
        %v4915 = vadd.f32 0.0, %v4914
        %v4916 = vpop.f32.mrf.mxu0
        %4917 = vmatprep.mubr.f32.mxu0 0.0
        %4918 = vmatmul.mubr.f32.gmra.mxu0 %v4805
        %v4919 = vpop.f32.mrf.mxu0
        %v4920 = vadd.f32 0.0, %v4919
        %v4921 = vpop.f32.mrf.mxu0
        %4922 = vmatprep.mubr.f32.mxu0 0.0
        %4923 = vmatmul.mubr.f32.gmra.mxu0 %v4808
        %v4924 = vpop.f32.mrf.mxu0
        %v4925 = vadd.f32 0.0, %v4924
        %v4926 = vpop.f32.mrf.mxu0
        %4927 = vmatprep.mubr.f32.mxu0 0.0
        %4928 = vmatmul.mubr.f32.gmra.mxu0 %v4811
        %v4929 = vpop.f32.mrf.mxu0
        %v4930 = vadd.f32 0.0, %v4929
        %v4931 = vpop.f32.mrf.mxu0
        %4932 = vmatprep.mubr.f32.mxu0 0.0
        %4933 = vmatmul.mubr.f32.gmra.mxu0 %v4814
        %v4934 = vpop.f32.mrf.mxu0
        %v4935 = vadd.f32 0.0, %v4934
        %v4936 = vpop.f32.mrf.mxu0
        %4937 = vmatprep.mubr.f32.mxu0 0.0
        %4938 = vmatmul.mubr.f32.gmra.mxu0 %v4817
        %v4939 = vpop.f32.mrf.mxu0
        %v4940 = vadd.f32 0.0, %v4939
        %v4941 = vpop.f32.mrf.mxu0
        %4942 = vmatprep.mubr.f32.mxu0 0.0
        %4943 = vmatmul.mubr.f32.gmra.mxu0 %v4820
        %v4944 = vpop.f32.mrf.mxu0
        %v4945 = vadd.f32 0.0, %v4944
        %v4946 = vpop.f32.mrf.mxu0
        %4947 = vmatprep.mubr.f32.mxu0 0.0
        %4948 = vmatmul.mubr.f32.gmra.mxu0 %v4823
        %v4949 = vpop.f32.mrf.mxu0
        %v4950 = vadd.f32 0.0, %v4949
        %v4951 = vpop.f32.mrf.mxu0
        %4952 = vmatprep.mubr.f32.mxu0 0.0
        %4953 = vmatmul.mubr.f32.gmra.mxu0 %v4826
        %v4954 = vpop.f32.mrf.mxu0
        %v4955 = vadd.f32 0.0, %v4954
        %v4956 = vpop.f32.mrf.mxu0
        %4957 = vdwg.mxu0
        %v4958 = vld [vmem:[%s640 + $0x5] sm:$0x1]
        %v4959 = vld [vmem:[%s640 + $0xd] sm:$0x1]
        %v4960 = vld [vmem:[%s640 + $0x15] sm:$0x1]
        %v4961 = vld [vmem:[%s640 + $0x1d] sm:$0x1]
        %v4962 = vld [vmem:[%s640 + $0x25] sm:$0x1]
        %v4963 = vld [vmem:[%s640 + $0x2d] sm:$0x1]
        %v4964 = vld [vmem:[%s640 + $0x35] sm:$0x1]
        %v4965 = vld [vmem:[%s640 + $0x3d] sm:$0x1]
        %v4966 = vld [vmem:[%s640 + $0x45] sm:$0x1]
        %v4967 = vld [vmem:[%s640 + $0x4d] sm:$0x1]
        %v4968 = vld [vmem:[%s640 + $0x55] sm:$0x1]
        %v4969 = vld [vmem:[%s640 + $0x5d] sm:$0x1]
        %v4970 = vld [vmem:[%s640 + $0x65] sm:$0x1]
        %v4971 = vld [vmem:[%s640 + $0x6d] sm:$0x1]
        %v4972 = vld [vmem:[%s640 + $0x75] sm:$0x1]
        %v4973 = vld [vmem:[%s640 + $0x7d] sm:$0x1]
        %v4974 = vld [vmem:[%s640 + $0x85] sm:$0x1]
        %v4975 = vld [vmem:[%s640 + $0x8d] sm:$0x1]
        %v4976 = vld [vmem:[%s640 + $0x95] sm:$0x1]
        %v4977 = vld [vmem:[%s640 + $0x9d] sm:$0x1]
        %v4978 = vld [vmem:[%s640 + $0xa5] sm:$0x1]
        %v4979 = vld [vmem:[%s640 + $0xad] sm:$0x1]
        %v4980 = vld [vmem:[%s640 + $0xb5] sm:$0x1]
        %v4981 = vld [vmem:[%s640 + $0xbd] sm:$0x1]
        %v4982 = vld [vmem:[%s640 + $0xc5] sm:$0x1]
        %v4983 = vld [vmem:[%s640 + $0xcd] sm:$0x1]
        %v4984 = vld [vmem:[%s640 + $0xd5] sm:$0x1]
        %v4985 = vld [vmem:[%s640 + $0xdd] sm:$0x1]
        %v4986 = vld [vmem:[%s640 + $0xe5] sm:$0x1]
        %v4987 = vld [vmem:[%s640 + $0xed] sm:$0x1]
        %v4988 = vld [vmem:[%s640 + $0xf5] sm:$0x1]
        %v4989 = vld [vmem:[%s640 + $0xfd] sm:$0x1]
        %v4990 = vld [vmem:[%s640 + $0x105] sm:$0x1]
        %v4991 = vld [vmem:[%s640 + $0x10d] sm:$0x1]
        %v4992 = vld [vmem:[%s640 + $0x115] sm:$0x1]
        %v4993 = vld [vmem:[%s640 + $0x11d] sm:$0x1]
        %v4994 = vld [vmem:[%s640 + $0x125] sm:$0x1]
        %v4995 = vld [vmem:[%s640 + $0x12d] sm:$0x1]
        %v4996 = vld [vmem:[%s640 + $0x135] sm:$0x1]
        %v4997 = vld [vmem:[%s640 + $0x13d] sm:$0x1]
        %v4998 = vld [vmem:[%s640 + $0x145] sm:$0x1]
        %v4999 = vld [vmem:[%s640 + $0x14d] sm:$0x1]
        %v5000 = vld [vmem:[%s640 + $0x155] sm:$0x1]
        %v5001 = vld [vmem:[%s640 + $0x15d] sm:$0x1]
        %v5002 = vld [vmem:[%s640 + $0x165] sm:$0x1]
        %v5003 = vld [vmem:[%s640 + $0x16d] sm:$0x1]
        %v5004 = vld [vmem:[%s640 + $0x175] sm:$0x1]
        %v5005 = vld [vmem:[%s640 + $0x17d] sm:$0x1]
        %v5006 = vld [vmem:[%s640 + $0x185] sm:$0x1]
        %v5007 = vld [vmem:[%s640 + $0x18d] sm:$0x1]
        %v5008 = vld [vmem:[%s640 + $0x195] sm:$0x1]
        %v5009 = vld [vmem:[%s640 + $0x19d] sm:$0x1]
        %v5010 = vld [vmem:[%s640 + $0x1a5] sm:$0x1]
        %v5011 = vld [vmem:[%s640 + $0x1ad] sm:$0x1]
        %v5012 = vld [vmem:[%s640 + $0x1b5] sm:$0x1]
        %v5013 = vld [vmem:[%s640 + $0x1bd] sm:$0x1]
        %v5014 = vld [vmem:[%s640 + $0x1c5] sm:$0x1]
        %v5015 = vld [vmem:[%s640 + $0x1cd] sm:$0x1]
        %v5016 = vld [vmem:[%s640 + $0x1d5] sm:$0x1]
        %v5017 = vld [vmem:[%s640 + $0x1dd] sm:$0x1]
        %v5018 = vld [vmem:[%s640 + $0x1e5] sm:$0x1]
        %v5019 = vld [vmem:[%s640 + $0x1ed] sm:$0x1]
        %v5020 = vld [vmem:[%s640 + $0x1f5] sm:$0x1]
        %v5021 = vld [vmem:[%s640 + $0x1fd] sm:$0x1]
        %v5022 = vld [vmem:[%s640 + $0x205] sm:$0x1]
        %v5023 = vld [vmem:[%s640 + $0x20d] sm:$0x1]
        %v5024 = vld [vmem:[%s640 + $0x215] sm:$0x1]
        %v5025 = vld [vmem:[%s640 + $0x21d] sm:$0x1]
        %v5026 = vld [vmem:[%s640 + $0x225] sm:$0x1]
        %v5027 = vld [vmem:[%s640 + $0x22d] sm:$0x1]
        %v5028 = vld [vmem:[%s640 + $0x235] sm:$0x1]
        %v5029 = vld [vmem:[%s640 + $0x23d] sm:$0x1]
        %v5030 = vld [vmem:[%s640 + $0x245] sm:$0x1]
        %v5031 = vld [vmem:[%s640 + $0x24d] sm:$0x1]
        %v5032 = vld [vmem:[%s640 + $0x255] sm:$0x1]
        %v5033 = vld [vmem:[%s640 + $0x25d] sm:$0x1]
        %v5034 = vld [vmem:[%s640 + $0x265] sm:$0x1]
        %v5035 = vld [vmem:[%s640 + $0x26d] sm:$0x1]
        %v5036 = vld [vmem:[%s640 + $0x275] sm:$0x1]
        %v5037 = vld [vmem:[%s640 + $0x27d] sm:$0x1]
        %v5038 = vld [vmem:[%s640 + $0x285] sm:$0x1]
        %v5039 = vld [vmem:[%s640 + $0x28d] sm:$0x1]
        %v5040 = vld [vmem:[%s640 + $0x295] sm:$0x1]
        %v5041 = vld [vmem:[%s640 + $0x29d] sm:$0x1]
        %v5042 = vld [vmem:[%s640 + $0x2a5] sm:$0x1]
        %v5043 = vld [vmem:[%s640 + $0x2ad] sm:$0x1]
        %v5044 = vld [vmem:[%s640 + $0x2b5] sm:$0x1]
        %v5045 = vld [vmem:[%s640 + $0x2bd] sm:$0x1]
        %v5046 = vld [vmem:[%s640 + $0x2c5] sm:$0x1]
        %v5047 = vld [vmem:[%s640 + $0x2cd] sm:$0x1]
        %v5048 = vld [vmem:[%s640 + $0x2d5] sm:$0x1]
        %v5049 = vld [vmem:[%s640 + $0x2dd] sm:$0x1]
        %v5050 = vld [vmem:[%s640 + $0x2e5] sm:$0x1]
        %v5051 = vld [vmem:[%s640 + $0x2ed] sm:$0x1]
        %v5052 = vld [vmem:[%s640 + $0x2f5] sm:$0x1]
        %v5053 = vld [vmem:[%s640 + $0x2fd] sm:$0x1]
        %v5054 = vld [vmem:[%s640 + $0x305] sm:$0x1]
        %v5055 = vld [vmem:[%s640 + $0x30d] sm:$0x1]
        %v5056 = vld [vmem:[%s640 + $0x315] sm:$0x1]
        %v5057 = vld [vmem:[%s640 + $0x31d] sm:$0x1]
        %v5058 = vld [vmem:[%s640 + $0x325] sm:$0x1]
        %v5059 = vld [vmem:[%s640 + $0x32d] sm:$0x1]
        %v5060 = vld [vmem:[%s640 + $0x335] sm:$0x1]
        %v5061 = vld [vmem:[%s640 + $0x33d] sm:$0x1]
        %v5166 = vrot.slane %v4959, 7
        %v5167 = vsel %vm1715, %v5166, %v4958
        %v5168 = vrot.slane %v4960, 6
        %v5169 = vsel %vm1718, %v5168, %v5167
        %v5170 = vrot.slane %v4961, 5
        %v5171 = vsel %vm1721, %v5170, %v5169
        %v5172 = vrot.slane %v4962, 4
        %v5173 = vsel %vm1724, %v5172, %v5171
        %v5174 = vrot.slane %v4963, 3
        %v5175 = vsel %vm1727, %v5174, %v5173
        %v5176 = vrot.slane %v4964, 2
        %v5177 = vsel %vm1730, %v5176, %v5175
        %v5178 = vrot.slane %v4965, 1
        %v5179 = vsel %vm1733, %v5178, %v5177
        %v5180 = vrot.slane %v4967, 7
        %v5181 = vsel %vm1715, %v5180, %v4966
        %v5182 = vrot.slane %v4968, 6
        %v5183 = vsel %vm1718, %v5182, %v5181
        %v5184 = vrot.slane %v4969, 5
        %v5185 = vsel %vm1721, %v5184, %v5183
        %v5186 = vrot.slane %v4970, 4
        %v5187 = vsel %vm1724, %v5186, %v5185
        %v5188 = vrot.slane %v4971, 3
        %v5189 = vsel %vm1727, %v5188, %v5187
        %v5190 = vrot.slane %v4972, 2
        %v5191 = vsel %vm1730, %v5190, %v5189
        %v5192 = vrot.slane %v4973, 1
        %v5193 = vsel %vm1733, %v5192, %v5191
        %v5194 = vrot.slane %v4975, 7
        %v5195 = vsel %vm1715, %v5194, %v4974
        %v5196 = vrot.slane %v4976, 6
        %v5197 = vsel %vm1718, %v5196, %v5195
        %v5198 = vrot.slane %v4977, 5
        %v5199 = vsel %vm1721, %v5198, %v5197
        %v5200 = vrot.slane %v4978, 4
        %v5201 = vsel %vm1724, %v5200, %v5199
        %v5202 = vrot.slane %v4979, 3
        %v5203 = vsel %vm1727, %v5202, %v5201
        %v5204 = vrot.slane %v4980, 2
        %v5205 = vsel %vm1730, %v5204, %v5203
        %v5206 = vrot.slane %v4981, 1
        %v5207 = vsel %vm1733, %v5206, %v5205
        %v5208 = vrot.slane %v4983, 7
        %v5209 = vsel %vm1715, %v5208, %v4982
        %v5210 = vrot.slane %v4984, 6
        %v5211 = vsel %vm1718, %v5210, %v5209
        %v5212 = vrot.slane %v4985, 5
        %v5213 = vsel %vm1721, %v5212, %v5211
        %v5214 = vrot.slane %v4986, 4
        %v5215 = vsel %vm1724, %v5214, %v5213
        %v5216 = vrot.slane %v4987, 3
        %v5217 = vsel %vm1727, %v5216, %v5215
        %v5218 = vrot.slane %v4988, 2
        %v5219 = vsel %vm1730, %v5218, %v5217
        %v5220 = vrot.slane %v4989, 1
        %v5221 = vsel %vm1733, %v5220, %v5219
        %v5222 = vrot.slane %v4991, 7
        %v5223 = vsel %vm1715, %v5222, %v4990
        %v5224 = vrot.slane %v4992, 6
        %v5225 = vsel %vm1718, %v5224, %v5223
        %v5226 = vrot.slane %v4993, 5
        %v5227 = vsel %vm1721, %v5226, %v5225
        %v5228 = vrot.slane %v4994, 4
        %v5229 = vsel %vm1724, %v5228, %v5227
        %v5230 = vrot.slane %v4995, 3
        %v5231 = vsel %vm1727, %v5230, %v5229
        %v5232 = vrot.slane %v4996, 2
        %v5233 = vsel %vm1730, %v5232, %v5231
        %v5234 = vrot.slane %v4997, 1
        %v5235 = vsel %vm1733, %v5234, %v5233
        %v5236 = vrot.slane %v4999, 7
        %v5237 = vsel %vm1715, %v5236, %v4998
        %v5238 = vrot.slane %v5000, 6
        %v5239 = vsel %vm1718, %v5238, %v5237
        %v5240 = vrot.slane %v5001, 5
        %v5241 = vsel %vm1721, %v5240, %v5239
        %v5242 = vrot.slane %v5002, 4
        %v5243 = vsel %vm1724, %v5242, %v5241
        %v5244 = vrot.slane %v5003, 3
        %v5245 = vsel %vm1727, %v5244, %v5243
        %v5246 = vrot.slane %v5004, 2
        %v5247 = vsel %vm1730, %v5246, %v5245
        %v5248 = vrot.slane %v5005, 1
        %v5249 = vsel %vm1733, %v5248, %v5247
        %v5250 = vrot.slane %v5007, 7
        %v5251 = vsel %vm1715, %v5250, %v5006
        %v5252 = vrot.slane %v5008, 6
        %v5253 = vsel %vm1718, %v5252, %v5251
        %v5254 = vrot.slane %v5009, 5
        %v5255 = vsel %vm1721, %v5254, %v5253
        %v5256 = vrot.slane %v5010, 4
        %v5257 = vsel %vm1724, %v5256, %v5255
        %v5258 = vrot.slane %v5011, 3
        %v5259 = vsel %vm1727, %v5258, %v5257
        %v5260 = vrot.slane %v5012, 2
        %v5261 = vsel %vm1730, %v5260, %v5259
        %v5262 = vrot.slane %v5013, 1
        %v5263 = vsel %vm1733, %v5262, %v5261
        %v5264 = vrot.slane %v5015, 7
        %v5265 = vsel %vm1715, %v5264, %v5014
        %v5266 = vrot.slane %v5016, 6
        %v5267 = vsel %vm1718, %v5266, %v5265
        %v5268 = vrot.slane %v5017, 5
        %v5269 = vsel %vm1721, %v5268, %v5267
        %v5270 = vrot.slane %v5018, 4
        %v5271 = vsel %vm1724, %v5270, %v5269
        %v5272 = vrot.slane %v5019, 3
        %v5273 = vsel %vm1727, %v5272, %v5271
        %v5274 = vrot.slane %v5020, 2
        %v5275 = vsel %vm1730, %v5274, %v5273
        %v5276 = vrot.slane %v5021, 1
        %v5277 = vsel %vm1733, %v5276, %v5275
        %v5278 = vrot.slane %v5023, 7
        %v5279 = vsel %vm1715, %v5278, %v5022
        %v5280 = vrot.slane %v5024, 6
        %v5281 = vsel %vm1718, %v5280, %v5279
        %v5282 = vrot.slane %v5025, 5
        %v5283 = vsel %vm1721, %v5282, %v5281
        %v5284 = vrot.slane %v5026, 4
        %v5285 = vsel %vm1724, %v5284, %v5283
        %v5286 = vrot.slane %v5027, 3
        %v5287 = vsel %vm1727, %v5286, %v5285
        %v5288 = vrot.slane %v5028, 2
        %v5289 = vsel %vm1730, %v5288, %v5287
        %v5290 = vrot.slane %v5029, 1
        %v5291 = vsel %vm1733, %v5290, %v5289
        %v5292 = vrot.slane %v5031, 7
        %v5293 = vsel %vm1715, %v5292, %v5030
        %v5294 = vrot.slane %v5032, 6
        %v5295 = vsel %vm1718, %v5294, %v5293
        %v5296 = vrot.slane %v5033, 5
        %v5297 = vsel %vm1721, %v5296, %v5295
        %v5298 = vrot.slane %v5034, 4
        %v5299 = vsel %vm1724, %v5298, %v5297
        %v5300 = vrot.slane %v5035, 3
        %v5301 = vsel %vm1727, %v5300, %v5299
        %v5302 = vrot.slane %v5036, 2
        %v5303 = vsel %vm1730, %v5302, %v5301
        %v5304 = vrot.slane %v5037, 1
        %v5305 = vsel %vm1733, %v5304, %v5303
        %v5306 = vrot.slane %v5039, 7
        %v5307 = vsel %vm1715, %v5306, %v5038
        %v5308 = vrot.slane %v5040, 6
        %v5309 = vsel %vm1718, %v5308, %v5307
        %v5310 = vrot.slane %v5041, 5
        %v5311 = vsel %vm1721, %v5310, %v5309
        %v5312 = vrot.slane %v5042, 4
        %v5313 = vsel %vm1724, %v5312, %v5311
        %v5314 = vrot.slane %v5043, 3
        %v5315 = vsel %vm1727, %v5314, %v5313
        %v5316 = vrot.slane %v5044, 2
        %v5317 = vsel %vm1730, %v5316, %v5315
        %v5318 = vrot.slane %v5045, 1
        %v5319 = vsel %vm1733, %v5318, %v5317
        %v5320 = vrot.slane %v5047, 7
        %v5321 = vsel %vm1715, %v5320, %v5046
        %v5322 = vrot.slane %v5048, 6
        %v5323 = vsel %vm1718, %v5322, %v5321
        %v5324 = vrot.slane %v5049, 5
        %v5325 = vsel %vm1721, %v5324, %v5323
        %v5326 = vrot.slane %v5050, 4
        %v5327 = vsel %vm1724, %v5326, %v5325
        %v5328 = vrot.slane %v5051, 3
        %v5329 = vsel %vm1727, %v5328, %v5327
        %v5330 = vrot.slane %v5052, 2
        %v5331 = vsel %vm1730, %v5330, %v5329
        %v5332 = vrot.slane %v5053, 1
        %v5333 = vsel %vm1733, %v5332, %v5331
        %v5334 = vrot.slane %v5055, 7
        %v5335 = vsel %vm1715, %v5334, %v5054
        %v5336 = vrot.slane %v5056, 6
        %v5337 = vsel %vm1718, %v5336, %v5335
        %v5338 = vrot.slane %v5057, 5
        %v5339 = vsel %vm1721, %v5338, %v5337
        %v5340 = vrot.slane %v5058, 4
        %v5341 = vsel %vm1724, %v5340, %v5339
        %v5342 = vrot.slane %v5059, 3
        %v5343 = vsel %vm1727, %v5342, %v5341
        %v5344 = vrot.slane %v5060, 2
        %v5345 = vsel %vm1730, %v5344, %v5343
        %v5346 = vrot.slane %v5061, 1
        %v5347 = vsel %vm1733, %v5346, %v5345
        %v5361 = vmul.f32 %v4895, %v5179
        %v5362 = vmul.f32 %v4900, %v5193
        %v5363 = vmul.f32 %v4905, %v5207
        %v5364 = vmul.f32 %v4910, %v5221
        %v5365 = vmul.f32 %v4915, %v5235
        %v5366 = vmul.f32 %v4920, %v5249
        %v5367 = vmul.f32 %v4925, %v5263
        %v5368 = vmul.f32 %v4930, %v5277
        %v5369 = vmul.f32 %v4935, %v5291
        %v5370 = vmul.f32 %v4940, %v5305
        %v5371 = vmul.f32 %v4945, %v5319
        %v5372 = vmul.f32 %v4950, %v5333
        %v5373 = vmul.f32 %v4955, %v5347
        %v5374 = vadd.f32 %v4685, %v5361
        %v5375 = vadd.f32 %v4686, %v5362
        %v5376 = vadd.f32 %v4687, %v5363
        %v5377 = vadd.f32 %v4688, %v5364
        %v5378 = vadd.f32 %v4689, %v5365
        %v5379 = vadd.f32 %v4690, %v5366
        %v5380 = vadd.f32 %v4691, %v5367
        %v5381 = vadd.f32 %v4692, %v5368
        %v5382 = vadd.f32 %v4693, %v5369
        %v5383 = vadd.f32 %v4694, %v5370
        %v5384 = vadd.f32 %v4695, %v5371
        %v5385 = vadd.f32 %v4696, %v5372
        %v5386 = vadd.f32 %v4697, %v5373
        %5387 = vset.pattern.permute.xlu0 6
        %5388 = vperm.xlu0 %5387, %v1216
        %v5389 = vpop.permute.xlu0 %5388
        %5390 = vset.pattern.permute.xlu0 6
        %5391 = vperm.xlu0 %5390, %v1217
        %v5392 = vpop.permute.xlu0 %5391
        %5393 = vset.pattern.permute.xlu0 6
        %5394 = vperm.xlu0 %5393, %v1218
        %v5395 = vpop.permute.xlu0 %5394
        %5396 = vset.pattern.permute.xlu0 6
        %5397 = vperm.xlu0 %5396, %v1219
        %v5398 = vpop.permute.xlu0 %5397
        %5399 = vset.pattern.permute.xlu0 6
        %5400 = vperm.xlu0 %5399, %v1220
        %v5401 = vpop.permute.xlu0 %5400
        %5402 = vset.pattern.permute.xlu0 6
        %5403 = vperm.xlu0 %5402, %v1221
        %v5404 = vpop.permute.xlu0 %5403
        %5405 = vset.pattern.permute.xlu0 6
        %5406 = vperm.xlu0 %5405, %v1222
        %v5407 = vpop.permute.xlu0 %5406
        %5408 = vset.pattern.permute.xlu0 6
        %5409 = vperm.xlu0 %5408, %v1223
        %v5410 = vpop.permute.xlu0 %5409
        %5411 = vset.pattern.permute.xlu0 6
        %5412 = vperm.xlu0 %5411, %v1224
        %v5413 = vpop.permute.xlu0 %5412
        %5414 = vset.pattern.permute.xlu0 6
        %5415 = vperm.xlu0 %5414, %v1225
        %v5416 = vpop.permute.xlu0 %5415
        %5417 = vset.pattern.permute.xlu0 6
        %5418 = vperm.xlu0 %5417, %v1226
        %v5419 = vpop.permute.xlu0 %5418
        %5420 = vset.pattern.permute.xlu0 6
        %5421 = vperm.xlu0 %5420, %v1227
        %v5422 = vpop.permute.xlu0 %5421
        %5423 = vset.pattern.permute.xlu0 6
        %5424 = vperm.xlu0 %5423, %v1228
        %v5425 = vpop.permute.xlu0 %5424
        %vm5426 = vcmp.eq.s32.totalorder %v5389, %v1244
        %vm5427 = vcmp.eq.s32.totalorder %v5392, %v1244
        %vm5428 = vcmp.eq.s32.totalorder %v5395, %v1244
        %vm5429 = vcmp.eq.s32.totalorder %v5398, %v1244
        %vm5430 = vcmp.eq.s32.totalorder %v5401, %v1244
        %vm5431 = vcmp.eq.s32.totalorder %v5404, %v1244
        %vm5432 = vcmp.eq.s32.totalorder %v5407, %v1244
        %vm5433 = vcmp.eq.s32.totalorder %v5410, %v1244
        %vm5434 = vcmp.eq.s32.totalorder %v5413, %v1244
        %vm5435 = vcmp.eq.s32.totalorder %v5416, %v1244
        %vm5436 = vcmp.eq.s32.totalorder %v5419, %v1244
        %vm5437 = vcmp.eq.s32.totalorder %v5422, %v1244
        %vm5438 = vcmp.eq.s32.totalorder %v5425, %v1244
        %v5439 = vsel %vm5426, 1, 0
        %v5440 = vsel %vm5427, 1, 0
        %v5441 = vsel %vm5428, 1, 0
        %v5442 = vsel %vm5429, 1, 0
        %v5443 = vsel %vm5430, 1, 0
        %v5444 = vsel %vm5431, 1, 0
        %v5445 = vsel %vm5432, 1, 0
        %v5446 = vsel %vm5433, 1, 0
        %v5447 = vsel %vm5434, 1, 0
        %v5448 = vsel %vm5435, 1, 0
        %v5449 = vsel %vm5436, 1, 0
        %v5450 = vsel %vm5437, 1, 0
        %v5451 = vsel %vm5438, 1, 0
        %v5452 = vcvt.s32.f32 %v5439
        %v5453 = vcvt.s32.f32 %v5440
        %v5454 = vcvt.s32.f32 %v5441
        %v5455 = vcvt.s32.f32 %v5442
        %v5456 = vcvt.s32.f32 %v5443
        %v5457 = vcvt.s32.f32 %v5444
        %v5458 = vcvt.s32.f32 %v5445
        %v5459 = vcvt.s32.f32 %v5446
        %v5460 = vcvt.s32.f32 %v5447
        %v5461 = vcvt.s32.f32 %v5448
        %v5462 = vcvt.s32.f32 %v5449
        %v5463 = vcvt.s32.f32 %v5450
        %v5464 = vcvt.s32.f32 %v5451
        %v5465 = vadd.f32 %v4776, %v5452
        %v5466 = vadd.f32 %v4777, %v5453
        %v5467 = vadd.f32 %v4778, %v5454
        %v5468 = vadd.f32 %v4779, %v5455
        %v5469 = vadd.f32 %v4780, %v5456
        %v5470 = vadd.f32 %v4781, %v5457
        %v5471 = vadd.f32 %v4782, %v5458
        %v5472 = vadd.f32 %v4783, %v5459
        %v5473 = vadd.f32 %v4784, %v5460
        %v5474 = vadd.f32 %v4785, %v5461
        %v5475 = vadd.f32 %v4786, %v5462
        %v5476 = vadd.f32 %v4787, %v5463
        %v5477 = vadd.f32 %v4788, %v5464
        %v5479 = vsel %vm1336, %v5452, 0
        %v5482 = vsel %vm1336, %v5453, 0
        %v5485 = vsel %vm1336, %v5454, 0
        %v5488 = vsel %vm1336, %v5455, 0
        %v5491 = vsel %vm1336, %v5456, 0
        %v5494 = vsel %vm1336, %v5457, 0
        %v5497 = vsel %vm1336, %v5458, 0
        %v5500 = vsel %vm1336, %v5459, 0
        %v5503 = vsel %vm1336, %v5460, 0
        %v5506 = vsel %vm1336, %v5461, 0
        %v5509 = vsel %vm1336, %v5462, 0
        %v5512 = vsel %vm1336, %v5463, 0
        %v5515 = vsel %vm1336, %v5464, 0
        %5517 = vmatprep.subr.mxu0 0.0
        %5518 = vmatpush1.msra.mxu0 0.0
        %5519 = vmatprep.subr.mxu0 0.0
        %5520 = vmatpush1.msra.mxu0 0.0
        %5521 = vmatprep.subr.mxu0 0.0
        %5522 = vmatpush1.msra.mxu0 0.0
        %5523 = vmatprep.subr.mxu0 0.0
        %5524 = vmatpush1.msra.mxu0 0.0
        %5525 = vmatprep.subr.mxu0 0.0
        %5526 = vmatpush1.msra.mxu0 0.0
        %5527 = vmatprep.subr.mxu0 0.0
        %5528 = vmatpush1.msra.mxu0 0.0
        %5529 = vmatprep.subr.mxu0 0.0
        %5530 = vmatpush1.msra.mxu0 0.0
        %5531 = vmatprep.subr.mxu0 0.0
        %5532 = vmatpush1.msra.mxu0 0.0
        %5533 = vmatprep.subr.mxu0 0.0
        %5534 = vmatpush1.msra.mxu0 0.0
        %5535 = vmatprep.subr.mxu0 0.0
        %5536 = vmatpush1.msra.mxu0 %v1242
        %5537 = vmatprep.subr.mxu0 0.0
        %5538 = vmatpush1.msra.mxu0 %v1241
        %5539 = vmatprep.subr.mxu0 0.0
        %5540 = vmatpush1.msra.mxu0 %v1240
        %5541 = vmatprep.subr.mxu0 0.0
        %5542 = vmatpush1.msra.mxu0 %v1239
        %5543 = vmatprep.subr.mxu0 0.0
        %5544 = vmatpush1.msra.mxu0 %v1238
        %5545 = vmatprep.subr.mxu0 0.0
        %5546 = vmatpush1.msra.mxu0 %v1237
        %5547 = vmatprep.subr.mxu0 0.0
        %5548 = vmatpush1.msra.mxu0 %v1236
        %5549 = vmatprep.subr.mxu0 0.0
        %5550 = vmatpush2.msra.mxu0 0.0
        %5551 = vmatprep.subr.mxu0 0.0
        %5552 = vmatpush2.msra.mxu0 0.0
        %5553 = vmatprep.subr.mxu0 0.0
        %5554 = vmatpush2.msra.mxu0 0.0
        %5555 = vmatprep.subr.mxu0 0.0
        %5556 = vmatpush2.msra.mxu0 0.0
        %5557 = vmatprep.subr.mxu0 0.0
        %5558 = vmatpush2.msra.mxu0 0.0
        %5559 = vmatprep.subr.mxu0 0.0
        %5560 = vmatpush2.msra.mxu0 0.0
        %5561 = vmatprep.subr.mxu0 0.0
        %5562 = vmatpush2.msra.mxu0 0.0
        %5563 = vmatprep.subr.mxu0 0.0
        %5564 = vmatpush2.msra.mxu0 0.0
        %5565 = vmatprep.subr.mxu0 0.0
        %5566 = vmatpush2.msra.mxu0 0.0
        %5567 = vmatprep.subr.mxu0 0.0
        %5568 = vmatpush2.msra.mxu0 0.0
        %5569 = vmatprep.subr.mxu0 0.0
        %5570 = vmatpush2.msra.mxu0 0.0
        %5571 = vmatprep.subr.mxu0 0.0
        %5572 = vmatpush2.msra.mxu0 0.0
        %5573 = vmatprep.subr.mxu0 0.0
        %5574 = vmatpush2.msra.mxu0 0.0
        %5575 = vmatprep.subr.mxu0 0.0
        %5576 = vmatpush2.msra.mxu0 0.0
        %5577 = vmatprep.subr.mxu0 0.0
        %5578 = vmatpush2.msra.mxu0 0.0
        %5579 = vmatprep.subr.mxu0 0.0
        %5580 = vmatpush2.msra.mxu0 0.0
        %5581 = vmatprep.mubr.f32.mxu0 0.0
        %5582 = vmatmul.mubr.f32.gmra.mxu0 %v5479
        %v5583 = vpop.f32.mrf.mxu0
        %v5584 = vadd.f32 0.0, %v5583
        %v5585 = vpop.f32.mrf.mxu0
        %5586 = vmatprep.mubr.f32.mxu0 0.0
        %5587 = vmatmul.mubr.f32.gmra.mxu0 %v5482
        %v5588 = vpop.f32.mrf.mxu0
        %v5589 = vadd.f32 0.0, %v5588
        %v5590 = vpop.f32.mrf.mxu0
        %5591 = vmatprep.mubr.f32.mxu0 0.0
        %5592 = vmatmul.mubr.f32.gmra.mxu0 %v5485
        %v5593 = vpop.f32.mrf.mxu0
        %v5594 = vadd.f32 0.0, %v5593
        %v5595 = vpop.f32.mrf.mxu0
        %5596 = vmatprep.mubr.f32.mxu0 0.0
        %5597 = vmatmul.mubr.f32.gmra.mxu0 %v5488
        %v5598 = vpop.f32.mrf.mxu0
        %v5599 = vadd.f32 0.0, %v5598
        %v5600 = vpop.f32.mrf.mxu0
        %5601 = vmatprep.mubr.f32.mxu0 0.0
        %5602 = vmatmul.mubr.f32.gmra.mxu0 %v5491
        %v5603 = vpop.f32.mrf.mxu0
        %v5604 = vadd.f32 0.0, %v5603
        %v5605 = vpop.f32.mrf.mxu0
        %5606 = vmatprep.mubr.f32.mxu0 0.0
        %5607 = vmatmul.mubr.f32.gmra.mxu0 %v5494
        %v5608 = vpop.f32.mrf.mxu0
        %v5609 = vadd.f32 0.0, %v5608
        %v5610 = vpop.f32.mrf.mxu0
        %5611 = vmatprep.mubr.f32.mxu0 0.0
        %5612 = vmatmul.mubr.f32.gmra.mxu0 %v5497
        %v5613 = vpop.f32.mrf.mxu0
        %v5614 = vadd.f32 0.0, %v5613
        %v5615 = vpop.f32.mrf.mxu0
        %5616 = vmatprep.mubr.f32.mxu0 0.0
        %5617 = vmatmul.mubr.f32.gmra.mxu0 %v5500
        %v5618 = vpop.f32.mrf.mxu0
        %v5619 = vadd.f32 0.0, %v5618
        %v5620 = vpop.f32.mrf.mxu0
        %5621 = vmatprep.mubr.f32.mxu0 0.0
        %5622 = vmatmul.mubr.f32.gmra.mxu0 %v5503
        %v5623 = vpop.f32.mrf.mxu0
        %v5624 = vadd.f32 0.0, %v5623
        %v5625 = vpop.f32.mrf.mxu0
        %5626 = vmatprep.mubr.f32.mxu0 0.0
        %5627 = vmatmul.mubr.f32.gmra.mxu0 %v5506
        %v5628 = vpop.f32.mrf.mxu0
        %v5629 = vadd.f32 0.0, %v5628
        %v5630 = vpop.f32.mrf.mxu0
        %5631 = vmatprep.mubr.f32.mxu0 0.0
        %5632 = vmatmul.mubr.f32.gmra.mxu0 %v5509
        %v5633 = vpop.f32.mrf.mxu0
        %v5634 = vadd.f32 0.0, %v5633
        %v5635 = vpop.f32.mrf.mxu0
        %5636 = vmatprep.mubr.f32.mxu0 0.0
        %5637 = vmatmul.mubr.f32.gmra.mxu0 %v5512
        %v5638 = vpop.f32.mrf.mxu0
        %v5639 = vadd.f32 0.0, %v5638
        %v5640 = vpop.f32.mrf.mxu0
        %5641 = vmatprep.mubr.f32.mxu0 0.0
        %5642 = vmatmul.mubr.f32.gmra.mxu0 %v5515
        %v5643 = vpop.f32.mrf.mxu0
        %v5644 = vadd.f32 0.0, %v5643
        %v5645 = vpop.f32.mrf.mxu0
        %5646 = vdwg.mxu0
        %v5647 = vld [vmem:[%s640 + $0x6] sm:$0x1]
        %v5648 = vld [vmem:[%s640 + $0xe] sm:$0x1]
        %v5649 = vld [vmem:[%s640 + $0x16] sm:$0x1]
        %v5650 = vld [vmem:[%s640 + $0x1e] sm:$0x1]
        %v5651 = vld [vmem:[%s640 + $0x26] sm:$0x1]
        %v5652 = vld [vmem:[%s640 + $0x2e] sm:$0x1]
        %v5653 = vld [vmem:[%s640 + $0x36] sm:$0x1]
        %v5654 = vld [vmem:[%s640 + $0x3e] sm:$0x1]
        %v5655 = vld [vmem:[%s640 + $0x46] sm:$0x1]
        %v5656 = vld [vmem:[%s640 + $0x4e] sm:$0x1]
        %v5657 = vld [vmem:[%s640 + $0x56] sm:$0x1]
        %v5658 = vld [vmem:[%s640 + $0x5e] sm:$0x1]
        %v5659 = vld [vmem:[%s640 + $0x66] sm:$0x1]
        %v5660 = vld [vmem:[%s640 + $0x6e] sm:$0x1]
        %v5661 = vld [vmem:[%s640 + $0x76] sm:$0x1]
        %v5662 = vld [vmem:[%s640 + $0x7e] sm:$0x1]
        %v5663 = vld [vmem:[%s640 + $0x86] sm:$0x1]
        %v5664 = vld [vmem:[%s640 + $0x8e] sm:$0x1]
        %v5665 = vld [vmem:[%s640 + $0x96] sm:$0x1]
        %v5666 = vld [vmem:[%s640 + $0x9e] sm:$0x1]
        %v5667 = vld [vmem:[%s640 + $0xa6] sm:$0x1]
        %v5668 = vld [vmem:[%s640 + $0xae] sm:$0x1]
        %v5669 = vld [vmem:[%s640 + $0xb6] sm:$0x1]
        %v5670 = vld [vmem:[%s640 + $0xbe] sm:$0x1]
        %v5671 = vld [vmem:[%s640 + $0xc6] sm:$0x1]
        %v5672 = vld [vmem:[%s640 + $0xce] sm:$0x1]
        %v5673 = vld [vmem:[%s640 + $0xd6] sm:$0x1]
        %v5674 = vld [vmem:[%s640 + $0xde] sm:$0x1]
        %v5675 = vld [vmem:[%s640 + $0xe6] sm:$0x1]
        %v5676 = vld [vmem:[%s640 + $0xee] sm:$0x1]
        %v5677 = vld [vmem:[%s640 + $0xf6] sm:$0x1]
        %v5678 = vld [vmem:[%s640 + $0xfe] sm:$0x1]
        %v5679 = vld [vmem:[%s640 + $0x106] sm:$0x1]
        %v5680 = vld [vmem:[%s640 + $0x10e] sm:$0x1]
        %v5681 = vld [vmem:[%s640 + $0x116] sm:$0x1]
        %v5682 = vld [vmem:[%s640 + $0x11e] sm:$0x1]
        %v5683 = vld [vmem:[%s640 + $0x126] sm:$0x1]
        %v5684 = vld [vmem:[%s640 + $0x12e] sm:$0x1]
        %v5685 = vld [vmem:[%s640 + $0x136] sm:$0x1]
        %v5686 = vld [vmem:[%s640 + $0x13e] sm:$0x1]
        %v5687 = vld [vmem:[%s640 + $0x146] sm:$0x1]
        %v5688 = vld [vmem:[%s640 + $0x14e] sm:$0x1]
        %v5689 = vld [vmem:[%s640 + $0x156] sm:$0x1]
        %v5690 = vld [vmem:[%s640 + $0x15e] sm:$0x1]
        %v5691 = vld [vmem:[%s640 + $0x166] sm:$0x1]
        %v5692 = vld [vmem:[%s640 + $0x16e] sm:$0x1]
        %v5693 = vld [vmem:[%s640 + $0x176] sm:$0x1]
        %v5694 = vld [vmem:[%s640 + $0x17e] sm:$0x1]
        %v5695 = vld [vmem:[%s640 + $0x186] sm:$0x1]
        %v5696 = vld [vmem:[%s640 + $0x18e] sm:$0x1]
        %v5697 = vld [vmem:[%s640 + $0x196] sm:$0x1]
        %v5698 = vld [vmem:[%s640 + $0x19e] sm:$0x1]
        %v5699 = vld [vmem:[%s640 + $0x1a6] sm:$0x1]
        %v5700 = vld [vmem:[%s640 + $0x1ae] sm:$0x1]
        %v5701 = vld [vmem:[%s640 + $0x1b6] sm:$0x1]
        %v5702 = vld [vmem:[%s640 + $0x1be] sm:$0x1]
        %v5703 = vld [vmem:[%s640 + $0x1c6] sm:$0x1]
        %v5704 = vld [vmem:[%s640 + $0x1ce] sm:$0x1]
        %v5705 = vld [vmem:[%s640 + $0x1d6] sm:$0x1]
        %v5706 = vld [vmem:[%s640 + $0x1de] sm:$0x1]
        %v5707 = vld [vmem:[%s640 + $0x1e6] sm:$0x1]
        %v5708 = vld [vmem:[%s640 + $0x1ee] sm:$0x1]
        %v5709 = vld [vmem:[%s640 + $0x1f6] sm:$0x1]
        %v5710 = vld [vmem:[%s640 + $0x1fe] sm:$0x1]
        %v5711 = vld [vmem:[%s640 + $0x206] sm:$0x1]
        %v5712 = vld [vmem:[%s640 + $0x20e] sm:$0x1]
        %v5713 = vld [vmem:[%s640 + $0x216] sm:$0x1]
        %v5714 = vld [vmem:[%s640 + $0x21e] sm:$0x1]
        %v5715 = vld [vmem:[%s640 + $0x226] sm:$0x1]
        %v5716 = vld [vmem:[%s640 + $0x22e] sm:$0x1]
        %v5717 = vld [vmem:[%s640 + $0x236] sm:$0x1]
        %v5718 = vld [vmem:[%s640 + $0x23e] sm:$0x1]
        %v5719 = vld [vmem:[%s640 + $0x246] sm:$0x1]
        %v5720 = vld [vmem:[%s640 + $0x24e] sm:$0x1]
        %v5721 = vld [vmem:[%s640 + $0x256] sm:$0x1]
        %v5722 = vld [vmem:[%s640 + $0x25e] sm:$0x1]
        %v5723 = vld [vmem:[%s640 + $0x266] sm:$0x1]
        %v5724 = vld [vmem:[%s640 + $0x26e] sm:$0x1]
        %v5725 = vld [vmem:[%s640 + $0x276] sm:$0x1]
        %v5726 = vld [vmem:[%s640 + $0x27e] sm:$0x1]
        %v5727 = vld [vmem:[%s640 + $0x286] sm:$0x1]
        %v5728 = vld [vmem:[%s640 + $0x28e] sm:$0x1]
        %v5729 = vld [vmem:[%s640 + $0x296] sm:$0x1]
        %v5730 = vld [vmem:[%s640 + $0x29e] sm:$0x1]
        %v5731 = vld [vmem:[%s640 + $0x2a6] sm:$0x1]
        %v5732 = vld [vmem:[%s640 + $0x2ae] sm:$0x1]
        %v5733 = vld [vmem:[%s640 + $0x2b6] sm:$0x1]
        %v5734 = vld [vmem:[%s640 + $0x2be] sm:$0x1]
        %v5735 = vld [vmem:[%s640 + $0x2c6] sm:$0x1]
        %v5736 = vld [vmem:[%s640 + $0x2ce] sm:$0x1]
        %v5737 = vld [vmem:[%s640 + $0x2d6] sm:$0x1]
        %v5738 = vld [vmem:[%s640 + $0x2de] sm:$0x1]
        %v5739 = vld [vmem:[%s640 + $0x2e6] sm:$0x1]
        %v5740 = vld [vmem:[%s640 + $0x2ee] sm:$0x1]
        %v5741 = vld [vmem:[%s640 + $0x2f6] sm:$0x1]
        %v5742 = vld [vmem:[%s640 + $0x2fe] sm:$0x1]
        %v5743 = vld [vmem:[%s640 + $0x306] sm:$0x1]
        %v5744 = vld [vmem:[%s640 + $0x30e] sm:$0x1]
        %v5745 = vld [vmem:[%s640 + $0x316] sm:$0x1]
        %v5746 = vld [vmem:[%s640 + $0x31e] sm:$0x1]
        %v5747 = vld [vmem:[%s640 + $0x326] sm:$0x1]
        %v5748 = vld [vmem:[%s640 + $0x32e] sm:$0x1]
        %v5749 = vld [vmem:[%s640 + $0x336] sm:$0x1]
        %v5750 = vld [vmem:[%s640 + $0x33e] sm:$0x1]
        %v5855 = vrot.slane %v5648, 7
        %v5856 = vsel %vm1715, %v5855, %v5647
        %v5857 = vrot.slane %v5649, 6
        %v5858 = vsel %vm1718, %v5857, %v5856
        %v5859 = vrot.slane %v5650, 5
        %v5860 = vsel %vm1721, %v5859, %v5858
        %v5861 = vrot.slane %v5651, 4
        %v5862 = vsel %vm1724, %v5861, %v5860
        %v5863 = vrot.slane %v5652, 3
        %v5864 = vsel %vm1727, %v5863, %v5862
        %v5865 = vrot.slane %v5653, 2
        %v5866 = vsel %vm1730, %v5865, %v5864
        %v5867 = vrot.slane %v5654, 1
        %v5868 = vsel %vm1733, %v5867, %v5866
        %v5869 = vrot.slane %v5656, 7
        %v5870 = vsel %vm1715, %v5869, %v5655
        %v5871 = vrot.slane %v5657, 6
        %v5872 = vsel %vm1718, %v5871, %v5870
        %v5873 = vrot.slane %v5658, 5
        %v5874 = vsel %vm1721, %v5873, %v5872
        %v5875 = vrot.slane %v5659, 4
        %v5876 = vsel %vm1724, %v5875, %v5874
        %v5877 = vrot.slane %v5660, 3
        %v5878 = vsel %vm1727, %v5877, %v5876
        %v5879 = vrot.slane %v5661, 2
        %v5880 = vsel %vm1730, %v5879, %v5878
        %v5881 = vrot.slane %v5662, 1
        %v5882 = vsel %vm1733, %v5881, %v5880
        %v5883 = vrot.slane %v5664, 7
        %v5884 = vsel %vm1715, %v5883, %v5663
        %v5885 = vrot.slane %v5665, 6
        %v5886 = vsel %vm1718, %v5885, %v5884
        %v5887 = vrot.slane %v5666, 5
        %v5888 = vsel %vm1721, %v5887, %v5886
        %v5889 = vrot.slane %v5667, 4
        %v5890 = vsel %vm1724, %v5889, %v5888
        %v5891 = vrot.slane %v5668, 3
        %v5892 = vsel %vm1727, %v5891, %v5890
        %v5893 = vrot.slane %v5669, 2
        %v5894 = vsel %vm1730, %v5893, %v5892
        %v5895 = vrot.slane %v5670, 1
        %v5896 = vsel %vm1733, %v5895, %v5894
        %v5897 = vrot.slane %v5672, 7
        %v5898 = vsel %vm1715, %v5897, %v5671
        %v5899 = vrot.slane %v5673, 6
        %v5900 = vsel %vm1718, %v5899, %v5898
        %v5901 = vrot.slane %v5674, 5
        %v5902 = vsel %vm1721, %v5901, %v5900
        %v5903 = vrot.slane %v5675, 4
        %v5904 = vsel %vm1724, %v5903, %v5902
        %v5905 = vrot.slane %v5676, 3
        %v5906 = vsel %vm1727, %v5905, %v5904
        %v5907 = vrot.slane %v5677, 2
        %v5908 = vsel %vm1730, %v5907, %v5906
        %v5909 = vrot.slane %v5678, 1
        %v5910 = vsel %vm1733, %v5909, %v5908
        %v5911 = vrot.slane %v5680, 7
        %v5912 = vsel %vm1715, %v5911, %v5679
        %v5913 = vrot.slane %v5681, 6
        %v5914 = vsel %vm1718, %v5913, %v5912
        %v5915 = vrot.slane %v5682, 5
        %v5916 = vsel %vm1721, %v5915, %v5914
        %v5917 = vrot.slane %v5683, 4
        %v5918 = vsel %vm1724, %v5917, %v5916
        %v5919 = vrot.slane %v5684, 3
        %v5920 = vsel %vm1727, %v5919, %v5918
        %v5921 = vrot.slane %v5685, 2
        %v5922 = vsel %vm1730, %v5921, %v5920
        %v5923 = vrot.slane %v5686, 1
        %v5924 = vsel %vm1733, %v5923, %v5922
        %v5925 = vrot.slane %v5688, 7
        %v5926 = vsel %vm1715, %v5925, %v5687
        %v5927 = vrot.slane %v5689, 6
        %v5928 = vsel %vm1718, %v5927, %v5926
        %v5929 = vrot.slane %v5690, 5
        %v5930 = vsel %vm1721, %v5929, %v5928
        %v5931 = vrot.slane %v5691, 4
        %v5932 = vsel %vm1724, %v5931, %v5930
        %v5933 = vrot.slane %v5692, 3
        %v5934 = vsel %vm1727, %v5933, %v5932
        %v5935 = vrot.slane %v5693, 2
        %v5936 = vsel %vm1730, %v5935, %v5934
        %v5937 = vrot.slane %v5694, 1
        %v5938 = vsel %vm1733, %v5937, %v5936
        %v5939 = vrot.slane %v5696, 7
        %v5940 = vsel %vm1715, %v5939, %v5695
        %v5941 = vrot.slane %v5697, 6
        %v5942 = vsel %vm1718, %v5941, %v5940
        %v5943 = vrot.slane %v5698, 5
        %v5944 = vsel %vm1721, %v5943, %v5942
        %v5945 = vrot.slane %v5699, 4
        %v5946 = vsel %vm1724, %v5945, %v5944
        %v5947 = vrot.slane %v5700, 3
        %v5948 = vsel %vm1727, %v5947, %v5946
        %v5949 = vrot.slane %v5701, 2
        %v5950 = vsel %vm1730, %v5949, %v5948
        %v5951 = vrot.slane %v5702, 1
        %v5952 = vsel %vm1733, %v5951, %v5950
        %v5953 = vrot.slane %v5704, 7
        %v5954 = vsel %vm1715, %v5953, %v5703
        %v5955 = vrot.slane %v5705, 6
        %v5956 = vsel %vm1718, %v5955, %v5954
        %v5957 = vrot.slane %v5706, 5
        %v5958 = vsel %vm1721, %v5957, %v5956
        %v5959 = vrot.slane %v5707, 4
        %v5960 = vsel %vm1724, %v5959, %v5958
        %v5961 = vrot.slane %v5708, 3
        %v5962 = vsel %vm1727, %v5961, %v5960
        %v5963 = vrot.slane %v5709, 2
        %v5964 = vsel %vm1730, %v5963, %v5962
        %v5965 = vrot.slane %v5710, 1
        %v5966 = vsel %vm1733, %v5965, %v5964
        %v5967 = vrot.slane %v5712, 7
        %v5968 = vsel %vm1715, %v5967, %v5711
        %v5969 = vrot.slane %v5713, 6
        %v5970 = vsel %vm1718, %v5969, %v5968
        %v5971 = vrot.slane %v5714, 5
        %v5972 = vsel %vm1721, %v5971, %v5970
        %v5973 = vrot.slane %v5715, 4
        %v5974 = vsel %vm1724, %v5973, %v5972
        %v5975 = vrot.slane %v5716, 3
        %v5976 = vsel %vm1727, %v5975, %v5974
        %v5977 = vrot.slane %v5717, 2
        %v5978 = vsel %vm1730, %v5977, %v5976
        %v5979 = vrot.slane %v5718, 1
        %v5980 = vsel %vm1733, %v5979, %v5978
        %v5981 = vrot.slane %v5720, 7
        %v5982 = vsel %vm1715, %v5981, %v5719
        %v5983 = vrot.slane %v5721, 6
        %v5984 = vsel %vm1718, %v5983, %v5982
        %v5985 = vrot.slane %v5722, 5
        %v5986 = vsel %vm1721, %v5985, %v5984
        %v5987 = vrot.slane %v5723, 4
        %v5988 = vsel %vm1724, %v5987, %v5986
        %v5989 = vrot.slane %v5724, 3
        %v5990 = vsel %vm1727, %v5989, %v5988
        %v5991 = vrot.slane %v5725, 2
        %v5992 = vsel %vm1730, %v5991, %v5990
        %v5993 = vrot.slane %v5726, 1
        %v5994 = vsel %vm1733, %v5993, %v5992
        %v5995 = vrot.slane %v5728, 7
        %v5996 = vsel %vm1715, %v5995, %v5727
        %v5997 = vrot.slane %v5729, 6
        %v5998 = vsel %vm1718, %v5997, %v5996
        %v5999 = vrot.slane %v5730, 5
        %v6000 = vsel %vm1721, %v5999, %v5998
        %v6001 = vrot.slane %v5731, 4
        %v6002 = vsel %vm1724, %v6001, %v6000
        %v6003 = vrot.slane %v5732, 3
        %v6004 = vsel %vm1727, %v6003, %v6002
        %v6005 = vrot.slane %v5733, 2
        %v6006 = vsel %vm1730, %v6005, %v6004
        %v6007 = vrot.slane %v5734, 1
        %v6008 = vsel %vm1733, %v6007, %v6006
        %v6009 = vrot.slane %v5736, 7
        %v6010 = vsel %vm1715, %v6009, %v5735
        %v6011 = vrot.slane %v5737, 6
        %v6012 = vsel %vm1718, %v6011, %v6010
        %v6013 = vrot.slane %v5738, 5
        %v6014 = vsel %vm1721, %v6013, %v6012
        %v6015 = vrot.slane %v5739, 4
        %v6016 = vsel %vm1724, %v6015, %v6014
        %v6017 = vrot.slane %v5740, 3
        %v6018 = vsel %vm1727, %v6017, %v6016
        %v6019 = vrot.slane %v5741, 2
        %v6020 = vsel %vm1730, %v6019, %v6018
        %v6021 = vrot.slane %v5742, 1
        %v6022 = vsel %vm1733, %v6021, %v6020
        %v6023 = vrot.slane %v5744, 7
        %v6024 = vsel %vm1715, %v6023, %v5743
        %v6025 = vrot.slane %v5745, 6
        %v6026 = vsel %vm1718, %v6025, %v6024
        %v6027 = vrot.slane %v5746, 5
        %v6028 = vsel %vm1721, %v6027, %v6026
        %v6029 = vrot.slane %v5747, 4
        %v6030 = vsel %vm1724, %v6029, %v6028
        %v6031 = vrot.slane %v5748, 3
        %v6032 = vsel %vm1727, %v6031, %v6030
        %v6033 = vrot.slane %v5749, 2
        %v6034 = vsel %vm1730, %v6033, %v6032
        %v6035 = vrot.slane %v5750, 1
        %v6036 = vsel %vm1733, %v6035, %v6034
        %v6050 = vmul.f32 %v5584, %v5868
        %v6051 = vmul.f32 %v5589, %v5882
        %v6052 = vmul.f32 %v5594, %v5896
        %v6053 = vmul.f32 %v5599, %v5910
        %v6054 = vmul.f32 %v5604, %v5924
        %v6055 = vmul.f32 %v5609, %v5938
        %v6056 = vmul.f32 %v5614, %v5952
        %v6057 = vmul.f32 %v5619, %v5966
        %v6058 = vmul.f32 %v5624, %v5980
        %v6059 = vmul.f32 %v5629, %v5994
        %v6060 = vmul.f32 %v5634, %v6008
        %v6061 = vmul.f32 %v5639, %v6022
        %v6062 = vmul.f32 %v5644, %v6036
        %v6063 = vadd.f32 %v5374, %v6050
        %v6064 = vadd.f32 %v5375, %v6051
        %v6065 = vadd.f32 %v5376, %v6052
        %v6066 = vadd.f32 %v5377, %v6053
        %v6067 = vadd.f32 %v5378, %v6054
        %v6068 = vadd.f32 %v5379, %v6055
        %v6069 = vadd.f32 %v5380, %v6056
        %v6070 = vadd.f32 %v5381, %v6057
        %v6071 = vadd.f32 %v5382, %v6058
        %v6072 = vadd.f32 %v5383, %v6059
        %v6073 = vadd.f32 %v5384, %v6060
        %v6074 = vadd.f32 %v5385, %v6061
        %v6075 = vadd.f32 %v5386, %v6062
        %6076 = vset.pattern.permute.xlu0 7
        %6077 = vperm.xlu0 %6076, %v1216
        %v6078 = vpop.permute.xlu0 %6077
        %6079 = vset.pattern.permute.xlu0 7
        %6080 = vperm.xlu0 %6079, %v1217
        %v6081 = vpop.permute.xlu0 %6080
        %6082 = vset.pattern.permute.xlu0 7
        %6083 = vperm.xlu0 %6082, %v1218
        %v6084 = vpop.permute.xlu0 %6083
        %6085 = vset.pattern.permute.xlu0 7
        %6086 = vperm.xlu0 %6085, %v1219
        %v6087 = vpop.permute.xlu0 %6086
        %6088 = vset.pattern.permute.xlu0 7
        %6089 = vperm.xlu0 %6088, %v1220
        %v6090 = vpop.permute.xlu0 %6089
        %6091 = vset.pattern.permute.xlu0 7
        %6092 = vperm.xlu0 %6091, %v1221
        %v6093 = vpop.permute.xlu0 %6092
        %6094 = vset.pattern.permute.xlu0 7
        %6095 = vperm.xlu0 %6094, %v1222
        %v6096 = vpop.permute.xlu0 %6095
        %6097 = vset.pattern.permute.xlu0 7
        %6098 = vperm.xlu0 %6097, %v1223
        %v6099 = vpop.permute.xlu0 %6098
        %6100 = vset.pattern.permute.xlu0 7
        %6101 = vperm.xlu0 %6100, %v1224
        %v6102 = vpop.permute.xlu0 %6101
        %6103 = vset.pattern.permute.xlu0 7
        %6104 = vperm.xlu0 %6103, %v1225
        %v6105 = vpop.permute.xlu0 %6104
        %6106 = vset.pattern.permute.xlu0 7
        %6107 = vperm.xlu0 %6106, %v1226
        %v6108 = vpop.permute.xlu0 %6107
        %6109 = vset.pattern.permute.xlu0 7
        %6110 = vperm.xlu0 %6109, %v1227
        %v6111 = vpop.permute.xlu0 %6110
        %6112 = vset.pattern.permute.xlu0 7
        %6113 = vperm.xlu0 %6112, %v1228
        %v6114 = vpop.permute.xlu0 %6113
        %vm6115 = vcmp.eq.s32.totalorder %v6078, %v1244
        %vm6116 = vcmp.eq.s32.totalorder %v6081, %v1244
        %vm6117 = vcmp.eq.s32.totalorder %v6084, %v1244
        %vm6118 = vcmp.eq.s32.totalorder %v6087, %v1244
        %vm6119 = vcmp.eq.s32.totalorder %v6090, %v1244
        %vm6120 = vcmp.eq.s32.totalorder %v6093, %v1244
        %vm6121 = vcmp.eq.s32.totalorder %v6096, %v1244
        %vm6122 = vcmp.eq.s32.totalorder %v6099, %v1244
        %vm6123 = vcmp.eq.s32.totalorder %v6102, %v1244
        %vm6124 = vcmp.eq.s32.totalorder %v6105, %v1244
        %vm6125 = vcmp.eq.s32.totalorder %v6108, %v1244
        %vm6126 = vcmp.eq.s32.totalorder %v6111, %v1244
        %vm6127 = vcmp.eq.s32.totalorder %v6114, %v1244
        %v6128 = vsel %vm6115, 1, 0
        %v6129 = vsel %vm6116, 1, 0
        %v6130 = vsel %vm6117, 1, 0
        %v6131 = vsel %vm6118, 1, 0
        %v6132 = vsel %vm6119, 1, 0
        %v6133 = vsel %vm6120, 1, 0
        %v6134 = vsel %vm6121, 1, 0
        %v6135 = vsel %vm6122, 1, 0
        %v6136 = vsel %vm6123, 1, 0
        %v6137 = vsel %vm6124, 1, 0
        %v6138 = vsel %vm6125, 1, 0
        %v6139 = vsel %vm6126, 1, 0
        %v6140 = vsel %vm6127, 1, 0
        %v6141 = vcvt.s32.f32 %v6128
        %v6142 = vcvt.s32.f32 %v6129
        %v6143 = vcvt.s32.f32 %v6130
        %v6144 = vcvt.s32.f32 %v6131
        %v6145 = vcvt.s32.f32 %v6132
        %v6146 = vcvt.s32.f32 %v6133
        %v6147 = vcvt.s32.f32 %v6134
        %v6148 = vcvt.s32.f32 %v6135
        %v6149 = vcvt.s32.f32 %v6136
        %v6150 = vcvt.s32.f32 %v6137
        %v6151 = vcvt.s32.f32 %v6138
        %v6152 = vcvt.s32.f32 %v6139
        %v6153 = vcvt.s32.f32 %v6140
        %v6154 = vadd.f32 %v5465, %v6141
        %v6155 = vadd.f32 %v5466, %v6142
        %v6156 = vadd.f32 %v5467, %v6143
        %v6157 = vadd.f32 %v5468, %v6144
        %v6158 = vadd.f32 %v5469, %v6145
        %v6159 = vadd.f32 %v5470, %v6146
        %v6160 = vadd.f32 %v5471, %v6147
        %v6161 = vadd.f32 %v5472, %v6148
        %v6162 = vadd.f32 %v5473, %v6149
        %v6163 = vadd.f32 %v5474, %v6150
        %v6164 = vadd.f32 %v5475, %v6151
        %v6165 = vadd.f32 %v5476, %v6152
        %v6166 = vadd.f32 %v5477, %v6153
        %v6168 = vsel %vm1336, %v6141, 0
        %v6171 = vsel %vm1336, %v6142, 0
        %v6174 = vsel %vm1336, %v6143, 0
        %v6177 = vsel %vm1336, %v6144, 0
        %v6180 = vsel %vm1336, %v6145, 0
        %v6183 = vsel %vm1336, %v6146, 0
        %v6186 = vsel %vm1336, %v6147, 0
        %v6189 = vsel %vm1336, %v6148, 0
        %v6192 = vsel %vm1336, %v6149, 0
        %v6195 = vsel %vm1336, %v6150, 0
        %v6198 = vsel %vm1336, %v6151, 0
        %v6201 = vsel %vm1336, %v6152, 0
        %v6204 = vsel %vm1336, %v6153, 0
        %6206 = vmatprep.subr.mxu0 0.0
        %6207 = vmatpush1.msra.mxu0 0.0
        %6208 = vmatprep.subr.mxu0 0.0
        %6209 = vmatpush1.msra.mxu0 0.0
        %6210 = vmatprep.subr.mxu0 0.0
        %6211 = vmatpush1.msra.mxu0 0.0
        %6212 = vmatprep.subr.mxu0 0.0
        %6213 = vmatpush1.msra.mxu0 0.0
        %6214 = vmatprep.subr.mxu0 0.0
        %6215 = vmatpush1.msra.mxu0 0.0
        %6216 = vmatprep.subr.mxu0 0.0
        %6217 = vmatpush1.msra.mxu0 0.0
        %6218 = vmatprep.subr.mxu0 0.0
        %6219 = vmatpush1.msra.mxu0 0.0
        %6220 = vmatprep.subr.mxu0 0.0
        %6221 = vmatpush1.msra.mxu0 0.0
        %6222 = vmatprep.subr.mxu0 0.0
        %6223 = vmatpush1.msra.mxu0 0.0
        %6224 = vmatprep.subr.mxu0 0.0
        %6225 = vmatpush1.msra.mxu0 %v1242
        %6226 = vmatprep.subr.mxu0 0.0
        %6227 = vmatpush1.msra.mxu0 %v1241
        %6228 = vmatprep.subr.mxu0 0.0
        %6229 = vmatpush1.msra.mxu0 %v1240
        %6230 = vmatprep.subr.mxu0 0.0
        %6231 = vmatpush1.msra.mxu0 %v1239
        %6232 = vmatprep.subr.mxu0 0.0
        %6233 = vmatpush1.msra.mxu0 %v1238
        %6234 = vmatprep.subr.mxu0 0.0
        %6235 = vmatpush1.msra.mxu0 %v1237
        %6236 = vmatprep.subr.mxu0 0.0
        %6237 = vmatpush1.msra.mxu0 %v1236
        %6238 = vmatprep.subr.mxu0 0.0
        %6239 = vmatpush2.msra.mxu0 0.0
        %6240 = vmatprep.subr.mxu0 0.0
        %6241 = vmatpush2.msra.mxu0 0.0
        %6242 = vmatprep.subr.mxu0 0.0
        %6243 = vmatpush2.msra.mxu0 0.0
        %6244 = vmatprep.subr.mxu0 0.0
        %6245 = vmatpush2.msra.mxu0 0.0
        %6246 = vmatprep.subr.mxu0 0.0
        %6247 = vmatpush2.msra.mxu0 0.0
        %6248 = vmatprep.subr.mxu0 0.0
        %6249 = vmatpush2.msra.mxu0 0.0
        %6250 = vmatprep.subr.mxu0 0.0
        %6251 = vmatpush2.msra.mxu0 0.0
        %6252 = vmatprep.subr.mxu0 0.0
        %6253 = vmatpush2.msra.mxu0 0.0
        %6254 = vmatprep.subr.mxu0 0.0
        %6255 = vmatpush2.msra.mxu0 0.0
        %6256 = vmatprep.subr.mxu0 0.0
        %6257 = vmatpush2.msra.mxu0 0.0
        %6258 = vmatprep.subr.mxu0 0.0
        %6259 = vmatpush2.msra.mxu0 0.0
        %6260 = vmatprep.subr.mxu0 0.0
        %6261 = vmatpush2.msra.mxu0 0.0
        %6262 = vmatprep.subr.mxu0 0.0
        %6263 = vmatpush2.msra.mxu0 0.0
        %6264 = vmatprep.subr.mxu0 0.0
        %6265 = vmatpush2.msra.mxu0 0.0
        %6266 = vmatprep.subr.mxu0 0.0
        %6267 = vmatpush2.msra.mxu0 0.0
        %6268 = vmatprep.subr.mxu0 0.0
        %6269 = vmatpush2.msra.mxu0 0.0
        %6270 = vmatprep.mubr.f32.mxu0 0.0
        %6271 = vmatmul.mubr.f32.gmra.mxu0 %v6168
        %v6272 = vpop.f32.mrf.mxu0
        %v6273 = vadd.f32 0.0, %v6272
        %v6274 = vpop.f32.mrf.mxu0
        %6275 = vmatprep.mubr.f32.mxu0 0.0
        %6276 = vmatmul.mubr.f32.gmra.mxu0 %v6171
        %v6277 = vpop.f32.mrf.mxu0
        %v6278 = vadd.f32 0.0, %v6277
        %v6279 = vpop.f32.mrf.mxu0
        %6280 = vmatprep.mubr.f32.mxu0 0.0
        %6281 = vmatmul.mubr.f32.gmra.mxu0 %v6174
        %v6282 = vpop.f32.mrf.mxu0
        %v6283 = vadd.f32 0.0, %v6282
        %v6284 = vpop.f32.mrf.mxu0
        %6285 = vmatprep.mubr.f32.mxu0 0.0
        %6286 = vmatmul.mubr.f32.gmra.mxu0 %v6177
        %v6287 = vpop.f32.mrf.mxu0
        %v6288 = vadd.f32 0.0, %v6287
        %v6289 = vpop.f32.mrf.mxu0
        %6290 = vmatprep.mubr.f32.mxu0 0.0
        %6291 = vmatmul.mubr.f32.gmra.mxu0 %v6180
        %v6292 = vpop.f32.mrf.mxu0
        %v6293 = vadd.f32 0.0, %v6292
        %v6294 = vpop.f32.mrf.mxu0
        %6295 = vmatprep.mubr.f32.mxu0 0.0
        %6296 = vmatmul.mubr.f32.gmra.mxu0 %v6183
        %v6297 = vpop.f32.mrf.mxu0
        %v6298 = vadd.f32 0.0, %v6297
        %v6299 = vpop.f32.mrf.mxu0
        %6300 = vmatprep.mubr.f32.mxu0 0.0
        %6301 = vmatmul.mubr.f32.gmra.mxu0 %v6186
        %v6302 = vpop.f32.mrf.mxu0
        %v6303 = vadd.f32 0.0, %v6302
        %v6304 = vpop.f32.mrf.mxu0
        %6305 = vmatprep.mubr.f32.mxu0 0.0
        %6306 = vmatmul.mubr.f32.gmra.mxu0 %v6189
        %v6307 = vpop.f32.mrf.mxu0
        %v6308 = vadd.f32 0.0, %v6307
        %v6309 = vpop.f32.mrf.mxu0
        %6310 = vmatprep.mubr.f32.mxu0 0.0
        %6311 = vmatmul.mubr.f32.gmra.mxu0 %v6192
        %v6312 = vpop.f32.mrf.mxu0
        %v6313 = vadd.f32 0.0, %v6312
        %v6314 = vpop.f32.mrf.mxu0
        %6315 = vmatprep.mubr.f32.mxu0 0.0
        %6316 = vmatmul.mubr.f32.gmra.mxu0 %v6195
        %v6317 = vpop.f32.mrf.mxu0
        %v6318 = vadd.f32 0.0, %v6317
        %v6319 = vpop.f32.mrf.mxu0
        %6320 = vmatprep.mubr.f32.mxu0 0.0
        %6321 = vmatmul.mubr.f32.gmra.mxu0 %v6198
        %v6322 = vpop.f32.mrf.mxu0
        %v6323 = vadd.f32 0.0, %v6322
        %v6324 = vpop.f32.mrf.mxu0
        %6325 = vmatprep.mubr.f32.mxu0 0.0
        %6326 = vmatmul.mubr.f32.gmra.mxu0 %v6201
        %v6327 = vpop.f32.mrf.mxu0
        %v6328 = vadd.f32 0.0, %v6327
        %v6329 = vpop.f32.mrf.mxu0
        %6330 = vmatprep.mubr.f32.mxu0 0.0
        %6331 = vmatmul.mubr.f32.gmra.mxu0 %v6204
        %v6332 = vpop.f32.mrf.mxu0
        %v6333 = vadd.f32 0.0, %v6332
        %v6334 = vpop.f32.mrf.mxu0
        %6335 = vdwg.mxu0
        %v6336 = vld [vmem:[%s640 + $0x7] sm:$0x1]
        %v6337 = vld [vmem:[%s640 + $0xf] sm:$0x1]
        %v6338 = vld [vmem:[%s640 + $0x17] sm:$0x1]
        %v6339 = vld [vmem:[%s640 + $0x1f] sm:$0x1]
        %v6340 = vld [vmem:[%s640 + $0x27] sm:$0x1]
        %v6341 = vld [vmem:[%s640 + $0x2f] sm:$0x1]
        %v6342 = vld [vmem:[%s640 + $0x37] sm:$0x1]
        %v6343 = vld [vmem:[%s640 + $0x3f] sm:$0x1]
        %v6344 = vld [vmem:[%s640 + $0x47] sm:$0x1]
        %v6345 = vld [vmem:[%s640 + $0x4f] sm:$0x1]
        %v6346 = vld [vmem:[%s640 + $0x57] sm:$0x1]
        %v6347 = vld [vmem:[%s640 + $0x5f] sm:$0x1]
        %v6348 = vld [vmem:[%s640 + $0x67] sm:$0x1]
        %v6349 = vld [vmem:[%s640 + $0x6f] sm:$0x1]
        %v6350 = vld [vmem:[%s640 + $0x77] sm:$0x1]
        %v6351 = vld [vmem:[%s640 + $0x7f] sm:$0x1]
        %v6352 = vld [vmem:[%s640 + $0x87] sm:$0x1]
        %v6353 = vld [vmem:[%s640 + $0x8f] sm:$0x1]
        %v6354 = vld [vmem:[%s640 + $0x97] sm:$0x1]
        %v6355 = vld [vmem:[%s640 + $0x9f] sm:$0x1]
        %v6356 = vld [vmem:[%s640 + $0xa7] sm:$0x1]
        %v6357 = vld [vmem:[%s640 + $0xaf] sm:$0x1]
        %v6358 = vld [vmem:[%s640 + $0xb7] sm:$0x1]
        %v6359 = vld [vmem:[%s640 + $0xbf] sm:$0x1]
        %v6360 = vld [vmem:[%s640 + $0xc7] sm:$0x1]
        %v6361 = vld [vmem:[%s640 + $0xcf] sm:$0x1]
        %v6362 = vld [vmem:[%s640 + $0xd7] sm:$0x1]
        %v6363 = vld [vmem:[%s640 + $0xdf] sm:$0x1]
        %v6364 = vld [vmem:[%s640 + $0xe7] sm:$0x1]
        %v6365 = vld [vmem:[%s640 + $0xef] sm:$0x1]
        %v6366 = vld [vmem:[%s640 + $0xf7] sm:$0x1]
        %v6367 = vld [vmem:[%s640 + $0xff] sm:$0x1]
        %v6368 = vld [vmem:[%s640 + $0x107] sm:$0x1]
        %v6369 = vld [vmem:[%s640 + $0x10f] sm:$0x1]
        %v6370 = vld [vmem:[%s640 + $0x117] sm:$0x1]
        %v6371 = vld [vmem:[%s640 + $0x11f] sm:$0x1]
        %v6372 = vld [vmem:[%s640 + $0x127] sm:$0x1]
        %v6373 = vld [vmem:[%s640 + $0x12f] sm:$0x1]
        %v6374 = vld [vmem:[%s640 + $0x137] sm:$0x1]
        %v6375 = vld [vmem:[%s640 + $0x13f] sm:$0x1]
        %v6376 = vld [vmem:[%s640 + $0x147] sm:$0x1]
        %v6377 = vld [vmem:[%s640 + $0x14f] sm:$0x1]
        %v6378 = vld [vmem:[%s640 + $0x157] sm:$0x1]
        %v6379 = vld [vmem:[%s640 + $0x15f] sm:$0x1]
        %v6380 = vld [vmem:[%s640 + $0x167] sm:$0x1]
        %v6381 = vld [vmem:[%s640 + $0x16f] sm:$0x1]
        %v6382 = vld [vmem:[%s640 + $0x177] sm:$0x1]
        %v6383 = vld [vmem:[%s640 + $0x17f] sm:$0x1]
        %v6384 = vld [vmem:[%s640 + $0x187] sm:$0x1]
        %v6385 = vld [vmem:[%s640 + $0x18f] sm:$0x1]
        %v6386 = vld [vmem:[%s640 + $0x197] sm:$0x1]
        %v6387 = vld [vmem:[%s640 + $0x19f] sm:$0x1]
        %v6388 = vld [vmem:[%s640 + $0x1a7] sm:$0x1]
        %v6389 = vld [vmem:[%s640 + $0x1af] sm:$0x1]
        %v6390 = vld [vmem:[%s640 + $0x1b7] sm:$0x1]
        %v6391 = vld [vmem:[%s640 + $0x1bf] sm:$0x1]
        %v6392 = vld [vmem:[%s640 + $0x1c7] sm:$0x1]
        %v6393 = vld [vmem:[%s640 + $0x1cf] sm:$0x1]
        %v6394 = vld [vmem:[%s640 + $0x1d7] sm:$0x1]
        %v6395 = vld [vmem:[%s640 + $0x1df] sm:$0x1]
        %v6396 = vld [vmem:[%s640 + $0x1e7] sm:$0x1]
        %v6397 = vld [vmem:[%s640 + $0x1ef] sm:$0x1]
        %v6398 = vld [vmem:[%s640 + $0x1f7] sm:$0x1]
        %v6399 = vld [vmem:[%s640 + $0x1ff] sm:$0x1]
        %v6400 = vld [vmem:[%s640 + $0x207] sm:$0x1]
        %v6401 = vld [vmem:[%s640 + $0x20f] sm:$0x1]
        %v6402 = vld [vmem:[%s640 + $0x217] sm:$0x1]
        %v6403 = vld [vmem:[%s640 + $0x21f] sm:$0x1]
        %v6404 = vld [vmem:[%s640 + $0x227] sm:$0x1]
        %v6405 = vld [vmem:[%s640 + $0x22f] sm:$0x1]
        %v6406 = vld [vmem:[%s640 + $0x237] sm:$0x1]
        %v6407 = vld [vmem:[%s640 + $0x23f] sm:$0x1]
        %v6408 = vld [vmem:[%s640 + $0x247] sm:$0x1]
        %v6409 = vld [vmem:[%s640 + $0x24f] sm:$0x1]
        %v6410 = vld [vmem:[%s640 + $0x257] sm:$0x1]
        %v6411 = vld [vmem:[%s640 + $0x25f] sm:$0x1]
        %v6412 = vld [vmem:[%s640 + $0x267] sm:$0x1]
        %v6413 = vld [vmem:[%s640 + $0x26f] sm:$0x1]
        %v6414 = vld [vmem:[%s640 + $0x277] sm:$0x1]
        %v6415 = vld [vmem:[%s640 + $0x27f] sm:$0x1]
        %v6416 = vld [vmem:[%s640 + $0x287] sm:$0x1]
        %v6417 = vld [vmem:[%s640 + $0x28f] sm:$0x1]
        %v6418 = vld [vmem:[%s640 + $0x297] sm:$0x1]
        %v6419 = vld [vmem:[%s640 + $0x29f] sm:$0x1]
        %v6420 = vld [vmem:[%s640 + $0x2a7] sm:$0x1]
        %v6421 = vld [vmem:[%s640 + $0x2af] sm:$0x1]
        %v6422 = vld [vmem:[%s640 + $0x2b7] sm:$0x1]
        %v6423 = vld [vmem:[%s640 + $0x2bf] sm:$0x1]
        %v6424 = vld [vmem:[%s640 + $0x2c7] sm:$0x1]
        %v6425 = vld [vmem:[%s640 + $0x2cf] sm:$0x1]
        %v6426 = vld [vmem:[%s640 + $0x2d7] sm:$0x1]
        %v6427 = vld [vmem:[%s640 + $0x2df] sm:$0x1]
        %v6428 = vld [vmem:[%s640 + $0x2e7] sm:$0x1]
        %v6429 = vld [vmem:[%s640 + $0x2ef] sm:$0x1]
        %v6430 = vld [vmem:[%s640 + $0x2f7] sm:$0x1]
        %v6431 = vld [vmem:[%s640 + $0x2ff] sm:$0x1]
        %v6432 = vld [vmem:[%s640 + $0x307] sm:$0x1]
        %v6433 = vld [vmem:[%s640 + $0x30f] sm:$0x1]
        %v6434 = vld [vmem:[%s640 + $0x317] sm:$0x1]
        %v6435 = vld [vmem:[%s640 + $0x31f] sm:$0x1]
        %v6436 = vld [vmem:[%s640 + $0x327] sm:$0x1]
        %v6437 = vld [vmem:[%s640 + $0x32f] sm:$0x1]
        %v6438 = vld [vmem:[%s640 + $0x337] sm:$0x1]
        %v6439 = vld [vmem:[%s640 + $0x33f] sm:$0x1]
        %v6544 = vrot.slane %v6337, 7
        %v6545 = vsel %vm1715, %v6544, %v6336
        %v6546 = vrot.slane %v6338, 6
        %v6547 = vsel %vm1718, %v6546, %v6545
        %v6548 = vrot.slane %v6339, 5
        %v6549 = vsel %vm1721, %v6548, %v6547
        %v6550 = vrot.slane %v6340, 4
        %v6551 = vsel %vm1724, %v6550, %v6549
        %v6552 = vrot.slane %v6341, 3
        %v6553 = vsel %vm1727, %v6552, %v6551
        %v6554 = vrot.slane %v6342, 2
        %v6555 = vsel %vm1730, %v6554, %v6553
        %v6556 = vrot.slane %v6343, 1
        %v6557 = vsel %vm1733, %v6556, %v6555
        %v6558 = vrot.slane %v6345, 7
        %v6559 = vsel %vm1715, %v6558, %v6344
        %v6560 = vrot.slane %v6346, 6
        %v6561 = vsel %vm1718, %v6560, %v6559
        %v6562 = vrot.slane %v6347, 5
        %v6563 = vsel %vm1721, %v6562, %v6561
        %v6564 = vrot.slane %v6348, 4
        %v6565 = vsel %vm1724, %v6564, %v6563
        %v6566 = vrot.slane %v6349, 3
        %v6567 = vsel %vm1727, %v6566, %v6565
        %v6568 = vrot.slane %v6350, 2
        %v6569 = vsel %vm1730, %v6568, %v6567
        %v6570 = vrot.slane %v6351, 1
        %v6571 = vsel %vm1733, %v6570, %v6569
        %v6572 = vrot.slane %v6353, 7
        %v6573 = vsel %vm1715, %v6572, %v6352
        %v6574 = vrot.slane %v6354, 6
        %v6575 = vsel %vm1718, %v6574, %v6573
        %v6576 = vrot.slane %v6355, 5
        %v6577 = vsel %vm1721, %v6576, %v6575
        %v6578 = vrot.slane %v6356, 4
        %v6579 = vsel %vm1724, %v6578, %v6577
        %v6580 = vrot.slane %v6357, 3
        %v6581 = vsel %vm1727, %v6580, %v6579
        %v6582 = vrot.slane %v6358, 2
        %v6583 = vsel %vm1730, %v6582, %v6581
        %v6584 = vrot.slane %v6359, 1
        %v6585 = vsel %vm1733, %v6584, %v6583
        %v6586 = vrot.slane %v6361, 7
        %v6587 = vsel %vm1715, %v6586, %v6360
        %v6588 = vrot.slane %v6362, 6
        %v6589 = vsel %vm1718, %v6588, %v6587
        %v6590 = vrot.slane %v6363, 5
        %v6591 = vsel %vm1721, %v6590, %v6589
        %v6592 = vrot.slane %v6364, 4
        %v6593 = vsel %vm1724, %v6592, %v6591
        %v6594 = vrot.slane %v6365, 3
        %v6595 = vsel %vm1727, %v6594, %v6593
        %v6596 = vrot.slane %v6366, 2
        %v6597 = vsel %vm1730, %v6596, %v6595
        %v6598 = vrot.slane %v6367, 1
        %v6599 = vsel %vm1733, %v6598, %v6597
        %v6600 = vrot.slane %v6369, 7
        %v6601 = vsel %vm1715, %v6600, %v6368
        %v6602 = vrot.slane %v6370, 6
        %v6603 = vsel %vm1718, %v6602, %v6601
        %v6604 = vrot.slane %v6371, 5
        %v6605 = vsel %vm1721, %v6604, %v6603
        %v6606 = vrot.slane %v6372, 4
        %v6607 = vsel %vm1724, %v6606, %v6605
        %v6608 = vrot.slane %v6373, 3
        %v6609 = vsel %vm1727, %v6608, %v6607
        %v6610 = vrot.slane %v6374, 2
        %v6611 = vsel %vm1730, %v6610, %v6609
        %v6612 = vrot.slane %v6375, 1
        %v6613 = vsel %vm1733, %v6612, %v6611
        %v6614 = vrot.slane %v6377, 7
        %v6615 = vsel %vm1715, %v6614, %v6376
        %v6616 = vrot.slane %v6378, 6
        %v6617 = vsel %vm1718, %v6616, %v6615
        %v6618 = vrot.slane %v6379, 5
        %v6619 = vsel %vm1721, %v6618, %v6617
        %v6620 = vrot.slane %v6380, 4
        %v6621 = vsel %vm1724, %v6620, %v6619
        %v6622 = vrot.slane %v6381, 3
        %v6623 = vsel %vm1727, %v6622, %v6621
        %v6624 = vrot.slane %v6382, 2
        %v6625 = vsel %vm1730, %v6624, %v6623
        %v6626 = vrot.slane %v6383, 1
        %v6627 = vsel %vm1733, %v6626, %v6625
        %v6628 = vrot.slane %v6385, 7
        %v6629 = vsel %vm1715, %v6628, %v6384
        %v6630 = vrot.slane %v6386, 6
        %v6631 = vsel %vm1718, %v6630, %v6629
        %v6632 = vrot.slane %v6387, 5
        %v6633 = vsel %vm1721, %v6632, %v6631
        %v6634 = vrot.slane %v6388, 4
        %v6635 = vsel %vm1724, %v6634, %v6633
        %v6636 = vrot.slane %v6389, 3
        %v6637 = vsel %vm1727, %v6636, %v6635
        %v6638 = vrot.slane %v6390, 2
        %v6639 = vsel %vm1730, %v6638, %v6637
        %v6640 = vrot.slane %v6391, 1
        %v6641 = vsel %vm1733, %v6640, %v6639
        %v6642 = vrot.slane %v6393, 7
        %v6643 = vsel %vm1715, %v6642, %v6392
        %v6644 = vrot.slane %v6394, 6
        %v6645 = vsel %vm1718, %v6644, %v6643
        %v6646 = vrot.slane %v6395, 5
        %v6647 = vsel %vm1721, %v6646, %v6645
        %v6648 = vrot.slane %v6396, 4
        %v6649 = vsel %vm1724, %v6648, %v6647
        %v6650 = vrot.slane %v6397, 3
        %v6651 = vsel %vm1727, %v6650, %v6649
        %v6652 = vrot.slane %v6398, 2
        %v6653 = vsel %vm1730, %v6652, %v6651
        %v6654 = vrot.slane %v6399, 1
        %v6655 = vsel %vm1733, %v6654, %v6653
        %v6656 = vrot.slane %v6401, 7
        %v6657 = vsel %vm1715, %v6656, %v6400
        %v6658 = vrot.slane %v6402, 6
        %v6659 = vsel %vm1718, %v6658, %v6657
        %v6660 = vrot.slane %v6403, 5
        %v6661 = vsel %vm1721, %v6660, %v6659
        %v6662 = vrot.slane %v6404, 4
        %v6663 = vsel %vm1724, %v6662, %v6661
        %v6664 = vrot.slane %v6405, 3
        %v6665 = vsel %vm1727, %v6664, %v6663
        %v6666 = vrot.slane %v6406, 2
        %v6667 = vsel %vm1730, %v6666, %v6665
        %v6668 = vrot.slane %v6407, 1
        %v6669 = vsel %vm1733, %v6668, %v6667
        %v6670 = vrot.slane %v6409, 7
        %v6671 = vsel %vm1715, %v6670, %v6408
        %v6672 = vrot.slane %v6410, 6
        %v6673 = vsel %vm1718, %v6672, %v6671
        %v6674 = vrot.slane %v6411, 5
        %v6675 = vsel %vm1721, %v6674, %v6673
        %v6676 = vrot.slane %v6412, 4
        %v6677 = vsel %vm1724, %v6676, %v6675
        %v6678 = vrot.slane %v6413, 3
        %v6679 = vsel %vm1727, %v6678, %v6677
        %v6680 = vrot.slane %v6414, 2
        %v6681 = vsel %vm1730, %v6680, %v6679
        %v6682 = vrot.slane %v6415, 1
        %v6683 = vsel %vm1733, %v6682, %v6681
        %v6684 = vrot.slane %v6417, 7
        %v6685 = vsel %vm1715, %v6684, %v6416
        %v6686 = vrot.slane %v6418, 6
        %v6687 = vsel %vm1718, %v6686, %v6685
        %v6688 = vrot.slane %v6419, 5
        %v6689 = vsel %vm1721, %v6688, %v6687
        %v6690 = vrot.slane %v6420, 4
        %v6691 = vsel %vm1724, %v6690, %v6689
        %v6692 = vrot.slane %v6421, 3
        %v6693 = vsel %vm1727, %v6692, %v6691
        %v6694 = vrot.slane %v6422, 2
        %v6695 = vsel %vm1730, %v6694, %v6693
        %v6696 = vrot.slane %v6423, 1
        %v6697 = vsel %vm1733, %v6696, %v6695
        %v6698 = vrot.slane %v6425, 7
        %v6699 = vsel %vm1715, %v6698, %v6424
        %v6700 = vrot.slane %v6426, 6
        %v6701 = vsel %vm1718, %v6700, %v6699
        %v6702 = vrot.slane %v6427, 5
        %v6703 = vsel %vm1721, %v6702, %v6701
        %v6704 = vrot.slane %v6428, 4
        %v6705 = vsel %vm1724, %v6704, %v6703
        %v6706 = vrot.slane %v6429, 3
        %v6707 = vsel %vm1727, %v6706, %v6705
        %v6708 = vrot.slane %v6430, 2
        %v6709 = vsel %vm1730, %v6708, %v6707
        %v6710 = vrot.slane %v6431, 1
        %v6711 = vsel %vm1733, %v6710, %v6709
        %v6712 = vrot.slane %v6433, 7
        %v6713 = vsel %vm1715, %v6712, %v6432
        %v6714 = vrot.slane %v6434, 6
        %v6715 = vsel %vm1718, %v6714, %v6713
        %v6716 = vrot.slane %v6435, 5
        %v6717 = vsel %vm1721, %v6716, %v6715
        %v6718 = vrot.slane %v6436, 4
        %v6719 = vsel %vm1724, %v6718, %v6717
        %v6720 = vrot.slane %v6437, 3
        %v6721 = vsel %vm1727, %v6720, %v6719
        %v6722 = vrot.slane %v6438, 2
        %v6723 = vsel %vm1730, %v6722, %v6721
        %v6724 = vrot.slane %v6439, 1
        %v6725 = vsel %vm1733, %v6724, %v6723
        %v6739 = vmul.f32 %v6273, %v6557
        %v6740 = vmul.f32 %v6278, %v6571
        %v6741 = vmul.f32 %v6283, %v6585
        %v6742 = vmul.f32 %v6288, %v6599
        %v6743 = vmul.f32 %v6293, %v6613
        %v6744 = vmul.f32 %v6298, %v6627
        %v6745 = vmul.f32 %v6303, %v6641
        %v6746 = vmul.f32 %v6308, %v6655
        %v6747 = vmul.f32 %v6313, %v6669
        %v6748 = vmul.f32 %v6318, %v6683
        %v6749 = vmul.f32 %v6323, %v6697
        %v6750 = vmul.f32 %v6328, %v6711
        %v6751 = vmul.f32 %v6333, %v6725
        %v6752 = vadd.f32 %v6063, %v6739
        %v6753 = vadd.f32 %v6064, %v6740
        %v6754 = vadd.f32 %v6065, %v6741
        %v6755 = vadd.f32 %v6066, %v6742
        %v6756 = vadd.f32 %v6067, %v6743
        %v6757 = vadd.f32 %v6068, %v6744
        %v6758 = vadd.f32 %v6069, %v6745
        %v6759 = vadd.f32 %v6070, %v6746
        %v6760 = vadd.f32 %v6071, %v6747
        %v6761 = vadd.f32 %v6072, %v6748
        %v6762 = vadd.f32 %v6073, %v6749
        %v6763 = vadd.f32 %v6074, %v6750
        %v6764 = vadd.f32 %v6075, %v6751
        %v6766 = vsel %vm1336, %v6154, 0
        %v6769 = vsel %vm1336, %v6155, 0
        %v6772 = vsel %vm1336, %v6156, 0
        %v6775 = vsel %vm1336, %v6157, 0
        %v6778 = vsel %vm1336, %v6158, 0
        %v6781 = vsel %vm1336, %v6159, 0
        %v6784 = vsel %vm1336, %v6160, 0
        %v6787 = vsel %vm1336, %v6161, 0
        %v6790 = vsel %vm1336, %v6162, 0
        %v6793 = vsel %vm1336, %v6163, 0
        %v6796 = vsel %vm1336, %v6164, 0
        %v6799 = vsel %vm1336, %v6165, 0
        %v6802 = vsel %vm1336, %v6166, 0
        %6804 = vmatprep.subr.mxu0 0.0
        %6805 = vmatpush1.msra.mxu0 0.0
        %6806 = vmatprep.subr.mxu0 0.0
        %6807 = vmatpush1.msra.mxu0 0.0
        %6808 = vmatprep.subr.mxu0 0.0
        %6809 = vmatpush1.msra.mxu0 0.0
        %6810 = vmatprep.subr.mxu0 0.0
        %6811 = vmatpush1.msra.mxu0 0.0
        %6812 = vmatprep.subr.mxu0 0.0
        %6813 = vmatpush1.msra.mxu0 0.0
        %6814 = vmatprep.subr.mxu0 0.0
        %6815 = vmatpush1.msra.mxu0 0.0
        %6816 = vmatprep.subr.mxu0 0.0
        %6817 = vmatpush1.msra.mxu0 0.0
        %6818 = vmatprep.subr.mxu0 0.0
        %6819 = vmatpush1.msra.mxu0 0.0
        %6820 = vmatprep.subr.mxu0 0.0
        %6821 = vmatpush1.msra.mxu0 0.0
        %6822 = vmatprep.subr.mxu0 0.0
        %6823 = vmatpush1.msra.mxu0 %v1235
        %6824 = vmatprep.subr.mxu0 0.0
        %6825 = vmatpush1.msra.mxu0 %v1234
        %6826 = vmatprep.subr.mxu0 0.0
        %6827 = vmatpush1.msra.mxu0 %v1233
        %6828 = vmatprep.subr.mxu0 0.0
        %6829 = vmatpush1.msra.mxu0 %v1232
        %6830 = vmatprep.subr.mxu0 0.0
        %6831 = vmatpush1.msra.mxu0 %v1231
        %6832 = vmatprep.subr.mxu0 0.0
        %6833 = vmatpush1.msra.mxu0 %v1230
        %6834 = vmatprep.subr.mxu0 0.0
        %6835 = vmatpush1.msra.mxu0 %v1229
        %6836 = vmatprep.subr.mxu0 0.0
        %6837 = vmatpush2.msra.mxu0 0.0
        %6838 = vmatprep.subr.mxu0 0.0
        %6839 = vmatpush2.msra.mxu0 0.0
        %6840 = vmatprep.subr.mxu0 0.0
        %6841 = vmatpush2.msra.mxu0 0.0
        %6842 = vmatprep.subr.mxu0 0.0
        %6843 = vmatpush2.msra.mxu0 0.0
        %6844 = vmatprep.subr.mxu0 0.0
        %6845 = vmatpush2.msra.mxu0 0.0
        %6846 = vmatprep.subr.mxu0 0.0
        %6847 = vmatpush2.msra.mxu0 0.0
        %6848 = vmatprep.subr.mxu0 0.0
        %6849 = vmatpush2.msra.mxu0 0.0
        %6850 = vmatprep.subr.mxu0 0.0
        %6851 = vmatpush2.msra.mxu0 0.0
        %6852 = vmatprep.subr.mxu0 0.0
        %6853 = vmatpush2.msra.mxu0 0.0
        %6854 = vmatprep.subr.mxu0 0.0
        %6855 = vmatpush2.msra.mxu0 0.0
        %6856 = vmatprep.subr.mxu0 0.0
        %6857 = vmatpush2.msra.mxu0 0.0
        %6858 = vmatprep.subr.mxu0 0.0
        %6859 = vmatpush2.msra.mxu0 0.0
        %6860 = vmatprep.subr.mxu0 0.0
        %6861 = vmatpush2.msra.mxu0 0.0
        %6862 = vmatprep.subr.mxu0 0.0
        %6863 = vmatpush2.msra.mxu0 0.0
        %6864 = vmatprep.subr.mxu0 0.0
        %6865 = vmatpush2.msra.mxu0 0.0
        %6866 = vmatprep.subr.mxu0 0.0
        %6867 = vmatpush2.msra.mxu0 0.0
        %6868 = vmatprep.mubr.f32.mxu0 0.0
        %6869 = vmatmul.mubr.f32.gmra.mxu0 %v6766
        %v6870 = vpop.f32.mrf.mxu0
        %v6871 = vadd.f32 0.0, %v6870
        %v6872 = vpop.f32.mrf.mxu0
        %6873 = vmatprep.mubr.f32.mxu0 0.0
        %6874 = vmatmul.mubr.f32.gmra.mxu0 %v6769
        %v6875 = vpop.f32.mrf.mxu0
        %v6876 = vadd.f32 0.0, %v6875
        %v6877 = vpop.f32.mrf.mxu0
        %6878 = vmatprep.mubr.f32.mxu0 0.0
        %6879 = vmatmul.mubr.f32.gmra.mxu0 %v6772
        %v6880 = vpop.f32.mrf.mxu0
        %v6881 = vadd.f32 0.0, %v6880
        %v6882 = vpop.f32.mrf.mxu0
        %6883 = vmatprep.mubr.f32.mxu0 0.0
        %6884 = vmatmul.mubr.f32.gmra.mxu0 %v6775
        %v6885 = vpop.f32.mrf.mxu0
        %v6886 = vadd.f32 0.0, %v6885
        %v6887 = vpop.f32.mrf.mxu0
        %6888 = vmatprep.mubr.f32.mxu0 0.0
        %6889 = vmatmul.mubr.f32.gmra.mxu0 %v6778
        %v6890 = vpop.f32.mrf.mxu0
        %v6891 = vadd.f32 0.0, %v6890
        %v6892 = vpop.f32.mrf.mxu0
        %6893 = vmatprep.mubr.f32.mxu0 0.0
        %6894 = vmatmul.mubr.f32.gmra.mxu0 %v6781
        %v6895 = vpop.f32.mrf.mxu0
        %v6896 = vadd.f32 0.0, %v6895
        %v6897 = vpop.f32.mrf.mxu0
        %6898 = vmatprep.mubr.f32.mxu0 0.0
        %6899 = vmatmul.mubr.f32.gmra.mxu0 %v6784
        %v6900 = vpop.f32.mrf.mxu0
        %v6901 = vadd.f32 0.0, %v6900
        %v6902 = vpop.f32.mrf.mxu0
        %6903 = vmatprep.mubr.f32.mxu0 0.0
        %6904 = vmatmul.mubr.f32.gmra.mxu0 %v6787
        %v6905 = vpop.f32.mrf.mxu0
        %v6906 = vadd.f32 0.0, %v6905
        %v6907 = vpop.f32.mrf.mxu0
        %6908 = vmatprep.mubr.f32.mxu0 0.0
        %6909 = vmatmul.mubr.f32.gmra.mxu0 %v6790
        %v6910 = vpop.f32.mrf.mxu0
        %v6911 = vadd.f32 0.0, %v6910
        %v6912 = vpop.f32.mrf.mxu0
        %6913 = vmatprep.mubr.f32.mxu0 0.0
        %6914 = vmatmul.mubr.f32.gmra.mxu0 %v6793
        %v6915 = vpop.f32.mrf.mxu0
        %v6916 = vadd.f32 0.0, %v6915
        %v6917 = vpop.f32.mrf.mxu0
        %6918 = vmatprep.mubr.f32.mxu0 0.0
        %6919 = vmatmul.mubr.f32.gmra.mxu0 %v6796
        %v6920 = vpop.f32.mrf.mxu0
        %v6921 = vadd.f32 0.0, %v6920
        %v6922 = vpop.f32.mrf.mxu0
        %6923 = vmatprep.mubr.f32.mxu0 0.0
        %6924 = vmatmul.mubr.f32.gmra.mxu0 %v6799
        %v6925 = vpop.f32.mrf.mxu0
        %v6926 = vadd.f32 0.0, %v6925
        %v6927 = vpop.f32.mrf.mxu0
        %6928 = vmatprep.mubr.f32.mxu0 0.0
        %6929 = vmatmul.mubr.f32.gmra.mxu0 %v6802
        %v6930 = vpop.f32.mrf.mxu0
        %v6931 = vadd.f32 0.0, %v6930
        %v6932 = vpop.f32.mrf.mxu0
        %6933 = vdwg.mxu0
        %v6934 = vadd.f32 %v6752, %v6871
        %v6935 = vadd.f32 %v6753, %v6876
        %v6936 = vadd.f32 %v6754, %v6881
        %v6937 = vadd.f32 %v6755, %v6886
        %v6938 = vadd.f32 %v6756, %v6891
        %v6939 = vadd.f32 %v6757, %v6896
        %v6940 = vadd.f32 %v6758, %v6901
        %v6941 = vadd.f32 %v6759, %v6906
        %v6942 = vadd.f32 %v6760, %v6911
        %v6943 = vadd.f32 %v6761, %v6916
        %v6944 = vadd.f32 %v6762, %v6921
        %v6945 = vadd.f32 %v6763, %v6926
        %v6946 = vadd.f32 %v6764, %v6931
        %s6947 = sld [smem:[#allocation2]]
        %6948 = vset.pattern.permute.xlu0 4
        %6949 = vperm.xlu0 %6948, %v826
        %v6950 = vpop.permute.xlu0 %6949
        %6952 = vset.pattern.permute.xlu0 4
        %6953 = vperm.xlu0 %6952, %v827
        %v6954 = vpop.permute.xlu0 %6953
        %6956 = vset.pattern.permute.xlu0 4
        %6957 = vperm.xlu0 %6956, %v828
        %v6958 = vpop.permute.xlu0 %6957
        %6960 = vset.pattern.permute.xlu0 4
        %6961 = vperm.xlu0 %6960, %v829
        %v6962 = vpop.permute.xlu0 %6961
        %6964 = vset.pattern.permute.xlu0 4
        %6965 = vperm.xlu0 %6964, %v830
        %v6966 = vpop.permute.xlu0 %6965
        %6968 = vset.pattern.permute.xlu0 4
        %6969 = vperm.xlu0 %6968, %v831
        %v6970 = vpop.permute.xlu0 %6969
        %6972 = vset.pattern.permute.xlu0 4
        %6973 = vperm.xlu0 %6972, %v832
        %v6974 = vpop.permute.xlu0 %6973
        %6976 = vset.pattern.permute.xlu0 4
        %6977 = vperm.xlu0 %6976, %v833
        %v6978 = vpop.permute.xlu0 %6977
        %6980 = vset.pattern.permute.xlu0 4
        %6981 = vperm.xlu0 %6980, %v834
        %v6982 = vpop.permute.xlu0 %6981
        %6984 = vset.pattern.permute.xlu0 4
        %6985 = vperm.xlu0 %6984, %v835
        %v6986 = vpop.permute.xlu0 %6985
        %6988 = vset.pattern.permute.xlu0 4
        %6989 = vperm.xlu0 %6988, %v836
        %v6990 = vpop.permute.xlu0 %6989
        %6992 = vset.pattern.permute.xlu0 4
        %6993 = vperm.xlu0 %6992, %v837
        %v6994 = vpop.permute.xlu0 %6993
        %6996 = vset.pattern.permute.xlu0 4
        %6997 = vperm.xlu0 %6996, %v838
        %v6998 = vpop.permute.xlu0 %6997
        %v7000 = vmul.f32 %v6934, %v6950
        %v7001 = vmul.f32 %v6935, %v6954
        %v7002 = vmul.f32 %v6936, %v6958
        %v7003 = vmul.f32 %v6937, %v6962
        %v7004 = vmul.f32 %v6938, %v6966
        %v7005 = vmul.f32 %v6939, %v6970
        %v7006 = vmul.f32 %v6940, %v6974
        %v7007 = vmul.f32 %v6941, %v6978
        %v7008 = vmul.f32 %v6942, %v6982
        %v7009 = vmul.f32 %v6943, %v6986
        %v7010 = vmul.f32 %v6944, %v6990
        %v7011 = vmul.f32 %v6945, %v6994
        %v7012 = vmul.f32 %v6946, %v6998
        %v7013 = vadd.f32 %v1177, %v7000
        %v7014 = vadd.f32 %v1178, %v7001
        %v7015 = vadd.f32 %v1179, %v7002
        %v7016 = vadd.f32 %v1180, %v7003
        %v7017 = vadd.f32 %v1181, %v7004
        %v7018 = vadd.f32 %v1182, %v7005
        %v7019 = vadd.f32 %v1183, %v7006
        %v7020 = vadd.f32 %v1184, %v7007
        %v7021 = vadd.f32 %v1185, %v7008
        %v7022 = vadd.f32 %v1186, %v7009
        %v7023 = vadd.f32 %v1187, %v7010
        %v7024 = vadd.f32 %v1188, %v7011
        %v7025 = vadd.f32 %v1189, %v7012
        %v7026 = vmul.f32 %v1203, %v7013
        %v7027 = vmul.f32 %v1204, %v7014
        %v7028 = vmul.f32 %v1205, %v7015
        %v7029 = vmul.f32 %v1206, %v7016
        %v7030 = vmul.f32 %v1207, %v7017
        %v7031 = vmul.f32 %v1208, %v7018
        %v7032 = vmul.f32 %v1209, %v7019
        %v7033 = vmul.f32 %v1210, %v7020
        %v7034 = vmul.f32 %v1211, %v7021
        %v7035 = vmul.f32 %v1212, %v7022
        %v7036 = vmul.f32 %v1213, %v7023
        %v7037 = vmul.f32 %v1214, %v7024
        %v7038 = vmul.f32 %v1215, %v7025
        %7039 = vadd.xlane.f32.xlu0 %v7026
        %v7040 = vpop.xlane.xlu0 %7039
        %7041 = vadd.xlane.f32.xlu0 %v7027
        %v7042 = vpop.xlane.xlu0 %7041
        %7043 = vadd.xlane.f32.xlu0 %v7028
        %v7044 = vpop.xlane.xlu0 %7043
        %7045 = vadd.xlane.f32.xlu0 %v7029
        %v7046 = vpop.xlane.xlu0 %7045
        %7047 = vadd.xlane.f32.xlu0 %v7030
        %v7048 = vpop.xlane.xlu0 %7047
        %7049 = vadd.xlane.f32.xlu0 %v7031
        %v7050 = vpop.xlane.xlu0 %7049
        %7051 = vadd.xlane.f32.xlu0 %v7032
        %v7052 = vpop.xlane.xlu0 %7051
        %7053 = vadd.xlane.f32.xlu0 %v7033
        %v7054 = vpop.xlane.xlu0 %7053
        %7055 = vadd.xlane.f32.xlu0 %v7034
        %v7056 = vpop.xlane.xlu0 %7055
        %7057 = vadd.xlane.f32.xlu0 %v7035
        %v7058 = vpop.xlane.xlu0 %7057
        %7059 = vadd.xlane.f32.xlu0 %v7036
        %v7060 = vpop.xlane.xlu0 %7059
        %7061 = vadd.xlane.f32.xlu0 %v7037
        %v7062 = vpop.xlane.xlu0 %7061
        %7063 = vadd.xlane.f32.xlu0 %v7038
        %v7064 = vpop.xlane.xlu0 %7063
        %7065 = vrot.lane.b32.xlu0 %v826, 127
        %v7066 = vpop.permute.xlu0 %7065
        %7067 = vrot.lane.b32.xlu0 %v827, 127
        %v7068 = vpop.permute.xlu0 %7067
        %7069 = vrot.lane.b32.xlu0 %v828, 127
        %v7070 = vpop.permute.xlu0 %7069
        %7071 = vrot.lane.b32.xlu0 %v829, 127
        %v7072 = vpop.permute.xlu0 %7071
        %7073 = vrot.lane.b32.xlu0 %v830, 127
        %v7074 = vpop.permute.xlu0 %7073
        %7075 = vrot.lane.b32.xlu0 %v831, 127
        %v7076 = vpop.permute.xlu0 %7075
        %7077 = vrot.lane.b32.xlu0 %v832, 127
        %v7078 = vpop.permute.xlu0 %7077
        %7079 = vrot.lane.b32.xlu0 %v833, 127
        %v7080 = vpop.permute.xlu0 %7079
        %7081 = vrot.lane.b32.xlu0 %v834, 127
        %v7082 = vpop.permute.xlu0 %7081
        %7083 = vrot.lane.b32.xlu0 %v835, 127
        %v7084 = vpop.permute.xlu0 %7083
        %7085 = vrot.lane.b32.xlu0 %v836, 127
        %v7086 = vpop.permute.xlu0 %7085
        %7087 = vrot.lane.b32.xlu0 %v837, 127
        %v7088 = vpop.permute.xlu0 %7087
        %7089 = vrot.lane.b32.xlu0 %v838, 127
        %v7090 = vpop.permute.xlu0 %7089
        %v7104 = vmul.f32 %v826, %v7066
        %v7105 = vmul.f32 %v827, %v7068
        %v7106 = vmul.f32 %v828, %v7070
        %v7107 = vmul.f32 %v829, %v7072
        %v7108 = vmul.f32 %v830, %v7074
        %v7109 = vmul.f32 %v831, %v7076
        %v7110 = vmul.f32 %v832, %v7078
        %v7111 = vmul.f32 %v833, %v7080
        %v7112 = vmul.f32 %v834, %v7082
        %v7113 = vmul.f32 %v835, %v7084
        %v7114 = vmul.f32 %v836, %v7086
        %v7115 = vmul.f32 %v837, %v7088
        %v7116 = vmul.f32 %v838, %v7090
        %v7117 = vmul.f32 %v7104, %v7040
        %v7118 = vmul.f32 %v7105, %v7042
        %v7119 = vmul.f32 %v7106, %v7044
        %v7120 = vmul.f32 %v7107, %v7046
        %v7121 = vmul.f32 %v7108, %v7048
        %v7122 = vmul.f32 %v7109, %v7050
        %v7123 = vmul.f32 %v7110, %v7052
        %v7124 = vmul.f32 %v7111, %v7054
        %v7125 = vmul.f32 %v7112, %v7056
        %v7126 = vmul.f32 %v7113, %v7058
        %v7127 = vmul.f32 %v7114, %v7060
        %v7128 = vmul.f32 %v7115, %v7062
        %v7129 = vmul.f32 %v7116, %v7064
        %7143 = vrot.lane.b32.xlu0 %v1034, 5
        %v7144 = vpop.permute.xlu0 %7143
        %7145 = vrot.lane.b32.xlu0 %v1035, 5
        %v7146 = vpop.permute.xlu0 %7145
        %7147 = vrot.lane.b32.xlu0 %v1036, 5
        %v7148 = vpop.permute.xlu0 %7147
        %7149 = vrot.lane.b32.xlu0 %v1037, 5
        %v7150 = vpop.permute.xlu0 %7149
        %7151 = vrot.lane.b32.xlu0 %v1038, 5
        %v7152 = vpop.permute.xlu0 %7151
        %7153 = vrot.lane.b32.xlu0 %v1039, 5
        %v7154 = vpop.permute.xlu0 %7153
        %7155 = vrot.lane.b32.xlu0 %v1040, 5
        %v7156 = vpop.permute.xlu0 %7155
        %7157 = vrot.lane.b32.xlu0 %v1041, 5
        %v7158 = vpop.permute.xlu0 %7157
        %7159 = vrot.lane.b32.xlu0 %v1042, 5
        %v7160 = vpop.permute.xlu0 %7159
        %7161 = vrot.lane.b32.xlu0 %v1043, 5
        %v7162 = vpop.permute.xlu0 %7161
        %7163 = vrot.lane.b32.xlu0 %v1044, 5
        %v7164 = vpop.permute.xlu0 %7163
        %7165 = vrot.lane.b32.xlu0 %v1045, 5
        %v7166 = vpop.permute.xlu0 %7165
        %7167 = vrot.lane.b32.xlu0 %v1046, 5
        %v7168 = vpop.permute.xlu0 %7167
        %v7182 = vmul.f32 %v826, %v7144
        %v7183 = vmul.f32 %v827, %v7146
        %v7184 = vmul.f32 %v828, %v7148
        %v7185 = vmul.f32 %v829, %v7150
        %v7186 = vmul.f32 %v830, %v7152
        %v7187 = vmul.f32 %v831, %v7154
        %v7188 = vmul.f32 %v832, %v7156
        %v7189 = vmul.f32 %v833, %v7158
        %v7190 = vmul.f32 %v834, %v7160
        %v7191 = vmul.f32 %v835, %v7162
        %v7192 = vmul.f32 %v836, %v7164
        %v7193 = vmul.f32 %v837, %v7166
        %v7194 = vmul.f32 %v838, %v7168
        %7208 = vrot.lane.b32.xlu0 %v1151, 4
        %v7209 = vpop.permute.xlu0 %7208
        %7210 = vrot.lane.b32.xlu0 %v1152, 4
        %v7211 = vpop.permute.xlu0 %7210
        %7212 = vrot.lane.b32.xlu0 %v1153, 4
        %v7213 = vpop.permute.xlu0 %7212
        %7214 = vrot.lane.b32.xlu0 %v1154, 4
        %v7215 = vpop.permute.xlu0 %7214
        %7216 = vrot.lane.b32.xlu0 %v1155, 4
        %v7217 = vpop.permute.xlu0 %7216
        %7218 = vrot.lane.b32.xlu0 %v1156, 4
        %v7219 = vpop.permute.xlu0 %7218
        %7220 = vrot.lane.b32.xlu0 %v1157, 4
        %v7221 = vpop.permute.xlu0 %7220
        %7222 = vrot.lane.b32.xlu0 %v1158, 4
        %v7223 = vpop.permute.xlu0 %7222
        %7224 = vrot.lane.b32.xlu0 %v1159, 4
        %v7225 = vpop.permute.xlu0 %7224
        %7226 = vrot.lane.b32.xlu0 %v1160, 4
        %v7227 = vpop.permute.xlu0 %7226
        %7228 = vrot.lane.b32.xlu0 %v1161, 4
        %v7229 = vpop.permute.xlu0 %7228
        %7230 = vrot.lane.b32.xlu0 %v1162, 4
        %v7231 = vpop.permute.xlu0 %7230
        %7232 = vrot.lane.b32.xlu0 %v1163, 4
        %v7233 = vpop.permute.xlu0 %7232
        %v7247 = vmul.f32 %v826, %v7209
        %v7248 = vmul.f32 %v827, %v7211
        %v7249 = vmul.f32 %v828, %v7213
        %v7250 = vmul.f32 %v829, %v7215
        %v7251 = vmul.f32 %v830, %v7217
        %v7252 = vmul.f32 %v831, %v7219
        %v7253 = vmul.f32 %v832, %v7221
        %v7254 = vmul.f32 %v833, %v7223
        %v7255 = vmul.f32 %v834, %v7225
        %v7256 = vmul.f32 %v835, %v7227
        %v7257 = vmul.f32 %v836, %v7229
        %v7258 = vmul.f32 %v837, %v7231
        %v7259 = vmul.f32 %v838, %v7233
        %7273 = vrot.lane.b32.xlu0 %v7247, 127
        %v7274 = vpop.permute.xlu0 %7273
        %7275 = vrot.lane.b32.xlu0 %v7248, 127
        %v7276 = vpop.permute.xlu0 %7275
        %7277 = vrot.lane.b32.xlu0 %v7249, 127
        %v7278 = vpop.permute.xlu0 %7277
        %7279 = vrot.lane.b32.xlu0 %v7250, 127
        %v7280 = vpop.permute.xlu0 %7279
        %7281 = vrot.lane.b32.xlu0 %v7251, 127
        %v7282 = vpop.permute.xlu0 %7281
        %7283 = vrot.lane.b32.xlu0 %v7252, 127
        %v7284 = vpop.permute.xlu0 %7283
        %7285 = vrot.lane.b32.xlu0 %v7253, 127
        %v7286 = vpop.permute.xlu0 %7285
        %7287 = vrot.lane.b32.xlu0 %v7254, 127
        %v7288 = vpop.permute.xlu0 %7287
        %7289 = vrot.lane.b32.xlu0 %v7255, 127
        %v7290 = vpop.permute.xlu0 %7289
        %7291 = vrot.lane.b32.xlu0 %v7256, 127
        %v7292 = vpop.permute.xlu0 %7291
        %7293 = vrot.lane.b32.xlu0 %v7257, 127
        %v7294 = vpop.permute.xlu0 %7293
        %7295 = vrot.lane.b32.xlu0 %v7258, 127
        %v7296 = vpop.permute.xlu0 %7295
        %7297 = vrot.lane.b32.xlu0 %v7259, 127
        %v7298 = vpop.permute.xlu0 %7297
        %v7312 = vadd.f32 %v7117, %v7274
        %v7313 = vadd.f32 %v7118, %v7276
        %v7314 = vadd.f32 %v7119, %v7278
        %v7315 = vadd.f32 %v7120, %v7280
        %v7316 = vadd.f32 %v7121, %v7282
        %v7317 = vadd.f32 %v7122, %v7284
        %v7318 = vadd.f32 %v7123, %v7286
        %v7319 = vadd.f32 %v7124, %v7288
        %v7320 = vadd.f32 %v7125, %v7290
        %v7321 = vadd.f32 %v7126, %v7292
        %v7322 = vadd.f32 %v7127, %v7294
        %v7323 = vadd.f32 %v7128, %v7296
        %v7324 = vadd.f32 %v7129, %v7298
        %v7325 = vadd.f32 %v7312, %v7182
        %v7326 = vadd.f32 %v7313, %v7183
        %v7327 = vadd.f32 %v7314, %v7184
        %v7328 = vadd.f32 %v7315, %v7185
        %v7329 = vadd.f32 %v7316, %v7186
        %v7330 = vadd.f32 %v7317, %v7187
        %v7331 = vadd.f32 %v7318, %v7188
        %v7332 = vadd.f32 %v7319, %v7189
        %v7333 = vadd.f32 %v7320, %v7190
        %v7334 = vadd.f32 %v7321, %v7191
        %v7335 = vadd.f32 %v7322, %v7192
        %v7336 = vadd.f32 %v7323, %v7193
        %v7337 = vadd.f32 %v7324, %v7194
        %v7338 = vstv %s6947
        %v7339 = vadd.f32 %v7325, %v7338
        %v7340 = vadd.f32 %v7326, %v7338
        %v7341 = vadd.f32 %v7327, %v7338
        %v7342 = vadd.f32 %v7328, %v7338
        %v7343 = vadd.f32 %v7329, %v7338
        %v7344 = vadd.f32 %v7330, %v7338
        %v7345 = vadd.f32 %v7331, %v7338
        %v7346 = vadd.f32 %v7332, %v7338
        %v7347 = vadd.f32 %v7333, %v7338
        %v7348 = vadd.f32 %v7334, %v7338
        %v7349 = vadd.f32 %v7335, %v7338
        %v7350 = vadd.f32 %v7336, %v7338
        %v7351 = vadd.f32 %v7337, %v7338
        %7365 = vrot.lane.b32.xlu0 %v7339, 123
        %v7366 = vpop.permute.xlu0 %7365
        %7367 = vrot.lane.b32.xlu0 %v7340, 123
        %v7368 = vpop.permute.xlu0 %7367
        %7369 = vrot.lane.b32.xlu0 %v7341, 123
        %v7370 = vpop.permute.xlu0 %7369
        %7371 = vrot.lane.b32.xlu0 %v7342, 123
        %v7372 = vpop.permute.xlu0 %7371
        %7373 = vrot.lane.b32.xlu0 %v7343, 123
        %v7374 = vpop.permute.xlu0 %7373
        %7375 = vrot.lane.b32.xlu0 %v7344, 123
        %v7376 = vpop.permute.xlu0 %7375
        %7377 = vrot.lane.b32.xlu0 %v7345, 123
        %v7378 = vpop.permute.xlu0 %7377
        %7379 = vrot.lane.b32.xlu0 %v7346, 123
        %v7380 = vpop.permute.xlu0 %7379
        %7381 = vrot.lane.b32.xlu0 %v7347, 123
        %v7382 = vpop.permute.xlu0 %7381
        %7383 = vrot.lane.b32.xlu0 %v7348, 123
        %v7384 = vpop.permute.xlu0 %7383
        %7385 = vrot.lane.b32.xlu0 %v7349, 123
        %v7386 = vpop.permute.xlu0 %7385
        %7387 = vrot.lane.b32.xlu0 %v7350, 123
        %v7388 = vpop.permute.xlu0 %7387
        %7389 = vrot.lane.b32.xlu0 %v7351, 123
        %v7390 = vpop.permute.xlu0 %7389
        %vm7404 = vcmask 7168
        %7405 = vst.msk [vmem:[%s739] sm:$0xff] %vm7404, %v7366
        %7406 = vst.msk [vmem:[%s739 + $0x8] sm:$0xff] %vm7404, %v7368
        %7407 = vst.msk [vmem:[%s739 + $0x10] sm:$0xff] %vm7404, %v7370
        %7408 = vst.msk [vmem:[%s739 + $0x18] sm:$0xff] %vm7404, %v7372
        %7409 = vst.msk [vmem:[%s739 + $0x20] sm:$0xff] %vm7404, %v7374
        %7410 = vst.msk [vmem:[%s739 + $0x28] sm:$0xff] %vm7404, %v7376
        %7411 = vst.msk [vmem:[%s739 + $0x30] sm:$0xff] %vm7404, %v7378
        %7412 = vst.msk [vmem:[%s739 + $0x38] sm:$0xff] %vm7404, %v7380
        %7413 = vst.msk [vmem:[%s739 + $0x40] sm:$0xff] %vm7404, %v7382
        %7414 = vst.msk [vmem:[%s739 + $0x48] sm:$0xff] %vm7404, %v7384
        %7415 = vst.msk [vmem:[%s739 + $0x50] sm:$0xff] %vm7404, %v7386
        %7416 = vst.msk [vmem:[%s739 + $0x58] sm:$0xff] %vm7404, %v7388
        %7417 = vst.msk [vmem:[%s739 + $0x60] sm:$0xff] %vm7404, %v7390
        %s7418 = sand.u32 %s339, 1
        %s7419 = sand.u32 %s339, 1
        %s7420 = smul.addr %s7419, 104
        %s7421 = scalar_lea.vmem [#allocation13], %s7420
        // Predicated region
        $region93: #{tpu_custom_call.1} parent=67 // pred_check
          %p7422 = pneg %p349
        $region94: #{tpu_custom_call.1} parent=67 // pred_check_branch
          %7424 = sbr.rel (%p7422) target = $region96
        $region95: #{tpu_custom_call.1} parent=67 // pred_region
          %s7425 = smul.u32 13, %s34
          %s7426 = ssub.s32 25, %s7425
          %p7427 = scmp.lt.s32.totalorder %s7426, 13
          %s7428 = scalar_select %p7427, %s7426, 13
          %s7429 = smul.u32 128, %s7428
          %p7430 = scmp.ne.s32.totalorder 0, %s7429
          %s7431 = smul.addr %s7425, 8
          %s7432 = scalar_lea.vmem %s12, %s7431
          // Predicated region
          $region97: #{tpu_custom_call.1} parent=95 // pred_check
            %p7433 = pneg %p7430
          $region98: #{tpu_custom_call.1} parent=95 // pred_check_branch
            %7435 = sbr.rel (%p7433) target = $region100
          $region99: #{tpu_custom_call.1} parent=95 // pred_region
            // Predicated region
            $region101: #{tpu_custom_call.1} parent=99 // pred_check
              _
            $region102: #{tpu_custom_call.1} parent=99 // pred_check_branch
              %7437 = sbr.rel (0) target = $region104
            $region103: #{tpu_custom_call.1} parent=99 // pred_region
              // Predicated region
              $region123: #{tpu_custom_call.1} parent=103 // pred_check
                _
              $region124: #{tpu_custom_call.1} parent=103 // pred_check_branch
                %7512 = sbr.rel (0) target = $region126
              $region125: #{tpu_custom_call.1} parent=103 // pred_region
                %s7513 = sdiv.u32.pop %s7428, 13
                %s7514 = srem.u32.pop %s7428, 13
                // While loop
                $region127: #{tpu_custom_call.1} parent=125 // loop_pre_header
                  _
                $region128: #{tpu_custom_call.1} parent=125 // loop_header
                  %s7516 = sphi 0, %s7518
                  %p7517 = scmp.ge.s32.totalorder %s7516, %s7513
                  %s7521 = sphi 0, %s7552
                  %s7522 = sphi %s7421, %s7555
                  %s7523 = sphi %s7432, %s7556
                $region129: #{tpu_custom_call.1} parent=125 // loop_header_branch
                  %7520 = sbr.rel (%p7517) target = $region133
                $region130: #{tpu_custom_call.1} parent=125 // loop_body
                  %v7524 = vld [vmem:[%s7522] sm:$0xff]
                  %7525 = vst [vmem:[%s7523] sm:$0xff] %v7524
                  %v7526 = vld [vmem:[%s7522 + $0x8] sm:$0xff]
                  %7527 = vst [vmem:[%s7523 + $0x8] sm:$0xff] %v7526
                  %v7528 = vld [vmem:[%s7522 + $0x10] sm:$0xff]
                  %7529 = vst [vmem:[%s7523 + $0x10] sm:$0xff] %v7528
                  %v7530 = vld [vmem:[%s7522 + $0x18] sm:$0xff]
                  %7531 = vst [vmem:[%s7523 + $0x18] sm:$0xff] %v7530
                  %v7532 = vld [vmem:[%s7522 + $0x20] sm:$0xff]
                  %7533 = vst [vmem:[%s7523 + $0x20] sm:$0xff] %v7532
                  %v7534 = vld [vmem:[%s7522 + $0x28] sm:$0xff]
                  %7535 = vst [vmem:[%s7523 + $0x28] sm:$0xff] %v7534
                  %v7536 = vld [vmem:[%s7522 + $0x30] sm:$0xff]
                  %7537 = vst [vmem:[%s7523 + $0x30] sm:$0xff] %v7536
                  %v7538 = vld [vmem:[%s7522 + $0x38] sm:$0xff]
                  %7539 = vst [vmem:[%s7523 + $0x38] sm:$0xff] %v7538
                  %v7540 = vld [vmem:[%s7522 + $0x40] sm:$0xff]
                  %7541 = vst [vmem:[%s7523 + $0x40] sm:$0xff] %v7540
                  %v7542 = vld [vmem:[%s7522 + $0x48] sm:$0xff]
                  %7543 = vst [vmem:[%s7523 + $0x48] sm:$0xff] %v7542
                  %v7544 = vld [vmem:[%s7522 + $0x50] sm:$0xff]
                  %7545 = vst [vmem:[%s7523 + $0x50] sm:$0xff] %v7544
                  %v7546 = vld [vmem:[%s7522 + $0x58] sm:$0xff]
                  %7547 = vst [vmem:[%s7523 + $0x58] sm:$0xff] %v7546
                  %v7548 = vld [vmem:[%s7522 + $0x60] sm:$0xff]
                  %7549 = vst [vmem:[%s7523 + $0x60] sm:$0xff] %v7548
                  %s7550 = sadd.s32 1, %s7521
                  %p7551 = scmp.ge.s32.totalorder %s7550, %s7513
                  %s7552 = scalar_select %p7551, 0, %s7550
                  %s7553 = smul.u32 %s7552, 104
                  %s7554 = smul.u32 %s7552, 104
                  %s7555 = scalar_lea.vmem %s7421, %s7553 [#allocation13]
                  %s7556 = scalar_lea.vmem %s7432, %s7554
                $region131: #{tpu_custom_call.1} parent=125 // loop_footer
                  %s7518 = sadd.s32 %s7516, 1
                $region132: #{tpu_custom_call.1} parent=125 // loop_footer_branch
                  %7515 = sbr.rel target = $region128
                $region133: #{tpu_custom_call.1} parent=125 // loop_exit
                  _
                %s7557 = sdiv.u32.pop %s7428, 13
                %s7558 = srem.u32.pop %s7428, 13
                %s7559 = smul.u32 %s7557, 13
                %s7560 = smul.u32 8, %s7559
                %s7561 = scalar_lea.vmem %s7421, %s7560 [#allocation13]
                %s7562 = smul.u32 8, %s7559
                %s7563 = scalar_lea.vmem %s7432, %s7562
                // While loop
                $region134: #{tpu_custom_call.1} parent=125 // loop_pre_header
                  _
                $region135: #{tpu_custom_call.1} parent=125 // loop_header
                  %s7565 = sphi 0, %s7567
                  %p7566 = scmp.ge.s32.totalorder %s7565, %s7558
                  %s7570 = sphi 0, %s7577
                  %s7571 = sphi %s7561, %s7580
                  %s7572 = sphi %s7563, %s7581
                $region136: #{tpu_custom_call.1} parent=125 // loop_header_branch
                  %7569 = sbr.rel (%p7566) target = $region140
                $region137: #{tpu_custom_call.1} parent=125 // loop_body
                  %v7573 = vld [vmem:[%s7571] sm:$0xff]
                  %7574 = vst [vmem:[%s7572] sm:$0xff] %v7573
                  %s7575 = sadd.s32 1, %s7570
                  %p7576 = scmp.ge.s32.totalorder %s7575, %s7558
                  %s7577 = scalar_select %p7576, 0, %s7575
                  %s7578 = smul.u32 %s7577, 8
                  %s7579 = smul.u32 %s7577, 8
                  %s7580 = scalar_lea.vmem %s7561, %s7578 [#allocation13]
                  %s7581 = scalar_lea.vmem %s7563, %s7579
                $region138: #{tpu_custom_call.1} parent=125 // loop_footer
                  %s7567 = sadd.s32 %s7565, 1
                $region139: #{tpu_custom_call.1} parent=125 // loop_footer_branch
                  %7564 = sbr.rel target = $region135
                $region140: #{tpu_custom_call.1} parent=125 // loop_exit
                  _
              $region126: #{tpu_custom_call.1} parent=103 // pred_fallthru
                _
              // Predicated region
              $region141: #{tpu_custom_call.1} parent=103 // pred_check
                _
              $region142: #{tpu_custom_call.1} parent=103 // pred_check_branch
                %7583 = sbr.rel target = $region144
              $region143: #{tpu_custom_call.1} parent=103 // pred_region
                _
              $region144: #{tpu_custom_call.1} parent=103 // pred_fallthru
                _
            $region104: #{tpu_custom_call.1} parent=99 // pred_fallthru
              _
            // Predicated region
            $region105: #{tpu_custom_call.1} parent=99 // pred_check
              _
            $region106: #{tpu_custom_call.1} parent=99 // pred_check_branch
              %7439 = sbr.rel target = $region108
            $region107: #{tpu_custom_call.1} parent=99 // pred_region
              %s7441 = ssub.s32 256, 1
              %s7442 = sdiv.u32.pop %s7428, 13
              %s7443 = srem.u32.pop %s7428, 13
              // While loop
              $region109: #{tpu_custom_call.1} parent=107 // loop_pre_header
                _
              $region110: #{tpu_custom_call.1} parent=107 // loop_header
                %s7445 = sphi 0, %s7447
                %p7446 = scmp.ge.s32.totalorder %s7445, %s7442
                %s7450 = sphi 0, %s7481
                %s7451 = sphi %s7421, %s7484
                %s7452 = sphi %s7432, %s7485
              $region111: #{tpu_custom_call.1} parent=107 // loop_header_branch
                %7449 = sbr.rel (%p7446) target = $region115
              $region112: #{tpu_custom_call.1} parent=107 // loop_body
                %v7453 = vld [vmem:[%s7451] sm:%s7441]
                %7454 = vst [vmem:[%s7452] sm:%s7441] %v7453
                %v7455 = vld [vmem:[%s7451 + $0x8] sm:%s7441]
                %7456 = vst [vmem:[%s7452 + $0x8] sm:%s7441] %v7455
                %v7457 = vld [vmem:[%s7451 + $0x10] sm:%s7441]
                %7458 = vst [vmem:[%s7452 + $0x10] sm:%s7441] %v7457
                %v7459 = vld [vmem:[%s7451 + $0x18] sm:%s7441]
                %7460 = vst [vmem:[%s7452 + $0x18] sm:%s7441] %v7459
                %v7461 = vld [vmem:[%s7451 + $0x20] sm:%s7441]
                %7462 = vst [vmem:[%s7452 + $0x20] sm:%s7441] %v7461
                %v7463 = vld [vmem:[%s7451 + $0x28] sm:%s7441]
                %7464 = vst [vmem:[%s7452 + $0x28] sm:%s7441] %v7463
                %v7465 = vld [vmem:[%s7451 + $0x30] sm:%s7441]
                %7466 = vst [vmem:[%s7452 + $0x30] sm:%s7441] %v7465
                %v7467 = vld [vmem:[%s7451 + $0x38] sm:%s7441]
                %7468 = vst [vmem:[%s7452 + $0x38] sm:%s7441] %v7467
                %v7469 = vld [vmem:[%s7451 + $0x40] sm:%s7441]
                %7470 = vst [vmem:[%s7452 + $0x40] sm:%s7441] %v7469
                %v7471 = vld [vmem:[%s7451 + $0x48] sm:%s7441]
                %7472 = vst [vmem:[%s7452 + $0x48] sm:%s7441] %v7471
                %v7473 = vld [vmem:[%s7451 + $0x50] sm:%s7441]
                %7474 = vst [vmem:[%s7452 + $0x50] sm:%s7441] %v7473
                %v7475 = vld [vmem:[%s7451 + $0x58] sm:%s7441]
                %7476 = vst [vmem:[%s7452 + $0x58] sm:%s7441] %v7475
                %v7477 = vld [vmem:[%s7451 + $0x60] sm:%s7441]
                %7478 = vst [vmem:[%s7452 + $0x60] sm:%s7441] %v7477
                %s7479 = sadd.s32 1, %s7450
                %p7480 = scmp.ge.s32.totalorder %s7479, %s7442
                %s7481 = scalar_select %p7480, 0, %s7479
                %s7482 = smul.u32 %s7481, 104
                %s7483 = smul.u32 %s7481, 104
                %s7484 = scalar_lea.vmem %s7421, %s7482 [#allocation13]
                %s7485 = scalar_lea.vmem %s7432, %s7483
              $region113: #{tpu_custom_call.1} parent=107 // loop_footer
                %s7447 = sadd.s32 %s7445, 1
              $region114: #{tpu_custom_call.1} parent=107 // loop_footer_branch
                %7444 = sbr.rel target = $region110
              $region115: #{tpu_custom_call.1} parent=107 // loop_exit
                _
              %s7486 = sdiv.u32.pop %s7428, 13
              %s7487 = srem.u32.pop %s7428, 13
              %s7488 = smul.u32 %s7486, 13
              %s7489 = smul.u32 8, %s7488
              %s7490 = scalar_lea.vmem %s7421, %s7489 [#allocation13]
              %s7491 = smul.u32 8, %s7488
              %s7492 = scalar_lea.vmem %s7432, %s7491
              // While loop
              $region116: #{tpu_custom_call.1} parent=107 // loop_pre_header
                _
              $region117: #{tpu_custom_call.1} parent=107 // loop_header
                %s7494 = sphi 0, %s7496
                %p7495 = scmp.ge.s32.totalorder %s7494, %s7487
                %s7499 = sphi 0, %s7506
                %s7500 = sphi %s7490, %s7509
                %s7501 = sphi %s7492, %s7510
              $region118: #{tpu_custom_call.1} parent=107 // loop_header_branch
                %7498 = sbr.rel (%p7495) target = $region122
              $region119: #{tpu_custom_call.1} parent=107 // loop_body
                %v7502 = vld [vmem:[%s7500] sm:%s7441]
                %7503 = vst [vmem:[%s7501] sm:%s7441] %v7502
                %s7504 = sadd.s32 1, %s7499
                %p7505 = scmp.ge.s32.totalorder %s7504, %s7487
                %s7506 = scalar_select %p7505, 0, %s7504
                %s7507 = smul.u32 %s7506, 8
                %s7508 = smul.u32 %s7506, 8
                %s7509 = scalar_lea.vmem %s7490, %s7507 [#allocation13]
                %s7510 = scalar_lea.vmem %s7492, %s7508
              $region120: #{tpu_custom_call.1} parent=107 // loop_footer
                %s7496 = sadd.s32 %s7494, 1
              $region121: #{tpu_custom_call.1} parent=107 // loop_footer_branch
                %7493 = sbr.rel target = $region117
              $region122: #{tpu_custom_call.1} parent=107 // loop_exit
                _
            $region108: #{tpu_custom_call.1} parent=99 // pred_fallthru
              _
          $region100: #{tpu_custom_call.1} parent=95 // pred_fallthru
            _
          %7584 = vnop
        $region96: #{tpu_custom_call.1} parent=67 // pred_fallthru
          _
      $region68: #{tpu_custom_call.1} parent=5 // pred_fallthru
        _
      %p7585 = scmp.le.s32.totalorder 2, %s29
      // Predicated region
      $region145: #{tpu_custom_call.1} parent=5 // pred_check
        %p7586 = pneg %p7585
      $region146: #{tpu_custom_call.1} parent=5 // pred_check_branch
        %7588 = sbr.rel (%p7586) target = $region148
      $region147: #{tpu_custom_call.1} parent=5 // pred_region
        %s7589 = ssub.s32 %s29, 2
        // Predicated region
        $region149: #{tpu_custom_call.1} parent=147 // pred_check
          %p7590 = pneg %p355
        $region150: #{tpu_custom_call.1} parent=147 // pred_check_branch
          %7592 = sbr.rel (%p7590) target = $region152
        $region151: #{tpu_custom_call.1} parent=147 // pred_region
          %s7593 = sand.u32 %s340, 1
          %s7594 = sand.u32 %s340, 1
          %s7595 = smul.addr %s7594, 104
          %s7596 = scalar_lea.vmem [#allocation13], %s7595
        $region152: #{tpu_custom_call.1} parent=147 // pred_fallthru
          _
      $region148: #{tpu_custom_call.1} parent=5 // pred_fallthru
        _
    $region6: #{tpu_custom_call.1} parent=1 // loop_footer
      %s33 = sadd.s32 1, %s29
    $region7: #{tpu_custom_call.1} parent=1 // loop_footer_branch
      %28 = sbr.rel target = $region3
    $region8: #{tpu_custom_call.1} parent=1 // loop_exit
      _
    %7597 = vsyncpa [#allocation4], 1
    %s7598 = scalar_lea.sflag [#allocation4], 1
    %7599 = vsyncpa %s7598, 1
    %7600 = vsyncpa [#allocation6], 1
    %s7601 = scalar_lea.sflag [#allocation6], 1
    %7602 = vsyncpa %s7601, 1
    %7603 = vsyncpa [#allocation9], 1
    %s7604 = scalar_lea.sflag [#allocation9], 1
    %7605 = vsyncpa %s7604, 1
    %7606 = vsyncpa [#allocation12], 1

</llo_original>
